<compile_context>
chip_gen: v7x
topology: tpu7x:2x2x1
jax: 0.10.0
libtpu: 0.0.40
codegen_flags: <defaults>
</compile_context>

<pallas_src>
import functools

import jax
import jax.numpy as jnp
from jax.experimental import pallas as pl
from jax.experimental.pallas import tpu as pltpu


CH_PAD = 16          # pad channel dims to the bf16 sublane pack
LAYER_STRIDES = (1, 2, 2, 2)


def _round_up(x, m):
    return (x + m - 1) // m * m


# -------------------- Pallas kernels --------------------

def _conv_kernel(offs, tm, tiled, res_mode, relu, *refs):
    """One conv lane-tile, single K step:
         acc  = bias                                   (folded BN bias)
         acc += sum_t W_t @ canvas[:, base+off_t : +tm]  (in-kernel im2col taps)
         acc += residual            (identity add or fused 1x1-projection dot)
         out  = relu(acc)  (lane-dense bf16 store)
    """
    if res_mode == 0:
        x2_ref, w_ref, b_ref, o_ref = refs
    elif res_mode == 1:
        x2_ref, w_ref, b_ref, r_ref, o_ref = refs
    else:
        x2_ref, w_ref, b_ref, r_ref, wr_ref, o_ref = refs

    cout_p = o_ref.shape[0]
    if tiled:
        base = pl.multiple_of(pl.program_id(0) * tm, 128)
    else:
        base = 0                                   # single tile: fully static slices

    # Bias folded into the accumulator init -> pure epilogue.
    acc = jnp.broadcast_to(b_ref[...], (cout_p, tm)).astype(jnp.float32)
    for t, off in enumerate(offs):                 # static unroll over kh*kw taps
        acc = acc + jnp.dot(w_ref[t], x2_ref[:, pl.ds(base + off, tm)],
                            preferred_element_type=jnp.float32)
    if res_mode == 1:                              # identity shortcut: plain add
        acc = acc + r_ref[...].astype(jnp.float32)
    elif res_mode == 2:                            # projection shortcut: fused 1x1 GEMM
        acc = acc + jnp.dot(wr_ref[...], r_ref[...],
                            preferred_element_type=jnp.float32)
    if relu:
        acc = jnp.maximum(acc, 0.0)
    o_ref[...] = acc.astype(o_ref.dtype)


def _head_kernel(stats_ref, w1_ref, b1_ref, rm_ref, rinv_ref, w2_ref, b2_ref,
                 a_ref, b_ref):
    """seg_1 -> embed_a ; relu -> BatchNorm1d(affine=False, eval) -> seg_2 -> embed_b."""
    a = jnp.dot(stats_ref[...], w1_ref[...],
                preferred_element_type=jnp.float32) + b1_ref[...]
    a_ref[...] = a
    h = jnp.maximum(a, 0.0)
    h = (h - rm_ref[...]) * rinv_ref[...]
    b_ref[...] = jnp.dot(h, w2_ref[...],
                         preferred_element_type=jnp.float32) + b2_ref[...]


# -------------------- conv wrapper --------------------

def _fold_bn(w, bn, cin_p, cout_p, eps=1e-5):
    """Fold eval-mode BN into conv weights; pad channels.
    Returns wt (kh*kw, cout_p, cin_p) bf16 and bias (cout_p, 1) f32."""
    gamma, beta, rmean, rvar = bn
    cout, cin, kh, kw = w.shape
    scale = gamma / jnp.sqrt(rvar + eps)
    bias = beta - rmean * scale
    wf = w * scale[:, None, None, None]
    wf = jnp.pad(wf, ((0, cout_p - cout), (0, cin_p - cin), (0, 0), (0, 0)))
    bias = jnp.pad(bias, (0, cout_p - cout)).astype(jnp.float32).reshape(cout_p, 1)
    wt = jnp.transpose(wf, (2, 3, 0, 1)).reshape(kh * kw, cout_p, cin_p)
    return wt.astype(jnp.bfloat16), bias


def fused_conv(x, w, bn, stride, relu=True, res=None, eps=1e-5):
    """3x3 conv (pad=1) + folded BN (+ fused shortcut) + ReLU as ONE Pallas GEMM.

    x   : (cin_p, B, H, W) bf16 channel-padded activation.
    w   : (cout, cin_real, 3, 3) PyTorch-layout weight.
    res : None
          | ('add',  r)                 r: (cout_p, B, Ho, Wo)  identity shortcut
          | ('proj', r, sc_w, sc_bn)    r: (cres_p, B, Ho, Wo)  1x1-shortcut input
    Returns (cout_p, B, Ho, Wo) bf16.
    """
    cin_p, B, H, W = x.shape
    cout, _, kh, kw = w.shape
    cout_p = _round_up(cout, CH_PAD)
    pad = (kh - 1) // 2
    Hp, Wp = H + 2 * pad, W + 2 * pad
    Ho = (H + 2 * pad - kh) // stride + 1
    Wo = (W + 2 * pad - kw) // stride + 1

    m_full = B * Hp * Wp                       # flat canvas positions (lane axis)
    m_out = _round_up(m_full, 128)
    if m_out > 1024:                           # single lane tile when small; 512-wide
        tm = 512                               # "parallel" tiles otherwise (>=2 tiles
        m_out = _round_up(m_out, tm)           # so both v7x TensorCores get work)
    else:
        tm = m_out
    tiled = m_out > tm
    offs = tuple(i * Wp + j for i in range(kh) for j in range(kw))
    canvas_len = _round_up(m_out + offs[-1], 128)

    # Input as ONE flat zero-padded canvas (a single pad + reshape in XLA -- the
    # kh*kw tap extraction happens inside the kernel, no 9x HBM expansion).
    # TODO(synk): for very long sequences the canvas should be windowed per M
    # tile (manual DMA / Element-offset window) instead of kept whole in VMEM.
    x2 = jnp.pad(x, ((0, 0), (0, 0), (pad, pad), (pad, pad)))
    x2 = x2.reshape(cin_p, m_full).astype(jnp.bfloat16)
    x2 = jnp.pad(x2, ((0, 0), (0, canvas_len - m_full)))

    wt, bias = _fold_bn(w, bn, cin_p, cout_p, eps)
    args = [x2, wt, bias]
    in_specs = [
        pl.BlockSpec((cin_p, canvas_len), lambda mi: (0, 0)),
        pl.BlockSpec((kh * kw, cout_p, cin_p), lambda mi: (0, 0, 0)),
        pl.BlockSpec((cout_p, 1), lambda mi: (0, 0)),
    ]

    res_mode = 0
    if res is not None:
        assert stride == 1                     # shortcuts are fused into conv2 (stride 1)
        if res[0] == 'proj':
            _, r4, sc_w, sc_bn = res
            wr, sc_bias = _fold_bn(sc_w, sc_bn, r4.shape[0], cout_p, eps)
            args[2] = bias + sc_bias           # fold both biases into the acc init
            res_mode = 2
        else:
            _, r4 = res
            res_mode = 1
        # Residual values laid on the same flat output canvas (top-left aligned).
        r2 = jnp.pad(r4, ((0, 0), (0, 0), (0, Hp - Ho), (0, Wp - Wo)))
        r2 = r2.reshape(r4.shape[0], m_full).astype(jnp.bfloat16)
        r2 = jnp.pad(r2, ((0, 0), (0, m_out - m_full)))
        args.append(r2)
        in_specs.append(pl.BlockSpec((r4.shape[0], tm), lambda mi: (0, mi)))
        if res_mode == 2:
            args.append(wr[0])                 # (cout_p, cres_p) folded 1x1 weights
            in_specs.append(pl.BlockSpec(wr[0].shape, lambda mi: (0, 0)))

    out = pl.pallas_call(
        functools.partial(_conv_kernel, offs, tm, tiled, res_mode, relu),
        out_shape=jax.ShapeDtypeStruct((cout_p, m_out), jnp.bfloat16),
        grid=(m_out // tm,),
        in_specs=in_specs,
        out_specs=pl.BlockSpec((cout_p, tm), lambda mi: (0, mi)),
        compiler_params=pltpu.CompilerParams(dimension_semantics=("parallel",)),
    )(*args)

    # De-canvas: valid conv outputs sit at canvas positions (b, stride*y, stride*x).
    # TODO(synk): this slice + the next layer's pad could be folded into the kernel
    # epilogue (mask junk lanes / emit the next canvas) to drop ~1x of XLA traffic.
    out = out[:, :m_full].reshape(cout_p, B, Hp, Wp)
    out = out[:, :, 0:stride * (Ho - 1) + 1:stride, 0:stride * (Wo - 1) + 1:stride]
    return out


# -------------------- pooling / head --------------------

def tstp(h):
    """Temporal statistics pooling. h: (C, B, F, T) -> (B, 2*C*F) = [mean_t | std_t].
    Plain JAX per the perf review: tensor is tiny and the reduced axis (T)
    would otherwise sit on lanes inside a kernel."""
    c, b, f, t = h.shape
    x = jnp.transpose(h, (1, 0, 2, 3)).reshape(b, c * f, t).astype(jnp.float32)
    mu = jnp.mean(x, axis=-1)
    var = jnp.sum((x - mu[..., None]) ** 2, axis=-1) / (t - 1)   # torch.var: unbiased
    std = jnp.sqrt(var + 1e-7)
    return jnp.concatenate([mu, std], axis=1)


def _full_spec(shape):
    n = len(shape)
    return pl.BlockSpec(shape, lambda i, n=n: (0,) * n)


def head(stats, hp, eps=1e-5):
    w1, b1, rm, rv, w2, b2 = hp
    b = stats.shape[0]
    e = w1.shape[1]
    rinv = (1.0 / jnp.sqrt(rv + eps)).reshape(1, e)
    args = [stats, w1, b1.reshape(1, e), rm.reshape(1, e), rinv, w2, b2.reshape(1, e)]
    return pl.pallas_call(
        _head_kernel,
        out_shape=(jax.ShapeDtypeStruct((b, e), jnp.float32),
                   jax.ShapeDtypeStruct((b, e), jnp.float32)),
        grid=(1,),
        in_specs=[_full_spec(a.shape) for a in args],
        out_specs=(_full_spec((b, e)), _full_spec((b, e))),
    )(*args)


# -------------------- model --------------------

def basic_block(x, blk, stride):
    """BasicBlock (expansion=1): relu(bn1(conv1)); bn2(conv2) + shortcut; relu.
    The shortcut (identity or 1x1 conv + BN) is fused into the conv2 kernel."""
    out = fused_conv(x, blk['conv1_w'], blk['bn1'], stride=stride, relu=True)
    if 'sc_w' in blk:
        r = x[:, :, ::stride, ::stride]        # 1x1 stride-s sampling of the block input
        res = ('proj', r, blk['sc_w'], blk['sc_bn'])
    else:
        res = ('add', x)
    return fused_conv(out, blk['conv2_w'], blk['bn2'], stride=1, relu=True, res=res)


def resnet_forward(params, x):
    """x: (B, T, feat_dim) -> (embed_a, embed_b), both (B, embed_dim)."""
    # PyTorch: (B, T, F) -> (B, 1, F, T) NCHW.  Ours: (C padded to CH_PAD, B, H=F, W=T).
    h = jnp.transpose(x, (0, 2, 1))[None].astype(jnp.bfloat16)
    h = jnp.pad(h, ((0, CH_PAD - 1), (0, 0), (0, 0), (0, 0)))
    h = fused_conv(h, params['conv1_w'], params['bn1'], stride=1, relu=True)
    for li in range(1, 5):
        for bi, blk in enumerate(params[f'layer{li}']):
            s = LAYER_STRIDES[li - 1] if bi == 0 else 1
            h = basic_block(h, blk, s)
    c_real = params['layer4'][-1]['conv2_w'].shape[0]
    stats = tstp(h[:c_real])                   # drop the channel padding once, here
    embed_a, embed_b = head(stats, params['head'])
    return embed_a, embed_b


def init_params(key, m_channels=4, feat_dim=16, embed_dim=32, num_blocks=(1, 1, 1, 1)):
    keys = iter(jax.random.split(key, 512))

    def nk():
        return next(keys)

    def init_conv(cout, cin, k):
        fan_in = cin * k * k
        return jax.random.normal(nk(), (cout, cin, k, k), jnp.float32) / jnp.sqrt(fan_in)

    def init_bn(c):
        gamma = jax.random.uniform(nk(), (c,), jnp.float32, 0.5, 1.5)
        beta = 0.1 * jax.random.normal(nk(), (c,), jnp.float32)
        rmean = 0.1 * jax.random.normal(nk(), (c,), jnp.float32)
        rvar = jax.random.uniform(nk(), (c,), jnp.float32, 0.5, 1.5)
        return (gamma, beta, rmean, rvar)

    params = {'conv1_w': init_conv(m_channels, 1, 3), 'bn1': init_bn(m_channels)}
    in_planes = m_channels
    layer_cfg = [(m_channels, num_blocks[0], 1),
                 (m_channels * 2, num_blocks[1], 2),
                 (m_channels * 4, num_blocks[2], 2),
                 (m_channels * 8, num_blocks[3], 2)]
    for li, (planes, nb, stride) in enumerate(layer_cfg, start=1):
        blocks = []
        for s in [stride] + [1] * (nb - 1):
            blk = {'conv1_w': init_conv(planes, in_planes, 3),
                   'bn1': init_bn(planes),
                   'conv2_w': init_conv(planes, planes, 3),
                   'bn2': init_bn(planes)}
            if s != 1 or in_planes != planes:          # BasicBlock expansion = 1
                blk['sc_w'] = init_conv(planes, in_planes, 1)
                blk['sc_bn'] = init_bn(planes)
            blocks.append(blk)
            in_planes = planes
        params[f'layer{li}'] = blocks

    stats_dim = (feat_dim // 8) * m_channels * 8
    pool_out = stats_dim * 2                            # TSTP: mean + std
    w1 = jax.random.normal(nk(), (pool_out, embed_dim), jnp.float32) / jnp.sqrt(pool_out)
    b1 = 0.1 * jax.random.normal(nk(), (embed_dim,), jnp.float32)
    rm = 0.1 * jax.random.normal(nk(), (embed_dim,), jnp.float32)
    rv = jax.random.uniform(nk(), (embed_dim,), jnp.float32, 0.5, 1.5)
    w2 = jax.random.normal(nk(), (embed_dim, embed_dim), jnp.float32) / jnp.sqrt(embed_dim)
    b2 = 0.1 * jax.random.normal(nk(), (embed_dim,), jnp.float32)
    params['head'] = (w1, b1, rm, rv, w2, b2)
    return params


if __name__ == "__main__":
    key = jax.random.PRNGKey(0)
    kx, kp = jax.random.split(key)

    B, T, FEAT = 2, 16, 16          # module input: (B, T, feat_dim); T/8 >= 2 required
    M_CH, EMBED = 4, 32             # m_channels, embed_dim (small synthetic config)

    x = jax.random.normal(kx, (B, T, FEAT), jnp.float32)
    params = init_params(kp, m_channels=M_CH, feat_dim=FEAT,
                         embed_dim=EMBED, num_blocks=(1, 1, 1, 1))

    fwd = jax.jit(resnet_forward)
    embed_a, embed_b = fwd(params, x)
    jax.block_until_ready((embed_a, embed_b))
    assert embed_a.shape == (B, EMBED) and embed_b.shape == (B, EMBED)
    assert bool(jnp.all(jnp.isfinite(embed_a))) and bool(jnp.all(jnp.isfinite(embed_b)))
    print("KERNEL_OK")
</pallas_src>

<mosaic_0001>
module attributes {stable_mosaic.version = 11 : i64} {
  func.func @_conv_kernel(%arg0: i32, %arg1: memref<16x896xbf16, #tpu.memory_space<vmem>>, %arg2: memref<9x16x16xbf16, #tpu.memory_space<vmem>>, %arg3: memref<16x1xf32, #tpu.memory_space<vmem>>, %arg4: memref<16x768xbf16, #tpu.memory_space<vmem>>) attributes {dimension_semantics = [#tpu.dimension_semantics<parallel>], iteration_bounds = array<i64: 1>, scalar_prefetch = 0 : i64, scratch_operands = 0 : i64, tpu.core_type = #tpu.core_type<tc>, window_params = [{pipeline_mode = #tpu.pipeline_mode<synchronous>, transform_indices = @transform_0, window_bounds = array<i64: 16, 896>}, {pipeline_mode = #tpu.pipeline_mode<synchronous>, transform_indices = @transform_1, window_bounds = array<i64: 9, 16, 16>}, {pipeline_mode = #tpu.pipeline_mode<synchronous>, transform_indices = @transform_2, window_bounds = array<i64: 16, 1>}, {transform_indices = @transform_3, window_bounds = array<i64: 16, 768>}]} {
    %c0 = arith.constant 0 : index
    %c0_0 = arith.constant 0 : index
    %0 = vector.load %arg3[%c0, %c0_0] : memref<16x1xf32, #tpu.memory_space<vmem>>, vector<16x1xf32>
    %1 = vector.shape_cast %0 : vector<16x1xf32> to vector<16x1xf32>
    %2 = vector.broadcast %1 : vector<16x1xf32> to vector<16x768xf32>
    %c0_1 = arith.constant 0 : index
    %c0_2 = arith.constant 0 : index
    %c0_3 = arith.constant 0 : index
    %3 = vector.load %arg2[%c0_1, %c0_2, %c0_3] : memref<9x16x16xbf16, #tpu.memory_space<vmem>>, vector<1x16x16xbf16>
    %4 = vector.shape_cast %3 : vector<1x16x16xbf16> to vector<16x16xbf16>
    %c0_4 = arith.constant 0 : index
    %c0_5 = arith.constant 0 : index
    %5 = vector.load %arg1[%c0_4, %c0_5] : memref<16x896xbf16, #tpu.memory_space<vmem>>, vector<16x768xbf16>
    %cst = arith.constant dense<0.000000e+00> : vector<16x768xf32>
    %6 = tpu.matmul %4, %5, %cst {dimension_numbers = #tpu.dot_dimension_numbers<[1], [0], [0], [1], [0, 0, 1, 1], [], []>} : vector<16x16xbf16>, vector<16x768xbf16>, vector<16x768xf32> -> vector<16x768xf32>
    %7 = arith.addf %2, %6 : vector<16x768xf32>
    %c1 = arith.constant 1 : index
    %c0_6 = arith.constant 0 : index
    %c0_7 = arith.constant 0 : index
    %8 = vector.load %arg2[%c1, %c0_6, %c0_7] : memref<9x16x16xbf16, #tpu.memory_space<vmem>>, vector<1x16x16xbf16>
    %9 = vector.shape_cast %8 : vector<1x16x16xbf16> to vector<16x16xbf16>
    %c0_8 = arith.constant 0 : index
    %c1_9 = arith.constant 1 : index
    %10 = vector.load %arg1[%c0_8, %c1_9] : memref<16x896xbf16, #tpu.memory_space<vmem>>, vector<16x768xbf16>
    %cst_10 = arith.constant dense<0.000000e+00> : vector<16x768xf32>
    %11 = tpu.matmul %9, %10, %cst_10 {dimension_numbers = #tpu.dot_dimension_numbers<[1], [0], [0], [1], [0, 0, 1, 1], [], []>} : vector<16x16xbf16>, vector<16x768xbf16>, vector<16x768xf32> -> vector<16x768xf32>
    %12 = arith.addf %7, %11 : vector<16x768xf32>
    %c2 = arith.constant 2 : index
    %c0_11 = arith.constant 0 : index
    %c0_12 = arith.constant 0 : index
    %13 = vector.load %arg2[%c2, %c0_11, %c0_12] : memref<9x16x16xbf16, #tpu.memory_space<vmem>>, vector<1x16x16xbf16>
    %14 = vector.shape_cast %13 : vector<1x16x16xbf16> to vector<16x16xbf16>
    %c0_13 = arith.constant 0 : index
    %c2_14 = arith.constant 2 : index
    %15 = vector.load %arg1[%c0_13, %c2_14] : memref<16x896xbf16, #tpu.memory_space<vmem>>, vector<16x768xbf16>
    %cst_15 = arith.constant dense<0.000000e+00> : vector<16x768xf32>
    %16 = tpu.matmul %14, %15, %cst_15 {dimension_numbers = #tpu.dot_dimension_numbers<[1], [0], [0], [1], [0, 0, 1, 1], [], []>} : vector<16x16xbf16>, vector<16x768xbf16>, vector<16x768xf32> -> vector<16x768xf32>
    %17 = arith.addf %12, %16 : vector<16x768xf32>
    %c3 = arith.constant 3 : index
    %c0_16 = arith.constant 0 : index
    %c0_17 = arith.constant 0 : index
    %18 = vector.load %arg2[%c3, %c0_16, %c0_17] : memref<9x16x16xbf16, #tpu.memory_space<vmem>>, vector<1x16x16xbf16>
    %19 = vector.shape_cast %18 : vector<1x16x16xbf16> to vector<16x16xbf16>
    %c0_18 = arith.constant 0 : index
    %c18 = arith.constant 18 : index
    %20 = vector.load %arg1[%c0_18, %c18] : memref<16x896xbf16, #tpu.memory_space<vmem>>, vector<16x768xbf16>
    %cst_19 = arith.constant dense<0.000000e+00> : vector<16x768xf32>
    %21 = tpu.matmul %19, %20, %cst_19 {dimension_numbers = #tpu.dot_dimension_numbers<[1], [0], [0], [1], [0, 0, 1, 1], [], []>} : vector<16x16xbf16>, vector<16x768xbf16>, vector<16x768xf32> -> vector<16x768xf32>
    %22 = arith.addf %17, %21 : vector<16x768xf32>
    %c4 = arith.constant 4 : index
    %c0_20 = arith.constant 0 : index
    %c0_21 = arith.constant 0 : index
    %23 = vector.load %arg2[%c4, %c0_20, %c0_21] : memref<9x16x16xbf16, #tpu.memory_space<vmem>>, vector<1x16x16xbf16>
    %24 = vector.shape_cast %23 : vector<1x16x16xbf16> to vector<16x16xbf16>
    %c0_22 = arith.constant 0 : index
    %c19 = arith.constant 19 : index
    %25 = vector.load %arg1[%c0_22, %c19] : memref<16x896xbf16, #tpu.memory_space<vmem>>, vector<16x768xbf16>
    %cst_23 = arith.constant dense<0.000000e+00> : vector<16x768xf32>
    %26 = tpu.matmul %24, %25, %cst_23 {dimension_numbers = #tpu.dot_dimension_numbers<[1], [0], [0], [1], [0, 0, 1, 1], [], []>} : vector<16x16xbf16>, vector<16x768xbf16>, vector<16x768xf32> -> vector<16x768xf32>
    %27 = arith.addf %22, %26 : vector<16x768xf32>
    %c5 = arith.constant 5 : index
    %c0_24 = arith.constant 0 : index
    %c0_25 = arith.constant 0 : index
    %28 = vector.load %arg2[%c5, %c0_24, %c0_25] : memref<9x16x16xbf16, #tpu.memory_space<vmem>>, vector<1x16x16xbf16>
    %29 = vector.shape_cast %28 : vector<1x16x16xbf16> to vector<16x16xbf16>
    %c0_26 = arith.constant 0 : index
    %c20 = arith.constant 20 : index
    %30 = vector.load %arg1[%c0_26, %c20] : memref<16x896xbf16, #tpu.memory_space<vmem>>, vector<16x768xbf16>
    %cst_27 = arith.constant dense<0.000000e+00> : vector<16x768xf32>
    %31 = tpu.matmul %29, %30, %cst_27 {dimension_numbers = #tpu.dot_dimension_numbers<[1], [0], [0], [1], [0, 0, 1, 1], [], []>} : vector<16x16xbf16>, vector<16x768xbf16>, vector<16x768xf32> -> vector<16x768xf32>
    %32 = arith.addf %27, %31 : vector<16x768xf32>
    %c6 = arith.constant 6 : index
    %c0_28 = arith.constant 0 : index
    %c0_29 = arith.constant 0 : index
    %33 = vector.load %arg2[%c6, %c0_28, %c0_29] : memref<9x16x16xbf16, #tpu.memory_space<vmem>>, vector<1x16x16xbf16>
    %34 = vector.shape_cast %33 : vector<1x16x16xbf16> to vector<16x16xbf16>
    %c0_30 = arith.constant 0 : index
    %c36 = arith.constant 36 : index
    %35 = vector.load %arg1[%c0_30, %c36] : memref<16x896xbf16, #tpu.memory_space<vmem>>, vector<16x768xbf16>
    %cst_31 = arith.constant dense<0.000000e+00> : vector<16x768xf32>
    %36 = tpu.matmul %34, %35, %cst_31 {dimension_numbers = #tpu.dot_dimension_numbers<[1], [0], [0], [1], [0, 0, 1, 1], [], []>} : vector<16x16xbf16>, vector<16x768xbf16>, vector<16x768xf32> -> vector<16x768xf32>
    %37 = arith.addf %32, %36 : vector<16x768xf32>
    %c7 = arith.constant 7 : index
    %c0_32 = arith.constant 0 : index
    %c0_33 = arith.constant 0 : index
    %38 = vector.load %arg2[%c7, %c0_32, %c0_33] : memref<9x16x16xbf16, #tpu.memory_space<vmem>>, vector<1x16x16xbf16>
    %39 = vector.shape_cast %38 : vector<1x16x16xbf16> to vector<16x16xbf16>
    %c0_34 = arith.constant 0 : index
    %c37 = arith.constant 37 : index
    %40 = vector.load %arg1[%c0_34, %c37] : memref<16x896xbf16, #tpu.memory_space<vmem>>, vector<16x768xbf16>
    %cst_35 = arith.constant dense<0.000000e+00> : vector<16x768xf32>
    %41 = tpu.matmul %39, %40, %cst_35 {dimension_numbers = #tpu.dot_dimension_numbers<[1], [0], [0], [1], [0, 0, 1, 1], [], []>} : vector<16x16xbf16>, vector<16x768xbf16>, vector<16x768xf32> -> vector<16x768xf32>
    %42 = arith.addf %37, %41 : vector<16x768xf32>
    %c8 = arith.constant 8 : index
    %c0_36 = arith.constant 0 : index
    %c0_37 = arith.constant 0 : index
    %43 = vector.load %arg2[%c8, %c0_36, %c0_37] : memref<9x16x16xbf16, #tpu.memory_space<vmem>>, vector<1x16x16xbf16>
    %44 = vector.shape_cast %43 : vector<1x16x16xbf16> to vector<16x16xbf16>
    %c0_38 = arith.constant 0 : index
    %c38 = arith.constant 38 : index
    %45 = vector.load %arg1[%c0_38, %c38] : memref<16x896xbf16, #tpu.memory_space<vmem>>, vector<16x768xbf16>
    %cst_39 = arith.constant dense<0.000000e+00> : vector<16x768xf32>
    %46 = tpu.matmul %44, %45, %cst_39 {dimension_numbers = #tpu.dot_dimension_numbers<[1], [0], [0], [1], [0, 0, 1, 1], [], []>} : vector<16x16xbf16>, vector<16x768xbf16>, vector<16x768xf32> -> vector<16x768xf32>
    %47 = arith.addf %42, %46 : vector<16x768xf32>
    %cst_40 = arith.constant 0.000000e+00 : f32
    %48 = vector.broadcast %cst_40 : f32 to vector<16x768xf32>
    %49 = arith.maximumf %47, %48 : vector<16x768xf32>
    %50 = arith.truncf %49 : vector<16x768xf32> to vector<16x768xbf16>
    %c0_41 = arith.constant 0 : index
    %c0_42 = arith.constant 0 : index
    %51 = vector.load %arg4[%c0_41, %c0_42] : memref<16x768xbf16, #tpu.memory_space<vmem>>, vector<16x768xbf16>
    tpu.vector_store %arg4[%c0_41, %c0_42], %50 {strides = array<i32>} : memref<16x768xbf16, #tpu.memory_space<vmem>>, vector<16x768xbf16>,
    return
  }
  func.func @transform_0(%arg0: i32) -> (i32, i32) {
    %c0_i32 = arith.constant 0 : i32
    %c0_i32_0 = arith.constant 0 : i32
    %c0_i32_1 = arith.constant 0 : i32
    return %c0_i32, %c0_i32_0 : i32, i32
  }
  func.func @transform_1(%arg0: i32) -> (i32, i32, i32) {
    %c0_i32 = arith.constant 0 : i32
    %c0_i32_0 = arith.constant 0 : i32
    %c0_i32_1 = arith.constant 0 : i32
    %c0_i32_2 = arith.constant 0 : i32
    return %c0_i32, %c0_i32_0, %c0_i32_1 : i32, i32, i32
  }
  func.func @transform_2(%arg0: i32) -> (i32, i32) {
    %c0_i32 = arith.constant 0 : i32
    %c0_i32_0 = arith.constant 0 : i32
    %c0_i32_1 = arith.constant 0 : i32
    return %c0_i32, %c0_i32_0 : i32, i32
  }
  func.func @transform_3(%arg0: i32) -> (i32, i32) {
    %c0_i32 = arith.constant 0 : i32
    %c0_i32_0 = arith.constant 0 : i32
    return %c0_i32, %arg0 : i32, i32
  }
}

module attributes {stable_mosaic.version = 11 : i64} {
  func.func @_conv_kernel(%arg0: i32, %arg1: memref<16x896xbf16, #tpu.memory_space<vmem>>, %arg2: memref<9x16x16xbf16, #tpu.memory_space<vmem>>, %arg3: memref<16x1xf32, #tpu.memory_space<vmem>>, %arg4: memref<16x768xbf16, #tpu.memory_space<vmem>>, %arg5: memref<16x768xbf16, #tpu.memory_space<vmem>>) attributes {dimension_semantics = [#tpu.dimension_semantics<parallel>], iteration_bounds = array<i64: 1>, scalar_prefetch = 0 : i64, scratch_operands = 0 : i64, tpu.core_type = #tpu.core_type<tc>, window_params = [{pipeline_mode = #tpu.pipeline_mode<synchronous>, transform_indices = @transform_0, window_bounds = array<i64: 16, 896>}, {pipeline_mode = #tpu.pipeline_mode<synchronous>, transform_indices = @transform_1, window_bounds = array<i64: 9, 16, 16>}, {pipeline_mode = #tpu.pipeline_mode<synchronous>, transform_indices = @transform_2, window_bounds = array<i64: 16, 1>}, {transform_indices = @transform_3, window_bounds = array<i64: 16, 768>}, {transform_indices = @transform_4, window_bounds = array<i64: 16, 768>}]} {
    %c0 = arith.constant 0 : index
    %c0_0 = arith.constant 0 : index
    %0 = vector.load %arg3[%c0, %c0_0] : memref<16x1xf32, #tpu.memory_space<vmem>>, vector<16x1xf32>
    %1 = vector.shape_cast %0 : vector<16x1xf32> to vector<16x1xf32>
    %2 = vector.broadcast %1 : vector<16x1xf32> to vector<16x768xf32>
    %c0_1 = arith.constant 0 : index
    %c0_2 = arith.constant 0 : index
    %c0_3 = arith.constant 0 : index
    %3 = vector.load %arg2[%c0_1, %c0_2, %c0_3] : memref<9x16x16xbf16, #tpu.memory_space<vmem>>, vector<1x16x16xbf16>
    %4 = vector.shape_cast %3 : vector<1x16x16xbf16> to vector<16x16xbf16>
    %c0_4 = arith.constant 0 : index
    %c0_5 = arith.constant 0 : index
    %5 = vector.load %arg1[%c0_4, %c0_5] : memref<16x896xbf16, #tpu.memory_space<vmem>>, vector<16x768xbf16>
    %cst = arith.constant dense<0.000000e+00> : vector<16x768xf32>
    %6 = tpu.matmul %4, %5, %cst {dimension_numbers = #tpu.dot_dimension_numbers<[1], [0], [0], [1], [0, 0, 1, 1], [], []>} : vector<16x16xbf16>, vector<16x768xbf16>, vector<16x768xf32> -> vector<16x768xf32>
    %7 = arith.addf %2, %6 : vector<16x768xf32>
    %c1 = arith.constant 1 : index
    %c0_6 = arith.constant 0 : index
    %c0_7 = arith.constant 0 : index
    %8 = vector.load %arg2[%c1, %c0_6, %c0_7] : memref<9x16x16xbf16, #tpu.memory_space<vmem>>, vector<1x16x16xbf16>
    %9 = vector.shape_cast %8 : vector<1x16x16xbf16> to vector<16x16xbf16>
    %c0_8 = arith.constant 0 : index
    %c1_9 = arith.constant 1 : index
    %10 = vector.load %arg1[%c0_8, %c1_9] : memref<16x896xbf16, #tpu.memory_space<vmem>>, vector<16x768xbf16>
    %cst_10 = arith.constant dense<0.000000e+00> : vector<16x768xf32>
    %11 = tpu.matmul %9, %10, %cst_10 {dimension_numbers = #tpu.dot_dimension_numbers<[1], [0], [0], [1], [0, 0, 1, 1], [], []>} : vector<16x16xbf16>, vector<16x768xbf16>, vector<16x768xf32> -> vector<16x768xf32>
    %12 = arith.addf %7, %11 : vector<16x768xf32>
    %c2 = arith.constant 2 : index
    %c0_11 = arith.constant 0 : index
    %c0_12 = arith.constant 0 : index
    %13 = vector.load %arg2[%c2, %c0_11, %c0_12] : memref<9x16x16xbf16, #tpu.memory_space<vmem>>, vector<1x16x16xbf16>
    %14 = vector.shape_cast %13 : vector<1x16x16xbf16> to vector<16x16xbf16>
    %c0_13 = arith.constant 0 : index
    %c2_14 = arith.constant 2 : index
    %15 = vector.load %arg1[%c0_13, %c2_14] : memref<16x896xbf16, #tpu.memory_space<vmem>>, vector<16x768xbf16>
    %cst_15 = arith.constant dense<0.000000e+00> : vector<16x768xf32>
    %16 = tpu.matmul %14, %15, %cst_15 {dimension_numbers = #tpu.dot_dimension_numbers<[1], [0], [0], [1], [0, 0, 1, 1], [], []>} : vector<16x16xbf16>, vector<16x768xbf16>, vector<16x768xf32> -> vector<16x768xf32>
    %17 = arith.addf %12, %16 : vector<16x768xf32>
    %c3 = arith.constant 3 : index
    %c0_16 = arith.constant 0 : index
    %c0_17 = arith.constant 0 : index
    %18 = vector.load %arg2[%c3, %c0_16, %c0_17] : memref<9x16x16xbf16, #tpu.memory_space<vmem>>, vector<1x16x16xbf16>
    %19 = vector.shape_cast %18 : vector<1x16x16xbf16> to vector<16x16xbf16>
    %c0_18 = arith.constant 0 : index
    %c18 = arith.constant 18 : index
    %20 = vector.load %arg1[%c0_18, %c18] : memref<16x896xbf16, #tpu.memory_space<vmem>>, vector<16x768xbf16>
    %cst_19 = arith.constant dense<0.000000e+00> : vector<16x768xf32>
    %21 = tpu.matmul %19, %20, %cst_19 {dimension_numbers = #tpu.dot_dimension_numbers<[1], [0], [0], [1], [0, 0, 1, 1], [], []>} : vector<16x16xbf16>, vector<16x768xbf16>, vector<16x768xf32> -> vector<16x768xf32>
    %22 = arith.addf %17, %21 : vector<16x768xf32>
    %c4 = arith.constant 4 : index
    %c0_20 = arith.constant 0 : index
    %c0_21 = arith.constant 0 : index
    %23 = vector.load %arg2[%c4, %c0_20, %c0_21] : memref<9x16x16xbf16, #tpu.memory_space<vmem>>, vector<1x16x16xbf16>
    %24 = vector.shape_cast %23 : vector<1x16x16xbf16> to vector<16x16xbf16>
    %c0_22 = arith.constant 0 : index
    %c19 = arith.constant 19 : index
    %25 = vector.load %arg1[%c0_22, %c19] : memref<16x896xbf16, #tpu.memory_space<vmem>>, vector<16x768xbf16>
    %cst_23 = arith.constant dense<0.000000e+00> : vector<16x768xf32>
    %26 = tpu.matmul %24, %25, %cst_23 {dimension_numbers = #tpu.dot_dimension_numbers<[1], [0], [0], [1], [0, 0, 1, 1], [], []>} : vector<16x16xbf16>, vector<16x768xbf16>, vector<16x768xf32> -> vector<16x768xf32>
    %27 = arith.addf %22, %26 : vector<16x768xf32>
    %c5 = arith.constant 5 : index
    %c0_24 = arith.constant 0 : index
    %c0_25 = arith.constant 0 : index
    %28 = vector.load %arg2[%c5, %c0_24, %c0_25] : memref<9x16x16xbf16, #tpu.memory_space<vmem>>, vector<1x16x16xbf16>
    %29 = vector.shape_cast %28 : vector<1x16x16xbf16> to vector<16x16xbf16>
    %c0_26 = arith.constant 0 : index
    %c20 = arith.constant 20 : index
    %30 = vector.load %arg1[%c0_26, %c20] : memref<16x896xbf16, #tpu.memory_space<vmem>>, vector<16x768xbf16>
    %cst_27 = arith.constant dense<0.000000e+00> : vector<16x768xf32>
    %31 = tpu.matmul %29, %30, %cst_27 {dimension_numbers = #tpu.dot_dimension_numbers<[1], [0], [0], [1], [0, 0, 1, 1], [], []>} : vector<16x16xbf16>, vector<16x768xbf16>, vector<16x768xf32> -> vector<16x768xf32>
    %32 = arith.addf %27, %31 : vector<16x768xf32>
    %c6 = arith.constant 6 : index
    %c0_28 = arith.constant 0 : index
    %c0_29 = arith.constant 0 : index
    %33 = vector.load %arg2[%c6, %c0_28, %c0_29] : memref<9x16x16xbf16, #tpu.memory_space<vmem>>, vector<1x16x16xbf16>
    %34 = vector.shape_cast %33 : vector<1x16x16xbf16> to vector<16x16xbf16>
    %c0_30 = arith.constant 0 : index
    %c36 = arith.constant 36 : index
    %35 = vector.load %arg1[%c0_30, %c36] : memref<16x896xbf16, #tpu.memory_space<vmem>>, vector<16x768xbf16>
    %cst_31 = arith.constant dense<0.000000e+00> : vector<16x768xf32>
    %36 = tpu.matmul %34, %35, %cst_31 {dimension_numbers = #tpu.dot_dimension_numbers<[1], [0], [0], [1], [0, 0, 1, 1], [], []>} : vector<16x16xbf16>, vector<16x768xbf16>, vector<16x768xf32> -> vector<16x768xf32>
    %37 = arith.addf %32, %36 : vector<16x768xf32>
    %c7 = arith.constant 7 : index
    %c0_32 = arith.constant 0 : index
    %c0_33 = arith.constant 0 : index
    %38 = vector.load %arg2[%c7, %c0_32, %c0_33] : memref<9x16x16xbf16, #tpu.memory_space<vmem>>, vector<1x16x16xbf16>
    %39 = vector.shape_cast %38 : vector<1x16x16xbf16> to vector<16x16xbf16>
    %c0_34 = arith.constant 0 : index
    %c37 = arith.constant 37 : index
    %40 = vector.load %arg1[%c0_34, %c37] : memref<16x896xbf16, #tpu.memory_space<vmem>>, vector<16x768xbf16>
    %cst_35 = arith.constant dense<0.000000e+00> : vector<16x768xf32>
    %41 = tpu.matmul %39, %40, %cst_35 {dimension_numbers = #tpu.dot_dimension_numbers<[1], [0], [0], [1], [0, 0, 1, 1], [], []>} : vector<16x16xbf16>, vector<16x768xbf16>, vector<16x768xf32> -> vector<16x768xf32>
    %42 = arith.addf %37, %41 : vector<16x768xf32>
    %c8 = arith.constant 8 : index
    %c0_36 = arith.constant 0 : index
    %c0_37 = arith.constant 0 : index
    %43 = vector.load %arg2[%c8, %c0_36, %c0_37] : memref<9x16x16xbf16, #tpu.memory_space<vmem>>, vector<1x16x16xbf16>
    %44 = vector.shape_cast %43 : vector<1x16x16xbf16> to vector<16x16xbf16>
    %c0_38 = arith.constant 0 : index
    %c38 = arith.constant 38 : index
    %45 = vector.load %arg1[%c0_38, %c38] : memref<16x896xbf16, #tpu.memory_space<vmem>>, vector<16x768xbf16>
    %cst_39 = arith.constant dense<0.000000e+00> : vector<16x768xf32>
    %46 = tpu.matmul %44, %45, %cst_39 {dimension_numbers = #tpu.dot_dimension_numbers<[1], [0], [0], [1], [0, 0, 1, 1], [], []>} : vector<16x16xbf16>, vector<16x768xbf16>, vector<16x768xf32> -> vector<16x768xf32>
    %47 = arith.addf %42, %46 : vector<16x768xf32>
    %c0_40 = arith.constant 0 : index
    %c0_41 = arith.constant 0 : index
    %48 = vector.load %arg4[%c0_40, %c0_41] : memref<16x768xbf16, #tpu.memory_space<vmem>>, vector<16x768xbf16>
    %49 = arith.extf %48 : vector<16x768xbf16> to vector<16x768xf32>
    %50 = arith.addf %47, %49 : vector<16x768xf32>
    %cst_42 = arith.constant 0.000000e+00 : f32
    %51 = vector.broadcast %cst_42 : f32 to vector<16x768xf32>
    %52 = arith.maximumf %50, %51 : vector<16x768xf32>
    %53 = arith.truncf %52 : vector<16x768xf32> to vector<16x768xbf16>
    %c0_43 = arith.constant 0 : index
    %c0_44 = arith.constant 0 : index
    %54 = vector.load %arg5[%c0_43, %c0_44] : memref<16x768xbf16, #tpu.memory_space<vmem>>, vector<16x768xbf16>
    tpu.vector_store %arg5[%c0_43, %c0_44], %53 {strides = array<i32>} : memref<16x768xbf16, #tpu.memory_space<vmem>>, vector<16x768xbf16>,
    return
  }
  func.func @transform_0(%arg0: i32) -> (i32, i32) {
    %c0_i32 = arith.constant 0 : i32
    %c0_i32_0 = arith.constant 0 : i32
    %c0_i32_1 = arith.constant 0 : i32
    return %c0_i32, %c0_i32_0 : i32, i32
  }
  func.func @transform_1(%arg0: i32) -> (i32, i32, i32) {
    %c0_i32 = arith.constant 0 : i32
    %c0_i32_0 = arith.constant 0 : i32
    %c0_i32_1 = arith.constant 0 : i32
    %c0_i32_2 = arith.constant 0 : i32
    return %c0_i32, %c0_i32_0, %c0_i32_1 : i32, i32, i32
  }
  func.func @transform_2(%arg0: i32) -> (i32, i32) {
    %c0_i32 = arith.constant 0 : i32
    %c0_i32_0 = arith.constant 0 : i32
    %c0_i32_1 = arith.constant 0 : i32
    return %c0_i32, %c0_i32_0 : i32, i32
  }
  func.func @transform_3(%arg0: i32) -> (i32, i32) {
    %c0_i32 = arith.constant 0 : i32
    %c0_i32_0 = arith.constant 0 : i32
    return %c0_i32, %arg0 : i32, i32
  }
  func.func @transform_4(%arg0: i32) -> (i32, i32) {
    %c0_i32 = arith.constant 0 : i32
    %c0_i32_0 = arith.constant 0 : i32
    return %c0_i32, %arg0 : i32, i32
  }
}

module attributes {stable_mosaic.version = 11 : i64} {
  func.func @_conv_kernel(%arg0: i32, %arg1: memref<16x384xbf16, #tpu.memory_space<vmem>>, %arg2: memref<9x16x16xbf16, #tpu.memory_space<vmem>>, %arg3: memref<16x1xf32, #tpu.memory_space<vmem>>, %arg4: memref<16x256xbf16, #tpu.memory_space<vmem>>, %arg5: memref<16x16xbf16, #tpu.memory_space<vmem>>, %arg6: memref<16x256xbf16, #tpu.memory_space<vmem>>) attributes {dimension_semantics = [#tpu.dimension_semantics<parallel>], iteration_bounds = array<i64: 1>, scalar_prefetch = 0 : i64, scratch_operands = 0 : i64, tpu.core_type = #tpu.core_type<tc>, window_params = [{pipeline_mode = #tpu.pipeline_mode<synchronous>, transform_indices = @transform_0, window_bounds = array<i64: 16, 384>}, {pipeline_mode = #tpu.pipeline_mode<synchronous>, transform_indices = @transform_1, window_bounds = array<i64: 9, 16, 16>}, {pipeline_mode = #tpu.pipeline_mode<synchronous>, transform_indices = @transform_2, window_bounds = array<i64: 16, 1>}, {transform_indices = @transform_3, window_bounds = array<i64: 16, 256>}, {pipeline_mode = #tpu.pipeline_mode<synchronous>, transform_indices = @transform_4, window_bounds = array<i64: 16, 16>}, {transform_indices = @transform_5, window_bounds = array<i64: 16, 256>}]} {
    %c0 = arith.constant 0 : index
    %c0_0 = arith.constant 0 : index
    %0 = vector.load %arg3[%c0, %c0_0] : memref<16x1xf32, #tpu.memory_space<vmem>>, vector<16x1xf32>
    %1 = vector.shape_cast %0 : vector<16x1xf32> to vector<16x1xf32>
    %2 = vector.broadcast %1 : vector<16x1xf32> to vector<16x256xf32>
    %c0_1 = arith.constant 0 : index
    %c0_2 = arith.constant 0 : index
    %c0_3 = arith.constant 0 : index
    %3 = vector.load %arg2[%c0_1, %c0_2, %c0_3] : memref<9x16x16xbf16, #tpu.memory_space<vmem>>, vector<1x16x16xbf16>
    %4 = vector.shape_cast %3 : vector<1x16x16xbf16> to vector<16x16xbf16>
    %c0_4 = arith.constant 0 : index
    %c0_5 = arith.constant 0 : index
    %5 = vector.load %arg1[%c0_4, %c0_5] : memref<16x384xbf16, #tpu.memory_space<vmem>>, vector<16x256xbf16>
    %cst = arith.constant dense<0.000000e+00> : vector<16x256xf32>
    %6 = tpu.matmul %4, %5, %cst {dimension_numbers = #tpu.dot_dimension_numbers<[1], [0], [0], [1], [0, 0, 1, 1], [], []>} : vector<16x16xbf16>, vector<16x256xbf16>, vector<16x256xf32> -> vector<16x256xf32>
    %7 = arith.addf %2, %6 : vector<16x256xf32>
    %c1 = arith.constant 1 : index
    %c0_6 = arith.constant 0 : index
    %c0_7 = arith.constant 0 : index
    %8 = vector.load %arg2[%c1, %c0_6, %c0_7] : memref<9x16x16xbf16, #tpu.memory_space<vmem>>, vector<1x16x16xbf16>
    %9 = vector.shape_cast %8 : vector<1x16x16xbf16> to vector<16x16xbf16>
    %c0_8 = arith.constant 0 : index
    %c1_9 = arith.constant 1 : index
    %10 = vector.load %arg1[%c0_8, %c1_9] : memref<16x384xbf16, #tpu.memory_space<vmem>>, vector<16x256xbf16>
    %cst_10 = arith.constant dense<0.000000e+00> : vector<16x256xf32>
    %11 = tpu.matmul %9, %10, %cst_10 {dimension_numbers = #tpu.dot_dimension_numbers<[1], [0], [0], [1], [0, 0, 1, 1], [], []>} : vector<16x16xbf16>, vector<16x256xbf16>, vector<16x256xf32> -> vector<16x256xf32>
    %12 = arith.addf %7, %11 : vector<16x256xf32>
    %c2 = arith.constant 2 : index
    %c0_11 = arith.constant 0 : index
    %c0_12 = arith.constant 0 : index
    %13 = vector.load %arg2[%c2, %c0_11, %c0_12] : memref<9x16x16xbf16, #tpu.memory_space<vmem>>, vector<1x16x16xbf16>
    %14 = vector.shape_cast %13 : vector<1x16x16xbf16> to vector<16x16xbf16>
    %c0_13 = arith.constant 0 : index
    %c2_14 = arith.constant 2 : index
    %15 = vector.load %arg1[%c0_13, %c2_14] : memref<16x384xbf16, #tpu.memory_space<vmem>>, vector<16x256xbf16>
    %cst_15 = arith.constant dense<0.000000e+00> : vector<16x256xf32>
    %16 = tpu.matmul %14, %15, %cst_15 {dimension_numbers = #tpu.dot_dimension_numbers<[1], [0], [0], [1], [0, 0, 1, 1], [], []>} : vector<16x16xbf16>, vector<16x256xbf16>, vector<16x256xf32> -> vector<16x256xf32>
    %17 = arith.addf %12, %16 : vector<16x256xf32>
    %c3 = arith.constant 3 : index
    %c0_16 = arith.constant 0 : index
    %c0_17 = arith.constant 0 : index
    %18 = vector.load %arg2[%c3, %c0_16, %c0_17] : memref<9x16x16xbf16, #tpu.memory_space<vmem>>, vector<1x16x16xbf16>
    %19 = vector.shape_cast %18 : vector<1x16x16xbf16> to vector<16x16xbf16>
    %c0_18 = arith.constant 0 : index
    %c10 = arith.constant 10 : index
    %20 = vector.load %arg1[%c0_18, %c10] : memref<16x384xbf16, #tpu.memory_space<vmem>>, vector<16x256xbf16>
    %cst_19 = arith.constant dense<0.000000e+00> : vector<16x256xf32>
    %21 = tpu.matmul %19, %20, %cst_19 {dimension_numbers = #tpu.dot_dimension_numbers<[1], [0], [0], [1], [0, 0, 1, 1], [], []>} : vector<16x16xbf16>, vector<16x256xbf16>, vector<16x256xf32> -> vector<16x256xf32>
    %22 = arith.addf %17, %21 : vector<16x256xf32>
    %c4 = arith.constant 4 : index
    %c0_20 = arith.constant 0 : index
    %c0_21 = arith.constant 0 : index
    %23 = vector.load %arg2[%c4, %c0_20, %c0_21] : memref<9x16x16xbf16, #tpu.memory_space<vmem>>, vector<1x16x16xbf16>
    %24 = vector.shape_cast %23 : vector<1x16x16xbf16> to vector<16x16xbf16>
    %c0_22 = arith.constant 0 : index
    %c11 = arith.constant 11 : index
    %25 = vector.load %arg1[%c0_22, %c11] : memref<16x384xbf16, #tpu.memory_space<vmem>>, vector<16x256xbf16>
    %cst_23 = arith.constant dense<0.000000e+00> : vector<16x256xf32>
    %26 = tpu.matmul %24, %25, %cst_23 {dimension_numbers = #tpu.dot_dimension_numbers<[1], [0], [0], [1], [0, 0, 1, 1], [], []>} : vector<16x16xbf16>, vector<16x256xbf16>, vector<16x256xf32> -> vector<16x256xf32>
    %27 = arith.addf %22, %26 : vector<16x256xf32>
    %c5 = arith.constant 5 : index
    %c0_24 = arith.constant 0 : index
    %c0_25 = arith.constant 0 : index
    %28 = vector.load %arg2[%c5, %c0_24, %c0_25] : memref<9x16x16xbf16, #tpu.memory_space<vmem>>, vector<1x16x16xbf16>
    %29 = vector.shape_cast %28 : vector<1x16x16xbf16> to vector<16x16xbf16>
    %c0_26 = arith.constant 0 : index
    %c12 = arith.constant 12 : index
    %30 = vector.load %arg1[%c0_26, %c12] : memref<16x384xbf16, #tpu.memory_space<vmem>>, vector<16x256xbf16>
    %cst_27 = arith.constant dense<0.000000e+00> : vector<16x256xf32>
    %31 = tpu.matmul %29, %30, %cst_27 {dimension_numbers = #tpu.dot_dimension_numbers<[1], [0], [0], [1], [0, 0, 1, 1], [], []>} : vector<16x16xbf16>, vector<16x256xbf16>, vector<16x256xf32> -> vector<16x256xf32>
    %32 = arith.addf %27, %31 : vector<16x256xf32>
    %c6 = arith.constant 6 : index
    %c0_28 = arith.constant 0 : index
    %c0_29 = arith.constant 0 : index
    %33 = vector.load %arg2[%c6, %c0_28, %c0_29] : memref<9x16x16xbf16, #tpu.memory_space<vmem>>, vector<1x16x16xbf16>
    %34 = vector.shape_cast %33 : vector<1x16x16xbf16> to vector<16x16xbf16>
    %c0_30 = arith.constant 0 : index
    %c20 = arith.constant 20 : index
    %35 = vector.load %arg1[%c0_30, %c20] : memref<16x384xbf16, #tpu.memory_space<vmem>>, vector<16x256xbf16>
    %cst_31 = arith.constant dense<0.000000e+00> : vector<16x256xf32>
    %36 = tpu.matmul %34, %35, %cst_31 {dimension_numbers = #tpu.dot_dimension_numbers<[1], [0], [0], [1], [0, 0, 1, 1], [], []>} : vector<16x16xbf16>, vector<16x256xbf16>, vector<16x256xf32> -> vector<16x256xf32>
    %37 = arith.addf %32, %36 : vector<16x256xf32>
    %c7 = arith.constant 7 : index
    %c0_32 = arith.constant 0 : index
    %c0_33 = arith.constant 0 : index
    %38 = vector.load %arg2[%c7, %c0_32, %c0_33] : memref<9x16x16xbf16, #tpu.memory_space<vmem>>, vector<1x16x16xbf16>
    %39 = vector.shape_cast %38 : vector<1x16x16xbf16> to vector<16x16xbf16>
    %c0_34 = arith.constant 0 : index
    %c21 = arith.constant 21 : index
    %40 = vector.load %arg1[%c0_34, %c21] : memref<16x384xbf16, #tpu.memory_space<vmem>>, vector<16x256xbf16>
    %cst_35 = arith.constant dense<0.000000e+00> : vector<16x256xf32>
    %41 = tpu.matmul %39, %40, %cst_35 {dimension_numbers = #tpu.dot_dimension_numbers<[1], [0], [0], [1], [0, 0, 1, 1], [], []>} : vector<16x16xbf16>, vector<16x256xbf16>, vector<16x256xf32> -> vector<16x256xf32>
    %42 = arith.addf %37, %41 : vector<16x256xf32>
    %c8 = arith.constant 8 : index
    %c0_36 = arith.constant 0 : index
    %c0_37 = arith.constant 0 : index
    %43 = vector.load %arg2[%c8, %c0_36, %c0_37] : memref<9x16x16xbf16, #tpu.memory_space<vmem>>, vector<1x16x16xbf16>
    %44 = vector.shape_cast %43 : vector<1x16x16xbf16> to vector<16x16xbf16>
    %c0_38 = arith.constant 0 : index
    %c22 = arith.constant 22 : index
    %45 = vector.load %arg1[%c0_38, %c22] : memref<16x384xbf16, #tpu.memory_space<vmem>>, vector<16x256xbf16>
    %cst_39 = arith.constant dense<0.000000e+00> : vector<16x256xf32>
    %46 = tpu.matmul %44, %45, %cst_39 {dimension_numbers = #tpu.dot_dimension_numbers<[1], [0], [0], [1], [0, 0, 1, 1], [], []>} : vector<16x16xbf16>, vector<16x256xbf16>, vector<16x256xf32> -> vector<16x256xf32>
    %47 = arith.addf %42, %46 : vector<16x256xf32>
    %c0_40 = arith.constant 0 : index
    %c0_41 = arith.constant 0 : index
    %48 = vector.load %arg5[%c0_40, %c0_41] : memref<16x16xbf16, #tpu.memory_space<vmem>>, vector<16x16xbf16>
    %c0_42 = arith.constant 0 : index
    %c0_43 = arith.constant 0 : index
    %49 = vector.load %arg4[%c0_42, %c0_43] : memref<16x256xbf16, #tpu.memory_space<vmem>>, vector<16x256xbf16>
    %cst_44 = arith.constant dense<0.000000e+00> : vector<16x256xf32>
    %50 = tpu.matmul %48, %49, %cst_44 {dimension_numbers = #tpu.dot_dimension_numbers<[1], [0], [0], [1], [0, 0, 1, 1], [], []>} : vector<16x16xbf16>, vector<16x256xbf16>, vector<16x256xf32> -> vector<16x256xf32>
    %51 = arith.addf %47, %50 : vector<16x256xf32>
    %cst_45 = arith.constant 0.000000e+00 : f32
    %52 = vector.broadcast %cst_45 : f32 to vector<16x256xf32>
    %53 = arith.maximumf %51, %52 : vector<16x256xf32>
    %54 = arith.truncf %53 : vector<16x256xf32> to vector<16x256xbf16>
    %c0_46 = arith.constant 0 : index
    %c0_47 = arith.constant 0 : index
    %55 = vector.load %arg6[%c0_46, %c0_47] : memref<16x256xbf16, #tpu.memory_space<vmem>>, vector<16x256xbf16>
    tpu.vector_store %arg6[%c0_46, %c0_47], %54 {strides = array<i32>} : memref<16x256xbf16, #tpu.memory_space<vmem>>, vector<16x256xbf16>,
    return
  }
  func.func @transform_0(%arg0: i32) -> (i32, i32) {
    %c0_i32 = arith.constant 0 : i32
    %c0_i32_0 = arith.constant 0 : i32
    %c0_i32_1 = arith.constant 0 : i32
    return %c0_i32, %c0_i32_0 : i32, i32
  }
  func.func @transform_1(%arg0: i32) -> (i32, i32, i32) {
    %c0_i32 = arith.constant 0 : i32
    %c0_i32_0 = arith.constant 0 : i32
    %c0_i32_1 = arith.constant 0 : i32
    %c0_i32_2 = arith.constant 0 : i32
    return %c0_i32, %c0_i32_0, %c0_i32_1 : i32, i32, i32
  }
  func.func @transform_2(%arg0: i32) -> (i32, i32) {
    %c0_i32 = arith.constant 0 : i32
    %c0_i32_0 = arith.constant 0 : i32
    %c0_i32_1 = arith.constant 0 : i32
    return %c0_i32, %c0_i32_0 : i32, i32
  }
  func.func @transform_3(%arg0: i32) -> (i32, i32) {
    %c0_i32 = arith.constant 0 : i32
    %c0_i32_0 = arith.constant 0 : i32
    return %c0_i32, %arg0 : i32, i32
  }
  func.func @transform_4(%arg0: i32) -> (i32, i32) {
    %c0_i32 = arith.constant 0 : i32
    %c0_i32_0 = arith.constant 0 : i32
    %c0_i32_1 = arith.constant 0 : i32
    return %c0_i32, %c0_i32_0 : i32, i32
  }
  func.func @transform_5(%arg0: i32) -> (i32, i32) {
    %c0_i32 = arith.constant 0 : i32
    %c0_i32_0 = arith.constant 0 : i32
    return %c0_i32, %arg0 : i32, i32
  }
}

module attributes {stable_mosaic.version = 11 : i64} {
  func.func @_conv_kernel(%arg0: i32, %arg1: memref<16x384xbf16, #tpu.memory_space<vmem>>, %arg2: memref<9x16x16xbf16, #tpu.memory_space<vmem>>, %arg3: memref<16x1xf32, #tpu.memory_space<vmem>>, %arg4: memref<16x256xbf16, #tpu.memory_space<vmem>>) attributes {dimension_semantics = [#tpu.dimension_semantics<parallel>], iteration_bounds = array<i64: 1>, scalar_prefetch = 0 : i64, scratch_operands = 0 : i64, tpu.core_type = #tpu.core_type<tc>, window_params = [{pipeline_mode = #tpu.pipeline_mode<synchronous>, transform_indices = @transform_0, window_bounds = array<i64: 16, 384>}, {pipeline_mode = #tpu.pipeline_mode<synchronous>, transform_indices = @transform_1, window_bounds = array<i64: 9, 16, 16>}, {pipeline_mode = #tpu.pipeline_mode<synchronous>, transform_indices = @transform_2, window_bounds = array<i64: 16, 1>}, {transform_indices = @transform_3, window_bounds = array<i64: 16, 256>}]} {
    %c0 = arith.constant 0 : index
    %c0_0 = arith.constant 0 : index
    %0 = vector.load %arg3[%c0, %c0_0] : memref<16x1xf32, #tpu.memory_space<vmem>>, vector<16x1xf32>
    %1 = vector.shape_cast %0 : vector<16x1xf32> to vector<16x1xf32>
    %2 = vector.broadcast %1 : vector<16x1xf32> to vector<16x256xf32>
    %c0_1 = arith.constant 0 : index
    %c0_2 = arith.constant 0 : index
    %c0_3 = arith.constant 0 : index
    %3 = vector.load %arg2[%c0_1, %c0_2, %c0_3] : memref<9x16x16xbf16, #tpu.memory_space<vmem>>, vector<1x16x16xbf16>
    %4 = vector.shape_cast %3 : vector<1x16x16xbf16> to vector<16x16xbf16>
    %c0_4 = arith.constant 0 : index
    %c0_5 = arith.constant 0 : index
    %5 = vector.load %arg1[%c0_4, %c0_5] : memref<16x384xbf16, #tpu.memory_space<vmem>>, vector<16x256xbf16>
    %cst = arith.constant dense<0.000000e+00> : vector<16x256xf32>
    %6 = tpu.matmul %4, %5, %cst {dimension_numbers = #tpu.dot_dimension_numbers<[1], [0], [0], [1], [0, 0, 1, 1], [], []>} : vector<16x16xbf16>, vector<16x256xbf16>, vector<16x256xf32> -> vector<16x256xf32>
    %7 = arith.addf %2, %6 : vector<16x256xf32>
    %c1 = arith.constant 1 : index
    %c0_6 = arith.constant 0 : index
    %c0_7 = arith.constant 0 : index
    %8 = vector.load %arg2[%c1, %c0_6, %c0_7] : memref<9x16x16xbf16, #tpu.memory_space<vmem>>, vector<1x16x16xbf16>
    %9 = vector.shape_cast %8 : vector<1x16x16xbf16> to vector<16x16xbf16>
    %c0_8 = arith.constant 0 : index
    %c1_9 = arith.constant 1 : index
    %10 = vector.load %arg1[%c0_8, %c1_9] : memref<16x384xbf16, #tpu.memory_space<vmem>>, vector<16x256xbf16>
    %cst_10 = arith.constant dense<0.000000e+00> : vector<16x256xf32>
    %11 = tpu.matmul %9, %10, %cst_10 {dimension_numbers = #tpu.dot_dimension_numbers<[1], [0], [0], [1], [0, 0, 1, 1], [], []>} : vector<16x16xbf16>, vector<16x256xbf16>, vector<16x256xf32> -> vector<16x256xf32>
    %12 = arith.addf %7, %11 : vector<16x256xf32>
    %c2 = arith.constant 2 : index
    %c0_11 = arith.constant 0 : index
    %c0_12 = arith.constant 0 : index
    %13 = vector.load %arg2[%c2, %c0_11, %c0_12] : memref<9x16x16xbf16, #tpu.memory_space<vmem>>, vector<1x16x16xbf16>
    %14 = vector.shape_cast %13 : vector<1x16x16xbf16> to vector<16x16xbf16>
    %c0_13 = arith.constant 0 : index
    %c2_14 = arith.constant 2 : index
    %15 = vector.load %arg1[%c0_13, %c2_14] : memref<16x384xbf16, #tpu.memory_space<vmem>>, vector<16x256xbf16>
    %cst_15 = arith.constant dense<0.000000e+00> : vector<16x256xf32>
    %16 = tpu.matmul %14, %15, %cst_15 {dimension_numbers = #tpu.dot_dimension_numbers<[1], [0], [0], [1], [0, 0, 1, 1], [], []>} : vector<16x16xbf16>, vector<16x256xbf16>, vector<16x256xf32> -> vector<16x256xf32>
    %17 = arith.addf %12, %16 : vector<16x256xf32>
    %c3 = arith.constant 3 : index
    %c0_16 = arith.constant 0 : index
    %c0_17 = arith.constant 0 : index
    %18 = vector.load %arg2[%c3, %c0_16, %c0_17] : memref<9x16x16xbf16, #tpu.memory_space<vmem>>, vector<1x16x16xbf16>
    %19 = vector.shape_cast %18 : vector<1x16x16xbf16> to vector<16x16xbf16>
    %c0_18 = arith.constant 0 : index
    %c10 = arith.constant 10 : index
    %20 = vector.load %arg1[%c0_18, %c10] : memref<16x384xbf16, #tpu.memory_space<vmem>>, vector<16x256xbf16>
    %cst_19 = arith.constant dense<0.000000e+00> : vector<16x256xf32>
    %21 = tpu.matmul %19, %20, %cst_19 {dimension_numbers = #tpu.dot_dimension_numbers<[1], [0], [0], [1], [0, 0, 1, 1], [], []>} : vector<16x16xbf16>, vector<16x256xbf16>, vector<16x256xf32> -> vector<16x256xf32>
    %22 = arith.addf %17, %21 : vector<16x256xf32>
    %c4 = arith.constant 4 : index
    %c0_20 = arith.constant 0 : index
    %c0_21 = arith.constant 0 : index
    %23 = vector.load %arg2[%c4, %c0_20, %c0_21] : memref<9x16x16xbf16, #tpu.memory_space<vmem>>, vector<1x16x16xbf16>
    %24 = vector.shape_cast %23 : vector<1x16x16xbf16> to vector<16x16xbf16>
    %c0_22 = arith.constant 0 : index
    %c11 = arith.constant 11 : index
    %25 = vector.load %arg1[%c0_22, %c11] : memref<16x384xbf16, #tpu.memory_space<vmem>>, vector<16x256xbf16>
    %cst_23 = arith.constant dense<0.000000e+00> : vector<16x256xf32>
    %26 = tpu.matmul %24, %25, %cst_23 {dimension_numbers = #tpu.dot_dimension_numbers<[1], [0], [0], [1], [0, 0, 1, 1], [], []>} : vector<16x16xbf16>, vector<16x256xbf16>, vector<16x256xf32> -> vector<16x256xf32>
    %27 = arith.addf %22, %26 : vector<16x256xf32>
    %c5 = arith.constant 5 : index
    %c0_24 = arith.constant 0 : index
    %c0_25 = arith.constant 0 : index
    %28 = vector.load %arg2[%c5, %c0_24, %c0_25] : memref<9x16x16xbf16, #tpu.memory_space<vmem>>, vector<1x16x16xbf16>
    %29 = vector.shape_cast %28 : vector<1x16x16xbf16> to vector<16x16xbf16>
    %c0_26 = arith.constant 0 : index
    %c12 = arith.constant 12 : index
    %30 = vector.load %arg1[%c0_26, %c12] : memref<16x384xbf16, #tpu.memory_space<vmem>>, vector<16x256xbf16>
    %cst_27 = arith.constant dense<0.000000e+00> : vector<16x256xf32>
    %31 = tpu.matmul %29, %30, %cst_27 {dimension_numbers = #tpu.dot_dimension_numbers<[1], [0], [0], [1], [0, 0, 1, 1], [], []>} : vector<16x16xbf16>, vector<16x256xbf16>, vector<16x256xf32> -> vector<16x256xf32>
    %32 = arith.addf %27, %31 : vector<16x256xf32>
    %c6 = arith.constant 6 : index
    %c0_28 = arith.constant 0 : index
    %c0_29 = arith.constant 0 : index
    %33 = vector.load %arg2[%c6, %c0_28, %c0_29] : memref<9x16x16xbf16, #tpu.memory_space<vmem>>, vector<1x16x16xbf16>
    %34 = vector.shape_cast %33 : vector<1x16x16xbf16> to vector<16x16xbf16>
    %c0_30 = arith.constant 0 : index
    %c20 = arith.constant 20 : index
    %35 = vector.load %arg1[%c0_30, %c20] : memref<16x384xbf16, #tpu.memory_space<vmem>>, vector<16x256xbf16>
    %cst_31 = arith.constant dense<0.000000e+00> : vector<16x256xf32>
    %36 = tpu.matmul %34, %35, %cst_31 {dimension_numbers = #tpu.dot_dimension_numbers<[1], [0], [0], [1], [0, 0, 1, 1], [], []>} : vector<16x16xbf16>, vector<16x256xbf16>, vector<16x256xf32> -> vector<16x256xf32>
    %37 = arith.addf %32, %36 : vector<16x256xf32>
    %c7 = arith.constant 7 : index
    %c0_32 = arith.constant 0 : index
    %c0_33 = arith.constant 0 : index
    %38 = vector.load %arg2[%c7, %c0_32, %c0_33] : memref<9x16x16xbf16, #tpu.memory_space<vmem>>, vector<1x16x16xbf16>
    %39 = vector.shape_cast %38 : vector<1x16x16xbf16> to vector<16x16xbf16>
    %c0_34 = arith.constant 0 : index
    %c21 = arith.constant 21 : index
    %40 = vector.load %arg1[%c0_34, %c21] : memref<16x384xbf16, #tpu.memory_space<vmem>>, vector<16x256xbf16>
    %cst_35 = arith.constant dense<0.000000e+00> : vector<16x256xf32>
    %41 = tpu.matmul %39, %40, %cst_35 {dimension_numbers = #tpu.dot_dimension_numbers<[1], [0], [0], [1], [0, 0, 1, 1], [], []>} : vector<16x16xbf16>, vector<16x256xbf16>, vector<16x256xf32> -> vector<16x256xf32>
    %42 = arith.addf %37, %41 : vector<16x256xf32>
    %c8 = arith.constant 8 : index
    %c0_36 = arith.constant 0 : index
    %c0_37 = arith.constant 0 : index
    %43 = vector.load %arg2[%c8, %c0_36, %c0_37] : memref<9x16x16xbf16, #tpu.memory_space<vmem>>, vector<1x16x16xbf16>
    %44 = vector.shape_cast %43 : vector<1x16x16xbf16> to vector<16x16xbf16>
    %c0_38 = arith.constant 0 : index
    %c22 = arith.constant 22 : index
    %45 = vector.load %arg1[%c0_38, %c22] : memref<16x384xbf16, #tpu.memory_space<vmem>>, vector<16x256xbf16>
    %cst_39 = arith.constant dense<0.000000e+00> : vector<16x256xf32>
    %46 = tpu.matmul %44, %45, %cst_39 {dimension_numbers = #tpu.dot_dimension_numbers<[1], [0], [0], [1], [0, 0, 1, 1], [], []>} : vector<16x16xbf16>, vector<16x256xbf16>, vector<16x256xf32> -> vector<16x256xf32>
    %47 = arith.addf %42, %46 : vector<16x256xf32>
    %cst_40 = arith.constant 0.000000e+00 : f32
    %48 = vector.broadcast %cst_40 : f32 to vector<16x256xf32>
    %49 = arith.maximumf %47, %48 : vector<16x256xf32>
    %50 = arith.truncf %49 : vector<16x256xf32> to vector<16x256xbf16>
    %c0_41 = arith.constant 0 : index
    %c0_42 = arith.constant 0 : index
    %51 = vector.load %arg4[%c0_41, %c0_42] : memref<16x256xbf16, #tpu.memory_space<vmem>>, vector<16x256xbf16>
    tpu.vector_store %arg4[%c0_41, %c0_42], %50 {strides = array<i32>} : memref<16x256xbf16, #tpu.memory_space<vmem>>, vector<16x256xbf16>,
    return
  }
  func.func @transform_0(%arg0: i32) -> (i32, i32) {
    %c0_i32 = arith.constant 0 : i32
    %c0_i32_0 = arith.constant 0 : i32
    %c0_i32_1 = arith.constant 0 : i32
    return %c0_i32, %c0_i32_0 : i32, i32
  }
  func.func @transform_1(%arg0: i32) -> (i32, i32, i32) {
    %c0_i32 = arith.constant 0 : i32
    %c0_i32_0 = arith.constant 0 : i32
    %c0_i32_1 = arith.constant 0 : i32
    %c0_i32_2 = arith.constant 0 : i32
    return %c0_i32, %c0_i32_0, %c0_i32_1 : i32, i32, i32
  }
  func.func @transform_2(%arg0: i32) -> (i32, i32) {
    %c0_i32 = arith.constant 0 : i32
    %c0_i32_0 = arith.constant 0 : i32
    %c0_i32_1 = arith.constant 0 : i32
    return %c0_i32, %c0_i32_0 : i32, i32
  }
  func.func @transform_3(%arg0: i32) -> (i32, i32) {
    %c0_i32 = arith.constant 0 : i32
    %c0_i32_0 = arith.constant 0 : i32
    return %c0_i32, %arg0 : i32, i32
  }
}

module attributes {stable_mosaic.version = 11 : i64} {
  func.func @_conv_kernel(%arg0: i32, %arg1: memref<16x256xbf16, #tpu.memory_space<vmem>>, %arg2: memref<9x16x16xbf16, #tpu.memory_space<vmem>>, %arg3: memref<16x1xf32, #tpu.memory_space<vmem>>, %arg4: memref<16x128xbf16, #tpu.memory_space<vmem>>, %arg5: memref<16x16xbf16, #tpu.memory_space<vmem>>, %arg6: memref<16x128xbf16, #tpu.memory_space<vmem>>) attributes {dimension_semantics = [#tpu.dimension_semantics<parallel>], iteration_bounds = array<i64: 1>, scalar_prefetch = 0 : i64, scratch_operands = 0 : i64, tpu.core_type = #tpu.core_type<tc>, window_params = [{pipeline_mode = #tpu.pipeline_mode<synchronous>, transform_indices = @transform_0, window_bounds = array<i64: 16, 256>}, {pipeline_mode = #tpu.pipeline_mode<synchronous>, transform_indices = @transform_1, window_bounds = array<i64: 9, 16, 16>}, {pipeline_mode = #tpu.pipeline_mode<synchronous>, transform_indices = @transform_2, window_bounds = array<i64: 16, 1>}, {transform_indices = @transform_3, window_bounds = array<i64: 16, 128>}, {pipeline_mode = #tpu.pipeline_mode<synchronous>, transform_indices = @transform_4, window_bounds = array<i64: 16, 16>}, {transform_indices = @transform_5, window_bounds = array<i64: 16, 128>}]} {
    %c0 = arith.constant 0 : index
    %c0_0 = arith.constant 0 : index
    %0 = vector.load %arg3[%c0, %c0_0] : memref<16x1xf32, #tpu.memory_space<vmem>>, vector<16x1xf32>
    %1 = vector.shape_cast %0 : vector<16x1xf32> to vector<16x1xf32>
    %2 = vector.broadcast %1 : vector<16x1xf32> to vector<16x128xf32>
    %c0_1 = arith.constant 0 : index
    %c0_2 = arith.constant 0 : index
    %c0_3 = arith.constant 0 : index
    %3 = vector.load %arg2[%c0_1, %c0_2, %c0_3] : memref<9x16x16xbf16, #tpu.memory_space<vmem>>, vector<1x16x16xbf16>
    %4 = vector.shape_cast %3 : vector<1x16x16xbf16> to vector<16x16xbf16>
    %c0_4 = arith.constant 0 : index
    %c0_5 = arith.constant 0 : index
    %5 = vector.load %arg1[%c0_4, %c0_5] : memref<16x256xbf16, #tpu.memory_space<vmem>>, vector<16x128xbf16>
    %cst = arith.constant dense<0.000000e+00> : vector<16x128xf32>
    %6 = tpu.matmul %4, %5, %cst {dimension_numbers = #tpu.dot_dimension_numbers<[1], [0], [0], [1], [0, 0, 1, 1], [], []>} : vector<16x16xbf16>, vector<16x128xbf16>, vector<16x128xf32> -> vector<16x128xf32>
    %7 = arith.addf %2, %6 : vector<16x128xf32>
    %c1 = arith.constant 1 : index
    %c0_6 = arith.constant 0 : index
    %c0_7 = arith.constant 0 : index
    %8 = vector.load %arg2[%c1, %c0_6, %c0_7] : memref<9x16x16xbf16, #tpu.memory_space<vmem>>, vector<1x16x16xbf16>
    %9 = vector.shape_cast %8 : vector<1x16x16xbf16> to vector<16x16xbf16>
    %c0_8 = arith.constant 0 : index
    %c1_9 = arith.constant 1 : index
    %10 = vector.load %arg1[%c0_8, %c1_9] : memref<16x256xbf16, #tpu.memory_space<vmem>>, vector<16x128xbf16>
    %cst_10 = arith.constant dense<0.000000e+00> : vector<16x128xf32>
    %11 = tpu.matmul %9, %10, %cst_10 {dimension_numbers = #tpu.dot_dimension_numbers<[1], [0], [0], [1], [0, 0, 1, 1], [], []>} : vector<16x16xbf16>, vector<16x128xbf16>, vector<16x128xf32> -> vector<16x128xf32>
    %12 = arith.addf %7, %11 : vector<16x128xf32>
    %c2 = arith.constant 2 : index
    %c0_11 = arith.constant 0 : index
    %c0_12 = arith.constant 0 : index
    %13 = vector.load %arg2[%c2, %c0_11, %c0_12] : memref<9x16x16xbf16, #tpu.memory_space<vmem>>, vector<1x16x16xbf16>
    %14 = vector.shape_cast %13 : vector<1x16x16xbf16> to vector<16x16xbf16>
    %c0_13 = arith.constant 0 : index
    %c2_14 = arith.constant 2 : index
    %15 = vector.load %arg1[%c0_13, %c2_14] : memref<16x256xbf16, #tpu.memory_space<vmem>>, vector<16x128xbf16>
    %cst_15 = arith.constant dense<0.000000e+00> : vector<16x128xf32>
    %16 = tpu.matmul %14, %15, %cst_15 {dimension_numbers = #tpu.dot_dimension_numbers<[1], [0], [0], [1], [0, 0, 1, 1], [], []>} : vector<16x16xbf16>, vector<16x128xbf16>, vector<16x128xf32> -> vector<16x128xf32>
    %17 = arith.addf %12, %16 : vector<16x128xf32>
    %c3 = arith.constant 3 : index
    %c0_16 = arith.constant 0 : index
    %c0_17 = arith.constant 0 : index
    %18 = vector.load %arg2[%c3, %c0_16, %c0_17] : memref<9x16x16xbf16, #tpu.memory_space<vmem>>, vector<1x16x16xbf16>
    %19 = vector.shape_cast %18 : vector<1x16x16xbf16> to vector<16x16xbf16>
    %c0_18 = arith.constant 0 : index
    %c6 = arith.constant 6 : index
    %20 = vector.load %arg1[%c0_18, %c6] : memref<16x256xbf16, #tpu.memory_space<vmem>>, vector<16x128xbf16>
    %cst_19 = arith.constant dense<0.000000e+00> : vector<16x128xf32>
    %21 = tpu.matmul %19, %20, %cst_19 {dimension_numbers = #tpu.dot_dimension_numbers<[1], [0], [0], [1], [0, 0, 1, 1], [], []>} : vector<16x16xbf16>, vector<16x128xbf16>, vector<16x128xf32> -> vector<16x128xf32>
    %22 = arith.addf %17, %21 : vector<16x128xf32>
    %c4 = arith.constant 4 : index
    %c0_20 = arith.constant 0 : index
    %c0_21 = arith.constant 0 : index
    %23 = vector.load %arg2[%c4, %c0_20, %c0_21] : memref<9x16x16xbf16, #tpu.memory_space<vmem>>, vector<1x16x16xbf16>
    %24 = vector.shape_cast %23 : vector<1x16x16xbf16> to vector<16x16xbf16>
    %c0_22 = arith.constant 0 : index
    %c7 = arith.constant 7 : index
    %25 = vector.load %arg1[%c0_22, %c7] : memref<16x256xbf16, #tpu.memory_space<vmem>>, vector<16x128xbf16>
    %cst_23 = arith.constant dense<0.000000e+00> : vector<16x128xf32>
    %26 = tpu.matmul %24, %25, %cst_23 {dimension_numbers = #tpu.dot_dimension_numbers<[1], [0], [0], [1], [0, 0, 1, 1], [], []>} : vector<16x16xbf16>, vector<16x128xbf16>, vector<16x128xf32> -> vector<16x128xf32>
    %27 = arith.addf %22, %26 : vector<16x128xf32>
    %c5 = arith.constant 5 : index
    %c0_24 = arith.constant 0 : index
    %c0_25 = arith.constant 0 : index
    %28 = vector.load %arg2[%c5, %c0_24, %c0_25] : memref<9x16x16xbf16, #tpu.memory_space<vmem>>, vector<1x16x16xbf16>
    %29 = vector.shape_cast %28 : vector<1x16x16xbf16> to vector<16x16xbf16>
    %c0_26 = arith.constant 0 : index
    %c8 = arith.constant 8 : index
    %30 = vector.load %arg1[%c0_26, %c8] : memref<16x256xbf16, #tpu.memory_space<vmem>>, vector<16x128xbf16>
    %cst_27 = arith.constant dense<0.000000e+00> : vector<16x128xf32>
    %31 = tpu.matmul %29, %30, %cst_27 {dimension_numbers = #tpu.dot_dimension_numbers<[1], [0], [0], [1], [0, 0, 1, 1], [], []>} : vector<16x16xbf16>, vector<16x128xbf16>, vector<16x128xf32> -> vector<16x128xf32>
    %32 = arith.addf %27, %31 : vector<16x128xf32>
    %c6_28 = arith.constant 6 : index
    %c0_29 = arith.constant 0 : index
    %c0_30 = arith.constant 0 : index
    %33 = vector.load %arg2[%c6_28, %c0_29, %c0_30] : memref<9x16x16xbf16, #tpu.memory_space<vmem>>, vector<1x16x16xbf16>
    %34 = vector.shape_cast %33 : vector<1x16x16xbf16> to vector<16x16xbf16>
    %c0_31 = arith.constant 0 : index
    %c12 = arith.constant 12 : index
    %35 = vector.load %arg1[%c0_31, %c12] : memref<16x256xbf16, #tpu.memory_space<vmem>>, vector<16x128xbf16>
    %cst_32 = arith.constant dense<0.000000e+00> : vector<16x128xf32>
    %36 = tpu.matmul %34, %35, %cst_32 {dimension_numbers = #tpu.dot_dimension_numbers<[1], [0], [0], [1], [0, 0, 1, 1], [], []>} : vector<16x16xbf16>, vector<16x128xbf16>, vector<16x128xf32> -> vector<16x128xf32>
    %37 = arith.addf %32, %36 : vector<16x128xf32>
    %c7_33 = arith.constant 7 : index
    %c0_34 = arith.constant 0 : index
    %c0_35 = arith.constant 0 : index
    %38 = vector.load %arg2[%c7_33, %c0_34, %c0_35] : memref<9x16x16xbf16, #tpu.memory_space<vmem>>, vector<1x16x16xbf16>
    %39 = vector.shape_cast %38 : vector<1x16x16xbf16> to vector<16x16xbf16>
    %c0_36 = arith.constant 0 : index
    %c13 = arith.constant 13 : index
    %40 = vector.load %arg1[%c0_36, %c13] : memref<16x256xbf16, #tpu.memory_space<vmem>>, vector<16x128xbf16>
    %cst_37 = arith.constant dense<0.000000e+00> : vector<16x128xf32>
    %41 = tpu.matmul %39, %40, %cst_37 {dimension_numbers = #tpu.dot_dimension_numbers<[1], [0], [0], [1], [0, 0, 1, 1], [], []>} : vector<16x16xbf16>, vector<16x128xbf16>, vector<16x128xf32> -> vector<16x128xf32>
    %42 = arith.addf %37, %41 : vector<16x128xf32>
    %c8_38 = arith.constant 8 : index
    %c0_39 = arith.constant 0 : index
    %c0_40 = arith.constant 0 : index
    %43 = vector.load %arg2[%c8_38, %c0_39, %c0_40] : memref<9x16x16xbf16, #tpu.memory_space<vmem>>, vector<1x16x16xbf16>
    %44 = vector.shape_cast %43 : vector<1x16x16xbf16> to vector<16x16xbf16>
    %c0_41 = arith.constant 0 : index
    %c14 = arith.constant 14 : index
    %45 = vector.load %arg1[%c0_41, %c14] : memref<16x256xbf16, #tpu.memory_space<vmem>>, vector<16x128xbf16>
    %cst_42 = arith.constant dense<0.000000e+00> : vector<16x128xf32>
    %46 = tpu.matmul %44, %45, %cst_42 {dimension_numbers = #tpu.dot_dimension_numbers<[1], [0], [0], [1], [0, 0, 1, 1], [], []>} : vector<16x16xbf16>, vector<16x128xbf16>, vector<16x128xf32> -> vector<16x128xf32>
    %47 = arith.addf %42, %46 : vector<16x128xf32>
    %c0_43 = arith.constant 0 : index
    %c0_44 = arith.constant 0 : index
    %48 = vector.load %arg5[%c0_43, %c0_44] : memref<16x16xbf16, #tpu.memory_space<vmem>>, vector<16x16xbf16>
    %c0_45 = arith.constant 0 : index
    %c0_46 = arith.constant 0 : index
    %49 = vector.load %arg4[%c0_45, %c0_46] : memref<16x128xbf16, #tpu.memory_space<vmem>>, vector<16x128xbf16>
    %cst_47 = arith.constant dense<0.000000e+00> : vector<16x128xf32>
    %50 = tpu.matmul %48, %49, %cst_47 {dimension_numbers = #tpu.dot_dimension_numbers<[1], [0], [0], [1], [0, 0, 1, 1], [], []>} : vector<16x16xbf16>, vector<16x128xbf16>, vector<16x128xf32> -> vector<16x128xf32>
    %51 = arith.addf %47, %50 : vector<16x128xf32>
    %cst_48 = arith.constant 0.000000e+00 : f32
    %52 = vector.broadcast %cst_48 : f32 to vector<16x128xf32>
    %53 = arith.maximumf %51, %52 : vector<16x128xf32>
    %54 = arith.truncf %53 : vector<16x128xf32> to vector<16x128xbf16>
    %c0_49 = arith.constant 0 : index
    %c0_50 = arith.constant 0 : index
    %55 = vector.load %arg6[%c0_49, %c0_50] : memref<16x128xbf16, #tpu.memory_space<vmem>>, vector<16x128xbf16>
    tpu.vector_store %arg6[%c0_49, %c0_50], %54 {strides = array<i32>} : memref<16x128xbf16, #tpu.memory_space<vmem>>, vector<16x128xbf16>,
    return
  }
  func.func @transform_0(%arg0: i32) -> (i32, i32) {
    %c0_i32 = arith.constant 0 : i32
    %c0_i32_0 = arith.constant 0 : i32
    %c0_i32_1 = arith.constant 0 : i32
    return %c0_i32, %c0_i32_0 : i32, i32
  }
  func.func @transform_1(%arg0: i32) -> (i32, i32, i32) {
    %c0_i32 = arith.constant 0 : i32
    %c0_i32_0 = arith.constant 0 : i32
    %c0_i32_1 = arith.constant 0 : i32
    %c0_i32_2 = arith.constant 0 : i32
    return %c0_i32, %c0_i32_0, %c0_i32_1 : i32, i32, i32
  }
  func.func @transform_2(%arg0: i32) -> (i32, i32) {
    %c0_i32 = arith.constant 0 : i32
    %c0_i32_0 = arith.constant 0 : i32
    %c0_i32_1 = arith.constant 0 : i32
    return %c0_i32, %c0_i32_0 : i32, i32
  }
  func.func @transform_3(%arg0: i32) -> (i32, i32) {
    %c0_i32 = arith.constant 0 : i32
    %c0_i32_0 = arith.constant 0 : i32
    return %c0_i32, %arg0 : i32, i32
  }
  func.func @transform_4(%arg0: i32) -> (i32, i32) {
    %c0_i32 = arith.constant 0 : i32
    %c0_i32_0 = arith.constant 0 : i32
    %c0_i32_1 = arith.constant 0 : i32
    return %c0_i32, %c0_i32_0 : i32, i32
  }
  func.func @transform_5(%arg0: i32) -> (i32, i32) {
    %c0_i32 = arith.constant 0 : i32
    %c0_i32_0 = arith.constant 0 : i32
    return %c0_i32, %arg0 : i32, i32
  }
}

module attributes {stable_mosaic.version = 11 : i64} {
  func.func @_conv_kernel(%arg0: i32, %arg1: memref<16x256xbf16, #tpu.memory_space<vmem>>, %arg2: memref<9x32x16xbf16, #tpu.memory_space<vmem>>, %arg3: memref<32x1xf32, #tpu.memory_space<vmem>>, %arg4: memref<32x128xbf16, #tpu.memory_space<vmem>>) attributes {dimension_semantics = [#tpu.dimension_semantics<parallel>], iteration_bounds = array<i64: 1>, scalar_prefetch = 0 : i64, scratch_operands = 0 : i64, tpu.core_type = #tpu.core_type<tc>, window_params = [{pipeline_mode = #tpu.pipeline_mode<synchronous>, transform_indices = @transform_0, window_bounds = array<i64: 16, 256>}, {pipeline_mode = #tpu.pipeline_mode<synchronous>, transform_indices = @transform_1, window_bounds = array<i64: 9, 32, 16>}, {pipeline_mode = #tpu.pipeline_mode<synchronous>, transform_indices = @transform_2, window_bounds = array<i64: 32, 1>}, {transform_indices = @transform_3, window_bounds = array<i64: 32, 128>}]} {
    %c0 = arith.constant 0 : index
    %c0_0 = arith.constant 0 : index
    %0 = vector.load %arg3[%c0, %c0_0] : memref<32x1xf32, #tpu.memory_space<vmem>>, vector<32x1xf32>
    %1 = vector.shape_cast %0 : vector<32x1xf32> to vector<32x1xf32>
    %2 = vector.broadcast %1 : vector<32x1xf32> to vector<32x128xf32>
    %c0_1 = arith.constant 0 : index
    %c0_2 = arith.constant 0 : index
    %c0_3 = arith.constant 0 : index
    %3 = vector.load %arg2[%c0_1, %c0_2, %c0_3] : memref<9x32x16xbf16, #tpu.memory_space<vmem>>, vector<1x32x16xbf16>
    %4 = vector.shape_cast %3 : vector<1x32x16xbf16> to vector<32x16xbf16>
    %c0_4 = arith.constant 0 : index
    %c0_5 = arith.constant 0 : index
    %5 = vector.load %arg1[%c0_4, %c0_5] : memref<16x256xbf16, #tpu.memory_space<vmem>>, vector<16x128xbf16>
    %cst = arith.constant dense<0.000000e+00> : vector<32x128xf32>
    %6 = tpu.matmul %4, %5, %cst {dimension_numbers = #tpu.dot_dimension_numbers<[1], [0], [0], [1], [0, 0, 1, 1], [], []>} : vector<32x16xbf16>, vector<16x128xbf16>, vector<32x128xf32> -> vector<32x128xf32>
    %7 = arith.addf %2, %6 : vector<32x128xf32>
    %c1 = arith.constant 1 : index
    %c0_6 = arith.constant 0 : index
    %c0_7 = arith.constant 0 : index
    %8 = vector.load %arg2[%c1, %c0_6, %c0_7] : memref<9x32x16xbf16, #tpu.memory_space<vmem>>, vector<1x32x16xbf16>
    %9 = vector.shape_cast %8 : vector<1x32x16xbf16> to vector<32x16xbf16>
    %c0_8 = arith.constant 0 : index
    %c1_9 = arith.constant 1 : index
    %10 = vector.load %arg1[%c0_8, %c1_9] : memref<16x256xbf16, #tpu.memory_space<vmem>>, vector<16x128xbf16>
    %cst_10 = arith.constant dense<0.000000e+00> : vector<32x128xf32>
    %11 = tpu.matmul %9, %10, %cst_10 {dimension_numbers = #tpu.dot_dimension_numbers<[1], [0], [0], [1], [0, 0, 1, 1], [], []>} : vector<32x16xbf16>, vector<16x128xbf16>, vector<32x128xf32> -> vector<32x128xf32>
    %12 = arith.addf %7, %11 : vector<32x128xf32>
    %c2 = arith.constant 2 : index
    %c0_11 = arith.constant 0 : index
    %c0_12 = arith.constant 0 : index
    %13 = vector.load %arg2[%c2, %c0_11, %c0_12] : memref<9x32x16xbf16, #tpu.memory_space<vmem>>, vector<1x32x16xbf16>
    %14 = vector.shape_cast %13 : vector<1x32x16xbf16> to vector<32x16xbf16>
    %c0_13 = arith.constant 0 : index
    %c2_14 = arith.constant 2 : index
    %15 = vector.load %arg1[%c0_13, %c2_14] : memref<16x256xbf16, #tpu.memory_space<vmem>>, vector<16x128xbf16>
    %cst_15 = arith.constant dense<0.000000e+00> : vector<32x128xf32>
    %16 = tpu.matmul %14, %15, %cst_15 {dimension_numbers = #tpu.dot_dimension_numbers<[1], [0], [0], [1], [0, 0, 1, 1], [], []>} : vector<32x16xbf16>, vector<16x128xbf16>, vector<32x128xf32> -> vector<32x128xf32>
    %17 = arith.addf %12, %16 : vector<32x128xf32>
    %c3 = arith.constant 3 : index
    %c0_16 = arith.constant 0 : index
    %c0_17 = arith.constant 0 : index
    %18 = vector.load %arg2[%c3, %c0_16, %c0_17] : memref<9x32x16xbf16, #tpu.memory_space<vmem>>, vector<1x32x16xbf16>
    %19 = vector.shape_cast %18 : vector<1x32x16xbf16> to vector<32x16xbf16>
    %c0_18 = arith.constant 0 : index
    %c6 = arith.constant 6 : index
    %20 = vector.load %arg1[%c0_18, %c6] : memref<16x256xbf16, #tpu.memory_space<vmem>>, vector<16x128xbf16>
    %cst_19 = arith.constant dense<0.000000e+00> : vector<32x128xf32>
    %21 = tpu.matmul %19, %20, %cst_19 {dimension_numbers = #tpu.dot_dimension_numbers<[1], [0], [0], [1], [0, 0, 1, 1], [], []>} : vector<32x16xbf16>, vector<16x128xbf16>, vector<32x128xf32> -> vector<32x128xf32>
    %22 = arith.addf %17, %21 : vector<32x128xf32>
    %c4 = arith.constant 4 : index
    %c0_20 = arith.constant 0 : index
    %c0_21 = arith.constant 0 : index
    %23 = vector.load %arg2[%c4, %c0_20, %c0_21] : memref<9x32x16xbf16, #tpu.memory_space<vmem>>, vector<1x32x16xbf16>
    %24 = vector.shape_cast %23 : vector<1x32x16xbf16> to vector<32x16xbf16>
    %c0_22 = arith.constant 0 : index
    %c7 = arith.constant 7 : index
    %25 = vector.load %arg1[%c0_22, %c7] : memref<16x256xbf16, #tpu.memory_space<vmem>>, vector<16x128xbf16>
    %cst_23 = arith.constant dense<0.000000e+00> : vector<32x128xf32>
    %26 = tpu.matmul %24, %25, %cst_23 {dimension_numbers = #tpu.dot_dimension_numbers<[1], [0], [0], [1], [0, 0, 1, 1], [], []>} : vector<32x16xbf16>, vector<16x128xbf16>, vector<32x128xf32> -> vector<32x128xf32>
    %27 = arith.addf %22, %26 : vector<32x128xf32>
    %c5 = arith.constant 5 : index
    %c0_24 = arith.constant 0 : index
    %c0_25 = arith.constant 0 : index
    %28 = vector.load %arg2[%c5, %c0_24, %c0_25] : memref<9x32x16xbf16, #tpu.memory_space<vmem>>, vector<1x32x16xbf16>
    %29 = vector.shape_cast %28 : vector<1x32x16xbf16> to vector<32x16xbf16>
    %c0_26 = arith.constant 0 : index
    %c8 = arith.constant 8 : index
    %30 = vector.load %arg1[%c0_26, %c8] : memref<16x256xbf16, #tpu.memory_space<vmem>>, vector<16x128xbf16>
    %cst_27 = arith.constant dense<0.000000e+00> : vector<32x128xf32>
    %31 = tpu.matmul %29, %30, %cst_27 {dimension_numbers = #tpu.dot_dimension_numbers<[1], [0], [0], [1], [0, 0, 1, 1], [], []>} : vector<32x16xbf16>, vector<16x128xbf16>, vector<32x128xf32> -> vector<32x128xf32>
    %32 = arith.addf %27, %31 : vector<32x128xf32>
    %c6_28 = arith.constant 6 : index
    %c0_29 = arith.constant 0 : index
    %c0_30 = arith.constant 0 : index
    %33 = vector.load %arg2[%c6_28, %c0_29, %c0_30] : memref<9x32x16xbf16, #tpu.memory_space<vmem>>, vector<1x32x16xbf16>
    %34 = vector.shape_cast %33 : vector<1x32x16xbf16> to vector<32x16xbf16>
    %c0_31 = arith.constant 0 : index
    %c12 = arith.constant 12 : index
    %35 = vector.load %arg1[%c0_31, %c12] : memref<16x256xbf16, #tpu.memory_space<vmem>>, vector<16x128xbf16>
    %cst_32 = arith.constant dense<0.000000e+00> : vector<32x128xf32>
    %36 = tpu.matmul %34, %35, %cst_32 {dimension_numbers = #tpu.dot_dimension_numbers<[1], [0], [0], [1], [0, 0, 1, 1], [], []>} : vector<32x16xbf16>, vector<16x128xbf16>, vector<32x128xf32> -> vector<32x128xf32>
    %37 = arith.addf %32, %36 : vector<32x128xf32>
    %c7_33 = arith.constant 7 : index
    %c0_34 = arith.constant 0 : index
    %c0_35 = arith.constant 0 : index
    %38 = vector.load %arg2[%c7_33, %c0_34, %c0_35] : memref<9x32x16xbf16, #tpu.memory_space<vmem>>, vector<1x32x16xbf16>
    %39 = vector.shape_cast %38 : vector<1x32x16xbf16> to vector<32x16xbf16>
    %c0_36 = arith.constant 0 : index
    %c13 = arith.constant 13 : index
    %40 = vector.load %arg1[%c0_36, %c13] : memref<16x256xbf16, #tpu.memory_space<vmem>>, vector<16x128xbf16>
    %cst_37 = arith.constant dense<0.000000e+00> : vector<32x128xf32>
    %41 = tpu.matmul %39, %40, %cst_37 {dimension_numbers = #tpu.dot_dimension_numbers<[1], [0], [0], [1], [0, 0, 1, 1], [], []>} : vector<32x16xbf16>, vector<16x128xbf16>, vector<32x128xf32> -> vector<32x128xf32>
    %42 = arith.addf %37, %41 : vector<32x128xf32>
    %c8_38 = arith.constant 8 : index
    %c0_39 = arith.constant 0 : index
    %c0_40 = arith.constant 0 : index
    %43 = vector.load %arg2[%c8_38, %c0_39, %c0_40] : memref<9x32x16xbf16, #tpu.memory_space<vmem>>, vector<1x32x16xbf16>
    %44 = vector.shape_cast %43 : vector<1x32x16xbf16> to vector<32x16xbf16>
    %c0_41 = arith.constant 0 : index
    %c14 = arith.constant 14 : index
    %45 = vector.load %arg1[%c0_41, %c14] : memref<16x256xbf16, #tpu.memory_space<vmem>>, vector<16x128xbf16>
    %cst_42 = arith.constant dense<0.000000e+00> : vector<32x128xf32>
    %46 = tpu.matmul %44, %45, %cst_42 {dimension_numbers = #tpu.dot_dimension_numbers<[1], [0], [0], [1], [0, 0, 1, 1], [], []>} : vector<32x16xbf16>, vector<16x128xbf16>, vector<32x128xf32> -> vector<32x128xf32>
    %47 = arith.addf %42, %46 : vector<32x128xf32>
    %cst_43 = arith.constant 0.000000e+00 : f32
    %48 = vector.broadcast %cst_43 : f32 to vector<32x128xf32>
    %49 = arith.maximumf %47, %48 : vector<32x128xf32>
    %50 = arith.truncf %49 : vector<32x128xf32> to vector<32x128xbf16>
    %c0_44 = arith.constant 0 : index
    %c0_45 = arith.constant 0 : index
    %51 = vector.load %arg4[%c0_44, %c0_45] : memref<32x128xbf16, #tpu.memory_space<vmem>>, vector<32x128xbf16>
    tpu.vector_store %arg4[%c0_44, %c0_45], %50 {strides = array<i32>} : memref<32x128xbf16, #tpu.memory_space<vmem>>, vector<32x128xbf16>,
    return
  }
  func.func @transform_0(%arg0: i32) -> (i32, i32) {
    %c0_i32 = arith.constant 0 : i32
    %c0_i32_0 = arith.constant 0 : i32
    %c0_i32_1 = arith.constant 0 : i32
    return %c0_i32, %c0_i32_0 : i32, i32
  }
  func.func @transform_1(%arg0: i32) -> (i32, i32, i32) {
    %c0_i32 = arith.constant 0 : i32
    %c0_i32_0 = arith.constant 0 : i32
    %c0_i32_1 = arith.constant 0 : i32
    %c0_i32_2 = arith.constant 0 : i32
    return %c0_i32, %c0_i32_0, %c0_i32_1 : i32, i32, i32
  }
  func.func @transform_2(%arg0: i32) -> (i32, i32) {
    %c0_i32 = arith.constant 0 : i32
    %c0_i32_0 = arith.constant 0 : i32
    %c0_i32_1 = arith.constant 0 : i32
    return %c0_i32, %c0_i32_0 : i32, i32
  }
  func.func @transform_3(%arg0: i32) -> (i32, i32) {
    %c0_i32 = arith.constant 0 : i32
    %c0_i32_0 = arith.constant 0 : i32
    return %c0_i32, %arg0 : i32, i32
  }
}

module attributes {stable_mosaic.version = 11 : i64} {
  func.func @_conv_kernel(%arg0: i32, %arg1: memref<32x256xbf16, #tpu.memory_space<vmem>>, %arg2: memref<9x32x32xbf16, #tpu.memory_space<vmem>>, %arg3: memref<32x1xf32, #tpu.memory_space<vmem>>, %arg4: memref<16x128xbf16, #tpu.memory_space<vmem>>, %arg5: memref<32x16xbf16, #tpu.memory_space<vmem>>, %arg6: memref<32x128xbf16, #tpu.memory_space<vmem>>) attributes {dimension_semantics = [#tpu.dimension_semantics<parallel>], iteration_bounds = array<i64: 1>, scalar_prefetch = 0 : i64, scratch_operands = 0 : i64, tpu.core_type = #tpu.core_type<tc>, window_params = [{pipeline_mode = #tpu.pipeline_mode<synchronous>, transform_indices = @transform_0, window_bounds = array<i64: 32, 256>}, {pipeline_mode = #tpu.pipeline_mode<synchronous>, transform_indices = @transform_1, window_bounds = array<i64: 9, 32, 32>}, {pipeline_mode = #tpu.pipeline_mode<synchronous>, transform_indices = @transform_2, window_bounds = array<i64: 32, 1>}, {transform_indices = @transform_3, window_bounds = array<i64: 16, 128>}, {pipeline_mode = #tpu.pipeline_mode<synchronous>, transform_indices = @transform_4, window_bounds = array<i64: 32, 16>}, {transform_indices = @transform_5, window_bounds = array<i64: 32, 128>}]} {
    %c0 = arith.constant 0 : index
    %c0_0 = arith.constant 0 : index
    %0 = vector.load %arg3[%c0, %c0_0] : memref<32x1xf32, #tpu.memory_space<vmem>>, vector<32x1xf32>
    %1 = vector.shape_cast %0 : vector<32x1xf32> to vector<32x1xf32>
    %2 = vector.broadcast %1 : vector<32x1xf32> to vector<32x128xf32>
    %c0_1 = arith.constant 0 : index
    %c0_2 = arith.constant 0 : index
    %c0_3 = arith.constant 0 : index
    %3 = vector.load %arg2[%c0_1, %c0_2, %c0_3] : memref<9x32x32xbf16, #tpu.memory_space<vmem>>, vector<1x32x32xbf16>
    %4 = vector.shape_cast %3 : vector<1x32x32xbf16> to vector<32x32xbf16>
    %c0_4 = arith.constant 0 : index
    %c0_5 = arith.constant 0 : index
    %5 = vector.load %arg1[%c0_4, %c0_5] : memref<32x256xbf16, #tpu.memory_space<vmem>>, vector<32x128xbf16>
    %cst = arith.constant dense<0.000000e+00> : vector<32x128xf32>
    %6 = tpu.matmul %4, %5, %cst {dimension_numbers = #tpu.dot_dimension_numbers<[1], [0], [0], [1], [0, 0, 1, 1], [], []>} : vector<32x32xbf16>, vector<32x128xbf16>, vector<32x128xf32> -> vector<32x128xf32>
    %7 = arith.addf %2, %6 : vector<32x128xf32>
    %c1 = arith.constant 1 : index
    %c0_6 = arith.constant 0 : index
    %c0_7 = arith.constant 0 : index
    %8 = vector.load %arg2[%c1, %c0_6, %c0_7] : memref<9x32x32xbf16, #tpu.memory_space<vmem>>, vector<1x32x32xbf16>
    %9 = vector.shape_cast %8 : vector<1x32x32xbf16> to vector<32x32xbf16>
    %c0_8 = arith.constant 0 : index
    %c1_9 = arith.constant 1 : index
    %10 = vector.load %arg1[%c0_8, %c1_9] : memref<32x256xbf16, #tpu.memory_space<vmem>>, vector<32x128xbf16>
    %cst_10 = arith.constant dense<0.000000e+00> : vector<32x128xf32>
    %11 = tpu.matmul %9, %10, %cst_10 {dimension_numbers = #tpu.dot_dimension_numbers<[1], [0], [0], [1], [0, 0, 1, 1], [], []>} : vector<32x32xbf16>, vector<32x128xbf16>, vector<32x128xf32> -> vector<32x128xf32>
    %12 = arith.addf %7, %11 : vector<32x128xf32>
    %c2 = arith.constant 2 : index
    %c0_11 = arith.constant 0 : index
    %c0_12 = arith.constant 0 : index
    %13 = vector.load %arg2[%c2, %c0_11, %c0_12] : memref<9x32x32xbf16, #tpu.memory_space<vmem>>, vector<1x32x32xbf16>
    %14 = vector.shape_cast %13 : vector<1x32x32xbf16> to vector<32x32xbf16>
    %c0_13 = arith.constant 0 : index
    %c2_14 = arith.constant 2 : index
    %15 = vector.load %arg1[%c0_13, %c2_14] : memref<32x256xbf16, #tpu.memory_space<vmem>>, vector<32x128xbf16>
    %cst_15 = arith.constant dense<0.000000e+00> : vector<32x128xf32>
    %16 = tpu.matmul %14, %15, %cst_15 {dimension_numbers = #tpu.dot_dimension_numbers<[1], [0], [0], [1], [0, 0, 1, 1], [], []>} : vector<32x32xbf16>, vector<32x128xbf16>, vector<32x128xf32> -> vector<32x128xf32>
    %17 = arith.addf %12, %16 : vector<32x128xf32>
    %c3 = arith.constant 3 : index
    %c0_16 = arith.constant 0 : index
    %c0_17 = arith.constant 0 : index
    %18 = vector.load %arg2[%c3, %c0_16, %c0_17] : memref<9x32x32xbf16, #tpu.memory_space<vmem>>, vector<1x32x32xbf16>
    %19 = vector.shape_cast %18 : vector<1x32x32xbf16> to vector<32x32xbf16>
    %c0_18 = arith.constant 0 : index
    %c4 = arith.constant 4 : index
    %20 = vector.load %arg1[%c0_18, %c4] : memref<32x256xbf16, #tpu.memory_space<vmem>>, vector<32x128xbf16>
    %cst_19 = arith.constant dense<0.000000e+00> : vector<32x128xf32>
    %21 = tpu.matmul %19, %20, %cst_19 {dimension_numbers = #tpu.dot_dimension_numbers<[1], [0], [0], [1], [0, 0, 1, 1], [], []>} : vector<32x32xbf16>, vector<32x128xbf16>, vector<32x128xf32> -> vector<32x128xf32>
    %22 = arith.addf %17, %21 : vector<32x128xf32>
    %c4_20 = arith.constant 4 : index
    %c0_21 = arith.constant 0 : index
    %c0_22 = arith.constant 0 : index
    %23 = vector.load %arg2[%c4_20, %c0_21, %c0_22] : memref<9x32x32xbf16, #tpu.memory_space<vmem>>, vector<1x32x32xbf16>
    %24 = vector.shape_cast %23 : vector<1x32x32xbf16> to vector<32x32xbf16>
    %c0_23 = arith.constant 0 : index
    %c5 = arith.constant 5 : index
    %25 = vector.load %arg1[%c0_23, %c5] : memref<32x256xbf16, #tpu.memory_space<vmem>>, vector<32x128xbf16>
    %cst_24 = arith.constant dense<0.000000e+00> : vector<32x128xf32>
    %26 = tpu.matmul %24, %25, %cst_24 {dimension_numbers = #tpu.dot_dimension_numbers<[1], [0], [0], [1], [0, 0, 1, 1], [], []>} : vector<32x32xbf16>, vector<32x128xbf16>, vector<32x128xf32> -> vector<32x128xf32>
    %27 = arith.addf %22, %26 : vector<32x128xf32>
    %c5_25 = arith.constant 5 : index
    %c0_26 = arith.constant 0 : index
    %c0_27 = arith.constant 0 : index
    %28 = vector.load %arg2[%c5_25, %c0_26, %c0_27] : memref<9x32x32xbf16, #tpu.memory_space<vmem>>, vector<1x32x32xbf16>
    %29 = vector.shape_cast %28 : vector<1x32x32xbf16> to vector<32x32xbf16>
    %c0_28 = arith.constant 0 : index
    %c6 = arith.constant 6 : index
    %30 = vector.load %arg1[%c0_28, %c6] : memref<32x256xbf16, #tpu.memory_space<vmem>>, vector<32x128xbf16>
    %cst_29 = arith.constant dense<0.000000e+00> : vector<32x128xf32>
    %31 = tpu.matmul %29, %30, %cst_29 {dimension_numbers = #tpu.dot_dimension_numbers<[1], [0], [0], [1], [0, 0, 1, 1], [], []>} : vector<32x32xbf16>, vector<32x128xbf16>, vector<32x128xf32> -> vector<32x128xf32>
    %32 = arith.addf %27, %31 : vector<32x128xf32>
    %c6_30 = arith.constant 6 : index
    %c0_31 = arith.constant 0 : index
    %c0_32 = arith.constant 0 : index
    %33 = vector.load %arg2[%c6_30, %c0_31, %c0_32] : memref<9x32x32xbf16, #tpu.memory_space<vmem>>, vector<1x32x32xbf16>
    %34 = vector.shape_cast %33 : vector<1x32x32xbf16> to vector<32x32xbf16>
    %c0_33 = arith.constant 0 : index
    %c8 = arith.constant 8 : index
    %35 = vector.load %arg1[%c0_33, %c8] : memref<32x256xbf16, #tpu.memory_space<vmem>>, vector<32x128xbf16>
    %cst_34 = arith.constant dense<0.000000e+00> : vector<32x128xf32>
    %36 = tpu.matmul %34, %35, %cst_34 {dimension_numbers = #tpu.dot_dimension_numbers<[1], [0], [0], [1], [0, 0, 1, 1], [], []>} : vector<32x32xbf16>, vector<32x128xbf16>, vector<32x128xf32> -> vector<32x128xf32>
    %37 = arith.addf %32, %36 : vector<32x128xf32>
    %c7 = arith.constant 7 : index
    %c0_35 = arith.constant 0 : index
    %c0_36 = arith.constant 0 : index
    %38 = vector.load %arg2[%c7, %c0_35, %c0_36] : memref<9x32x32xbf16, #tpu.memory_space<vmem>>, vector<1x32x32xbf16>
    %39 = vector.shape_cast %38 : vector<1x32x32xbf16> to vector<32x32xbf16>
    %c0_37 = arith.constant 0 : index
    %c9 = arith.constant 9 : index
    %40 = vector.load %arg1[%c0_37, %c9] : memref<32x256xbf16, #tpu.memory_space<vmem>>, vector<32x128xbf16>
    %cst_38 = arith.constant dense<0.000000e+00> : vector<32x128xf32>
    %41 = tpu.matmul %39, %40, %cst_38 {dimension_numbers = #tpu.dot_dimension_numbers<[1], [0], [0], [1], [0, 0, 1, 1], [], []>} : vector<32x32xbf16>, vector<32x128xbf16>, vector<32x128xf32> -> vector<32x128xf32>
    %42 = arith.addf %37, %41 : vector<32x128xf32>
    %c8_39 = arith.constant 8 : index
    %c0_40 = arith.constant 0 : index
    %c0_41 = arith.constant 0 : index
    %43 = vector.load %arg2[%c8_39, %c0_40, %c0_41] : memref<9x32x32xbf16, #tpu.memory_space<vmem>>, vector<1x32x32xbf16>
    %44 = vector.shape_cast %43 : vector<1x32x32xbf16> to vector<32x32xbf16>
    %c0_42 = arith.constant 0 : index
    %c10 = arith.constant 10 : index
    %45 = vector.load %arg1[%c0_42, %c10] : memref<32x256xbf16, #tpu.memory_space<vmem>>, vector<32x128xbf16>
    %cst_43 = arith.constant dense<0.000000e+00> : vector<32x128xf32>
    %46 = tpu.matmul %44, %45, %cst_43 {dimension_numbers = #tpu.dot_dimension_numbers<[1], [0], [0], [1], [0, 0, 1, 1], [], []>} : vector<32x32xbf16>, vector<32x128xbf16>, vector<32x128xf32> -> vector<32x128xf32>
    %47 = arith.addf %42, %46 : vector<32x128xf32>
    %c0_44 = arith.constant 0 : index
    %c0_45 = arith.constant 0 : index
    %48 = vector.load %arg5[%c0_44, %c0_45] : memref<32x16xbf16, #tpu.memory_space<vmem>>, vector<32x16xbf16>
    %c0_46 = arith.constant 0 : index
    %c0_47 = arith.constant 0 : index
    %49 = vector.load %arg4[%c0_46, %c0_47] : memref<16x128xbf16, #tpu.memory_space<vmem>>, vector<16x128xbf16>
    %cst_48 = arith.constant dense<0.000000e+00> : vector<32x128xf32>
    %50 = tpu.matmul %48, %49, %cst_48 {dimension_numbers = #tpu.dot_dimension_numbers<[1], [0], [0], [1], [0, 0, 1, 1], [], []>} : vector<32x16xbf16>, vector<16x128xbf16>, vector<32x128xf32> -> vector<32x128xf32>
    %51 = arith.addf %47, %50 : vector<32x128xf32>
    %cst_49 = arith.constant 0.000000e+00 : f32
    %52 = vector.broadcast %cst_49 : f32 to vector<32x128xf32>
    %53 = arith.maximumf %51, %52 : vector<32x128xf32>
    %54 = arith.truncf %53 : vector<32x128xf32> to vector<32x128xbf16>
    %c0_50 = arith.constant 0 : index
    %c0_51 = arith.constant 0 : index
    %55 = vector.load %arg6[%c0_50, %c0_51] : memref<32x128xbf16, #tpu.memory_space<vmem>>, vector<32x128xbf16>
    tpu.vector_store %arg6[%c0_50, %c0_51], %54 {strides = array<i32>} : memref<32x128xbf16, #tpu.memory_space<vmem>>, vector<32x128xbf16>,
    return
  }
  func.func @transform_0(%arg0: i32) -> (i32, i32) {
    %c0_i32 = arith.constant 0 : i32
    %c0_i32_0 = arith.constant 0 : i32
    %c0_i32_1 = arith.constant 0 : i32
    return %c0_i32, %c0_i32_0 : i32, i32
  }
  func.func @transform_1(%arg0: i32) -> (i32, i32, i32) {
    %c0_i32 = arith.constant 0 : i32
    %c0_i32_0 = arith.constant 0 : i32
    %c0_i32_1 = arith.constant 0 : i32
    %c0_i32_2 = arith.constant 0 : i32
    return %c0_i32, %c0_i32_0, %c0_i32_1 : i32, i32, i32
  }
  func.func @transform_2(%arg0: i32) -> (i32, i32) {
    %c0_i32 = arith.constant 0 : i32
    %c0_i32_0 = arith.constant 0 : i32
    %c0_i32_1 = arith.constant 0 : i32
    return %c0_i32, %c0_i32_0 : i32, i32
  }
  func.func @transform_3(%arg0: i32) -> (i32, i32) {
    %c0_i32 = arith.constant 0 : i32
    %c0_i32_0 = arith.constant 0 : i32
    return %c0_i32, %arg0 : i32, i32
  }
  func.func @transform_4(%arg0: i32) -> (i32, i32) {
    %c0_i32 = arith.constant 0 : i32
    %c0_i32_0 = arith.constant 0 : i32
    %c0_i32_1 = arith.constant 0 : i32
    return %c0_i32, %c0_i32_0 : i32, i32
  }
  func.func @transform_5(%arg0: i32) -> (i32, i32) {
    %c0_i32 = arith.constant 0 : i32
    %c0_i32_0 = arith.constant 0 : i32
    return %c0_i32, %arg0 : i32, i32
  }
}

module attributes {stable_mosaic.version = 11 : i64} {
  func.func @_head_kernel(%arg0: i32, %arg1: memref<2x128xf32, #tpu.memory_space<vmem>>, %arg2: memref<128x32xf32, #tpu.memory_space<vmem>>, %arg3: memref<1x32xf32, #tpu.memory_space<vmem>>, %arg4: memref<1x32xf32, #tpu.memory_space<vmem>>, %arg5: memref<1x32xf32, #tpu.memory_space<vmem>>, %arg6: memref<32x32xf32, #tpu.memory_space<vmem>>, %arg7: memref<1x32xf32, #tpu.memory_space<vmem>>, %arg8: memref<2x32xf32, #tpu.memory_space<vmem>>, %arg9: memref<2x32xf32, #tpu.memory_space<vmem>>) attributes {dimension_semantics = [#tpu.dimension_semantics<arbitrary>], iteration_bounds = array<i64: 1>, scalar_prefetch = 0 : i64, scratch_operands = 0 : i64, tpu.core_type = #tpu.core_type<tc>, window_params = [{pipeline_mode = #tpu.pipeline_mode<synchronous>, transform_indices = @transform_0, window_bounds = array<i64: 2, 128>}, {pipeline_mode = #tpu.pipeline_mode<synchronous>, transform_indices = @transform_1, window_bounds = array<i64: 128, 32>}, {pipeline_mode = #tpu.pipeline_mode<synchronous>, transform_indices = @transform_2, window_bounds = array<i64: 1, 32>}, {pipeline_mode = #tpu.pipeline_mode<synchronous>, transform_indices = @transform_3, window_bounds = array<i64: 1, 32>}, {pipeline_mode = #tpu.pipeline_mode<synchronous>, transform_indices = @transform_4, window_bounds = array<i64: 1, 32>}, {pipeline_mode = #tpu.pipeline_mode<synchronous>, transform_indices = @transform_5, window_bounds = array<i64: 32, 32>}, {pipeline_mode = #tpu.pipeline_mode<synchronous>, transform_indices = @transform_6, window_bounds = array<i64: 1, 32>}, {pipeline_mode = #tpu.pipeline_mode<synchronous>, transform_indices = @transform_7, window_bounds = array<i64: 2, 32>}, {pipeline_mode = #tpu.pipeline_mode<synchronous>, transform_indices = @transform_8, window_bounds = array<i64: 2, 32>}]} {
    %c0 = arith.constant 0 : index
    %c0_0 = arith.constant 0 : index
    %0 = vector.load %arg1[%c0, %c0_0] : memref<2x128xf32, #tpu.memory_space<vmem>>, vector<2x128xf32>
    %c0_1 = arith.constant 0 : index
    %c0_2 = arith.constant 0 : index
    %1 = vector.load %arg2[%c0_1, %c0_2] : memref<128x32xf32, #tpu.memory_space<vmem>>, vector<128x32xf32>
    %cst = arith.constant dense<0.000000e+00> : vector<2x32xf32>
    %2 = tpu.matmul %0, %1, %cst {dimension_numbers = #tpu.dot_dimension_numbers<[1], [0], [0], [1], [0, 0, 1, 1], [], []>} : vector<2x128xf32>, vector<128x32xf32>, vector<2x32xf32> -> vector<2x32xf32>
    %c0_3 = arith.constant 0 : index
    %c0_4 = arith.constant 0 : index
    %3 = vector.load %arg3[%c0_3, %c0_4] : memref<1x32xf32, #tpu.memory_space<vmem>>, vector<1x32xf32>
    %4 = vector.broadcast %3 : vector<1x32xf32> to vector<2x32xf32>
    %5 = arith.addf %2, %4 : vector<2x32xf32>
    %c0_5 = arith.constant 0 : index
    %c0_6 = arith.constant 0 : index
    %6 = vector.load %arg8[%c0_5, %c0_6] : memref<2x32xf32, #tpu.memory_space<vmem>>, vector<2x32xf32>
    tpu.vector_store %arg8[%c0_5, %c0_6], %5 {strides = array<i32>} : memref<2x32xf32, #tpu.memory_space<vmem>>, vector<2x32xf32>,
    %cst_7 = arith.constant 0.000000e+00 : f32
    %7 = vector.broadcast %cst_7 : f32 to vector<2x32xf32>
    %8 = arith.maximumf %5, %7 : vector<2x32xf32>
    %c0_8 = arith.constant 0 : index
    %c0_9 = arith.constant 0 : index
    %9 = vector.load %arg4[%c0_8, %c0_9] : memref<1x32xf32, #tpu.memory_space<vmem>>, vector<1x32xf32>
    %10 = vector.broadcast %9 : vector<1x32xf32> to vector<2x32xf32>
    %11 = arith.subf %8, %10 : vector<2x32xf32>
    %c0_10 = arith.constant 0 : index
    %c0_11 = arith.constant 0 : index
    %12 = vector.load %arg5[%c0_10, %c0_11] : memref<1x32xf32, #tpu.memory_space<vmem>>, vector<1x32xf32>
    %13 = vector.broadcast %12 : vector<1x32xf32> to vector<2x32xf32>
    %14 = arith.mulf %11, %13 : vector<2x32xf32>
    %c0_12 = arith.constant 0 : index
    %c0_13 = arith.constant 0 : index
    %15 = vector.load %arg6[%c0_12, %c0_13] : memref<32x32xf32, #tpu.memory_space<vmem>>, vector<32x32xf32>
    %cst_14 = arith.constant dense<0.000000e+00> : vector<2x32xf32>
    %16 = tpu.matmul %14, %15, %cst_14 {dimension_numbers = #tpu.dot_dimension_numbers<[1], [0], [0], [1], [0, 0, 1, 1], [], []>} : vector<2x32xf32>, vector<32x32xf32>, vector<2x32xf32> -> vector<2x32xf32>
    %c0_15 = arith.constant 0 : index
    %c0_16 = arith.constant 0 : index
    %17 = vector.load %arg7[%c0_15, %c0_16] : memref<1x32xf32, #tpu.memory_space<vmem>>, vector<1x32xf32>
    %18 = vector.broadcast %17 : vector<1x32xf32> to vector<2x32xf32>
    %19 = arith.addf %16, %18 : vector<2x32xf32>
    %c0_17 = arith.constant 0 : index
    %c0_18 = arith.constant 0 : index
    %20 = vector.load %arg9[%c0_17, %c0_18] : memref<2x32xf32, #tpu.memory_space<vmem>>, vector<2x32xf32>
    tpu.vector_store %arg9[%c0_17, %c0_18], %19 {strides = array<i32>} : memref<2x32xf32, #tpu.memory_space<vmem>>, vector<2x32xf32>,
    return
  }
  func.func @transform_0(%arg0: i32) -> (i32, i32) {
    %c0_i32 = arith.constant 0 : i32
    %c0_i32_0 = arith.constant 0 : i32
    %c0_i32_1 = arith.constant 0 : i32
    return %c0_i32, %c0_i32_0 : i32, i32
  }
  func.func @transform_1(%arg0: i32) -> (i32, i32) {
    %c0_i32 = arith.constant 0 : i32
    %c0_i32_0 = arith.constant 0 : i32
    %c0_i32_1 = arith.constant 0 : i32
    return %c0_i32, %c0_i32_0 : i32, i32
  }
  func.func @transform_2(%arg0: i32) -> (i32, i32) {
    %c0_i32 = arith.constant 0 : i32
    %c0_i32_0 = arith.constant 0 : i32
    %c0_i32_1 = arith.constant 0 : i32
    return %c0_i32, %c0_i32_0 : i32, i32
  }
  func.func @transform_3(%arg0: i32) -> (i32, i32) {
    %c0_i32 = arith.constant 0 : i32
    %c0_i32_0 = arith.constant 0 : i32
    %c0_i32_1 = arith.constant 0 : i32
    return %c0_i32, %c0_i32_0 : i32, i32
  }
  func.func @transform_4(%arg0: i32) -> (i32, i32) {
    %c0_i32 = arith.constant 0 : i32
    %c0_i32_0 = arith.constant 0 : i32
    %c0_i32_1 = arith.constant 0 : i32
    return %c0_i32, %c0_i32_0 : i32, i32
  }
  func.func @transform_5(%arg0: i32) -> (i32, i32) {
    %c0_i32 = arith.constant 0 : i32
    %c0_i32_0 = arith.constant 0 : i32
    %c0_i32_1 = arith.constant 0 : i32
    return %c0_i32, %c0_i32_0 : i32, i32
  }
  func.func @transform_6(%arg0: i32) -> (i32, i32) {
    %c0_i32 = arith.constant 0 : i32
    %c0_i32_0 = arith.constant 0 : i32
    %c0_i32_1 = arith.constant 0 : i32
    return %c0_i32, %c0_i32_0 : i32, i32
  }
  func.func @transform_7(%arg0: i32) -> (i32, i32) {
    %c0_i32 = arith.constant 0 : i32
    %c0_i32_0 = arith.constant 0 : i32
    %c0_i32_1 = arith.constant 0 : i32
    return %c0_i32, %c0_i32_0 : i32, i32
  }
  func.func @transform_8(%arg0: i32) -> (i32, i32) {
    %c0_i32 = arith.constant 0 : i32
    %c0_i32_0 = arith.constant 0 : i32
    %c0_i32_1 = arith.constant 0 : i32
    return %c0_i32, %c0_i32_0 : i32, i32
  }
}

</mosaic_0001>

<llo_original>
// kernel: resnet_forward.10
$region0: #{resnet_forward.10}
  #allocation0 [shape = 'u32[]', space=smem, size = 0x4, offset = 0x4, fixed_abs, tag = 'smem constant byte address 0x4 - core index']
  #allocation1 [shape = 'u32[144,128]{1,0:T(1,128)}', space=vmem, size = 0x12000, scoped, tag = 'internal scratch']
  %s0 = inlined_call_operand.vmem [shape: bf16[16,896], index: 0, kind: input, shape index: {}]
  %s1 = inlined_call_operand.vmem [shape: bf16[9,16,16], index: 1, kind: input, shape index: {}]
  %s2 = inlined_call_operand.vmem [shape: f32[16,1], index: 2, kind: input, shape index: {}]
  %s3 = inlined_call_operand.vmem [shape: bf16[16,768], index: 3, kind: output, shape index: {}]
  %s4 = sld [smem:[#allocation0]]
  $region22: #{resnet_forward.10} parent=0
    _
  %s6 = ssub.s32 1, %s4
  %s7 = scalar_select 0, %s6, %s4
  // Predicated region
  $region2: #{resnet_forward.10} parent=0 // pred_check
    _
  $region3: #{resnet_forward.10} parent=0 // pred_check_branch
    %9 = sbr.rel (0) target = $region5
  $region4: #{resnet_forward.10} parent=0 // pred_region
    _
  $region5: #{resnet_forward.10} parent=0 // pred_fallthru
    _
  // Predicated region
  $region6: #{resnet_forward.10} parent=0 // pred_check
    _
  $region7: #{resnet_forward.10} parent=0 // pred_check_branch
    %11 = sbr.rel (0) target = $region9
  $region8: #{resnet_forward.10} parent=0 // pred_region
    _
  $region9: #{resnet_forward.10} parent=0 // pred_fallthru
    _
  // Predicated region
  $region10: #{resnet_forward.10} parent=0 // pred_check
    _
  $region11: #{resnet_forward.10} parent=0 // pred_check_branch
    %13 = sbr.rel (0) target = $region13
  $region12: #{resnet_forward.10} parent=0 // pred_region
    _
  $region13: #{resnet_forward.10} parent=0 // pred_fallthru
    _
  %v15 = vld [vmem:[%s2] sm:$0xff]
  %v16 = vld [vmem:[%s2 + $0x8] sm:$0xff]
  %18 = vset.pattern.permute.xlu0 0
  %19 = vperm.xlu0 %18, %v15
  %v20 = vpop.permute.xlu0 %19
  %23 = vset.pattern.permute.xlu0 0
  %24 = vperm.xlu0 %23, %v16
  %v25 = vpop.permute.xlu0 %24
  %v27 = vld [vmem:[%s1] sm:$0xf]
  %v28 = vld [vmem:[%s1 + $0x4] sm:$0xf]
  %v29 = vld [vmem:[%s0] sm:$0xff]
  %v30 = vld [vmem:[%s0 + $0x8] sm:$0xff]
  %v31 = vld [vmem:[%s0 + $0x10] sm:$0xff]
  %v32 = vld [vmem:[%s0 + $0x1c] sm:$0xff]
  %v33 = vld [vmem:[%s0 + $0x24] sm:$0xff]
  %v34 = vld [vmem:[%s0 + $0x2c] sm:$0xff]
  %v37 = vunpack.c.l.b16 %v27
  %v38 = vunpack.c.l.b16 %v28
  %v39 = vpack.c.b16 %v38, %v37
  %v46 = vunpack.c.l.b16 %v29
  %v47 = vunpack.c.h.b16 %v29
  %v48 = vunpack.c.l.b16 %v30
  %v49 = vunpack.c.h.b16 %v30
  %v50 = vunpack.c.l.b16 %v31
  %v51 = vunpack.c.h.b16 %v31
  %v52 = vunpack.c.l.b16 %v32
  %v53 = vunpack.c.h.b16 %v32
  %v54 = vunpack.c.l.b16 %v33
  %v55 = vunpack.c.h.b16 %v33
  %v56 = vunpack.c.l.b16 %v34
  %v57 = vunpack.c.h.b16 %v34
  %v58 = vpack.c.b16 %v52, %v46
  %v59 = vpack.c.b16 %v53, %v47
  %v60 = vpack.c.b16 %v54, %v48
  %v61 = vpack.c.b16 %v55, %v49
  %v62 = vpack.c.b16 %v56, %v50
  %v63 = vpack.c.b16 %v57, %v51
  %vm70 = vcmask 130048
  %v72 = vsel %vm70, %v39, 0
  %74 = vmatprep.subr.bf16.mxu0 %v59
  %75 = vmatpush1.bf16.msra.mxu0 %v58
  %76 = vmatprep.subr.bf16.mxu0 0
  %77 = vmatpush1.bf16.msra.mxu0 0
  %78 = vmatprep.subr.bf16.mxu0 0
  %79 = vmatpush1.bf16.msra.mxu0 0
  %80 = vmatprep.subr.bf16.mxu0 0
  %81 = vmatpush1.bf16.msra.mxu0 0
  %82 = vmatprep.subr.bf16.mxu0 0
  %83 = vmatpush1.bf16.msra.mxu0 0
  %84 = vmatprep.subr.bf16.mxu0 0
  %85 = vmatpush1.bf16.msra.mxu0 0
  %86 = vmatprep.subr.bf16.mxu0 0
  %87 = vmatpush1.bf16.msra.mxu0 0
  %88 = vmatprep.subr.bf16.mxu0 0
  %89 = vmatpush1.bf16.msra.mxu0 0
  %90 = vmatprep.subr.bf16.mxu0 0
  %91 = vmatpush1.bf16.msra.mxu0 0
  %92 = vmatprep.subr.bf16.mxu0 0
  %93 = vmatpush1.bf16.msra.mxu0 0
  %94 = vmatprep.subr.bf16.mxu0 0
  %95 = vmatpush1.bf16.msra.mxu0 0
  %96 = vmatprep.subr.bf16.mxu0 0
  %97 = vmatpush1.bf16.msra.mxu0 0
  %98 = vmatprep.subr.bf16.mxu0 0
  %99 = vmatpush1.bf16.msra.mxu0 0
  %100 = vmatprep.subr.bf16.mxu0 0
  %101 = vmatpush1.bf16.msra.mxu0 0
  %102 = vmatprep.subr.bf16.mxu0 0
  %103 = vmatpush1.bf16.msra.mxu0 0
  %104 = vmatprep.subr.bf16.mxu0 0
  %105 = vmatpush1.bf16.msra.mxu0 0
  %106 = vmatprep.mubr.bf16.mxu0 0
  %107 = vmatmul.mubr.bf16.gmra.mrb[0].mxu0 %v72
  %v108 = vpop.f32.mrb[0].mxu0
  %v109 = vadd.f32 0.0, %v108
  %v110 = vpop.f32.mrb[0].mxu0
  %v111 = vadd.f32 0.0, %v110
  %v112 = vpop.f32.mrb[0].mxu0
  %v113 = vadd.f32 0.0, %v112
  %v114 = vpop.f32.mrb[0].mxu0
  %v115 = vadd.f32 0.0, %v114
  %116 = vdwg.mxu0
  %117 = vmatprep.subr.bf16.mxu0 %v61
  %118 = vmatpush1.bf16.msra.mxu0 %v60
  %119 = vmatprep.subr.bf16.mxu0 0
  %120 = vmatpush1.bf16.msra.mxu0 0
  %121 = vmatprep.subr.bf16.mxu0 0
  %122 = vmatpush1.bf16.msra.mxu0 0
  %123 = vmatprep.subr.bf16.mxu0 0
  %124 = vmatpush1.bf16.msra.mxu0 0
  %125 = vmatprep.subr.bf16.mxu0 0
  %126 = vmatpush1.bf16.msra.mxu0 0
  %127 = vmatprep.subr.bf16.mxu0 0
  %128 = vmatpush1.bf16.msra.mxu0 0
  %129 = vmatprep.subr.bf16.mxu0 0
  %130 = vmatpush1.bf16.msra.mxu0 0
  %131 = vmatprep.subr.bf16.mxu0 0
  %132 = vmatpush1.bf16.msra.mxu0 0
  %133 = vmatprep.subr.bf16.mxu0 0
  %134 = vmatpush1.bf16.msra.mxu0 0
  %135 = vmatprep.subr.bf16.mxu0 0
  %136 = vmatpush1.bf16.msra.mxu0 0
  %137 = vmatprep.subr.bf16.mxu0 0
  %138 = vmatpush1.bf16.msra.mxu0 0
  %139 = vmatprep.subr.bf16.mxu0 0
  %140 = vmatpush1.bf16.msra.mxu0 0
  %141 = vmatprep.subr.bf16.mxu0 0
  %142 = vmatpush1.bf16.msra.mxu0 0
  %143 = vmatprep.subr.bf16.mxu0 0
  %144 = vmatpush1.bf16.msra.mxu0 0
  %145 = vmatprep.subr.bf16.mxu0 0
  %146 = vmatpush1.bf16.msra.mxu0 0
  %147 = vmatprep.subr.bf16.mxu0 0
  %148 = vmatpush1.bf16.msra.mxu0 0
  %149 = vmatprep.mubr.bf16.mxu0 0
  %150 = vmatmul.mubr.bf16.gmra.mrb[0].mxu0 %v72
  %v151 = vpop.f32.mrb[0].mxu0
  %v152 = vadd.f32 0.0, %v151
  %v153 = vpop.f32.mrb[0].mxu0
  %v154 = vadd.f32 0.0, %v153
  %v155 = vpop.f32.mrb[0].mxu0
  %v156 = vadd.f32 0.0, %v155
  %v157 = vpop.f32.mrb[0].mxu0
  %v158 = vadd.f32 0.0, %v157
  %159 = vdwg.mxu0
  %160 = vmatprep.subr.bf16.mxu0 %v63
  %161 = vmatpush1.bf16.msra.mxu0 %v62
  %162 = vmatprep.subr.bf16.mxu0 0
  %163 = vmatpush1.bf16.msra.mxu0 0
  %164 = vmatprep.subr.bf16.mxu0 0
  %165 = vmatpush1.bf16.msra.mxu0 0
  %166 = vmatprep.subr.bf16.mxu0 0
  %167 = vmatpush1.bf16.msra.mxu0 0
  %168 = vmatprep.subr.bf16.mxu0 0
  %169 = vmatpush1.bf16.msra.mxu0 0
  %170 = vmatprep.subr.bf16.mxu0 0
  %171 = vmatpush1.bf16.msra.mxu0 0
  %172 = vmatprep.subr.bf16.mxu0 0
  %173 = vmatpush1.bf16.msra.mxu0 0
  %174 = vmatprep.subr.bf16.mxu0 0
  %175 = vmatpush1.bf16.msra.mxu0 0
  %176 = vmatprep.subr.bf16.mxu0 0
  %177 = vmatpush1.bf16.msra.mxu0 0
  %178 = vmatprep.subr.bf16.mxu0 0
  %179 = vmatpush1.bf16.msra.mxu0 0
  %180 = vmatprep.subr.bf16.mxu0 0
  %181 = vmatpush1.bf16.msra.mxu0 0
  %182 = vmatprep.subr.bf16.mxu0 0
  %183 = vmatpush1.bf16.msra.mxu0 0
  %184 = vmatprep.subr.bf16.mxu0 0
  %185 = vmatpush1.bf16.msra.mxu0 0
  %186 = vmatprep.subr.bf16.mxu0 0
  %187 = vmatpush1.bf16.msra.mxu0 0
  %188 = vmatprep.subr.bf16.mxu0 0
  %189 = vmatpush1.bf16.msra.mxu0 0
  %190 = vmatprep.subr.bf16.mxu0 0
  %191 = vmatpush1.bf16.msra.mxu0 0
  %192 = vmatprep.mubr.bf16.mxu0 0
  %193 = vmatmul.mubr.bf16.gmra.mrb[0].mxu0 %v72
  %v194 = vpop.f32.mrb[0].mxu0
  %v195 = vadd.f32 0.0, %v194
  %v196 = vpop.f32.mrb[0].mxu0
  %v197 = vadd.f32 0.0, %v196
  %v198 = vpop.f32.mrb[0].mxu0
  %v199 = vadd.f32 0.0, %v198
  %v200 = vpop.f32.mrb[0].mxu0
  %v201 = vadd.f32 0.0, %v200
  %202 = vdwg.mxu0
  %v203 = vadd.f32 %v20, %v109
  %v204 = vadd.f32 %v20, %v111
  %v205 = vadd.f32 %v20, %v152
  %v206 = vadd.f32 %v20, %v154
  %v207 = vadd.f32 %v20, %v195
  %v208 = vadd.f32 %v20, %v197
  %v209 = vadd.f32 %v25, %v113
  %v210 = vadd.f32 %v25, %v115
  %v211 = vadd.f32 %v25, %v156
  %v212 = vadd.f32 %v25, %v158
  %v213 = vadd.f32 %v25, %v199
  %v214 = vadd.f32 %v25, %v201
  %s215 = scalar_lea.vmem %s1, 8
  %v216 = vld [vmem:[%s215] sm:$0xf]
  %v217 = vld [vmem:[%s215 + $0x4] sm:$0xf]
  %v218 = vld [vmem:[%s0] sm:$0xff]
  %v219 = vld [vmem:[%s0 + $0x8] sm:$0xff]
  %v220 = vld [vmem:[%s0 + $0x10] sm:$0xff]
  %v221 = vld [vmem:[%s0 + $0x18] sm:$0xf]
  %v222 = vld [vmem:[%s0 + $0x1c] sm:$0xff]
  %v223 = vld [vmem:[%s0 + $0x24] sm:$0xff]
  %v224 = vld [vmem:[%s0 + $0x2c] sm:$0xff]
  %v225 = vld [vmem:[%s0 + $0x34] sm:$0xf]
  %v228 = vunpack.c.l.b16 %v216
  %v229 = vunpack.c.l.b16 %v217
  %v230 = vpack.c.b16 %v229, %v228
  %v239 = vunpack.c.l.b16 %v218
  %v240 = vunpack.c.h.b16 %v218
  %v241 = vunpack.c.l.b16 %v219
  %v242 = vunpack.c.h.b16 %v219
  %v243 = vunpack.c.l.b16 %v220
  %v244 = vunpack.c.h.b16 %v220
  %v245 = vunpack.c.l.b16 %v221
  %v246 = vunpack.c.l.b16 %v222
  %v247 = vunpack.c.h.b16 %v222
  %v248 = vunpack.c.l.b16 %v223
  %v249 = vunpack.c.h.b16 %v223
  %v250 = vunpack.c.l.b16 %v224
  %v251 = vunpack.c.h.b16 %v224
  %v252 = vunpack.c.l.b16 %v225
  %v253 = vpack.c.b16 %v246, %v239
  %v254 = vpack.c.b16 %v247, %v240
  %v255 = vpack.c.b16 %v248, %v241
  %v256 = vpack.c.b16 %v249, %v242
  %v257 = vpack.c.b16 %v250, %v243
  %v258 = vpack.c.b16 %v251, %v244
  %v259 = vpack.c.b16 %v252, %v245
  %260 = vrot.lane.b32.xlu0 %v253, 127
  %v261 = vpop.permute.xlu0 %260
  %262 = vrot.lane.b32.xlu0 %v254, 127
  %v263 = vpop.permute.xlu0 %262
  %264 = vrot.lane.b32.xlu0 %v255, 127
  %v265 = vpop.permute.xlu0 %264
  %266 = vrot.lane.b32.xlu0 %v256, 127
  %v267 = vpop.permute.xlu0 %266
  %268 = vrot.lane.b32.xlu0 %v257, 127
  %v269 = vpop.permute.xlu0 %268
  %270 = vrot.lane.b32.xlu0 %v258, 127
  %v271 = vpop.permute.xlu0 %270
  %272 = vrot.lane.b32.xlu0 %v259, 127
  %v273 = vpop.permute.xlu0 %272
  %vm274 = vcmask 1039360
  %v275 = vsel %vm274, %v261, %v263
  %v276 = vsel %vm274, %v263, %v265
  %v277 = vsel %vm274, %v265, %v267
  %v278 = vsel %vm274, %v267, %v269
  %v279 = vsel %vm274, %v269, %v271
  %v280 = vsel %vm274, %v271, %v273
  %v288 = vsel %vm70, %v230, 0
  %290 = vmatprep.subr.bf16.mxu0 %v276
  %291 = vmatpush1.bf16.msra.mxu0 %v275
  %292 = vmatprep.subr.bf16.mxu0 0
  %293 = vmatpush1.bf16.msra.mxu0 0
  %294 = vmatprep.subr.bf16.mxu0 0
  %295 = vmatpush1.bf16.msra.mxu0 0
  %296 = vmatprep.subr.bf16.mxu0 0
  %297 = vmatpush1.bf16.msra.mxu0 0
  %298 = vmatprep.subr.bf16.mxu0 0
  %299 = vmatpush1.bf16.msra.mxu0 0
  %300 = vmatprep.subr.bf16.mxu0 0
  %301 = vmatpush1.bf16.msra.mxu0 0
  %302 = vmatprep.subr.bf16.mxu0 0
  %303 = vmatpush1.bf16.msra.mxu0 0
  %304 = vmatprep.subr.bf16.mxu0 0
  %305 = vmatpush1.bf16.msra.mxu0 0
  %306 = vmatprep.subr.bf16.mxu0 0
  %307 = vmatpush1.bf16.msra.mxu0 0
  %308 = vmatprep.subr.bf16.mxu0 0
  %309 = vmatpush1.bf16.msra.mxu0 0
  %310 = vmatprep.subr.bf16.mxu0 0
  %311 = vmatpush1.bf16.msra.mxu0 0
  %312 = vmatprep.subr.bf16.mxu0 0
  %313 = vmatpush1.bf16.msra.mxu0 0
  %314 = vmatprep.subr.bf16.mxu0 0
  %315 = vmatpush1.bf16.msra.mxu0 0
  %316 = vmatprep.subr.bf16.mxu0 0
  %317 = vmatpush1.bf16.msra.mxu0 0
  %318 = vmatprep.subr.bf16.mxu0 0
  %319 = vmatpush1.bf16.msra.mxu0 0
  %320 = vmatprep.subr.bf16.mxu0 0
  %321 = vmatpush1.bf16.msra.mxu0 0
  %322 = vmatprep.mubr.bf16.mxu0 0
  %323 = vmatmul.mubr.bf16.gmra.mrb[0].mxu0 %v288
  %v324 = vpop.f32.mrb[0].mxu0
  %v325 = vadd.f32 0.0, %v324
  %v326 = vpop.f32.mrb[0].mxu0
  %v327 = vadd.f32 0.0, %v326
  %v328 = vpop.f32.mrb[0].mxu0
  %v329 = vadd.f32 0.0, %v328
  %v330 = vpop.f32.mrb[0].mxu0
  %v331 = vadd.f32 0.0, %v330
  %332 = vdwg.mxu0
  %333 = vmatprep.subr.bf16.mxu0 %v278
  %334 = vmatpush1.bf16.msra.mxu0 %v277
  %335 = vmatprep.subr.bf16.mxu0 0
  %336 = vmatpush1.bf16.msra.mxu0 0
  %337 = vmatprep.subr.bf16.mxu0 0
  %338 = vmatpush1.bf16.msra.mxu0 0
  %339 = vmatprep.subr.bf16.mxu0 0
  %340 = vmatpush1.bf16.msra.mxu0 0
  %341 = vmatprep.subr.bf16.mxu0 0
  %342 = vmatpush1.bf16.msra.mxu0 0
  %343 = vmatprep.subr.bf16.mxu0 0
  %344 = vmatpush1.bf16.msra.mxu0 0
  %345 = vmatprep.subr.bf16.mxu0 0
  %346 = vmatpush1.bf16.msra.mxu0 0
  %347 = vmatprep.subr.bf16.mxu0 0
  %348 = vmatpush1.bf16.msra.mxu0 0
  %349 = vmatprep.subr.bf16.mxu0 0
  %350 = vmatpush1.bf16.msra.mxu0 0
  %351 = vmatprep.subr.bf16.mxu0 0
  %352 = vmatpush1.bf16.msra.mxu0 0
  %353 = vmatprep.subr.bf16.mxu0 0
  %354 = vmatpush1.bf16.msra.mxu0 0
  %355 = vmatprep.subr.bf16.mxu0 0
  %356 = vmatpush1.bf16.msra.mxu0 0
  %357 = vmatprep.subr.bf16.mxu0 0
  %358 = vmatpush1.bf16.msra.mxu0 0
  %359 = vmatprep.subr.bf16.mxu0 0
  %360 = vmatpush1.bf16.msra.mxu0 0
  %361 = vmatprep.subr.bf16.mxu0 0
  %362 = vmatpush1.bf16.msra.mxu0 0
  %363 = vmatprep.subr.bf16.mxu0 0
  %364 = vmatpush1.bf16.msra.mxu0 0
  %365 = vmatprep.mubr.bf16.mxu0 0
  %366 = vmatmul.mubr.bf16.gmra.mrb[0].mxu0 %v288
  %v367 = vpop.f32.mrb[0].mxu0
  %v368 = vadd.f32 0.0, %v367
  %v369 = vpop.f32.mrb[0].mxu0
  %v370 = vadd.f32 0.0, %v369
  %v371 = vpop.f32.mrb[0].mxu0
  %v372 = vadd.f32 0.0, %v371
  %v373 = vpop.f32.mrb[0].mxu0
  %v374 = vadd.f32 0.0, %v373
  %375 = vdwg.mxu0
  %376 = vmatprep.subr.bf16.mxu0 %v280
  %377 = vmatpush1.bf16.msra.mxu0 %v279
  %378 = vmatprep.subr.bf16.mxu0 0
  %379 = vmatpush1.bf16.msra.mxu0 0
  %380 = vmatprep.subr.bf16.mxu0 0
  %381 = vmatpush1.bf16.msra.mxu0 0
  %382 = vmatprep.subr.bf16.mxu0 0
  %383 = vmatpush1.bf16.msra.mxu0 0
  %384 = vmatprep.subr.bf16.mxu0 0
  %385 = vmatpush1.bf16.msra.mxu0 0
  %386 = vmatprep.subr.bf16.mxu0 0
  %387 = vmatpush1.bf16.msra.mxu0 0
  %388 = vmatprep.subr.bf16.mxu0 0
  %389 = vmatpush1.bf16.msra.mxu0 0
  %390 = vmatprep.subr.bf16.mxu0 0
  %391 = vmatpush1.bf16.msra.mxu0 0
  %392 = vmatprep.subr.bf16.mxu0 0
  %393 = vmatpush1.bf16.msra.mxu0 0
  %394 = vmatprep.subr.bf16.mxu0 0
  %395 = vmatpush1.bf16.msra.mxu0 0
  %396 = vmatprep.subr.bf16.mxu0 0
  %397 = vmatpush1.bf16.msra.mxu0 0
  %398 = vmatprep.subr.bf16.mxu0 0
  %399 = vmatpush1.bf16.msra.mxu0 0
  %400 = vmatprep.subr.bf16.mxu0 0
  %401 = vmatpush1.bf16.msra.mxu0 0
  %402 = vmatprep.subr.bf16.mxu0 0
  %403 = vmatpush1.bf16.msra.mxu0 0
  %404 = vmatprep.subr.bf16.mxu0 0
  %405 = vmatpush1.bf16.msra.mxu0 0
  %406 = vmatprep.subr.bf16.mxu0 0
  %407 = vmatpush1.bf16.msra.mxu0 0
  %408 = vmatprep.mubr.bf16.mxu0 0
  %409 = vmatmul.mubr.bf16.gmra.mrb[0].mxu0 %v288
  %v410 = vpop.f32.mrb[0].mxu0
  %v411 = vadd.f32 0.0, %v410
  %v412 = vpop.f32.mrb[0].mxu0
  %v413 = vadd.f32 0.0, %v412
  %v414 = vpop.f32.mrb[0].mxu0
  %v415 = vadd.f32 0.0, %v414
  %v416 = vpop.f32.mrb[0].mxu0
  %v417 = vadd.f32 0.0, %v416
  %418 = vdwg.mxu0
  %v419 = vadd.f32 %v203, %v325
  %v420 = vadd.f32 %v204, %v327
  %v421 = vadd.f32 %v205, %v368
  %v422 = vadd.f32 %v206, %v370
  %v423 = vadd.f32 %v207, %v411
  %v424 = vadd.f32 %v208, %v413
  %v425 = vadd.f32 %v209, %v329
  %v426 = vadd.f32 %v210, %v331
  %v427 = vadd.f32 %v211, %v372
  %v428 = vadd.f32 %v212, %v374
  %v429 = vadd.f32 %v213, %v415
  %v430 = vadd.f32 %v214, %v417
  %s431 = scalar_lea.vmem %s1, 16
  %v432 = vld [vmem:[%s431] sm:$0xf]
  %v433 = vld [vmem:[%s431 + $0x4] sm:$0xf]
  %v436 = vunpack.c.l.b16 %v432
  %v437 = vunpack.c.l.b16 %v433
  %v438 = vpack.c.b16 %v437, %v436
  %439 = vrot.lane.b32.xlu0 %v253, 126
  %v440 = vpop.permute.xlu0 %439
  %441 = vrot.lane.b32.xlu0 %v254, 126
  %v442 = vpop.permute.xlu0 %441
  %443 = vrot.lane.b32.xlu0 %v255, 126
  %v444 = vpop.permute.xlu0 %443
  %445 = vrot.lane.b32.xlu0 %v256, 126
  %v446 = vpop.permute.xlu0 %445
  %447 = vrot.lane.b32.xlu0 %v257, 126
  %v448 = vpop.permute.xlu0 %447
  %449 = vrot.lane.b32.xlu0 %v258, 126
  %v450 = vpop.permute.xlu0 %449
  %451 = vrot.lane.b32.xlu0 %v259, 126
  %v452 = vpop.permute.xlu0 %451
  %vm453 = vcmask 1031168
  %v454 = vsel %vm453, %v440, %v442
  %v455 = vsel %vm453, %v442, %v444
  %v456 = vsel %vm453, %v444, %v446
  %v457 = vsel %vm453, %v446, %v448
  %v458 = vsel %vm453, %v448, %v450
  %v459 = vsel %vm453, %v450, %v452
  %v467 = vsel %vm70, %v438, 0
  %469 = vmatprep.subr.bf16.mxu0 %v455
  %470 = vmatpush1.bf16.msra.mxu0 %v454
  %471 = vmatprep.subr.bf16.mxu0 0
  %472 = vmatpush1.bf16.msra.mxu0 0
  %473 = vmatprep.subr.bf16.mxu0 0
  %474 = vmatpush1.bf16.msra.mxu0 0
  %475 = vmatprep.subr.bf16.mxu0 0
  %476 = vmatpush1.bf16.msra.mxu0 0
  %477 = vmatprep.subr.bf16.mxu0 0
  %478 = vmatpush1.bf16.msra.mxu0 0
  %479 = vmatprep.subr.bf16.mxu0 0
  %480 = vmatpush1.bf16.msra.mxu0 0
  %481 = vmatprep.subr.bf16.mxu0 0
  %482 = vmatpush1.bf16.msra.mxu0 0
  %483 = vmatprep.subr.bf16.mxu0 0
  %484 = vmatpush1.bf16.msra.mxu0 0
  %485 = vmatprep.subr.bf16.mxu0 0
  %486 = vmatpush1.bf16.msra.mxu0 0
  %487 = vmatprep.subr.bf16.mxu0 0
  %488 = vmatpush1.bf16.msra.mxu0 0
  %489 = vmatprep.subr.bf16.mxu0 0
  %490 = vmatpush1.bf16.msra.mxu0 0
  %491 = vmatprep.subr.bf16.mxu0 0
  %492 = vmatpush1.bf16.msra.mxu0 0
  %493 = vmatprep.subr.bf16.mxu0 0
  %494 = vmatpush1.bf16.msra.mxu0 0
  %495 = vmatprep.subr.bf16.mxu0 0
  %496 = vmatpush1.bf16.msra.mxu0 0
  %497 = vmatprep.subr.bf16.mxu0 0
  %498 = vmatpush1.bf16.msra.mxu0 0
  %499 = vmatprep.subr.bf16.mxu0 0
  %500 = vmatpush1.bf16.msra.mxu0 0
  %501 = vmatprep.mubr.bf16.mxu0 0
  %502 = vmatmul.mubr.bf16.gmra.mrb[0].mxu0 %v467
  %v503 = vpop.f32.mrb[0].mxu0
  %v504 = vadd.f32 0.0, %v503
  %v505 = vpop.f32.mrb[0].mxu0
  %v506 = vadd.f32 0.0, %v505
  %v507 = vpop.f32.mrb[0].mxu0
  %v508 = vadd.f32 0.0, %v507
  %v509 = vpop.f32.mrb[0].mxu0
  %v510 = vadd.f32 0.0, %v509
  %511 = vdwg.mxu0
  %512 = vmatprep.subr.bf16.mxu0 %v457
  %513 = vmatpush1.bf16.msra.mxu0 %v456
  %514 = vmatprep.subr.bf16.mxu0 0
  %515 = vmatpush1.bf16.msra.mxu0 0
  %516 = vmatprep.subr.bf16.mxu0 0
  %517 = vmatpush1.bf16.msra.mxu0 0
  %518 = vmatprep.subr.bf16.mxu0 0
  %519 = vmatpush1.bf16.msra.mxu0 0
  %520 = vmatprep.subr.bf16.mxu0 0
  %521 = vmatpush1.bf16.msra.mxu0 0
  %522 = vmatprep.subr.bf16.mxu0 0
  %523 = vmatpush1.bf16.msra.mxu0 0
  %524 = vmatprep.subr.bf16.mxu0 0
  %525 = vmatpush1.bf16.msra.mxu0 0
  %526 = vmatprep.subr.bf16.mxu0 0
  %527 = vmatpush1.bf16.msra.mxu0 0
  %528 = vmatprep.subr.bf16.mxu0 0
  %529 = vmatpush1.bf16.msra.mxu0 0
  %530 = vmatprep.subr.bf16.mxu0 0
  %531 = vmatpush1.bf16.msra.mxu0 0
  %532 = vmatprep.subr.bf16.mxu0 0
  %533 = vmatpush1.bf16.msra.mxu0 0
  %534 = vmatprep.subr.bf16.mxu0 0
  %535 = vmatpush1.bf16.msra.mxu0 0
  %536 = vmatprep.subr.bf16.mxu0 0
  %537 = vmatpush1.bf16.msra.mxu0 0
  %538 = vmatprep.subr.bf16.mxu0 0
  %539 = vmatpush1.bf16.msra.mxu0 0
  %540 = vmatprep.subr.bf16.mxu0 0
  %541 = vmatpush1.bf16.msra.mxu0 0
  %542 = vmatprep.subr.bf16.mxu0 0
  %543 = vmatpush1.bf16.msra.mxu0 0
  %544 = vmatprep.mubr.bf16.mxu0 0
  %545 = vmatmul.mubr.bf16.gmra.mrb[0].mxu0 %v467
  %v546 = vpop.f32.mrb[0].mxu0
  %v547 = vadd.f32 0.0, %v546
  %v548 = vpop.f32.mrb[0].mxu0
  %v549 = vadd.f32 0.0, %v548
  %v550 = vpop.f32.mrb[0].mxu0
  %v551 = vadd.f32 0.0, %v550
  %v552 = vpop.f32.mrb[0].mxu0
  %v553 = vadd.f32 0.0, %v552
  %554 = vdwg.mxu0
  %555 = vmatprep.subr.bf16.mxu0 %v459
  %556 = vmatpush1.bf16.msra.mxu0 %v458
  %557 = vmatprep.subr.bf16.mxu0 0
  %558 = vmatpush1.bf16.msra.mxu0 0
  %559 = vmatprep.subr.bf16.mxu0 0
  %560 = vmatpush1.bf16.msra.mxu0 0
  %561 = vmatprep.subr.bf16.mxu0 0
  %562 = vmatpush1.bf16.msra.mxu0 0
  %563 = vmatprep.subr.bf16.mxu0 0
  %564 = vmatpush1.bf16.msra.mxu0 0
  %565 = vmatprep.subr.bf16.mxu0 0
  %566 = vmatpush1.bf16.msra.mxu0 0
  %567 = vmatprep.subr.bf16.mxu0 0
  %568 = vmatpush1.bf16.msra.mxu0 0
  %569 = vmatprep.subr.bf16.mxu0 0
  %570 = vmatpush1.bf16.msra.mxu0 0
  %571 = vmatprep.subr.bf16.mxu0 0
  %572 = vmatpush1.bf16.msra.mxu0 0
  %573 = vmatprep.subr.bf16.mxu0 0
  %574 = vmatpush1.bf16.msra.mxu0 0
  %575 = vmatprep.subr.bf16.mxu0 0
  %576 = vmatpush1.bf16.msra.mxu0 0
  %577 = vmatprep.subr.bf16.mxu0 0
  %578 = vmatpush1.bf16.msra.mxu0 0
  %579 = vmatprep.subr.bf16.mxu0 0
  %580 = vmatpush1.bf16.msra.mxu0 0
  %581 = vmatprep.subr.bf16.mxu0 0
  %582 = vmatpush1.bf16.msra.mxu0 0
  %583 = vmatprep.subr.bf16.mxu0 0
  %584 = vmatpush1.bf16.msra.mxu0 0
  %585 = vmatprep.subr.bf16.mxu0 0
  %586 = vmatpush1.bf16.msra.mxu0 0
  %587 = vmatprep.mubr.bf16.mxu0 0
  %588 = vmatmul.mubr.bf16.gmra.mrb[0].mxu0 %v467
  %v589 = vpop.f32.mrb[0].mxu0
  %v590 = vadd.f32 0.0, %v589
  %v591 = vpop.f32.mrb[0].mxu0
  %v592 = vadd.f32 0.0, %v591
  %v593 = vpop.f32.mrb[0].mxu0
  %v594 = vadd.f32 0.0, %v593
  %v595 = vpop.f32.mrb[0].mxu0
  %v596 = vadd.f32 0.0, %v595
  %597 = vdwg.mxu0
  %v598 = vadd.f32 %v419, %v504
  %v599 = vadd.f32 %v420, %v506
  %v600 = vadd.f32 %v421, %v547
  %v601 = vadd.f32 %v422, %v549
  %v602 = vadd.f32 %v423, %v590
  %v603 = vadd.f32 %v424, %v592
  %v604 = vadd.f32 %v425, %v508
  %v605 = vadd.f32 %v426, %v510
  %v606 = vadd.f32 %v427, %v551
  %v607 = vadd.f32 %v428, %v553
  %v608 = vadd.f32 %v429, %v594
  %v609 = vadd.f32 %v430, %v596
  %s610 = scalar_lea.vmem %s1, 24
  %v611 = vld [vmem:[%s610] sm:$0xf]
  %v612 = vld [vmem:[%s610 + $0x4] sm:$0xf]
  %v615 = vunpack.c.l.b16 %v611
  %v616 = vunpack.c.l.b16 %v612
  %v617 = vpack.c.b16 %v616, %v615
  %618 = vrot.lane.b32.xlu0 %v253, 110
  %v619 = vpop.permute.xlu0 %618
  %620 = vrot.lane.b32.xlu0 %v254, 110
  %v621 = vpop.permute.xlu0 %620
  %622 = vrot.lane.b32.xlu0 %v255, 110
  %v623 = vpop.permute.xlu0 %622
  %624 = vrot.lane.b32.xlu0 %v256, 110
  %v625 = vpop.permute.xlu0 %624
  %626 = vrot.lane.b32.xlu0 %v257, 110
  %v627 = vpop.permute.xlu0 %626
  %628 = vrot.lane.b32.xlu0 %v258, 110
  %v629 = vpop.permute.xlu0 %628
  %630 = vrot.lane.b32.xlu0 %v259, 110
  %v631 = vpop.permute.xlu0 %630
  %vm632 = vcmask 900096
  %v633 = vsel %vm632, %v619, %v621
  %v634 = vsel %vm632, %v621, %v623
  %v635 = vsel %vm632, %v623, %v625
  %v636 = vsel %vm632, %v625, %v627
  %v637 = vsel %vm632, %v627, %v629
  %v638 = vsel %vm632, %v629, %v631
  %v646 = vsel %vm70, %v617, 0
  %648 = vmatprep.subr.bf16.mxu0 %v634
  %649 = vmatpush1.bf16.msra.mxu0 %v633
  %650 = vmatprep.subr.bf16.mxu0 0
  %651 = vmatpush1.bf16.msra.mxu0 0
  %652 = vmatprep.subr.bf16.mxu0 0
  %653 = vmatpush1.bf16.msra.mxu0 0
  %654 = vmatprep.subr.bf16.mxu0 0
  %655 = vmatpush1.bf16.msra.mxu0 0
  %656 = vmatprep.subr.bf16.mxu0 0
  %657 = vmatpush1.bf16.msra.mxu0 0
  %658 = vmatprep.subr.bf16.mxu0 0
  %659 = vmatpush1.bf16.msra.mxu0 0
  %660 = vmatprep.subr.bf16.mxu0 0
  %661 = vmatpush1.bf16.msra.mxu0 0
  %662 = vmatprep.subr.bf16.mxu0 0
  %663 = vmatpush1.bf16.msra.mxu0 0
  %664 = vmatprep.subr.bf16.mxu0 0
  %665 = vmatpush1.bf16.msra.mxu0 0
  %666 = vmatprep.subr.bf16.mxu0 0
  %667 = vmatpush1.bf16.msra.mxu0 0
  %668 = vmatprep.subr.bf16.mxu0 0
  %669 = vmatpush1.bf16.msra.mxu0 0
  %670 = vmatprep.subr.bf16.mxu0 0
  %671 = vmatpush1.bf16.msra.mxu0 0
  %672 = vmatprep.subr.bf16.mxu0 0
  %673 = vmatpush1.bf16.msra.mxu0 0
  %674 = vmatprep.subr.bf16.mxu0 0
  %675 = vmatpush1.bf16.msra.mxu0 0
  %676 = vmatprep.subr.bf16.mxu0 0
  %677 = vmatpush1.bf16.msra.mxu0 0
  %678 = vmatprep.subr.bf16.mxu0 0
  %679 = vmatpush1.bf16.msra.mxu0 0
  %680 = vmatprep.mubr.bf16.mxu0 0
  %681 = vmatmul.mubr.bf16.gmra.mrb[0].mxu0 %v646
  %v682 = vpop.f32.mrb[0].mxu0
  %v683 = vadd.f32 0.0, %v682
  %v684 = vpop.f32.mrb[0].mxu0
  %v685 = vadd.f32 0.0, %v684
  %v686 = vpop.f32.mrb[0].mxu0
  %v687 = vadd.f32 0.0, %v686
  %v688 = vpop.f32.mrb[0].mxu0
  %v689 = vadd.f32 0.0, %v688
  %690 = vdwg.mxu0
  %691 = vmatprep.subr.bf16.mxu0 %v636
  %692 = vmatpush1.bf16.msra.mxu0 %v635
  %693 = vmatprep.subr.bf16.mxu0 0
  %694 = vmatpush1.bf16.msra.mxu0 0
  %695 = vmatprep.subr.bf16.mxu0 0
  %696 = vmatpush1.bf16.msra.mxu0 0
  %697 = vmatprep.subr.bf16.mxu0 0
  %698 = vmatpush1.bf16.msra.mxu0 0
  %699 = vmatprep.subr.bf16.mxu0 0
  %700 = vmatpush1.bf16.msra.mxu0 0
  %701 = vmatprep.subr.bf16.mxu0 0
  %702 = vmatpush1.bf16.msra.mxu0 0
  %703 = vmatprep.subr.bf16.mxu0 0
  %704 = vmatpush1.bf16.msra.mxu0 0
  %705 = vmatprep.subr.bf16.mxu0 0
  %706 = vmatpush1.bf16.msra.mxu0 0
  %707 = vmatprep.subr.bf16.mxu0 0
  %708 = vmatpush1.bf16.msra.mxu0 0
  %709 = vmatprep.subr.bf16.mxu0 0
  %710 = vmatpush1.bf16.msra.mxu0 0
  %711 = vmatprep.subr.bf16.mxu0 0
  %712 = vmatpush1.bf16.msra.mxu0 0
  %713 = vmatprep.subr.bf16.mxu0 0
  %714 = vmatpush1.bf16.msra.mxu0 0
  %715 = vmatprep.subr.bf16.mxu0 0
  %716 = vmatpush1.bf16.msra.mxu0 0
  %717 = vmatprep.subr.bf16.mxu0 0
  %718 = vmatpush1.bf16.msra.mxu0 0
  %719 = vmatprep.subr.bf16.mxu0 0
  %720 = vmatpush1.bf16.msra.mxu0 0
  %721 = vmatprep.subr.bf16.mxu0 0
  %722 = vmatpush1.bf16.msra.mxu0 0
  %723 = vmatprep.mubr.bf16.mxu0 0
  %724 = vmatmul.mubr.bf16.gmra.mrb[0].mxu0 %v646
  %v725 = vpop.f32.mrb[0].mxu0
  %v726 = vadd.f32 0.0, %v725
  %v727 = vpop.f32.mrb[0].mxu0
  %v728 = vadd.f32 0.0, %v727
  %v729 = vpop.f32.mrb[0].mxu0
  %v730 = vadd.f32 0.0, %v729
  %v731 = vpop.f32.mrb[0].mxu0
  %v732 = vadd.f32 0.0, %v731
  %733 = vdwg.mxu0
  %734 = vmatprep.subr.bf16.mxu0 %v638
  %735 = vmatpush1.bf16.msra.mxu0 %v637
  %736 = vmatprep.subr.bf16.mxu0 0
  %737 = vmatpush1.bf16.msra.mxu0 0
  %738 = vmatprep.subr.bf16.mxu0 0
  %739 = vmatpush1.bf16.msra.mxu0 0
  %740 = vmatprep.subr.bf16.mxu0 0
  %741 = vmatpush1.bf16.msra.mxu0 0
  %742 = vmatprep.subr.bf16.mxu0 0
  %743 = vmatpush1.bf16.msra.mxu0 0
  %744 = vmatprep.subr.bf16.mxu0 0
  %745 = vmatpush1.bf16.msra.mxu0 0
  %746 = vmatprep.subr.bf16.mxu0 0
  %747 = vmatpush1.bf16.msra.mxu0 0
  %748 = vmatprep.subr.bf16.mxu0 0
  %749 = vmatpush1.bf16.msra.mxu0 0
  %750 = vmatprep.subr.bf16.mxu0 0
  %751 = vmatpush1.bf16.msra.mxu0 0
  %752 = vmatprep.subr.bf16.mxu0 0
  %753 = vmatpush1.bf16.msra.mxu0 0
  %754 = vmatprep.subr.bf16.mxu0 0
  %755 = vmatpush1.bf16.msra.mxu0 0
  %756 = vmatprep.subr.bf16.mxu0 0
  %757 = vmatpush1.bf16.msra.mxu0 0
  %758 = vmatprep.subr.bf16.mxu0 0
  %759 = vmatpush1.bf16.msra.mxu0 0
  %760 = vmatprep.subr.bf16.mxu0 0
  %761 = vmatpush1.bf16.msra.mxu0 0
  %762 = vmatprep.subr.bf16.mxu0 0
  %763 = vmatpush1.bf16.msra.mxu0 0
  %764 = vmatprep.subr.bf16.mxu0 0
  %765 = vmatpush1.bf16.msra.mxu0 0
  %766 = vmatprep.mubr.bf16.mxu0 0
  %767 = vmatmul.mubr.bf16.gmra.mrb[0].mxu0 %v646
  %v768 = vpop.f32.mrb[0].mxu0
  %v769 = vadd.f32 0.0, %v768
  %v770 = vpop.f32.mrb[0].mxu0
  %v771 = vadd.f32 0.0, %v770
  %v772 = vpop.f32.mrb[0].mxu0
  %v773 = vadd.f32 0.0, %v772
  %v774 = vpop.f32.mrb[0].mxu0
  %v775 = vadd.f32 0.0, %v774
  %776 = vdwg.mxu0
  %v777 = vadd.f32 %v598, %v683
  %v778 = vadd.f32 %v599, %v685
  %v779 = vadd.f32 %v600, %v726
  %v780 = vadd.f32 %v601, %v728
  %v781 = vadd.f32 %v602, %v769
  %v782 = vadd.f32 %v603, %v771
  %v783 = vadd.f32 %v604, %v687
  %v784 = vadd.f32 %v605, %v689
  %v785 = vadd.f32 %v606, %v730
  %v786 = vadd.f32 %v607, %v732
  %v787 = vadd.f32 %v608, %v773
  %v788 = vadd.f32 %v609, %v775
  %s789 = scalar_lea.vmem %s1, 32
  %v790 = vld [vmem:[%s789] sm:$0xf]
  %v791 = vld [vmem:[%s789 + $0x4] sm:$0xf]
  %v794 = vunpack.c.l.b16 %v790
  %v795 = vunpack.c.l.b16 %v791
  %v796 = vpack.c.b16 %v795, %v794
  %797 = vrot.lane.b32.xlu0 %v253, 109
  %v798 = vpop.permute.xlu0 %797
  %799 = vrot.lane.b32.xlu0 %v254, 109
  %v800 = vpop.permute.xlu0 %799
  %801 = vrot.lane.b32.xlu0 %v255, 109
  %v802 = vpop.permute.xlu0 %801
  %803 = vrot.lane.b32.xlu0 %v256, 109
  %v804 = vpop.permute.xlu0 %803
  %805 = vrot.lane.b32.xlu0 %v257, 109
  %v806 = vpop.permute.xlu0 %805
  %807 = vrot.lane.b32.xlu0 %v258, 109
  %v808 = vpop.permute.xlu0 %807
  %809 = vrot.lane.b32.xlu0 %v259, 109
  %v810 = vpop.permute.xlu0 %809
  %vm811 = vcmask 891904
  %v812 = vsel %vm811, %v798, %v800
  %v813 = vsel %vm811, %v800, %v802
  %v814 = vsel %vm811, %v802, %v804
  %v815 = vsel %vm811, %v804, %v806
  %v816 = vsel %vm811, %v806, %v808
  %v817 = vsel %vm811, %v808, %v810
  %v825 = vsel %vm70, %v796, 0
  %827 = vmatprep.subr.bf16.mxu0 %v813
  %828 = vmatpush1.bf16.msra.mxu0 %v812
  %829 = vmatprep.subr.bf16.mxu0 0
  %830 = vmatpush1.bf16.msra.mxu0 0
  %831 = vmatprep.subr.bf16.mxu0 0
  %832 = vmatpush1.bf16.msra.mxu0 0
  %833 = vmatprep.subr.bf16.mxu0 0
  %834 = vmatpush1.bf16.msra.mxu0 0
  %835 = vmatprep.subr.bf16.mxu0 0
  %836 = vmatpush1.bf16.msra.mxu0 0
  %837 = vmatprep.subr.bf16.mxu0 0
  %838 = vmatpush1.bf16.msra.mxu0 0
  %839 = vmatprep.subr.bf16.mxu0 0
  %840 = vmatpush1.bf16.msra.mxu0 0
  %841 = vmatprep.subr.bf16.mxu0 0
  %842 = vmatpush1.bf16.msra.mxu0 0
  %843 = vmatprep.subr.bf16.mxu0 0
  %844 = vmatpush1.bf16.msra.mxu0 0
  %845 = vmatprep.subr.bf16.mxu0 0
  %846 = vmatpush1.bf16.msra.mxu0 0
  %847 = vmatprep.subr.bf16.mxu0 0
  %848 = vmatpush1.bf16.msra.mxu0 0
  %849 = vmatprep.subr.bf16.mxu0 0
  %850 = vmatpush1.bf16.msra.mxu0 0
  %851 = vmatprep.subr.bf16.mxu0 0
  %852 = vmatpush1.bf16.msra.mxu0 0
  %853 = vmatprep.subr.bf16.mxu0 0
  %854 = vmatpush1.bf16.msra.mxu0 0
  %855 = vmatprep.subr.bf16.mxu0 0
  %856 = vmatpush1.bf16.msra.mxu0 0
  %857 = vmatprep.subr.bf16.mxu0 0
  %858 = vmatpush1.bf16.msra.mxu0 0
  %859 = vmatprep.mubr.bf16.mxu0 0
  %860 = vmatmul.mubr.bf16.gmra.mrb[0].mxu0 %v825
  %v861 = vpop.f32.mrb[0].mxu0
  %v862 = vadd.f32 0.0, %v861
  %v863 = vpop.f32.mrb[0].mxu0
  %v864 = vadd.f32 0.0, %v863
  %v865 = vpop.f32.mrb[0].mxu0
  %v866 = vadd.f32 0.0, %v865
  %v867 = vpop.f32.mrb[0].mxu0
  %v868 = vadd.f32 0.0, %v867
  %869 = vdwg.mxu0
  %870 = vmatprep.subr.bf16.mxu0 %v815
  %871 = vmatpush1.bf16.msra.mxu0 %v814
  %872 = vmatprep.subr.bf16.mxu0 0
  %873 = vmatpush1.bf16.msra.mxu0 0
  %874 = vmatprep.subr.bf16.mxu0 0
  %875 = vmatpush1.bf16.msra.mxu0 0
  %876 = vmatprep.subr.bf16.mxu0 0
  %877 = vmatpush1.bf16.msra.mxu0 0
  %878 = vmatprep.subr.bf16.mxu0 0
  %879 = vmatpush1.bf16.msra.mxu0 0
  %880 = vmatprep.subr.bf16.mxu0 0
  %881 = vmatpush1.bf16.msra.mxu0 0
  %882 = vmatprep.subr.bf16.mxu0 0
  %883 = vmatpush1.bf16.msra.mxu0 0
  %884 = vmatprep.subr.bf16.mxu0 0
  %885 = vmatpush1.bf16.msra.mxu0 0
  %886 = vmatprep.subr.bf16.mxu0 0
  %887 = vmatpush1.bf16.msra.mxu0 0
  %888 = vmatprep.subr.bf16.mxu0 0
  %889 = vmatpush1.bf16.msra.mxu0 0
  %890 = vmatprep.subr.bf16.mxu0 0
  %891 = vmatpush1.bf16.msra.mxu0 0
  %892 = vmatprep.subr.bf16.mxu0 0
  %893 = vmatpush1.bf16.msra.mxu0 0
  %894 = vmatprep.subr.bf16.mxu0 0
  %895 = vmatpush1.bf16.msra.mxu0 0
  %896 = vmatprep.subr.bf16.mxu0 0
  %897 = vmatpush1.bf16.msra.mxu0 0
  %898 = vmatprep.subr.bf16.mxu0 0
  %899 = vmatpush1.bf16.msra.mxu0 0
  %900 = vmatprep.subr.bf16.mxu0 0
  %901 = vmatpush1.bf16.msra.mxu0 0
  %902 = vmatprep.mubr.bf16.mxu0 0
  %903 = vmatmul.mubr.bf16.gmra.mrb[0].mxu0 %v825
  %v904 = vpop.f32.mrb[0].mxu0
  %v905 = vadd.f32 0.0, %v904
  %v906 = vpop.f32.mrb[0].mxu0
  %v907 = vadd.f32 0.0, %v906
  %v908 = vpop.f32.mrb[0].mxu0
  %v909 = vadd.f32 0.0, %v908
  %v910 = vpop.f32.mrb[0].mxu0
  %v911 = vadd.f32 0.0, %v910
  %912 = vdwg.mxu0
  %913 = vmatprep.subr.bf16.mxu0 %v817
  %914 = vmatpush1.bf16.msra.mxu0 %v816
  %915 = vmatprep.subr.bf16.mxu0 0
  %916 = vmatpush1.bf16.msra.mxu0 0
  %917 = vmatprep.subr.bf16.mxu0 0
  %918 = vmatpush1.bf16.msra.mxu0 0
  %919 = vmatprep.subr.bf16.mxu0 0
  %920 = vmatpush1.bf16.msra.mxu0 0
  %921 = vmatprep.subr.bf16.mxu0 0
  %922 = vmatpush1.bf16.msra.mxu0 0
  %923 = vmatprep.subr.bf16.mxu0 0
  %924 = vmatpush1.bf16.msra.mxu0 0
  %925 = vmatprep.subr.bf16.mxu0 0
  %926 = vmatpush1.bf16.msra.mxu0 0
  %927 = vmatprep.subr.bf16.mxu0 0
  %928 = vmatpush1.bf16.msra.mxu0 0
  %929 = vmatprep.subr.bf16.mxu0 0
  %930 = vmatpush1.bf16.msra.mxu0 0
  %931 = vmatprep.subr.bf16.mxu0 0
  %932 = vmatpush1.bf16.msra.mxu0 0
  %933 = vmatprep.subr.bf16.mxu0 0
  %934 = vmatpush1.bf16.msra.mxu0 0
  %935 = vmatprep.subr.bf16.mxu0 0
  %936 = vmatpush1.bf16.msra.mxu0 0
  %937 = vmatprep.subr.bf16.mxu0 0
  %938 = vmatpush1.bf16.msra.mxu0 0
  %939 = vmatprep.subr.bf16.mxu0 0
  %940 = vmatpush1.bf16.msra.mxu0 0
  %941 = vmatprep.subr.bf16.mxu0 0
  %942 = vmatpush1.bf16.msra.mxu0 0
  %943 = vmatprep.subr.bf16.mxu0 0
  %944 = vmatpush1.bf16.msra.mxu0 0
  %945 = vmatprep.mubr.bf16.mxu0 0
  %946 = vmatmul.mubr.bf16.gmra.mrb[0].mxu0 %v825
  %v947 = vpop.f32.mrb[0].mxu0
  %v948 = vadd.f32 0.0, %v947
  %v949 = vpop.f32.mrb[0].mxu0
  %v950 = vadd.f32 0.0, %v949
  %v951 = vpop.f32.mrb[0].mxu0
  %v952 = vadd.f32 0.0, %v951
  %v953 = vpop.f32.mrb[0].mxu0
  %v954 = vadd.f32 0.0, %v953
  %955 = vdwg.mxu0
  %v956 = vadd.f32 %v777, %v862
  %v957 = vadd.f32 %v778, %v864
  %v958 = vadd.f32 %v779, %v905
  %v959 = vadd.f32 %v780, %v907
  %v960 = vadd.f32 %v781, %v948
  %v961 = vadd.f32 %v782, %v950
  %v962 = vadd.f32 %v783, %v866
  %v963 = vadd.f32 %v784, %v868
  %v964 = vadd.f32 %v785, %v909
  %v965 = vadd.f32 %v786, %v911
  %v966 = vadd.f32 %v787, %v952
  %v967 = vadd.f32 %v788, %v954
  %s968 = scalar_lea.vmem %s1, 40
  %v969 = vld [vmem:[%s968] sm:$0xf]
  %v970 = vld [vmem:[%s968 + $0x4] sm:$0xf]
  %v973 = vunpack.c.l.b16 %v969
  %v974 = vunpack.c.l.b16 %v970
  %v975 = vpack.c.b16 %v974, %v973
  %976 = vrot.lane.b32.xlu0 %v253, 108
  %v977 = vpop.permute.xlu0 %976
  %978 = vrot.lane.b32.xlu0 %v254, 108
  %v979 = vpop.permute.xlu0 %978
  %980 = vrot.lane.b32.xlu0 %v255, 108
  %v981 = vpop.permute.xlu0 %980
  %982 = vrot.lane.b32.xlu0 %v256, 108
  %v983 = vpop.permute.xlu0 %982
  %984 = vrot.lane.b32.xlu0 %v257, 108
  %v985 = vpop.permute.xlu0 %984
  %986 = vrot.lane.b32.xlu0 %v258, 108
  %v987 = vpop.permute.xlu0 %986
  %988 = vrot.lane.b32.xlu0 %v259, 108
  %v989 = vpop.permute.xlu0 %988
  %vm990 = vcmask 883712
  %v991 = vsel %vm990, %v977, %v979
  %v992 = vsel %vm990, %v979, %v981
  %v993 = vsel %vm990, %v981, %v983
  %v994 = vsel %vm990, %v983, %v985
  %v995 = vsel %vm990, %v985, %v987
  %v996 = vsel %vm990, %v987, %v989
  %v1004 = vsel %vm70, %v975, 0
  %1006 = vmatprep.subr.bf16.mxu0 %v992
  %1007 = vmatpush1.bf16.msra.mxu0 %v991
  %1008 = vmatprep.subr.bf16.mxu0 0
  %1009 = vmatpush1.bf16.msra.mxu0 0
  %1010 = vmatprep.subr.bf16.mxu0 0
  %1011 = vmatpush1.bf16.msra.mxu0 0
  %1012 = vmatprep.subr.bf16.mxu0 0
  %1013 = vmatpush1.bf16.msra.mxu0 0
  %1014 = vmatprep.subr.bf16.mxu0 0
  %1015 = vmatpush1.bf16.msra.mxu0 0
  %1016 = vmatprep.subr.bf16.mxu0 0
  %1017 = vmatpush1.bf16.msra.mxu0 0
  %1018 = vmatprep.subr.bf16.mxu0 0
  %1019 = vmatpush1.bf16.msra.mxu0 0
  %1020 = vmatprep.subr.bf16.mxu0 0
  %1021 = vmatpush1.bf16.msra.mxu0 0
  %1022 = vmatprep.subr.bf16.mxu0 0
  %1023 = vmatpush1.bf16.msra.mxu0 0
  %1024 = vmatprep.subr.bf16.mxu0 0
  %1025 = vmatpush1.bf16.msra.mxu0 0
  %1026 = vmatprep.subr.bf16.mxu0 0
  %1027 = vmatpush1.bf16.msra.mxu0 0
  %1028 = vmatprep.subr.bf16.mxu0 0
  %1029 = vmatpush1.bf16.msra.mxu0 0
  %1030 = vmatprep.subr.bf16.mxu0 0
  %1031 = vmatpush1.bf16.msra.mxu0 0
  %1032 = vmatprep.subr.bf16.mxu0 0
  %1033 = vmatpush1.bf16.msra.mxu0 0
  %1034 = vmatprep.subr.bf16.mxu0 0
  %1035 = vmatpush1.bf16.msra.mxu0 0
  %1036 = vmatprep.subr.bf16.mxu0 0
  %1037 = vmatpush1.bf16.msra.mxu0 0
  %1038 = vmatprep.mubr.bf16.mxu0 0
  %1039 = vmatmul.mubr.bf16.gmra.mrb[0].mxu0 %v1004
  %v1040 = vpop.f32.mrb[0].mxu0
  %v1041 = vadd.f32 0.0, %v1040
  %v1042 = vpop.f32.mrb[0].mxu0
  %v1043 = vadd.f32 0.0, %v1042
  %v1044 = vpop.f32.mrb[0].mxu0
  %v1045 = vadd.f32 0.0, %v1044
  %v1046 = vpop.f32.mrb[0].mxu0
  %v1047 = vadd.f32 0.0, %v1046
  %1048 = vdwg.mxu0
  %1049 = vmatprep.subr.bf16.mxu0 %v994
  %1050 = vmatpush1.bf16.msra.mxu0 %v993
  %1051 = vmatprep.subr.bf16.mxu0 0
  %1052 = vmatpush1.bf16.msra.mxu0 0
  %1053 = vmatprep.subr.bf16.mxu0 0
  %1054 = vmatpush1.bf16.msra.mxu0 0
  %1055 = vmatprep.subr.bf16.mxu0 0
  %1056 = vmatpush1.bf16.msra.mxu0 0
  %1057 = vmatprep.subr.bf16.mxu0 0
  %1058 = vmatpush1.bf16.msra.mxu0 0
  %1059 = vmatprep.subr.bf16.mxu0 0
  %1060 = vmatpush1.bf16.msra.mxu0 0
  %1061 = vmatprep.subr.bf16.mxu0 0
  %1062 = vmatpush1.bf16.msra.mxu0 0
  %1063 = vmatprep.subr.bf16.mxu0 0
  %1064 = vmatpush1.bf16.msra.mxu0 0
  %1065 = vmatprep.subr.bf16.mxu0 0
  %1066 = vmatpush1.bf16.msra.mxu0 0
  %1067 = vmatprep.subr.bf16.mxu0 0
  %1068 = vmatpush1.bf16.msra.mxu0 0
  %1069 = vmatprep.subr.bf16.mxu0 0
  %1070 = vmatpush1.bf16.msra.mxu0 0
  %1071 = vmatprep.subr.bf16.mxu0 0
  %1072 = vmatpush1.bf16.msra.mxu0 0
  %1073 = vmatprep.subr.bf16.mxu0 0
  %1074 = vmatpush1.bf16.msra.mxu0 0
  %1075 = vmatprep.subr.bf16.mxu0 0
  %1076 = vmatpush1.bf16.msra.mxu0 0
  %1077 = vmatprep.subr.bf16.mxu0 0
  %1078 = vmatpush1.bf16.msra.mxu0 0
  %1079 = vmatprep.subr.bf16.mxu0 0
  %1080 = vmatpush1.bf16.msra.mxu0 0
  %1081 = vmatprep.mubr.bf16.mxu0 0
  %1082 = vmatmul.mubr.bf16.gmra.mrb[0].mxu0 %v1004
  %v1083 = vpop.f32.mrb[0].mxu0
  %v1084 = vadd.f32 0.0, %v1083
  %v1085 = vpop.f32.mrb[0].mxu0
  %v1086 = vadd.f32 0.0, %v1085
  %v1087 = vpop.f32.mrb[0].mxu0
  %v1088 = vadd.f32 0.0, %v1087
  %v1089 = vpop.f32.mrb[0].mxu0
  %v1090 = vadd.f32 0.0, %v1089
  %1091 = vdwg.mxu0
  %1092 = vmatprep.subr.bf16.mxu0 %v996
  %1093 = vmatpush1.bf16.msra.mxu0 %v995
  %1094 = vmatprep.subr.bf16.mxu0 0
  %1095 = vmatpush1.bf16.msra.mxu0 0
  %1096 = vmatprep.subr.bf16.mxu0 0
  %1097 = vmatpush1.bf16.msra.mxu0 0
  %1098 = vmatprep.subr.bf16.mxu0 0
  %1099 = vmatpush1.bf16.msra.mxu0 0
  %1100 = vmatprep.subr.bf16.mxu0 0
  %1101 = vmatpush1.bf16.msra.mxu0 0
  %1102 = vmatprep.subr.bf16.mxu0 0
  %1103 = vmatpush1.bf16.msra.mxu0 0
  %1104 = vmatprep.subr.bf16.mxu0 0
  %1105 = vmatpush1.bf16.msra.mxu0 0
  %1106 = vmatprep.subr.bf16.mxu0 0
  %1107 = vmatpush1.bf16.msra.mxu0 0
  %1108 = vmatprep.subr.bf16.mxu0 0
  %1109 = vmatpush1.bf16.msra.mxu0 0
  %1110 = vmatprep.subr.bf16.mxu0 0
  %1111 = vmatpush1.bf16.msra.mxu0 0
  %1112 = vmatprep.subr.bf16.mxu0 0
  %1113 = vmatpush1.bf16.msra.mxu0 0
  %1114 = vmatprep.subr.bf16.mxu0 0
  %1115 = vmatpush1.bf16.msra.mxu0 0
  %1116 = vmatprep.subr.bf16.mxu0 0
  %1117 = vmatpush1.bf16.msra.mxu0 0
  %1118 = vmatprep.subr.bf16.mxu0 0
  %1119 = vmatpush1.bf16.msra.mxu0 0
  %1120 = vmatprep.subr.bf16.mxu0 0
  %1121 = vmatpush1.bf16.msra.mxu0 0
  %1122 = vmatprep.subr.bf16.mxu0 0
  %1123 = vmatpush1.bf16.msra.mxu0 0
  %1124 = vmatprep.mubr.bf16.mxu0 0
  %1125 = vmatmul.mubr.bf16.gmra.mrb[0].mxu0 %v1004
  %v1126 = vpop.f32.mrb[0].mxu0
  %v1127 = vadd.f32 0.0, %v1126
  %v1128 = vpop.f32.mrb[0].mxu0
  %v1129 = vadd.f32 0.0, %v1128
  %v1130 = vpop.f32.mrb[0].mxu0
  %v1131 = vadd.f32 0.0, %v1130
  %v1132 = vpop.f32.mrb[0].mxu0
  %v1133 = vadd.f32 0.0, %v1132
  %1134 = vdwg.mxu0
  %v1135 = vadd.f32 %v956, %v1041
  %v1136 = vadd.f32 %v957, %v1043
  %v1137 = vadd.f32 %v958, %v1084
  %v1138 = vadd.f32 %v959, %v1086
  %v1139 = vadd.f32 %v960, %v1127
  %v1140 = vadd.f32 %v961, %v1129
  %v1141 = vadd.f32 %v962, %v1045
  %v1142 = vadd.f32 %v963, %v1047
  %v1143 = vadd.f32 %v964, %v1088
  %v1144 = vadd.f32 %v965, %v1090
  %v1145 = vadd.f32 %v966, %v1131
  %v1146 = vadd.f32 %v967, %v1133
  %s1147 = scalar_lea.vmem %s1, 48
  %v1148 = vld [vmem:[%s1147] sm:$0xf]
  %v1149 = vld [vmem:[%s1147 + $0x4] sm:$0xf]
  %v1152 = vunpack.c.l.b16 %v1148
  %v1153 = vunpack.c.l.b16 %v1149
  %v1154 = vpack.c.b16 %v1153, %v1152
  %1155 = vrot.lane.b32.xlu0 %v253, 92
  %v1156 = vpop.permute.xlu0 %1155
  %1157 = vrot.lane.b32.xlu0 %v254, 92
  %v1158 = vpop.permute.xlu0 %1157
  %1159 = vrot.lane.b32.xlu0 %v255, 92
  %v1160 = vpop.permute.xlu0 %1159
  %1161 = vrot.lane.b32.xlu0 %v256, 92
  %v1162 = vpop.permute.xlu0 %1161
  %1163 = vrot.lane.b32.xlu0 %v257, 92
  %v1164 = vpop.permute.xlu0 %1163
  %1165 = vrot.lane.b32.xlu0 %v258, 92
  %v1166 = vpop.permute.xlu0 %1165
  %1167 = vrot.lane.b32.xlu0 %v259, 92
  %v1168 = vpop.permute.xlu0 %1167
  %vm1169 = vcmask 752640
  %v1170 = vsel %vm1169, %v1156, %v1158
  %v1171 = vsel %vm1169, %v1158, %v1160
  %v1172 = vsel %vm1169, %v1160, %v1162
  %v1173 = vsel %vm1169, %v1162, %v1164
  %v1174 = vsel %vm1169, %v1164, %v1166
  %v1175 = vsel %vm1169, %v1166, %v1168
  %v1183 = vsel %vm70, %v1154, 0
  %1185 = vmatprep.subr.bf16.mxu0 %v1171
  %1186 = vmatpush1.bf16.msra.mxu0 %v1170
  %1187 = vmatprep.subr.bf16.mxu0 0
  %1188 = vmatpush1.bf16.msra.mxu0 0
  %1189 = vmatprep.subr.bf16.mxu0 0
  %1190 = vmatpush1.bf16.msra.mxu0 0
  %1191 = vmatprep.subr.bf16.mxu0 0
  %1192 = vmatpush1.bf16.msra.mxu0 0
  %1193 = vmatprep.subr.bf16.mxu0 0
  %1194 = vmatpush1.bf16.msra.mxu0 0
  %1195 = vmatprep.subr.bf16.mxu0 0
  %1196 = vmatpush1.bf16.msra.mxu0 0
  %1197 = vmatprep.subr.bf16.mxu0 0
  %1198 = vmatpush1.bf16.msra.mxu0 0
  %1199 = vmatprep.subr.bf16.mxu0 0
  %1200 = vmatpush1.bf16.msra.mxu0 0
  %1201 = vmatprep.subr.bf16.mxu0 0
  %1202 = vmatpush1.bf16.msra.mxu0 0
  %1203 = vmatprep.subr.bf16.mxu0 0
  %1204 = vmatpush1.bf16.msra.mxu0 0
  %1205 = vmatprep.subr.bf16.mxu0 0
  %1206 = vmatpush1.bf16.msra.mxu0 0
  %1207 = vmatprep.subr.bf16.mxu0 0
  %1208 = vmatpush1.bf16.msra.mxu0 0
  %1209 = vmatprep.subr.bf16.mxu0 0
  %1210 = vmatpush1.bf16.msra.mxu0 0
  %1211 = vmatprep.subr.bf16.mxu0 0
  %1212 = vmatpush1.bf16.msra.mxu0 0
  %1213 = vmatprep.subr.bf16.mxu0 0
  %1214 = vmatpush1.bf16.msra.mxu0 0
  %1215 = vmatprep.subr.bf16.mxu0 0
  %1216 = vmatpush1.bf16.msra.mxu0 0
  %1217 = vmatprep.mubr.bf16.mxu0 0
  %1218 = vmatmul.mubr.bf16.gmra.mrb[0].mxu0 %v1183
  %v1219 = vpop.f32.mrb[0].mxu0
  %v1220 = vadd.f32 0.0, %v1219
  %v1221 = vpop.f32.mrb[0].mxu0
  %v1222 = vadd.f32 0.0, %v1221
  %v1223 = vpop.f32.mrb[0].mxu0
  %v1224 = vadd.f32 0.0, %v1223
  %v1225 = vpop.f32.mrb[0].mxu0
  %v1226 = vadd.f32 0.0, %v1225
  %1227 = vdwg.mxu0
  %1228 = vmatprep.subr.bf16.mxu0 %v1173
  %1229 = vmatpush1.bf16.msra.mxu0 %v1172
  %1230 = vmatprep.subr.bf16.mxu0 0
  %1231 = vmatpush1.bf16.msra.mxu0 0
  %1232 = vmatprep.subr.bf16.mxu0 0
  %1233 = vmatpush1.bf16.msra.mxu0 0
  %1234 = vmatprep.subr.bf16.mxu0 0
  %1235 = vmatpush1.bf16.msra.mxu0 0
  %1236 = vmatprep.subr.bf16.mxu0 0
  %1237 = vmatpush1.bf16.msra.mxu0 0
  %1238 = vmatprep.subr.bf16.mxu0 0
  %1239 = vmatpush1.bf16.msra.mxu0 0
  %1240 = vmatprep.subr.bf16.mxu0 0
  %1241 = vmatpush1.bf16.msra.mxu0 0
  %1242 = vmatprep.subr.bf16.mxu0 0
  %1243 = vmatpush1.bf16.msra.mxu0 0
  %1244 = vmatprep.subr.bf16.mxu0 0
  %1245 = vmatpush1.bf16.msra.mxu0 0
  %1246 = vmatprep.subr.bf16.mxu0 0
  %1247 = vmatpush1.bf16.msra.mxu0 0
  %1248 = vmatprep.subr.bf16.mxu0 0
  %1249 = vmatpush1.bf16.msra.mxu0 0
  %1250 = vmatprep.subr.bf16.mxu0 0
  %1251 = vmatpush1.bf16.msra.mxu0 0
  %1252 = vmatprep.subr.bf16.mxu0 0
  %1253 = vmatpush1.bf16.msra.mxu0 0
  %1254 = vmatprep.subr.bf16.mxu0 0
  %1255 = vmatpush1.bf16.msra.mxu0 0
  %1256 = vmatprep.subr.bf16.mxu0 0
  %1257 = vmatpush1.bf16.msra.mxu0 0
  %1258 = vmatprep.subr.bf16.mxu0 0
  %1259 = vmatpush1.bf16.msra.mxu0 0
  %1260 = vmatprep.mubr.bf16.mxu0 0
  %1261 = vmatmul.mubr.bf16.gmra.mrb[0].mxu0 %v1183
  %v1262 = vpop.f32.mrb[0].mxu0
  %v1263 = vadd.f32 0.0, %v1262
  %v1264 = vpop.f32.mrb[0].mxu0
  %v1265 = vadd.f32 0.0, %v1264
  %v1266 = vpop.f32.mrb[0].mxu0
  %v1267 = vadd.f32 0.0, %v1266
  %v1268 = vpop.f32.mrb[0].mxu0
  %v1269 = vadd.f32 0.0, %v1268
  %1270 = vdwg.mxu0
  %1271 = vmatprep.subr.bf16.mxu0 %v1175
  %1272 = vmatpush1.bf16.msra.mxu0 %v1174
  %1273 = vmatprep.subr.bf16.mxu0 0
  %1274 = vmatpush1.bf16.msra.mxu0 0
  %1275 = vmatprep.subr.bf16.mxu0 0
  %1276 = vmatpush1.bf16.msra.mxu0 0
  %1277 = vmatprep.subr.bf16.mxu0 0
  %1278 = vmatpush1.bf16.msra.mxu0 0
  %1279 = vmatprep.subr.bf16.mxu0 0
  %1280 = vmatpush1.bf16.msra.mxu0 0
  %1281 = vmatprep.subr.bf16.mxu0 0
  %1282 = vmatpush1.bf16.msra.mxu0 0
  %1283 = vmatprep.subr.bf16.mxu0 0
  %1284 = vmatpush1.bf16.msra.mxu0 0
  %1285 = vmatprep.subr.bf16.mxu0 0
  %1286 = vmatpush1.bf16.msra.mxu0 0
  %1287 = vmatprep.subr.bf16.mxu0 0
  %1288 = vmatpush1.bf16.msra.mxu0 0
  %1289 = vmatprep.subr.bf16.mxu0 0
  %1290 = vmatpush1.bf16.msra.mxu0 0
  %1291 = vmatprep.subr.bf16.mxu0 0
  %1292 = vmatpush1.bf16.msra.mxu0 0
  %1293 = vmatprep.subr.bf16.mxu0 0
  %1294 = vmatpush1.bf16.msra.mxu0 0
  %1295 = vmatprep.subr.bf16.mxu0 0
  %1296 = vmatpush1.bf16.msra.mxu0 0
  %1297 = vmatprep.subr.bf16.mxu0 0
  %1298 = vmatpush1.bf16.msra.mxu0 0
  %1299 = vmatprep.subr.bf16.mxu0 0
  %1300 = vmatpush1.bf16.msra.mxu0 0
  %1301 = vmatprep.subr.bf16.mxu0 0
  %1302 = vmatpush1.bf16.msra.mxu0 0
  %1303 = vmatprep.mubr.bf16.mxu0 0
  %1304 = vmatmul.mubr.bf16.gmra.mrb[0].mxu0 %v1183
  %v1305 = vpop.f32.mrb[0].mxu0
  %v1306 = vadd.f32 0.0, %v1305
  %v1307 = vpop.f32.mrb[0].mxu0
  %v1308 = vadd.f32 0.0, %v1307
  %v1309 = vpop.f32.mrb[0].mxu0
  %v1310 = vadd.f32 0.0, %v1309
  %v1311 = vpop.f32.mrb[0].mxu0
  %v1312 = vadd.f32 0.0, %v1311
  %1313 = vdwg.mxu0
  %v1314 = vadd.f32 %v1135, %v1220
  %v1315 = vadd.f32 %v1136, %v1222
  %v1316 = vadd.f32 %v1137, %v1263
  %v1317 = vadd.f32 %v1138, %v1265
  %v1318 = vadd.f32 %v1139, %v1306
  %v1319 = vadd.f32 %v1140, %v1308
  %v1320 = vadd.f32 %v1141, %v1224
  %v1321 = vadd.f32 %v1142, %v1226
  %v1322 = vadd.f32 %v1143, %v1267
  %v1323 = vadd.f32 %v1144, %v1269
  %v1324 = vadd.f32 %v1145, %v1310
  %v1325 = vadd.f32 %v1146, %v1312
  %s1326 = scalar_lea.vmem %s1, 56
  %v1327 = vld [vmem:[%s1326] sm:$0xf]
  %v1328 = vld [vmem:[%s1326 + $0x4] sm:$0xf]
  %v1331 = vunpack.c.l.b16 %v1327
  %v1332 = vunpack.c.l.b16 %v1328
  %v1333 = vpack.c.b16 %v1332, %v1331
  %1334 = vrot.lane.b32.xlu0 %v253, 91
  %v1335 = vpop.permute.xlu0 %1334
  %1336 = vrot.lane.b32.xlu0 %v254, 91
  %v1337 = vpop.permute.xlu0 %1336
  %1338 = vrot.lane.b32.xlu0 %v255, 91
  %v1339 = vpop.permute.xlu0 %1338
  %1340 = vrot.lane.b32.xlu0 %v256, 91
  %v1341 = vpop.permute.xlu0 %1340
  %1342 = vrot.lane.b32.xlu0 %v257, 91
  %v1343 = vpop.permute.xlu0 %1342
  %1344 = vrot.lane.b32.xlu0 %v258, 91
  %v1345 = vpop.permute.xlu0 %1344
  %1346 = vrot.lane.b32.xlu0 %v259, 91
  %v1347 = vpop.permute.xlu0 %1346
  %vm1348 = vcmask 744448
  %v1349 = vsel %vm1348, %v1335, %v1337
  %v1350 = vsel %vm1348, %v1337, %v1339
  %v1351 = vsel %vm1348, %v1339, %v1341
  %v1352 = vsel %vm1348, %v1341, %v1343
  %v1353 = vsel %vm1348, %v1343, %v1345
  %v1354 = vsel %vm1348, %v1345, %v1347
  %v1362 = vsel %vm70, %v1333, 0
  %1364 = vmatprep.subr.bf16.mxu0 %v1350
  %1365 = vmatpush1.bf16.msra.mxu0 %v1349
  %1366 = vmatprep.subr.bf16.mxu0 0
  %1367 = vmatpush1.bf16.msra.mxu0 0
  %1368 = vmatprep.subr.bf16.mxu0 0
  %1369 = vmatpush1.bf16.msra.mxu0 0
  %1370 = vmatprep.subr.bf16.mxu0 0
  %1371 = vmatpush1.bf16.msra.mxu0 0
  %1372 = vmatprep.subr.bf16.mxu0 0
  %1373 = vmatpush1.bf16.msra.mxu0 0
  %1374 = vmatprep.subr.bf16.mxu0 0
  %1375 = vmatpush1.bf16.msra.mxu0 0
  %1376 = vmatprep.subr.bf16.mxu0 0
  %1377 = vmatpush1.bf16.msra.mxu0 0
  %1378 = vmatprep.subr.bf16.mxu0 0
  %1379 = vmatpush1.bf16.msra.mxu0 0
  %1380 = vmatprep.subr.bf16.mxu0 0
  %1381 = vmatpush1.bf16.msra.mxu0 0
  %1382 = vmatprep.subr.bf16.mxu0 0
  %1383 = vmatpush1.bf16.msra.mxu0 0
  %1384 = vmatprep.subr.bf16.mxu0 0
  %1385 = vmatpush1.bf16.msra.mxu0 0
  %1386 = vmatprep.subr.bf16.mxu0 0
  %1387 = vmatpush1.bf16.msra.mxu0 0
  %1388 = vmatprep.subr.bf16.mxu0 0
  %1389 = vmatpush1.bf16.msra.mxu0 0
  %1390 = vmatprep.subr.bf16.mxu0 0
  %1391 = vmatpush1.bf16.msra.mxu0 0
  %1392 = vmatprep.subr.bf16.mxu0 0
  %1393 = vmatpush1.bf16.msra.mxu0 0
  %1394 = vmatprep.subr.bf16.mxu0 0
  %1395 = vmatpush1.bf16.msra.mxu0 0
  %1396 = vmatprep.mubr.bf16.mxu0 0
  %1397 = vmatmul.mubr.bf16.gmra.mrb[0].mxu0 %v1362
  %v1398 = vpop.f32.mrb[0].mxu0
  %v1399 = vadd.f32 0.0, %v1398
  %v1400 = vpop.f32.mrb[0].mxu0
  %v1401 = vadd.f32 0.0, %v1400
  %v1402 = vpop.f32.mrb[0].mxu0
  %v1403 = vadd.f32 0.0, %v1402
  %v1404 = vpop.f32.mrb[0].mxu0
  %v1405 = vadd.f32 0.0, %v1404
  %1406 = vdwg.mxu0
  %1407 = vmatprep.subr.bf16.mxu0 %v1352
  %1408 = vmatpush1.bf16.msra.mxu0 %v1351
  %1409 = vmatprep.subr.bf16.mxu0 0
  %1410 = vmatpush1.bf16.msra.mxu0 0
  %1411 = vmatprep.subr.bf16.mxu0 0
  %1412 = vmatpush1.bf16.msra.mxu0 0
  %1413 = vmatprep.subr.bf16.mxu0 0
  %1414 = vmatpush1.bf16.msra.mxu0 0
  %1415 = vmatprep.subr.bf16.mxu0 0
  %1416 = vmatpush1.bf16.msra.mxu0 0
  %1417 = vmatprep.subr.bf16.mxu0 0
  %1418 = vmatpush1.bf16.msra.mxu0 0
  %1419 = vmatprep.subr.bf16.mxu0 0
  %1420 = vmatpush1.bf16.msra.mxu0 0
  %1421 = vmatprep.subr.bf16.mxu0 0
  %1422 = vmatpush1.bf16.msra.mxu0 0
  %1423 = vmatprep.subr.bf16.mxu0 0
  %1424 = vmatpush1.bf16.msra.mxu0 0
  %1425 = vmatprep.subr.bf16.mxu0 0
  %1426 = vmatpush1.bf16.msra.mxu0 0
  %1427 = vmatprep.subr.bf16.mxu0 0
  %1428 = vmatpush1.bf16.msra.mxu0 0
  %1429 = vmatprep.subr.bf16.mxu0 0
  %1430 = vmatpush1.bf16.msra.mxu0 0
  %1431 = vmatprep.subr.bf16.mxu0 0
  %1432 = vmatpush1.bf16.msra.mxu0 0
  %1433 = vmatprep.subr.bf16.mxu0 0
  %1434 = vmatpush1.bf16.msra.mxu0 0
  %1435 = vmatprep.subr.bf16.mxu0 0
  %1436 = vmatpush1.bf16.msra.mxu0 0
  %1437 = vmatprep.subr.bf16.mxu0 0
  %1438 = vmatpush1.bf16.msra.mxu0 0
  %1439 = vmatprep.mubr.bf16.mxu0 0
  %1440 = vmatmul.mubr.bf16.gmra.mrb[0].mxu0 %v1362
  %v1441 = vpop.f32.mrb[0].mxu0
  %v1442 = vadd.f32 0.0, %v1441
  %v1443 = vpop.f32.mrb[0].mxu0
  %v1444 = vadd.f32 0.0, %v1443
  %v1445 = vpop.f32.mrb[0].mxu0
  %v1446 = vadd.f32 0.0, %v1445
  %v1447 = vpop.f32.mrb[0].mxu0
  %v1448 = vadd.f32 0.0, %v1447
  %1449 = vdwg.mxu0
  %1450 = vmatprep.subr.bf16.mxu0 %v1354
  %1451 = vmatpush1.bf16.msra.mxu0 %v1353
  %1452 = vmatprep.subr.bf16.mxu0 0
  %1453 = vmatpush1.bf16.msra.mxu0 0
  %1454 = vmatprep.subr.bf16.mxu0 0
  %1455 = vmatpush1.bf16.msra.mxu0 0
  %1456 = vmatprep.subr.bf16.mxu0 0
  %1457 = vmatpush1.bf16.msra.mxu0 0
  %1458 = vmatprep.subr.bf16.mxu0 0
  %1459 = vmatpush1.bf16.msra.mxu0 0
  %1460 = vmatprep.subr.bf16.mxu0 0
  %1461 = vmatpush1.bf16.msra.mxu0 0
  %1462 = vmatprep.subr.bf16.mxu0 0
  %1463 = vmatpush1.bf16.msra.mxu0 0
  %1464 = vmatprep.subr.bf16.mxu0 0
  %1465 = vmatpush1.bf16.msra.mxu0 0
  %1466 = vmatprep.subr.bf16.mxu0 0
  %1467 = vmatpush1.bf16.msra.mxu0 0
  %1468 = vmatprep.subr.bf16.mxu0 0
  %1469 = vmatpush1.bf16.msra.mxu0 0
  %1470 = vmatprep.subr.bf16.mxu0 0
  %1471 = vmatpush1.bf16.msra.mxu0 0
  %1472 = vmatprep.subr.bf16.mxu0 0
  %1473 = vmatpush1.bf16.msra.mxu0 0
  %1474 = vmatprep.subr.bf16.mxu0 0
  %1475 = vmatpush1.bf16.msra.mxu0 0
  %1476 = vmatprep.subr.bf16.mxu0 0
  %1477 = vmatpush1.bf16.msra.mxu0 0
  %1478 = vmatprep.subr.bf16.mxu0 0
  %1479 = vmatpush1.bf16.msra.mxu0 0
  %1480 = vmatprep.subr.bf16.mxu0 0
  %1481 = vmatpush1.bf16.msra.mxu0 0
  %1482 = vmatprep.mubr.bf16.mxu0 0
  %1483 = vmatmul.mubr.bf16.gmra.mrb[0].mxu0 %v1362
  %v1484 = vpop.f32.mrb[0].mxu0
  %v1485 = vadd.f32 0.0, %v1484
  %v1486 = vpop.f32.mrb[0].mxu0
  %v1487 = vadd.f32 0.0, %v1486
  %v1488 = vpop.f32.mrb[0].mxu0
  %v1489 = vadd.f32 0.0, %v1488
  %v1490 = vpop.f32.mrb[0].mxu0
  %v1491 = vadd.f32 0.0, %v1490
  %1492 = vdwg.mxu0
  %v1493 = vadd.f32 %v1314, %v1399
  %v1494 = vadd.f32 %v1315, %v1401
  %v1495 = vadd.f32 %v1316, %v1442
  %v1496 = vadd.f32 %v1317, %v1444
  %v1497 = vadd.f32 %v1318, %v1485
  %v1498 = vadd.f32 %v1319, %v1487
  %v1499 = vadd.f32 %v1320, %v1403
  %v1500 = vadd.f32 %v1321, %v1405
  %v1501 = vadd.f32 %v1322, %v1446
  %v1502 = vadd.f32 %v1323, %v1448
  %v1503 = vadd.f32 %v1324, %v1489
  %v1504 = vadd.f32 %v1325, %v1491
  %s1505 = scalar_lea.vmem %s1, 64
  %v1506 = vld [vmem:[%s1505] sm:$0xf]
  %v1507 = vld [vmem:[%s1505 + $0x4] sm:$0xf]
  %v1510 = vunpack.c.l.b16 %v1506
  %v1511 = vunpack.c.l.b16 %v1507
  %v1512 = vpack.c.b16 %v1511, %v1510
  %1513 = vrot.lane.b32.xlu0 %v253, 90
  %v1514 = vpop.permute.xlu0 %1513
  %1515 = vrot.lane.b32.xlu0 %v254, 90
  %v1516 = vpop.permute.xlu0 %1515
  %1517 = vrot.lane.b32.xlu0 %v255, 90
  %v1518 = vpop.permute.xlu0 %1517
  %1519 = vrot.lane.b32.xlu0 %v256, 90
  %v1520 = vpop.permute.xlu0 %1519
  %1521 = vrot.lane.b32.xlu0 %v257, 90
  %v1522 = vpop.permute.xlu0 %1521
  %1523 = vrot.lane.b32.xlu0 %v258, 90
  %v1524 = vpop.permute.xlu0 %1523
  %1525 = vrot.lane.b32.xlu0 %v259, 90
  %v1526 = vpop.permute.xlu0 %1525
  %vm1527 = vcmask 736256
  %v1528 = vsel %vm1527, %v1514, %v1516
  %v1529 = vsel %vm1527, %v1516, %v1518
  %v1530 = vsel %vm1527, %v1518, %v1520
  %v1531 = vsel %vm1527, %v1520, %v1522
  %v1532 = vsel %vm1527, %v1522, %v1524
  %v1533 = vsel %vm1527, %v1524, %v1526
  %v1541 = vsel %vm70, %v1512, 0
  %1543 = vmatprep.subr.bf16.mxu0 %v1529
  %1544 = vmatpush1.bf16.msra.mxu0 %v1528
  %1545 = vmatprep.subr.bf16.mxu0 0
  %1546 = vmatpush1.bf16.msra.mxu0 0
  %1547 = vmatprep.subr.bf16.mxu0 0
  %1548 = vmatpush1.bf16.msra.mxu0 0
  %1549 = vmatprep.subr.bf16.mxu0 0
  %1550 = vmatpush1.bf16.msra.mxu0 0
  %1551 = vmatprep.subr.bf16.mxu0 0
  %1552 = vmatpush1.bf16.msra.mxu0 0
  %1553 = vmatprep.subr.bf16.mxu0 0
  %1554 = vmatpush1.bf16.msra.mxu0 0
  %1555 = vmatprep.subr.bf16.mxu0 0
  %1556 = vmatpush1.bf16.msra.mxu0 0
  %1557 = vmatprep.subr.bf16.mxu0 0
  %1558 = vmatpush1.bf16.msra.mxu0 0
  %1559 = vmatprep.subr.bf16.mxu0 0
  %1560 = vmatpush1.bf16.msra.mxu0 0
  %1561 = vmatprep.subr.bf16.mxu0 0
  %1562 = vmatpush1.bf16.msra.mxu0 0
  %1563 = vmatprep.subr.bf16.mxu0 0
  %1564 = vmatpush1.bf16.msra.mxu0 0
  %1565 = vmatprep.subr.bf16.mxu0 0
  %1566 = vmatpush1.bf16.msra.mxu0 0
  %1567 = vmatprep.subr.bf16.mxu0 0
  %1568 = vmatpush1.bf16.msra.mxu0 0
  %1569 = vmatprep.subr.bf16.mxu0 0
  %1570 = vmatpush1.bf16.msra.mxu0 0
  %1571 = vmatprep.subr.bf16.mxu0 0
  %1572 = vmatpush1.bf16.msra.mxu0 0
  %1573 = vmatprep.subr.bf16.mxu0 0
  %1574 = vmatpush1.bf16.msra.mxu0 0
  %1575 = vmatprep.mubr.bf16.mxu0 0
  %1576 = vmatmul.mubr.bf16.gmra.mrb[0].mxu0 %v1541
  %v1577 = vpop.f32.mrb[0].mxu0
  %v1578 = vadd.f32 0.0, %v1577
  %v1579 = vpop.f32.mrb[0].mxu0
  %v1580 = vadd.f32 0.0, %v1579
  %v1581 = vpop.f32.mrb[0].mxu0
  %v1582 = vadd.f32 0.0, %v1581
  %v1583 = vpop.f32.mrb[0].mxu0
  %v1584 = vadd.f32 0.0, %v1583
  %1585 = vdwg.mxu0
  %1586 = vmatprep.subr.bf16.mxu0 %v1531
  %1587 = vmatpush1.bf16.msra.mxu0 %v1530
  %1588 = vmatprep.subr.bf16.mxu0 0
  %1589 = vmatpush1.bf16.msra.mxu0 0
  %1590 = vmatprep.subr.bf16.mxu0 0
  %1591 = vmatpush1.bf16.msra.mxu0 0
  %1592 = vmatprep.subr.bf16.mxu0 0
  %1593 = vmatpush1.bf16.msra.mxu0 0
  %1594 = vmatprep.subr.bf16.mxu0 0
  %1595 = vmatpush1.bf16.msra.mxu0 0
  %1596 = vmatprep.subr.bf16.mxu0 0
  %1597 = vmatpush1.bf16.msra.mxu0 0
  %1598 = vmatprep.subr.bf16.mxu0 0
  %1599 = vmatpush1.bf16.msra.mxu0 0
  %1600 = vmatprep.subr.bf16.mxu0 0
  %1601 = vmatpush1.bf16.msra.mxu0 0
  %1602 = vmatprep.subr.bf16.mxu0 0
  %1603 = vmatpush1.bf16.msra.mxu0 0
  %1604 = vmatprep.subr.bf16.mxu0 0
  %1605 = vmatpush1.bf16.msra.mxu0 0
  %1606 = vmatprep.subr.bf16.mxu0 0
  %1607 = vmatpush1.bf16.msra.mxu0 0
  %1608 = vmatprep.subr.bf16.mxu0 0
  %1609 = vmatpush1.bf16.msra.mxu0 0
  %1610 = vmatprep.subr.bf16.mxu0 0
  %1611 = vmatpush1.bf16.msra.mxu0 0
  %1612 = vmatprep.subr.bf16.mxu0 0
  %1613 = vmatpush1.bf16.msra.mxu0 0
  %1614 = vmatprep.subr.bf16.mxu0 0
  %1615 = vmatpush1.bf16.msra.mxu0 0
  %1616 = vmatprep.subr.bf16.mxu0 0
  %1617 = vmatpush1.bf16.msra.mxu0 0
  %1618 = vmatprep.mubr.bf16.mxu0 0
  %1619 = vmatmul.mubr.bf16.gmra.mrb[0].mxu0 %v1541
  %v1620 = vpop.f32.mrb[0].mxu0
  %v1621 = vadd.f32 0.0, %v1620
  %v1622 = vpop.f32.mrb[0].mxu0
  %v1623 = vadd.f32 0.0, %v1622
  %v1624 = vpop.f32.mrb[0].mxu0
  %v1625 = vadd.f32 0.0, %v1624
  %v1626 = vpop.f32.mrb[0].mxu0
  %v1627 = vadd.f32 0.0, %v1626
  %1628 = vdwg.mxu0
  %1629 = vmatprep.subr.bf16.mxu0 %v1533
  %1630 = vmatpush1.bf16.msra.mxu0 %v1532
  %1631 = vmatprep.subr.bf16.mxu0 0
  %1632 = vmatpush1.bf16.msra.mxu0 0
  %1633 = vmatprep.subr.bf16.mxu0 0
  %1634 = vmatpush1.bf16.msra.mxu0 0
  %1635 = vmatprep.subr.bf16.mxu0 0
  %1636 = vmatpush1.bf16.msra.mxu0 0
  %1637 = vmatprep.subr.bf16.mxu0 0
  %1638 = vmatpush1.bf16.msra.mxu0 0
  %1639 = vmatprep.subr.bf16.mxu0 0
  %1640 = vmatpush1.bf16.msra.mxu0 0
  %1641 = vmatprep.subr.bf16.mxu0 0
  %1642 = vmatpush1.bf16.msra.mxu0 0
  %1643 = vmatprep.subr.bf16.mxu0 0
  %1644 = vmatpush1.bf16.msra.mxu0 0
  %1645 = vmatprep.subr.bf16.mxu0 0
  %1646 = vmatpush1.bf16.msra.mxu0 0
  %1647 = vmatprep.subr.bf16.mxu0 0
  %1648 = vmatpush1.bf16.msra.mxu0 0
  %1649 = vmatprep.subr.bf16.mxu0 0
  %1650 = vmatpush1.bf16.msra.mxu0 0
  %1651 = vmatprep.subr.bf16.mxu0 0
  %1652 = vmatpush1.bf16.msra.mxu0 0
  %1653 = vmatprep.subr.bf16.mxu0 0
  %1654 = vmatpush1.bf16.msra.mxu0 0
  %1655 = vmatprep.subr.bf16.mxu0 0
  %1656 = vmatpush1.bf16.msra.mxu0 0
  %1657 = vmatprep.subr.bf16.mxu0 0
  %1658 = vmatpush1.bf16.msra.mxu0 0
  %1659 = vmatprep.subr.bf16.mxu0 0
  %1660 = vmatpush1.bf16.msra.mxu0 0
  %1661 = vmatprep.mubr.bf16.mxu0 0
  %1662 = vmatmul.mubr.bf16.gmra.mrb[0].mxu0 %v1541
  %v1663 = vpop.f32.mrb[0].mxu0
  %v1664 = vadd.f32 0.0, %v1663
  %v1665 = vpop.f32.mrb[0].mxu0
  %v1666 = vadd.f32 0.0, %v1665
  %v1667 = vpop.f32.mrb[0].mxu0
  %v1668 = vadd.f32 0.0, %v1667
  %v1669 = vpop.f32.mrb[0].mxu0
  %v1670 = vadd.f32 0.0, %v1669
  %1671 = vdwg.mxu0
  %v1672 = vadd.f32 %v1493, %v1578
  %v1673 = vadd.f32 %v1494, %v1580
  %v1674 = vadd.f32 %v1495, %v1621
  %v1675 = vadd.f32 %v1496, %v1623
  %v1676 = vadd.f32 %v1497, %v1664
  %v1677 = vadd.f32 %v1498, %v1666
  %v1678 = vadd.f32 %v1499, %v1582
  %v1679 = vadd.f32 %v1500, %v1584
  %v1680 = vadd.f32 %v1501, %v1625
  %v1681 = vadd.f32 %v1502, %v1627
  %v1682 = vadd.f32 %v1503, %v1668
  %v1683 = vadd.f32 %v1504, %v1670
  %v1684 = vmax.f32 %v1672, 0.0
  %v1685 = vmax.f32 %v1673, 0.0
  %v1686 = vmax.f32 %v1674, 0.0
  %v1687 = vmax.f32 %v1675, 0.0
  %v1688 = vmax.f32 %v1676, 0.0
  %v1689 = vmax.f32 %v1677, 0.0
  %v1690 = vmax.f32 %v1678, 0.0
  %v1691 = vmax.f32 %v1679, 0.0
  %v1692 = vmax.f32 %v1680, 0.0
  %v1693 = vmax.f32 %v1681, 0.0
  %v1694 = vmax.f32 %v1682, 0.0
  %v1695 = vmax.f32 %v1683, 0.0
  %v1696 = vpack.c.bf16 %v1690, %v1684
  %v1697 = vpack.c.bf16 %v1691, %v1685
  %v1698 = vpack.c.bf16 %v1692, %v1686
  %v1699 = vpack.c.bf16 %v1693, %v1687
  %v1700 = vpack.c.bf16 %v1694, %v1688
  %v1701 = vpack.c.bf16 %v1695, %v1689
  %v1708 = vunpack.c.l.b16 %v1696
  %v1709 = vunpack.c.l.b16 %v1697
  %v1710 = vunpack.c.l.b16 %v1698
  %v1711 = vunpack.c.l.b16 %v1699
  %v1712 = vunpack.c.l.b16 %v1700
  %v1713 = vunpack.c.l.b16 %v1701
  %v1714 = vunpack.c.h.b16 %v1696
  %v1715 = vunpack.c.h.b16 %v1697
  %v1716 = vunpack.c.h.b16 %v1698
  %v1717 = vunpack.c.h.b16 %v1699
  %v1718 = vunpack.c.h.b16 %v1700
  %v1719 = vunpack.c.h.b16 %v1701
  %v1720 = vpack.c.b16 %v1709, %v1708
  %v1721 = vpack.c.b16 %v1711, %v1710
  %v1722 = vpack.c.b16 %v1713, %v1712
  %v1723 = vpack.c.b16 %v1715, %v1714
  %v1724 = vpack.c.b16 %v1717, %v1716
  %v1725 = vpack.c.b16 %v1719, %v1718
  %1732 = vst [vmem:[%s3] sm:$0xff] %v1720
  %1733 = vst [vmem:[%s3 + $0x8] sm:$0xff] %v1721
  %1734 = vst [vmem:[%s3 + $0x10] sm:$0xff] %v1722
  %1735 = vst [vmem:[%s3 + $0x18] sm:$0xff] %v1723
  %1736 = vst [vmem:[%s3 + $0x20] sm:$0xff] %v1724
  %1737 = vst [vmem:[%s3 + $0x28] sm:$0xff] %v1725
  // Predicated region
  $region14: #{resnet_forward.10} parent=0 // pred_check
    _
  $region15: #{resnet_forward.10} parent=0 // pred_check_branch
    %1739 = sbr.rel (0) target = $region17
  $region16: #{resnet_forward.10} parent=0 // pred_region
    _
  $region17: #{resnet_forward.10} parent=0 // pred_fallthru
    _
  // Predicated region
  $region18: #{resnet_forward.10} parent=0 // pred_check
    _
  $region19: #{resnet_forward.10} parent=0 // pred_check_branch
    %1741 = sbr.rel (0) target = $region21
  $region20: #{resnet_forward.10} parent=0 // pred_region
    _
  $region21: #{resnet_forward.10} parent=0 // pred_fallthru
    _

// kernel: resnet_forward.12
$region0: #{resnet_forward.12}
  #allocation0 [shape = 'u32[]', space=smem, size = 0x4, offset = 0x4, fixed_abs, tag = 'smem constant byte address 0x4 - core index']
  #allocation1 [shape = 'u32[144,128]{1,0:T(1,128)}', space=vmem, size = 0x12000, scoped, tag = 'internal scratch']
  %s0 = inlined_call_operand.vmem [shape: bf16[16,896], index: 0, kind: input, shape index: {}]
  %s1 = inlined_call_operand.vmem [shape: bf16[9,16,16], index: 1, kind: input, shape index: {}]
  %s2 = inlined_call_operand.vmem [shape: f32[16,1], index: 2, kind: input, shape index: {}]
  %s3 = inlined_call_operand.vmem [shape: bf16[16,768], index: 3, kind: input, shape index: {}]
  %s4 = inlined_call_operand.vmem [shape: bf16[16,768], index: 4, kind: output, shape index: {}]
  %s5 = sld [smem:[#allocation0]]
  $region26: #{resnet_forward.12} parent=0
    _
  %s7 = ssub.s32 1, %s5
  %s8 = scalar_select 0, %s7, %s5
  // Predicated region
  $region2: #{resnet_forward.12} parent=0 // pred_check
    _
  $region3: #{resnet_forward.12} parent=0 // pred_check_branch
    %10 = sbr.rel (0) target = $region5
  $region4: #{resnet_forward.12} parent=0 // pred_region
    _
  $region5: #{resnet_forward.12} parent=0 // pred_fallthru
    _
  // Predicated region
  $region6: #{resnet_forward.12} parent=0 // pred_check
    _
  $region7: #{resnet_forward.12} parent=0 // pred_check_branch
    %12 = sbr.rel (0) target = $region9
  $region8: #{resnet_forward.12} parent=0 // pred_region
    _
  $region9: #{resnet_forward.12} parent=0 // pred_fallthru
    _
  // Predicated region
  $region10: #{resnet_forward.12} parent=0 // pred_check
    _
  $region11: #{resnet_forward.12} parent=0 // pred_check_branch
    %14 = sbr.rel (0) target = $region13
  $region12: #{resnet_forward.12} parent=0 // pred_region
    _
  $region13: #{resnet_forward.12} parent=0 // pred_fallthru
    _
  // Predicated region
  $region14: #{resnet_forward.12} parent=0 // pred_check
    _
  $region15: #{resnet_forward.12} parent=0 // pred_check_branch
    %16 = sbr.rel (0) target = $region17
  $region16: #{resnet_forward.12} parent=0 // pred_region
    _
  $region17: #{resnet_forward.12} parent=0 // pred_fallthru
    _
  %v18 = vld [vmem:[%s2] sm:$0xff]
  %v19 = vld [vmem:[%s2 + $0x8] sm:$0xff]
  %21 = vset.pattern.permute.xlu0 0
  %22 = vperm.xlu0 %21, %v18
  %v23 = vpop.permute.xlu0 %22
  %26 = vset.pattern.permute.xlu0 0
  %27 = vperm.xlu0 %26, %v19
  %v28 = vpop.permute.xlu0 %27
  %v30 = vld [vmem:[%s1] sm:$0xf]
  %v31 = vld [vmem:[%s1 + $0x4] sm:$0xf]
  %v32 = vld [vmem:[%s0] sm:$0xff]
  %v33 = vld [vmem:[%s0 + $0x8] sm:$0xff]
  %v34 = vld [vmem:[%s0 + $0x10] sm:$0xff]
  %v35 = vld [vmem:[%s0 + $0x1c] sm:$0xff]
  %v36 = vld [vmem:[%s0 + $0x24] sm:$0xff]
  %v37 = vld [vmem:[%s0 + $0x2c] sm:$0xff]
  %v40 = vunpack.c.l.b16 %v30
  %v41 = vunpack.c.l.b16 %v31
  %v42 = vpack.c.b16 %v41, %v40
  %v49 = vunpack.c.l.b16 %v32
  %v50 = vunpack.c.h.b16 %v32
  %v51 = vunpack.c.l.b16 %v33
  %v52 = vunpack.c.h.b16 %v33
  %v53 = vunpack.c.l.b16 %v34
  %v54 = vunpack.c.h.b16 %v34
  %v55 = vunpack.c.l.b16 %v35
  %v56 = vunpack.c.h.b16 %v35
  %v57 = vunpack.c.l.b16 %v36
  %v58 = vunpack.c.h.b16 %v36
  %v59 = vunpack.c.l.b16 %v37
  %v60 = vunpack.c.h.b16 %v37
  %v61 = vpack.c.b16 %v55, %v49
  %v62 = vpack.c.b16 %v56, %v50
  %v63 = vpack.c.b16 %v57, %v51
  %v64 = vpack.c.b16 %v58, %v52
  %v65 = vpack.c.b16 %v59, %v53
  %v66 = vpack.c.b16 %v60, %v54
  %vm73 = vcmask 130048
  %v75 = vsel %vm73, %v42, 0
  %77 = vmatprep.subr.bf16.mxu0 %v62
  %78 = vmatpush1.bf16.msra.mxu0 %v61
  %79 = vmatprep.subr.bf16.mxu0 0
  %80 = vmatpush1.bf16.msra.mxu0 0
  %81 = vmatprep.subr.bf16.mxu0 0
  %82 = vmatpush1.bf16.msra.mxu0 0
  %83 = vmatprep.subr.bf16.mxu0 0
  %84 = vmatpush1.bf16.msra.mxu0 0
  %85 = vmatprep.subr.bf16.mxu0 0
  %86 = vmatpush1.bf16.msra.mxu0 0
  %87 = vmatprep.subr.bf16.mxu0 0
  %88 = vmatpush1.bf16.msra.mxu0 0
  %89 = vmatprep.subr.bf16.mxu0 0
  %90 = vmatpush1.bf16.msra.mxu0 0
  %91 = vmatprep.subr.bf16.mxu0 0
  %92 = vmatpush1.bf16.msra.mxu0 0
  %93 = vmatprep.subr.bf16.mxu0 0
  %94 = vmatpush1.bf16.msra.mxu0 0
  %95 = vmatprep.subr.bf16.mxu0 0
  %96 = vmatpush1.bf16.msra.mxu0 0
  %97 = vmatprep.subr.bf16.mxu0 0
  %98 = vmatpush1.bf16.msra.mxu0 0
  %99 = vmatprep.subr.bf16.mxu0 0
  %100 = vmatpush1.bf16.msra.mxu0 0
  %101 = vmatprep.subr.bf16.mxu0 0
  %102 = vmatpush1.bf16.msra.mxu0 0
  %103 = vmatprep.subr.bf16.mxu0 0
  %104 = vmatpush1.bf16.msra.mxu0 0
  %105 = vmatprep.subr.bf16.mxu0 0
  %106 = vmatpush1.bf16.msra.mxu0 0
  %107 = vmatprep.subr.bf16.mxu0 0
  %108 = vmatpush1.bf16.msra.mxu0 0
  %109 = vmatprep.mubr.bf16.mxu0 0
  %110 = vmatmul.mubr.bf16.gmra.mrb[0].mxu0 %v75
  %v111 = vpop.f32.mrb[0].mxu0
  %v112 = vadd.f32 0.0, %v111
  %v113 = vpop.f32.mrb[0].mxu0
  %v114 = vadd.f32 0.0, %v113
  %v115 = vpop.f32.mrb[0].mxu0
  %v116 = vadd.f32 0.0, %v115
  %v117 = vpop.f32.mrb[0].mxu0
  %v118 = vadd.f32 0.0, %v117
  %119 = vdwg.mxu0
  %120 = vmatprep.subr.bf16.mxu0 %v64
  %121 = vmatpush1.bf16.msra.mxu0 %v63
  %122 = vmatprep.subr.bf16.mxu0 0
  %123 = vmatpush1.bf16.msra.mxu0 0
  %124 = vmatprep.subr.bf16.mxu0 0
  %125 = vmatpush1.bf16.msra.mxu0 0
  %126 = vmatprep.subr.bf16.mxu0 0
  %127 = vmatpush1.bf16.msra.mxu0 0
  %128 = vmatprep.subr.bf16.mxu0 0
  %129 = vmatpush1.bf16.msra.mxu0 0
  %130 = vmatprep.subr.bf16.mxu0 0
  %131 = vmatpush1.bf16.msra.mxu0 0
  %132 = vmatprep.subr.bf16.mxu0 0
  %133 = vmatpush1.bf16.msra.mxu0 0
  %134 = vmatprep.subr.bf16.mxu0 0
  %135 = vmatpush1.bf16.msra.mxu0 0
  %136 = vmatprep.subr.bf16.mxu0 0
  %137 = vmatpush1.bf16.msra.mxu0 0
  %138 = vmatprep.subr.bf16.mxu0 0
  %139 = vmatpush1.bf16.msra.mxu0 0
  %140 = vmatprep.subr.bf16.mxu0 0
  %141 = vmatpush1.bf16.msra.mxu0 0
  %142 = vmatprep.subr.bf16.mxu0 0
  %143 = vmatpush1.bf16.msra.mxu0 0
  %144 = vmatprep.subr.bf16.mxu0 0
  %145 = vmatpush1.bf16.msra.mxu0 0
  %146 = vmatprep.subr.bf16.mxu0 0
  %147 = vmatpush1.bf16.msra.mxu0 0
  %148 = vmatprep.subr.bf16.mxu0 0
  %149 = vmatpush1.bf16.msra.mxu0 0
  %150 = vmatprep.subr.bf16.mxu0 0
  %151 = vmatpush1.bf16.msra.mxu0 0
  %152 = vmatprep.mubr.bf16.mxu0 0
  %153 = vmatmul.mubr.bf16.gmra.mrb[0].mxu0 %v75
  %v154 = vpop.f32.mrb[0].mxu0
  %v155 = vadd.f32 0.0, %v154
  %v156 = vpop.f32.mrb[0].mxu0
  %v157 = vadd.f32 0.0, %v156
  %v158 = vpop.f32.mrb[0].mxu0
  %v159 = vadd.f32 0.0, %v158
  %v160 = vpop.f32.mrb[0].mxu0
  %v161 = vadd.f32 0.0, %v160
  %162 = vdwg.mxu0
  %163 = vmatprep.subr.bf16.mxu0 %v66
  %164 = vmatpush1.bf16.msra.mxu0 %v65
  %165 = vmatprep.subr.bf16.mxu0 0
  %166 = vmatpush1.bf16.msra.mxu0 0
  %167 = vmatprep.subr.bf16.mxu0 0
  %168 = vmatpush1.bf16.msra.mxu0 0
  %169 = vmatprep.subr.bf16.mxu0 0
  %170 = vmatpush1.bf16.msra.mxu0 0
  %171 = vmatprep.subr.bf16.mxu0 0
  %172 = vmatpush1.bf16.msra.mxu0 0
  %173 = vmatprep.subr.bf16.mxu0 0
  %174 = vmatpush1.bf16.msra.mxu0 0
  %175 = vmatprep.subr.bf16.mxu0 0
  %176 = vmatpush1.bf16.msra.mxu0 0
  %177 = vmatprep.subr.bf16.mxu0 0
  %178 = vmatpush1.bf16.msra.mxu0 0
  %179 = vmatprep.subr.bf16.mxu0 0
  %180 = vmatpush1.bf16.msra.mxu0 0
  %181 = vmatprep.subr.bf16.mxu0 0
  %182 = vmatpush1.bf16.msra.mxu0 0
  %183 = vmatprep.subr.bf16.mxu0 0
  %184 = vmatpush1.bf16.msra.mxu0 0
  %185 = vmatprep.subr.bf16.mxu0 0
  %186 = vmatpush1.bf16.msra.mxu0 0
  %187 = vmatprep.subr.bf16.mxu0 0
  %188 = vmatpush1.bf16.msra.mxu0 0
  %189 = vmatprep.subr.bf16.mxu0 0
  %190 = vmatpush1.bf16.msra.mxu0 0
  %191 = vmatprep.subr.bf16.mxu0 0
  %192 = vmatpush1.bf16.msra.mxu0 0
  %193 = vmatprep.subr.bf16.mxu0 0
  %194 = vmatpush1.bf16.msra.mxu0 0
  %195 = vmatprep.mubr.bf16.mxu0 0
  %196 = vmatmul.mubr.bf16.gmra.mrb[0].mxu0 %v75
  %v197 = vpop.f32.mrb[0].mxu0
  %v198 = vadd.f32 0.0, %v197
  %v199 = vpop.f32.mrb[0].mxu0
  %v200 = vadd.f32 0.0, %v199
  %v201 = vpop.f32.mrb[0].mxu0
  %v202 = vadd.f32 0.0, %v201
  %v203 = vpop.f32.mrb[0].mxu0
  %v204 = vadd.f32 0.0, %v203
  %205 = vdwg.mxu0
  %v206 = vadd.f32 %v23, %v112
  %v207 = vadd.f32 %v23, %v114
  %v208 = vadd.f32 %v23, %v155
  %v209 = vadd.f32 %v23, %v157
  %v210 = vadd.f32 %v23, %v198
  %v211 = vadd.f32 %v23, %v200
  %v212 = vadd.f32 %v28, %v116
  %v213 = vadd.f32 %v28, %v118
  %v214 = vadd.f32 %v28, %v159
  %v215 = vadd.f32 %v28, %v161
  %v216 = vadd.f32 %v28, %v202
  %v217 = vadd.f32 %v28, %v204
  %s218 = scalar_lea.vmem %s1, 8
  %v219 = vld [vmem:[%s218] sm:$0xf]
  %v220 = vld [vmem:[%s218 + $0x4] sm:$0xf]
  %v221 = vld [vmem:[%s0] sm:$0xff]
  %v222 = vld [vmem:[%s0 + $0x8] sm:$0xff]
  %v223 = vld [vmem:[%s0 + $0x10] sm:$0xff]
  %v224 = vld [vmem:[%s0 + $0x18] sm:$0xf]
  %v225 = vld [vmem:[%s0 + $0x1c] sm:$0xff]
  %v226 = vld [vmem:[%s0 + $0x24] sm:$0xff]
  %v227 = vld [vmem:[%s0 + $0x2c] sm:$0xff]
  %v228 = vld [vmem:[%s0 + $0x34] sm:$0xf]
  %v231 = vunpack.c.l.b16 %v219
  %v232 = vunpack.c.l.b16 %v220
  %v233 = vpack.c.b16 %v232, %v231
  %v242 = vunpack.c.l.b16 %v221
  %v243 = vunpack.c.h.b16 %v221
  %v244 = vunpack.c.l.b16 %v222
  %v245 = vunpack.c.h.b16 %v222
  %v246 = vunpack.c.l.b16 %v223
  %v247 = vunpack.c.h.b16 %v223
  %v248 = vunpack.c.l.b16 %v224
  %v249 = vunpack.c.l.b16 %v225
  %v250 = vunpack.c.h.b16 %v225
  %v251 = vunpack.c.l.b16 %v226
  %v252 = vunpack.c.h.b16 %v226
  %v253 = vunpack.c.l.b16 %v227
  %v254 = vunpack.c.h.b16 %v227
  %v255 = vunpack.c.l.b16 %v228
  %v256 = vpack.c.b16 %v249, %v242
  %v257 = vpack.c.b16 %v250, %v243
  %v258 = vpack.c.b16 %v251, %v244
  %v259 = vpack.c.b16 %v252, %v245
  %v260 = vpack.c.b16 %v253, %v246
  %v261 = vpack.c.b16 %v254, %v247
  %v262 = vpack.c.b16 %v255, %v248
  %263 = vrot.lane.b32.xlu0 %v256, 127
  %v264 = vpop.permute.xlu0 %263
  %265 = vrot.lane.b32.xlu0 %v257, 127
  %v266 = vpop.permute.xlu0 %265
  %267 = vrot.lane.b32.xlu0 %v258, 127
  %v268 = vpop.permute.xlu0 %267
  %269 = vrot.lane.b32.xlu0 %v259, 127
  %v270 = vpop.permute.xlu0 %269
  %271 = vrot.lane.b32.xlu0 %v260, 127
  %v272 = vpop.permute.xlu0 %271
  %273 = vrot.lane.b32.xlu0 %v261, 127
  %v274 = vpop.permute.xlu0 %273
  %275 = vrot.lane.b32.xlu0 %v262, 127
  %v276 = vpop.permute.xlu0 %275
  %vm277 = vcmask 1039360
  %v278 = vsel %vm277, %v264, %v266
  %v279 = vsel %vm277, %v266, %v268
  %v280 = vsel %vm277, %v268, %v270
  %v281 = vsel %vm277, %v270, %v272
  %v282 = vsel %vm277, %v272, %v274
  %v283 = vsel %vm277, %v274, %v276
  %v291 = vsel %vm73, %v233, 0
  %293 = vmatprep.subr.bf16.mxu0 %v279
  %294 = vmatpush1.bf16.msra.mxu0 %v278
  %295 = vmatprep.subr.bf16.mxu0 0
  %296 = vmatpush1.bf16.msra.mxu0 0
  %297 = vmatprep.subr.bf16.mxu0 0
  %298 = vmatpush1.bf16.msra.mxu0 0
  %299 = vmatprep.subr.bf16.mxu0 0
  %300 = vmatpush1.bf16.msra.mxu0 0
  %301 = vmatprep.subr.bf16.mxu0 0
  %302 = vmatpush1.bf16.msra.mxu0 0
  %303 = vmatprep.subr.bf16.mxu0 0
  %304 = vmatpush1.bf16.msra.mxu0 0
  %305 = vmatprep.subr.bf16.mxu0 0
  %306 = vmatpush1.bf16.msra.mxu0 0
  %307 = vmatprep.subr.bf16.mxu0 0
  %308 = vmatpush1.bf16.msra.mxu0 0
  %309 = vmatprep.subr.bf16.mxu0 0
  %310 = vmatpush1.bf16.msra.mxu0 0
  %311 = vmatprep.subr.bf16.mxu0 0
  %312 = vmatpush1.bf16.msra.mxu0 0
  %313 = vmatprep.subr.bf16.mxu0 0
  %314 = vmatpush1.bf16.msra.mxu0 0
  %315 = vmatprep.subr.bf16.mxu0 0
  %316 = vmatpush1.bf16.msra.mxu0 0
  %317 = vmatprep.subr.bf16.mxu0 0
  %318 = vmatpush1.bf16.msra.mxu0 0
  %319 = vmatprep.subr.bf16.mxu0 0
  %320 = vmatpush1.bf16.msra.mxu0 0
  %321 = vmatprep.subr.bf16.mxu0 0
  %322 = vmatpush1.bf16.msra.mxu0 0
  %323 = vmatprep.subr.bf16.mxu0 0
  %324 = vmatpush1.bf16.msra.mxu0 0
  %325 = vmatprep.mubr.bf16.mxu0 0
  %326 = vmatmul.mubr.bf16.gmra.mrb[0].mxu0 %v291
  %v327 = vpop.f32.mrb[0].mxu0
  %v328 = vadd.f32 0.0, %v327
  %v329 = vpop.f32.mrb[0].mxu0
  %v330 = vadd.f32 0.0, %v329
  %v331 = vpop.f32.mrb[0].mxu0
  %v332 = vadd.f32 0.0, %v331
  %v333 = vpop.f32.mrb[0].mxu0
  %v334 = vadd.f32 0.0, %v333
  %335 = vdwg.mxu0
  %336 = vmatprep.subr.bf16.mxu0 %v281
  %337 = vmatpush1.bf16.msra.mxu0 %v280
  %338 = vmatprep.subr.bf16.mxu0 0
  %339 = vmatpush1.bf16.msra.mxu0 0
  %340 = vmatprep.subr.bf16.mxu0 0
  %341 = vmatpush1.bf16.msra.mxu0 0
  %342 = vmatprep.subr.bf16.mxu0 0
  %343 = vmatpush1.bf16.msra.mxu0 0
  %344 = vmatprep.subr.bf16.mxu0 0
  %345 = vmatpush1.bf16.msra.mxu0 0
  %346 = vmatprep.subr.bf16.mxu0 0
  %347 = vmatpush1.bf16.msra.mxu0 0
  %348 = vmatprep.subr.bf16.mxu0 0
  %349 = vmatpush1.bf16.msra.mxu0 0
  %350 = vmatprep.subr.bf16.mxu0 0
  %351 = vmatpush1.bf16.msra.mxu0 0
  %352 = vmatprep.subr.bf16.mxu0 0
  %353 = vmatpush1.bf16.msra.mxu0 0
  %354 = vmatprep.subr.bf16.mxu0 0
  %355 = vmatpush1.bf16.msra.mxu0 0
  %356 = vmatprep.subr.bf16.mxu0 0
  %357 = vmatpush1.bf16.msra.mxu0 0
  %358 = vmatprep.subr.bf16.mxu0 0
  %359 = vmatpush1.bf16.msra.mxu0 0
  %360 = vmatprep.subr.bf16.mxu0 0
  %361 = vmatpush1.bf16.msra.mxu0 0
  %362 = vmatprep.subr.bf16.mxu0 0
  %363 = vmatpush1.bf16.msra.mxu0 0
  %364 = vmatprep.subr.bf16.mxu0 0
  %365 = vmatpush1.bf16.msra.mxu0 0
  %366 = vmatprep.subr.bf16.mxu0 0
  %367 = vmatpush1.bf16.msra.mxu0 0
  %368 = vmatprep.mubr.bf16.mxu0 0
  %369 = vmatmul.mubr.bf16.gmra.mrb[0].mxu0 %v291
  %v370 = vpop.f32.mrb[0].mxu0
  %v371 = vadd.f32 0.0, %v370
  %v372 = vpop.f32.mrb[0].mxu0
  %v373 = vadd.f32 0.0, %v372
  %v374 = vpop.f32.mrb[0].mxu0
  %v375 = vadd.f32 0.0, %v374
  %v376 = vpop.f32.mrb[0].mxu0
  %v377 = vadd.f32 0.0, %v376
  %378 = vdwg.mxu0
  %379 = vmatprep.subr.bf16.mxu0 %v283
  %380 = vmatpush1.bf16.msra.mxu0 %v282
  %381 = vmatprep.subr.bf16.mxu0 0
  %382 = vmatpush1.bf16.msra.mxu0 0
  %383 = vmatprep.subr.bf16.mxu0 0
  %384 = vmatpush1.bf16.msra.mxu0 0
  %385 = vmatprep.subr.bf16.mxu0 0
  %386 = vmatpush1.bf16.msra.mxu0 0
  %387 = vmatprep.subr.bf16.mxu0 0
  %388 = vmatpush1.bf16.msra.mxu0 0
  %389 = vmatprep.subr.bf16.mxu0 0
  %390 = vmatpush1.bf16.msra.mxu0 0
  %391 = vmatprep.subr.bf16.mxu0 0
  %392 = vmatpush1.bf16.msra.mxu0 0
  %393 = vmatprep.subr.bf16.mxu0 0
  %394 = vmatpush1.bf16.msra.mxu0 0
  %395 = vmatprep.subr.bf16.mxu0 0
  %396 = vmatpush1.bf16.msra.mxu0 0
  %397 = vmatprep.subr.bf16.mxu0 0
  %398 = vmatpush1.bf16.msra.mxu0 0
  %399 = vmatprep.subr.bf16.mxu0 0
  %400 = vmatpush1.bf16.msra.mxu0 0
  %401 = vmatprep.subr.bf16.mxu0 0
  %402 = vmatpush1.bf16.msra.mxu0 0
  %403 = vmatprep.subr.bf16.mxu0 0
  %404 = vmatpush1.bf16.msra.mxu0 0
  %405 = vmatprep.subr.bf16.mxu0 0
  %406 = vmatpush1.bf16.msra.mxu0 0
  %407 = vmatprep.subr.bf16.mxu0 0
  %408 = vmatpush1.bf16.msra.mxu0 0
  %409 = vmatprep.subr.bf16.mxu0 0
  %410 = vmatpush1.bf16.msra.mxu0 0
  %411 = vmatprep.mubr.bf16.mxu0 0
  %412 = vmatmul.mubr.bf16.gmra.mrb[0].mxu0 %v291
  %v413 = vpop.f32.mrb[0].mxu0
  %v414 = vadd.f32 0.0, %v413
  %v415 = vpop.f32.mrb[0].mxu0
  %v416 = vadd.f32 0.0, %v415
  %v417 = vpop.f32.mrb[0].mxu0
  %v418 = vadd.f32 0.0, %v417
  %v419 = vpop.f32.mrb[0].mxu0
  %v420 = vadd.f32 0.0, %v419
  %421 = vdwg.mxu0
  %v422 = vadd.f32 %v206, %v328
  %v423 = vadd.f32 %v207, %v330
  %v424 = vadd.f32 %v208, %v371
  %v425 = vadd.f32 %v209, %v373
  %v426 = vadd.f32 %v210, %v414
  %v427 = vadd.f32 %v211, %v416
  %v428 = vadd.f32 %v212, %v332
  %v429 = vadd.f32 %v213, %v334
  %v430 = vadd.f32 %v214, %v375
  %v431 = vadd.f32 %v215, %v377
  %v432 = vadd.f32 %v216, %v418
  %v433 = vadd.f32 %v217, %v420
  %s434 = scalar_lea.vmem %s1, 16
  %v435 = vld [vmem:[%s434] sm:$0xf]
  %v436 = vld [vmem:[%s434 + $0x4] sm:$0xf]
  %v439 = vunpack.c.l.b16 %v435
  %v440 = vunpack.c.l.b16 %v436
  %v441 = vpack.c.b16 %v440, %v439
  %442 = vrot.lane.b32.xlu0 %v256, 126
  %v443 = vpop.permute.xlu0 %442
  %444 = vrot.lane.b32.xlu0 %v257, 126
  %v445 = vpop.permute.xlu0 %444
  %446 = vrot.lane.b32.xlu0 %v258, 126
  %v447 = vpop.permute.xlu0 %446
  %448 = vrot.lane.b32.xlu0 %v259, 126
  %v449 = vpop.permute.xlu0 %448
  %450 = vrot.lane.b32.xlu0 %v260, 126
  %v451 = vpop.permute.xlu0 %450
  %452 = vrot.lane.b32.xlu0 %v261, 126
  %v453 = vpop.permute.xlu0 %452
  %454 = vrot.lane.b32.xlu0 %v262, 126
  %v455 = vpop.permute.xlu0 %454
  %vm456 = vcmask 1031168
  %v457 = vsel %vm456, %v443, %v445
  %v458 = vsel %vm456, %v445, %v447
  %v459 = vsel %vm456, %v447, %v449
  %v460 = vsel %vm456, %v449, %v451
  %v461 = vsel %vm456, %v451, %v453
  %v462 = vsel %vm456, %v453, %v455
  %v470 = vsel %vm73, %v441, 0
  %472 = vmatprep.subr.bf16.mxu0 %v458
  %473 = vmatpush1.bf16.msra.mxu0 %v457
  %474 = vmatprep.subr.bf16.mxu0 0
  %475 = vmatpush1.bf16.msra.mxu0 0
  %476 = vmatprep.subr.bf16.mxu0 0
  %477 = vmatpush1.bf16.msra.mxu0 0
  %478 = vmatprep.subr.bf16.mxu0 0
  %479 = vmatpush1.bf16.msra.mxu0 0
  %480 = vmatprep.subr.bf16.mxu0 0
  %481 = vmatpush1.bf16.msra.mxu0 0
  %482 = vmatprep.subr.bf16.mxu0 0
  %483 = vmatpush1.bf16.msra.mxu0 0
  %484 = vmatprep.subr.bf16.mxu0 0
  %485 = vmatpush1.bf16.msra.mxu0 0
  %486 = vmatprep.subr.bf16.mxu0 0
  %487 = vmatpush1.bf16.msra.mxu0 0
  %488 = vmatprep.subr.bf16.mxu0 0
  %489 = vmatpush1.bf16.msra.mxu0 0
  %490 = vmatprep.subr.bf16.mxu0 0
  %491 = vmatpush1.bf16.msra.mxu0 0
  %492 = vmatprep.subr.bf16.mxu0 0
  %493 = vmatpush1.bf16.msra.mxu0 0
  %494 = vmatprep.subr.bf16.mxu0 0
  %495 = vmatpush1.bf16.msra.mxu0 0
  %496 = vmatprep.subr.bf16.mxu0 0
  %497 = vmatpush1.bf16.msra.mxu0 0
  %498 = vmatprep.subr.bf16.mxu0 0
  %499 = vmatpush1.bf16.msra.mxu0 0
  %500 = vmatprep.subr.bf16.mxu0 0
  %501 = vmatpush1.bf16.msra.mxu0 0
  %502 = vmatprep.subr.bf16.mxu0 0
  %503 = vmatpush1.bf16.msra.mxu0 0
  %504 = vmatprep.mubr.bf16.mxu0 0
  %505 = vmatmul.mubr.bf16.gmra.mrb[0].mxu0 %v470
  %v506 = vpop.f32.mrb[0].mxu0
  %v507 = vadd.f32 0.0, %v506
  %v508 = vpop.f32.mrb[0].mxu0
  %v509 = vadd.f32 0.0, %v508
  %v510 = vpop.f32.mrb[0].mxu0
  %v511 = vadd.f32 0.0, %v510
  %v512 = vpop.f32.mrb[0].mxu0
  %v513 = vadd.f32 0.0, %v512
  %514 = vdwg.mxu0
  %515 = vmatprep.subr.bf16.mxu0 %v460
  %516 = vmatpush1.bf16.msra.mxu0 %v459
  %517 = vmatprep.subr.bf16.mxu0 0
  %518 = vmatpush1.bf16.msra.mxu0 0
  %519 = vmatprep.subr.bf16.mxu0 0
  %520 = vmatpush1.bf16.msra.mxu0 0
  %521 = vmatprep.subr.bf16.mxu0 0
  %522 = vmatpush1.bf16.msra.mxu0 0
  %523 = vmatprep.subr.bf16.mxu0 0
  %524 = vmatpush1.bf16.msra.mxu0 0
  %525 = vmatprep.subr.bf16.mxu0 0
  %526 = vmatpush1.bf16.msra.mxu0 0
  %527 = vmatprep.subr.bf16.mxu0 0
  %528 = vmatpush1.bf16.msra.mxu0 0
  %529 = vmatprep.subr.bf16.mxu0 0
  %530 = vmatpush1.bf16.msra.mxu0 0
  %531 = vmatprep.subr.bf16.mxu0 0
  %532 = vmatpush1.bf16.msra.mxu0 0
  %533 = vmatprep.subr.bf16.mxu0 0
  %534 = vmatpush1.bf16.msra.mxu0 0
  %535 = vmatprep.subr.bf16.mxu0 0
  %536 = vmatpush1.bf16.msra.mxu0 0
  %537 = vmatprep.subr.bf16.mxu0 0
  %538 = vmatpush1.bf16.msra.mxu0 0
  %539 = vmatprep.subr.bf16.mxu0 0
  %540 = vmatpush1.bf16.msra.mxu0 0
  %541 = vmatprep.subr.bf16.mxu0 0
  %542 = vmatpush1.bf16.msra.mxu0 0
  %543 = vmatprep.subr.bf16.mxu0 0
  %544 = vmatpush1.bf16.msra.mxu0 0
  %545 = vmatprep.subr.bf16.mxu0 0
  %546 = vmatpush1.bf16.msra.mxu0 0
  %547 = vmatprep.mubr.bf16.mxu0 0
  %548 = vmatmul.mubr.bf16.gmra.mrb[0].mxu0 %v470
  %v549 = vpop.f32.mrb[0].mxu0
  %v550 = vadd.f32 0.0, %v549
  %v551 = vpop.f32.mrb[0].mxu0
  %v552 = vadd.f32 0.0, %v551
  %v553 = vpop.f32.mrb[0].mxu0
  %v554 = vadd.f32 0.0, %v553
  %v555 = vpop.f32.mrb[0].mxu0
  %v556 = vadd.f32 0.0, %v555
  %557 = vdwg.mxu0
  %558 = vmatprep.subr.bf16.mxu0 %v462
  %559 = vmatpush1.bf16.msra.mxu0 %v461
  %560 = vmatprep.subr.bf16.mxu0 0
  %561 = vmatpush1.bf16.msra.mxu0 0
  %562 = vmatprep.subr.bf16.mxu0 0
  %563 = vmatpush1.bf16.msra.mxu0 0
  %564 = vmatprep.subr.bf16.mxu0 0
  %565 = vmatpush1.bf16.msra.mxu0 0
  %566 = vmatprep.subr.bf16.mxu0 0
  %567 = vmatpush1.bf16.msra.mxu0 0
  %568 = vmatprep.subr.bf16.mxu0 0
  %569 = vmatpush1.bf16.msra.mxu0 0
  %570 = vmatprep.subr.bf16.mxu0 0
  %571 = vmatpush1.bf16.msra.mxu0 0
  %572 = vmatprep.subr.bf16.mxu0 0
  %573 = vmatpush1.bf16.msra.mxu0 0
  %574 = vmatprep.subr.bf16.mxu0 0
  %575 = vmatpush1.bf16.msra.mxu0 0
  %576 = vmatprep.subr.bf16.mxu0 0
  %577 = vmatpush1.bf16.msra.mxu0 0
  %578 = vmatprep.subr.bf16.mxu0 0
  %579 = vmatpush1.bf16.msra.mxu0 0
  %580 = vmatprep.subr.bf16.mxu0 0
  %581 = vmatpush1.bf16.msra.mxu0 0
  %582 = vmatprep.subr.bf16.mxu0 0
  %583 = vmatpush1.bf16.msra.mxu0 0
  %584 = vmatprep.subr.bf16.mxu0 0
  %585 = vmatpush1.bf16.msra.mxu0 0
  %586 = vmatprep.subr.bf16.mxu0 0
  %587 = vmatpush1.bf16.msra.mxu0 0
  %588 = vmatprep.subr.bf16.mxu0 0
  %589 = vmatpush1.bf16.msra.mxu0 0
  %590 = vmatprep.mubr.bf16.mxu0 0
  %591 = vmatmul.mubr.bf16.gmra.mrb[0].mxu0 %v470
  %v592 = vpop.f32.mrb[0].mxu0
  %v593 = vadd.f32 0.0, %v592
  %v594 = vpop.f32.mrb[0].mxu0
  %v595 = vadd.f32 0.0, %v594
  %v596 = vpop.f32.mrb[0].mxu0
  %v597 = vadd.f32 0.0, %v596
  %v598 = vpop.f32.mrb[0].mxu0
  %v599 = vadd.f32 0.0, %v598
  %600 = vdwg.mxu0
  %v601 = vadd.f32 %v422, %v507
  %v602 = vadd.f32 %v423, %v509
  %v603 = vadd.f32 %v424, %v550
  %v604 = vadd.f32 %v425, %v552
  %v605 = vadd.f32 %v426, %v593
  %v606 = vadd.f32 %v427, %v595
  %v607 = vadd.f32 %v428, %v511
  %v608 = vadd.f32 %v429, %v513
  %v609 = vadd.f32 %v430, %v554
  %v610 = vadd.f32 %v431, %v556
  %v611 = vadd.f32 %v432, %v597
  %v612 = vadd.f32 %v433, %v599
  %s613 = scalar_lea.vmem %s1, 24
  %v614 = vld [vmem:[%s613] sm:$0xf]
  %v615 = vld [vmem:[%s613 + $0x4] sm:$0xf]
  %v618 = vunpack.c.l.b16 %v614
  %v619 = vunpack.c.l.b16 %v615
  %v620 = vpack.c.b16 %v619, %v618
  %621 = vrot.lane.b32.xlu0 %v256, 110
  %v622 = vpop.permute.xlu0 %621
  %623 = vrot.lane.b32.xlu0 %v257, 110
  %v624 = vpop.permute.xlu0 %623
  %625 = vrot.lane.b32.xlu0 %v258, 110
  %v626 = vpop.permute.xlu0 %625
  %627 = vrot.lane.b32.xlu0 %v259, 110
  %v628 = vpop.permute.xlu0 %627
  %629 = vrot.lane.b32.xlu0 %v260, 110
  %v630 = vpop.permute.xlu0 %629
  %631 = vrot.lane.b32.xlu0 %v261, 110
  %v632 = vpop.permute.xlu0 %631
  %633 = vrot.lane.b32.xlu0 %v262, 110
  %v634 = vpop.permute.xlu0 %633
  %vm635 = vcmask 900096
  %v636 = vsel %vm635, %v622, %v624
  %v637 = vsel %vm635, %v624, %v626
  %v638 = vsel %vm635, %v626, %v628
  %v639 = vsel %vm635, %v628, %v630
  %v640 = vsel %vm635, %v630, %v632
  %v641 = vsel %vm635, %v632, %v634
  %v649 = vsel %vm73, %v620, 0
  %651 = vmatprep.subr.bf16.mxu0 %v637
  %652 = vmatpush1.bf16.msra.mxu0 %v636
  %653 = vmatprep.subr.bf16.mxu0 0
  %654 = vmatpush1.bf16.msra.mxu0 0
  %655 = vmatprep.subr.bf16.mxu0 0
  %656 = vmatpush1.bf16.msra.mxu0 0
  %657 = vmatprep.subr.bf16.mxu0 0
  %658 = vmatpush1.bf16.msra.mxu0 0
  %659 = vmatprep.subr.bf16.mxu0 0
  %660 = vmatpush1.bf16.msra.mxu0 0
  %661 = vmatprep.subr.bf16.mxu0 0
  %662 = vmatpush1.bf16.msra.mxu0 0
  %663 = vmatprep.subr.bf16.mxu0 0
  %664 = vmatpush1.bf16.msra.mxu0 0
  %665 = vmatprep.subr.bf16.mxu0 0
  %666 = vmatpush1.bf16.msra.mxu0 0
  %667 = vmatprep.subr.bf16.mxu0 0
  %668 = vmatpush1.bf16.msra.mxu0 0
  %669 = vmatprep.subr.bf16.mxu0 0
  %670 = vmatpush1.bf16.msra.mxu0 0
  %671 = vmatprep.subr.bf16.mxu0 0
  %672 = vmatpush1.bf16.msra.mxu0 0
  %673 = vmatprep.subr.bf16.mxu0 0
  %674 = vmatpush1.bf16.msra.mxu0 0
  %675 = vmatprep.subr.bf16.mxu0 0
  %676 = vmatpush1.bf16.msra.mxu0 0
  %677 = vmatprep.subr.bf16.mxu0 0
  %678 = vmatpush1.bf16.msra.mxu0 0
  %679 = vmatprep.subr.bf16.mxu0 0
  %680 = vmatpush1.bf16.msra.mxu0 0
  %681 = vmatprep.subr.bf16.mxu0 0
  %682 = vmatpush1.bf16.msra.mxu0 0
  %683 = vmatprep.mubr.bf16.mxu0 0
  %684 = vmatmul.mubr.bf16.gmra.mrb[0].mxu0 %v649
  %v685 = vpop.f32.mrb[0].mxu0
  %v686 = vadd.f32 0.0, %v685
  %v687 = vpop.f32.mrb[0].mxu0
  %v688 = vadd.f32 0.0, %v687
  %v689 = vpop.f32.mrb[0].mxu0
  %v690 = vadd.f32 0.0, %v689
  %v691 = vpop.f32.mrb[0].mxu0
  %v692 = vadd.f32 0.0, %v691
  %693 = vdwg.mxu0
  %694 = vmatprep.subr.bf16.mxu0 %v639
  %695 = vmatpush1.bf16.msra.mxu0 %v638
  %696 = vmatprep.subr.bf16.mxu0 0
  %697 = vmatpush1.bf16.msra.mxu0 0
  %698 = vmatprep.subr.bf16.mxu0 0
  %699 = vmatpush1.bf16.msra.mxu0 0
  %700 = vmatprep.subr.bf16.mxu0 0
  %701 = vmatpush1.bf16.msra.mxu0 0
  %702 = vmatprep.subr.bf16.mxu0 0
  %703 = vmatpush1.bf16.msra.mxu0 0
  %704 = vmatprep.subr.bf16.mxu0 0
  %705 = vmatpush1.bf16.msra.mxu0 0
  %706 = vmatprep.subr.bf16.mxu0 0
  %707 = vmatpush1.bf16.msra.mxu0 0
  %708 = vmatprep.subr.bf16.mxu0 0
  %709 = vmatpush1.bf16.msra.mxu0 0
  %710 = vmatprep.subr.bf16.mxu0 0
  %711 = vmatpush1.bf16.msra.mxu0 0
  %712 = vmatprep.subr.bf16.mxu0 0
  %713 = vmatpush1.bf16.msra.mxu0 0
  %714 = vmatprep.subr.bf16.mxu0 0
  %715 = vmatpush1.bf16.msra.mxu0 0
  %716 = vmatprep.subr.bf16.mxu0 0
  %717 = vmatpush1.bf16.msra.mxu0 0
  %718 = vmatprep.subr.bf16.mxu0 0
  %719 = vmatpush1.bf16.msra.mxu0 0
  %720 = vmatprep.subr.bf16.mxu0 0
  %721 = vmatpush1.bf16.msra.mxu0 0
  %722 = vmatprep.subr.bf16.mxu0 0
  %723 = vmatpush1.bf16.msra.mxu0 0
  %724 = vmatprep.subr.bf16.mxu0 0
  %725 = vmatpush1.bf16.msra.mxu0 0
  %726 = vmatprep.mubr.bf16.mxu0 0
  %727 = vmatmul.mubr.bf16.gmra.mrb[0].mxu0 %v649
  %v728 = vpop.f32.mrb[0].mxu0
  %v729 = vadd.f32 0.0, %v728
  %v730 = vpop.f32.mrb[0].mxu0
  %v731 = vadd.f32 0.0, %v730
  %v732 = vpop.f32.mrb[0].mxu0
  %v733 = vadd.f32 0.0, %v732
  %v734 = vpop.f32.mrb[0].mxu0
  %v735 = vadd.f32 0.0, %v734
  %736 = vdwg.mxu0
  %737 = vmatprep.subr.bf16.mxu0 %v641
  %738 = vmatpush1.bf16.msra.mxu0 %v640
  %739 = vmatprep.subr.bf16.mxu0 0
  %740 = vmatpush1.bf16.msra.mxu0 0
  %741 = vmatprep.subr.bf16.mxu0 0
  %742 = vmatpush1.bf16.msra.mxu0 0
  %743 = vmatprep.subr.bf16.mxu0 0
  %744 = vmatpush1.bf16.msra.mxu0 0
  %745 = vmatprep.subr.bf16.mxu0 0
  %746 = vmatpush1.bf16.msra.mxu0 0
  %747 = vmatprep.subr.bf16.mxu0 0
  %748 = vmatpush1.bf16.msra.mxu0 0
  %749 = vmatprep.subr.bf16.mxu0 0
  %750 = vmatpush1.bf16.msra.mxu0 0
  %751 = vmatprep.subr.bf16.mxu0 0
  %752 = vmatpush1.bf16.msra.mxu0 0
  %753 = vmatprep.subr.bf16.mxu0 0
  %754 = vmatpush1.bf16.msra.mxu0 0
  %755 = vmatprep.subr.bf16.mxu0 0
  %756 = vmatpush1.bf16.msra.mxu0 0
  %757 = vmatprep.subr.bf16.mxu0 0
  %758 = vmatpush1.bf16.msra.mxu0 0
  %759 = vmatprep.subr.bf16.mxu0 0
  %760 = vmatpush1.bf16.msra.mxu0 0
  %761 = vmatprep.subr.bf16.mxu0 0
  %762 = vmatpush1.bf16.msra.mxu0 0
  %763 = vmatprep.subr.bf16.mxu0 0
  %764 = vmatpush1.bf16.msra.mxu0 0
  %765 = vmatprep.subr.bf16.mxu0 0
  %766 = vmatpush1.bf16.msra.mxu0 0
  %767 = vmatprep.subr.bf16.mxu0 0
  %768 = vmatpush1.bf16.msra.mxu0 0
  %769 = vmatprep.mubr.bf16.mxu0 0
  %770 = vmatmul.mubr.bf16.gmra.mrb[0].mxu0 %v649
  %v771 = vpop.f32.mrb[0].mxu0
  %v772 = vadd.f32 0.0, %v771
  %v773 = vpop.f32.mrb[0].mxu0
  %v774 = vadd.f32 0.0, %v773
  %v775 = vpop.f32.mrb[0].mxu0
  %v776 = vadd.f32 0.0, %v775
  %v777 = vpop.f32.mrb[0].mxu0
  %v778 = vadd.f32 0.0, %v777
  %779 = vdwg.mxu0
  %v780 = vadd.f32 %v601, %v686
  %v781 = vadd.f32 %v602, %v688
  %v782 = vadd.f32 %v603, %v729
  %v783 = vadd.f32 %v604, %v731
  %v784 = vadd.f32 %v605, %v772
  %v785 = vadd.f32 %v606, %v774
  %v786 = vadd.f32 %v607, %v690
  %v787 = vadd.f32 %v608, %v692
  %v788 = vadd.f32 %v609, %v733
  %v789 = vadd.f32 %v610, %v735
  %v790 = vadd.f32 %v611, %v776
  %v791 = vadd.f32 %v612, %v778
  %s792 = scalar_lea.vmem %s1, 32
  %v793 = vld [vmem:[%s792] sm:$0xf]
  %v794 = vld [vmem:[%s792 + $0x4] sm:$0xf]
  %v797 = vunpack.c.l.b16 %v793
  %v798 = vunpack.c.l.b16 %v794
  %v799 = vpack.c.b16 %v798, %v797
  %800 = vrot.lane.b32.xlu0 %v256, 109
  %v801 = vpop.permute.xlu0 %800
  %802 = vrot.lane.b32.xlu0 %v257, 109
  %v803 = vpop.permute.xlu0 %802
  %804 = vrot.lane.b32.xlu0 %v258, 109
  %v805 = vpop.permute.xlu0 %804
  %806 = vrot.lane.b32.xlu0 %v259, 109
  %v807 = vpop.permute.xlu0 %806
  %808 = vrot.lane.b32.xlu0 %v260, 109
  %v809 = vpop.permute.xlu0 %808
  %810 = vrot.lane.b32.xlu0 %v261, 109
  %v811 = vpop.permute.xlu0 %810
  %812 = vrot.lane.b32.xlu0 %v262, 109
  %v813 = vpop.permute.xlu0 %812
  %vm814 = vcmask 891904
  %v815 = vsel %vm814, %v801, %v803
  %v816 = vsel %vm814, %v803, %v805
  %v817 = vsel %vm814, %v805, %v807
  %v818 = vsel %vm814, %v807, %v809
  %v819 = vsel %vm814, %v809, %v811
  %v820 = vsel %vm814, %v811, %v813
  %v828 = vsel %vm73, %v799, 0
  %830 = vmatprep.subr.bf16.mxu0 %v816
  %831 = vmatpush1.bf16.msra.mxu0 %v815
  %832 = vmatprep.subr.bf16.mxu0 0
  %833 = vmatpush1.bf16.msra.mxu0 0
  %834 = vmatprep.subr.bf16.mxu0 0
  %835 = vmatpush1.bf16.msra.mxu0 0
  %836 = vmatprep.subr.bf16.mxu0 0
  %837 = vmatpush1.bf16.msra.mxu0 0
  %838 = vmatprep.subr.bf16.mxu0 0
  %839 = vmatpush1.bf16.msra.mxu0 0
  %840 = vmatprep.subr.bf16.mxu0 0
  %841 = vmatpush1.bf16.msra.mxu0 0
  %842 = vmatprep.subr.bf16.mxu0 0
  %843 = vmatpush1.bf16.msra.mxu0 0
  %844 = vmatprep.subr.bf16.mxu0 0
  %845 = vmatpush1.bf16.msra.mxu0 0
  %846 = vmatprep.subr.bf16.mxu0 0
  %847 = vmatpush1.bf16.msra.mxu0 0
  %848 = vmatprep.subr.bf16.mxu0 0
  %849 = vmatpush1.bf16.msra.mxu0 0
  %850 = vmatprep.subr.bf16.mxu0 0
  %851 = vmatpush1.bf16.msra.mxu0 0
  %852 = vmatprep.subr.bf16.mxu0 0
  %853 = vmatpush1.bf16.msra.mxu0 0
  %854 = vmatprep.subr.bf16.mxu0 0
  %855 = vmatpush1.bf16.msra.mxu0 0
  %856 = vmatprep.subr.bf16.mxu0 0
  %857 = vmatpush1.bf16.msra.mxu0 0
  %858 = vmatprep.subr.bf16.mxu0 0
  %859 = vmatpush1.bf16.msra.mxu0 0
  %860 = vmatprep.subr.bf16.mxu0 0
  %861 = vmatpush1.bf16.msra.mxu0 0
  %862 = vmatprep.mubr.bf16.mxu0 0
  %863 = vmatmul.mubr.bf16.gmra.mrb[0].mxu0 %v828
  %v864 = vpop.f32.mrb[0].mxu0
  %v865 = vadd.f32 0.0, %v864
  %v866 = vpop.f32.mrb[0].mxu0
  %v867 = vadd.f32 0.0, %v866
  %v868 = vpop.f32.mrb[0].mxu0
  %v869 = vadd.f32 0.0, %v868
  %v870 = vpop.f32.mrb[0].mxu0
  %v871 = vadd.f32 0.0, %v870
  %872 = vdwg.mxu0
  %873 = vmatprep.subr.bf16.mxu0 %v818
  %874 = vmatpush1.bf16.msra.mxu0 %v817
  %875 = vmatprep.subr.bf16.mxu0 0
  %876 = vmatpush1.bf16.msra.mxu0 0
  %877 = vmatprep.subr.bf16.mxu0 0
  %878 = vmatpush1.bf16.msra.mxu0 0
  %879 = vmatprep.subr.bf16.mxu0 0
  %880 = vmatpush1.bf16.msra.mxu0 0
  %881 = vmatprep.subr.bf16.mxu0 0
  %882 = vmatpush1.bf16.msra.mxu0 0
  %883 = vmatprep.subr.bf16.mxu0 0
  %884 = vmatpush1.bf16.msra.mxu0 0
  %885 = vmatprep.subr.bf16.mxu0 0
  %886 = vmatpush1.bf16.msra.mxu0 0
  %887 = vmatprep.subr.bf16.mxu0 0
  %888 = vmatpush1.bf16.msra.mxu0 0
  %889 = vmatprep.subr.bf16.mxu0 0
  %890 = vmatpush1.bf16.msra.mxu0 0
  %891 = vmatprep.subr.bf16.mxu0 0
  %892 = vmatpush1.bf16.msra.mxu0 0
  %893 = vmatprep.subr.bf16.mxu0 0
  %894 = vmatpush1.bf16.msra.mxu0 0
  %895 = vmatprep.subr.bf16.mxu0 0
  %896 = vmatpush1.bf16.msra.mxu0 0
  %897 = vmatprep.subr.bf16.mxu0 0
  %898 = vmatpush1.bf16.msra.mxu0 0
  %899 = vmatprep.subr.bf16.mxu0 0
  %900 = vmatpush1.bf16.msra.mxu0 0
  %901 = vmatprep.subr.bf16.mxu0 0
  %902 = vmatpush1.bf16.msra.mxu0 0
  %903 = vmatprep.subr.bf16.mxu0 0
  %904 = vmatpush1.bf16.msra.mxu0 0
  %905 = vmatprep.mubr.bf16.mxu0 0
  %906 = vmatmul.mubr.bf16.gmra.mrb[0].mxu0 %v828
  %v907 = vpop.f32.mrb[0].mxu0
  %v908 = vadd.f32 0.0, %v907
  %v909 = vpop.f32.mrb[0].mxu0
  %v910 = vadd.f32 0.0, %v909
  %v911 = vpop.f32.mrb[0].mxu0
  %v912 = vadd.f32 0.0, %v911
  %v913 = vpop.f32.mrb[0].mxu0
  %v914 = vadd.f32 0.0, %v913
  %915 = vdwg.mxu0
  %916 = vmatprep.subr.bf16.mxu0 %v820
  %917 = vmatpush1.bf16.msra.mxu0 %v819
  %918 = vmatprep.subr.bf16.mxu0 0
  %919 = vmatpush1.bf16.msra.mxu0 0
  %920 = vmatprep.subr.bf16.mxu0 0
  %921 = vmatpush1.bf16.msra.mxu0 0
  %922 = vmatprep.subr.bf16.mxu0 0
  %923 = vmatpush1.bf16.msra.mxu0 0
  %924 = vmatprep.subr.bf16.mxu0 0
  %925 = vmatpush1.bf16.msra.mxu0 0
  %926 = vmatprep.subr.bf16.mxu0 0
  %927 = vmatpush1.bf16.msra.mxu0 0
  %928 = vmatprep.subr.bf16.mxu0 0
  %929 = vmatpush1.bf16.msra.mxu0 0
  %930 = vmatprep.subr.bf16.mxu0 0
  %931 = vmatpush1.bf16.msra.mxu0 0
  %932 = vmatprep.subr.bf16.mxu0 0
  %933 = vmatpush1.bf16.msra.mxu0 0
  %934 = vmatprep.subr.bf16.mxu0 0
  %935 = vmatpush1.bf16.msra.mxu0 0
  %936 = vmatprep.subr.bf16.mxu0 0
  %937 = vmatpush1.bf16.msra.mxu0 0
  %938 = vmatprep.subr.bf16.mxu0 0
  %939 = vmatpush1.bf16.msra.mxu0 0
  %940 = vmatprep.subr.bf16.mxu0 0
  %941 = vmatpush1.bf16.msra.mxu0 0
  %942 = vmatprep.subr.bf16.mxu0 0
  %943 = vmatpush1.bf16.msra.mxu0 0
  %944 = vmatprep.subr.bf16.mxu0 0
  %945 = vmatpush1.bf16.msra.mxu0 0
  %946 = vmatprep.subr.bf16.mxu0 0
  %947 = vmatpush1.bf16.msra.mxu0 0
  %948 = vmatprep.mubr.bf16.mxu0 0
  %949 = vmatmul.mubr.bf16.gmra.mrb[0].mxu0 %v828
  %v950 = vpop.f32.mrb[0].mxu0
  %v951 = vadd.f32 0.0, %v950
  %v952 = vpop.f32.mrb[0].mxu0
  %v953 = vadd.f32 0.0, %v952
  %v954 = vpop.f32.mrb[0].mxu0
  %v955 = vadd.f32 0.0, %v954
  %v956 = vpop.f32.mrb[0].mxu0
  %v957 = vadd.f32 0.0, %v956
  %958 = vdwg.mxu0
  %v959 = vadd.f32 %v780, %v865
  %v960 = vadd.f32 %v781, %v867
  %v961 = vadd.f32 %v782, %v908
  %v962 = vadd.f32 %v783, %v910
  %v963 = vadd.f32 %v784, %v951
  %v964 = vadd.f32 %v785, %v953
  %v965 = vadd.f32 %v786, %v869
  %v966 = vadd.f32 %v787, %v871
  %v967 = vadd.f32 %v788, %v912
  %v968 = vadd.f32 %v789, %v914
  %v969 = vadd.f32 %v790, %v955
  %v970 = vadd.f32 %v791, %v957
  %s971 = scalar_lea.vmem %s1, 40
  %v972 = vld [vmem:[%s971] sm:$0xf]
  %v973 = vld [vmem:[%s971 + $0x4] sm:$0xf]
  %v976 = vunpack.c.l.b16 %v972
  %v977 = vunpack.c.l.b16 %v973
  %v978 = vpack.c.b16 %v977, %v976
  %979 = vrot.lane.b32.xlu0 %v256, 108
  %v980 = vpop.permute.xlu0 %979
  %981 = vrot.lane.b32.xlu0 %v257, 108
  %v982 = vpop.permute.xlu0 %981
  %983 = vrot.lane.b32.xlu0 %v258, 108
  %v984 = vpop.permute.xlu0 %983
  %985 = vrot.lane.b32.xlu0 %v259, 108
  %v986 = vpop.permute.xlu0 %985
  %987 = vrot.lane.b32.xlu0 %v260, 108
  %v988 = vpop.permute.xlu0 %987
  %989 = vrot.lane.b32.xlu0 %v261, 108
  %v990 = vpop.permute.xlu0 %989
  %991 = vrot.lane.b32.xlu0 %v262, 108
  %v992 = vpop.permute.xlu0 %991
  %vm993 = vcmask 883712
  %v994 = vsel %vm993, %v980, %v982
  %v995 = vsel %vm993, %v982, %v984
  %v996 = vsel %vm993, %v984, %v986
  %v997 = vsel %vm993, %v986, %v988
  %v998 = vsel %vm993, %v988, %v990
  %v999 = vsel %vm993, %v990, %v992
  %v1007 = vsel %vm73, %v978, 0
  %1009 = vmatprep.subr.bf16.mxu0 %v995
  %1010 = vmatpush1.bf16.msra.mxu0 %v994
  %1011 = vmatprep.subr.bf16.mxu0 0
  %1012 = vmatpush1.bf16.msra.mxu0 0
  %1013 = vmatprep.subr.bf16.mxu0 0
  %1014 = vmatpush1.bf16.msra.mxu0 0
  %1015 = vmatprep.subr.bf16.mxu0 0
  %1016 = vmatpush1.bf16.msra.mxu0 0
  %1017 = vmatprep.subr.bf16.mxu0 0
  %1018 = vmatpush1.bf16.msra.mxu0 0
  %1019 = vmatprep.subr.bf16.mxu0 0
  %1020 = vmatpush1.bf16.msra.mxu0 0
  %1021 = vmatprep.subr.bf16.mxu0 0
  %1022 = vmatpush1.bf16.msra.mxu0 0
  %1023 = vmatprep.subr.bf16.mxu0 0
  %1024 = vmatpush1.bf16.msra.mxu0 0
  %1025 = vmatprep.subr.bf16.mxu0 0
  %1026 = vmatpush1.bf16.msra.mxu0 0
  %1027 = vmatprep.subr.bf16.mxu0 0
  %1028 = vmatpush1.bf16.msra.mxu0 0
  %1029 = vmatprep.subr.bf16.mxu0 0
  %1030 = vmatpush1.bf16.msra.mxu0 0
  %1031 = vmatprep.subr.bf16.mxu0 0
  %1032 = vmatpush1.bf16.msra.mxu0 0
  %1033 = vmatprep.subr.bf16.mxu0 0
  %1034 = vmatpush1.bf16.msra.mxu0 0
  %1035 = vmatprep.subr.bf16.mxu0 0
  %1036 = vmatpush1.bf16.msra.mxu0 0
  %1037 = vmatprep.subr.bf16.mxu0 0
  %1038 = vmatpush1.bf16.msra.mxu0 0
  %1039 = vmatprep.subr.bf16.mxu0 0
  %1040 = vmatpush1.bf16.msra.mxu0 0
  %1041 = vmatprep.mubr.bf16.mxu0 0
  %1042 = vmatmul.mubr.bf16.gmra.mrb[0].mxu0 %v1007
  %v1043 = vpop.f32.mrb[0].mxu0
  %v1044 = vadd.f32 0.0, %v1043
  %v1045 = vpop.f32.mrb[0].mxu0
  %v1046 = vadd.f32 0.0, %v1045
  %v1047 = vpop.f32.mrb[0].mxu0
  %v1048 = vadd.f32 0.0, %v1047
  %v1049 = vpop.f32.mrb[0].mxu0
  %v1050 = vadd.f32 0.0, %v1049
  %1051 = vdwg.mxu0
  %1052 = vmatprep.subr.bf16.mxu0 %v997
  %1053 = vmatpush1.bf16.msra.mxu0 %v996
  %1054 = vmatprep.subr.bf16.mxu0 0
  %1055 = vmatpush1.bf16.msra.mxu0 0
  %1056 = vmatprep.subr.bf16.mxu0 0
  %1057 = vmatpush1.bf16.msra.mxu0 0
  %1058 = vmatprep.subr.bf16.mxu0 0
  %1059 = vmatpush1.bf16.msra.mxu0 0
  %1060 = vmatprep.subr.bf16.mxu0 0
  %1061 = vmatpush1.bf16.msra.mxu0 0
  %1062 = vmatprep.subr.bf16.mxu0 0
  %1063 = vmatpush1.bf16.msra.mxu0 0
  %1064 = vmatprep.subr.bf16.mxu0 0
  %1065 = vmatpush1.bf16.msra.mxu0 0
  %1066 = vmatprep.subr.bf16.mxu0 0
  %1067 = vmatpush1.bf16.msra.mxu0 0
  %1068 = vmatprep.subr.bf16.mxu0 0
  %1069 = vmatpush1.bf16.msra.mxu0 0
  %1070 = vmatprep.subr.bf16.mxu0 0
  %1071 = vmatpush1.bf16.msra.mxu0 0
  %1072 = vmatprep.subr.bf16.mxu0 0
  %1073 = vmatpush1.bf16.msra.mxu0 0
  %1074 = vmatprep.subr.bf16.mxu0 0
  %1075 = vmatpush1.bf16.msra.mxu0 0
  %1076 = vmatprep.subr.bf16.mxu0 0
  %1077 = vmatpush1.bf16.msra.mxu0 0
  %1078 = vmatprep.subr.bf16.mxu0 0
  %1079 = vmatpush1.bf16.msra.mxu0 0
  %1080 = vmatprep.subr.bf16.mxu0 0
  %1081 = vmatpush1.bf16.msra.mxu0 0
  %1082 = vmatprep.subr.bf16.mxu0 0
  %1083 = vmatpush1.bf16.msra.mxu0 0
  %1084 = vmatprep.mubr.bf16.mxu0 0
  %1085 = vmatmul.mubr.bf16.gmra.mrb[0].mxu0 %v1007
  %v1086 = vpop.f32.mrb[0].mxu0
  %v1087 = vadd.f32 0.0, %v1086
  %v1088 = vpop.f32.mrb[0].mxu0
  %v1089 = vadd.f32 0.0, %v1088
  %v1090 = vpop.f32.mrb[0].mxu0
  %v1091 = vadd.f32 0.0, %v1090
  %v1092 = vpop.f32.mrb[0].mxu0
  %v1093 = vadd.f32 0.0, %v1092
  %1094 = vdwg.mxu0
  %1095 = vmatprep.subr.bf16.mxu0 %v999
  %1096 = vmatpush1.bf16.msra.mxu0 %v998
  %1097 = vmatprep.subr.bf16.mxu0 0
  %1098 = vmatpush1.bf16.msra.mxu0 0
  %1099 = vmatprep.subr.bf16.mxu0 0
  %1100 = vmatpush1.bf16.msra.mxu0 0
  %1101 = vmatprep.subr.bf16.mxu0 0
  %1102 = vmatpush1.bf16.msra.mxu0 0
  %1103 = vmatprep.subr.bf16.mxu0 0
  %1104 = vmatpush1.bf16.msra.mxu0 0
  %1105 = vmatprep.subr.bf16.mxu0 0
  %1106 = vmatpush1.bf16.msra.mxu0 0
  %1107 = vmatprep.subr.bf16.mxu0 0
  %1108 = vmatpush1.bf16.msra.mxu0 0
  %1109 = vmatprep.subr.bf16.mxu0 0
  %1110 = vmatpush1.bf16.msra.mxu0 0
  %1111 = vmatprep.subr.bf16.mxu0 0
  %1112 = vmatpush1.bf16.msra.mxu0 0
  %1113 = vmatprep.subr.bf16.mxu0 0
  %1114 = vmatpush1.bf16.msra.mxu0 0
  %1115 = vmatprep.subr.bf16.mxu0 0
  %1116 = vmatpush1.bf16.msra.mxu0 0
  %1117 = vmatprep.subr.bf16.mxu0 0
  %1118 = vmatpush1.bf16.msra.mxu0 0
  %1119 = vmatprep.subr.bf16.mxu0 0
  %1120 = vmatpush1.bf16.msra.mxu0 0
  %1121 = vmatprep.subr.bf16.mxu0 0
  %1122 = vmatpush1.bf16.msra.mxu0 0
  %1123 = vmatprep.subr.bf16.mxu0 0
  %1124 = vmatpush1.bf16.msra.mxu0 0
  %1125 = vmatprep.subr.bf16.mxu0 0
  %1126 = vmatpush1.bf16.msra.mxu0 0
  %1127 = vmatprep.mubr.bf16.mxu0 0
  %1128 = vmatmul.mubr.bf16.gmra.mrb[0].mxu0 %v1007
  %v1129 = vpop.f32.mrb[0].mxu0
  %v1130 = vadd.f32 0.0, %v1129
  %v1131 = vpop.f32.mrb[0].mxu0
  %v1132 = vadd.f32 0.0, %v1131
  %v1133 = vpop.f32.mrb[0].mxu0
  %v1134 = vadd.f32 0.0, %v1133
  %v1135 = vpop.f32.mrb[0].mxu0
  %v1136 = vadd.f32 0.0, %v1135
  %1137 = vdwg.mxu0
  %v1138 = vadd.f32 %v959, %v1044
  %v1139 = vadd.f32 %v960, %v1046
  %v1140 = vadd.f32 %v961, %v1087
  %v1141 = vadd.f32 %v962, %v1089
  %v1142 = vadd.f32 %v963, %v1130
  %v1143 = vadd.f32 %v964, %v1132
  %v1144 = vadd.f32 %v965, %v1048
  %v1145 = vadd.f32 %v966, %v1050
  %v1146 = vadd.f32 %v967, %v1091
  %v1147 = vadd.f32 %v968, %v1093
  %v1148 = vadd.f32 %v969, %v1134
  %v1149 = vadd.f32 %v970, %v1136
  %s1150 = scalar_lea.vmem %s1, 48
  %v1151 = vld [vmem:[%s1150] sm:$0xf]
  %v1152 = vld [vmem:[%s1150 + $0x4] sm:$0xf]
  %v1155 = vunpack.c.l.b16 %v1151
  %v1156 = vunpack.c.l.b16 %v1152
  %v1157 = vpack.c.b16 %v1156, %v1155
  %1158 = vrot.lane.b32.xlu0 %v256, 92
  %v1159 = vpop.permute.xlu0 %1158
  %1160 = vrot.lane.b32.xlu0 %v257, 92
  %v1161 = vpop.permute.xlu0 %1160
  %1162 = vrot.lane.b32.xlu0 %v258, 92
  %v1163 = vpop.permute.xlu0 %1162
  %1164 = vrot.lane.b32.xlu0 %v259, 92
  %v1165 = vpop.permute.xlu0 %1164
  %1166 = vrot.lane.b32.xlu0 %v260, 92
  %v1167 = vpop.permute.xlu0 %1166
  %1168 = vrot.lane.b32.xlu0 %v261, 92
  %v1169 = vpop.permute.xlu0 %1168
  %1170 = vrot.lane.b32.xlu0 %v262, 92
  %v1171 = vpop.permute.xlu0 %1170
  %vm1172 = vcmask 752640
  %v1173 = vsel %vm1172, %v1159, %v1161
  %v1174 = vsel %vm1172, %v1161, %v1163
  %v1175 = vsel %vm1172, %v1163, %v1165
  %v1176 = vsel %vm1172, %v1165, %v1167
  %v1177 = vsel %vm1172, %v1167, %v1169
  %v1178 = vsel %vm1172, %v1169, %v1171
  %v1186 = vsel %vm73, %v1157, 0
  %1188 = vmatprep.subr.bf16.mxu0 %v1174
  %1189 = vmatpush1.bf16.msra.mxu0 %v1173
  %1190 = vmatprep.subr.bf16.mxu0 0
  %1191 = vmatpush1.bf16.msra.mxu0 0
  %1192 = vmatprep.subr.bf16.mxu0 0
  %1193 = vmatpush1.bf16.msra.mxu0 0
  %1194 = vmatprep.subr.bf16.mxu0 0
  %1195 = vmatpush1.bf16.msra.mxu0 0
  %1196 = vmatprep.subr.bf16.mxu0 0
  %1197 = vmatpush1.bf16.msra.mxu0 0
  %1198 = vmatprep.subr.bf16.mxu0 0
  %1199 = vmatpush1.bf16.msra.mxu0 0
  %1200 = vmatprep.subr.bf16.mxu0 0
  %1201 = vmatpush1.bf16.msra.mxu0 0
  %1202 = vmatprep.subr.bf16.mxu0 0
  %1203 = vmatpush1.bf16.msra.mxu0 0
  %1204 = vmatprep.subr.bf16.mxu0 0
  %1205 = vmatpush1.bf16.msra.mxu0 0
  %1206 = vmatprep.subr.bf16.mxu0 0
  %1207 = vmatpush1.bf16.msra.mxu0 0
  %1208 = vmatprep.subr.bf16.mxu0 0
  %1209 = vmatpush1.bf16.msra.mxu0 0
  %1210 = vmatprep.subr.bf16.mxu0 0
  %1211 = vmatpush1.bf16.msra.mxu0 0
  %1212 = vmatprep.subr.bf16.mxu0 0
  %1213 = vmatpush1.bf16.msra.mxu0 0
  %1214 = vmatprep.subr.bf16.mxu0 0
  %1215 = vmatpush1.bf16.msra.mxu0 0
  %1216 = vmatprep.subr.bf16.mxu0 0
  %1217 = vmatpush1.bf16.msra.mxu0 0
  %1218 = vmatprep.subr.bf16.mxu0 0
  %1219 = vmatpush1.bf16.msra.mxu0 0
  %1220 = vmatprep.mubr.bf16.mxu0 0
  %1221 = vmatmul.mubr.bf16.gmra.mrb[0].mxu0 %v1186
  %v1222 = vpop.f32.mrb[0].mxu0
  %v1223 = vadd.f32 0.0, %v1222
  %v1224 = vpop.f32.mrb[0].mxu0
  %v1225 = vadd.f32 0.0, %v1224
  %v1226 = vpop.f32.mrb[0].mxu0
  %v1227 = vadd.f32 0.0, %v1226
  %v1228 = vpop.f32.mrb[0].mxu0
  %v1229 = vadd.f32 0.0, %v1228
  %1230 = vdwg.mxu0
  %1231 = vmatprep.subr.bf16.mxu0 %v1176
  %1232 = vmatpush1.bf16.msra.mxu0 %v1175
  %1233 = vmatprep.subr.bf16.mxu0 0
  %1234 = vmatpush1.bf16.msra.mxu0 0
  %1235 = vmatprep.subr.bf16.mxu0 0
  %1236 = vmatpush1.bf16.msra.mxu0 0
  %1237 = vmatprep.subr.bf16.mxu0 0
  %1238 = vmatpush1.bf16.msra.mxu0 0
  %1239 = vmatprep.subr.bf16.mxu0 0
  %1240 = vmatpush1.bf16.msra.mxu0 0
  %1241 = vmatprep.subr.bf16.mxu0 0
  %1242 = vmatpush1.bf16.msra.mxu0 0
  %1243 = vmatprep.subr.bf16.mxu0 0
  %1244 = vmatpush1.bf16.msra.mxu0 0
  %1245 = vmatprep.subr.bf16.mxu0 0
  %1246 = vmatpush1.bf16.msra.mxu0 0
  %1247 = vmatprep.subr.bf16.mxu0 0
  %1248 = vmatpush1.bf16.msra.mxu0 0
  %1249 = vmatprep.subr.bf16.mxu0 0
  %1250 = vmatpush1.bf16.msra.mxu0 0
  %1251 = vmatprep.subr.bf16.mxu0 0
  %1252 = vmatpush1.bf16.msra.mxu0 0
  %1253 = vmatprep.subr.bf16.mxu0 0
  %1254 = vmatpush1.bf16.msra.mxu0 0
  %1255 = vmatprep.subr.bf16.mxu0 0
  %1256 = vmatpush1.bf16.msra.mxu0 0
  %1257 = vmatprep.subr.bf16.mxu0 0
  %1258 = vmatpush1.bf16.msra.mxu0 0
  %1259 = vmatprep.subr.bf16.mxu0 0
  %1260 = vmatpush1.bf16.msra.mxu0 0
  %1261 = vmatprep.subr.bf16.mxu0 0
  %1262 = vmatpush1.bf16.msra.mxu0 0
  %1263 = vmatprep.mubr.bf16.mxu0 0
  %1264 = vmatmul.mubr.bf16.gmra.mrb[0].mxu0 %v1186
  %v1265 = vpop.f32.mrb[0].mxu0
  %v1266 = vadd.f32 0.0, %v1265
  %v1267 = vpop.f32.mrb[0].mxu0
  %v1268 = vadd.f32 0.0, %v1267
  %v1269 = vpop.f32.mrb[0].mxu0
  %v1270 = vadd.f32 0.0, %v1269
  %v1271 = vpop.f32.mrb[0].mxu0
  %v1272 = vadd.f32 0.0, %v1271
  %1273 = vdwg.mxu0
  %1274 = vmatprep.subr.bf16.mxu0 %v1178
  %1275 = vmatpush1.bf16.msra.mxu0 %v1177
  %1276 = vmatprep.subr.bf16.mxu0 0
  %1277 = vmatpush1.bf16.msra.mxu0 0
  %1278 = vmatprep.subr.bf16.mxu0 0
  %1279 = vmatpush1.bf16.msra.mxu0 0
  %1280 = vmatprep.subr.bf16.mxu0 0
  %1281 = vmatpush1.bf16.msra.mxu0 0
  %1282 = vmatprep.subr.bf16.mxu0 0
  %1283 = vmatpush1.bf16.msra.mxu0 0
  %1284 = vmatprep.subr.bf16.mxu0 0
  %1285 = vmatpush1.bf16.msra.mxu0 0
  %1286 = vmatprep.subr.bf16.mxu0 0
  %1287 = vmatpush1.bf16.msra.mxu0 0
  %1288 = vmatprep.subr.bf16.mxu0 0
  %1289 = vmatpush1.bf16.msra.mxu0 0
  %1290 = vmatprep.subr.bf16.mxu0 0
  %1291 = vmatpush1.bf16.msra.mxu0 0
  %1292 = vmatprep.subr.bf16.mxu0 0
  %1293 = vmatpush1.bf16.msra.mxu0 0
  %1294 = vmatprep.subr.bf16.mxu0 0
  %1295 = vmatpush1.bf16.msra.mxu0 0
  %1296 = vmatprep.subr.bf16.mxu0 0
  %1297 = vmatpush1.bf16.msra.mxu0 0
  %1298 = vmatprep.subr.bf16.mxu0 0
  %1299 = vmatpush1.bf16.msra.mxu0 0
  %1300 = vmatprep.subr.bf16.mxu0 0
  %1301 = vmatpush1.bf16.msra.mxu0 0
  %1302 = vmatprep.subr.bf16.mxu0 0
  %1303 = vmatpush1.bf16.msra.mxu0 0
  %1304 = vmatprep.subr.bf16.mxu0 0
  %1305 = vmatpush1.bf16.msra.mxu0 0
  %1306 = vmatprep.mubr.bf16.mxu0 0
  %1307 = vmatmul.mubr.bf16.gmra.mrb[0].mxu0 %v1186
  %v1308 = vpop.f32.mrb[0].mxu0
  %v1309 = vadd.f32 0.0, %v1308
  %v1310 = vpop.f32.mrb[0].mxu0
  %v1311 = vadd.f32 0.0, %v1310
  %v1312 = vpop.f32.mrb[0].mxu0
  %v1313 = vadd.f32 0.0, %v1312
  %v1314 = vpop.f32.mrb[0].mxu0
  %v1315 = vadd.f32 0.0, %v1314
  %1316 = vdwg.mxu0
  %v1317 = vadd.f32 %v1138, %v1223
  %v1318 = vadd.f32 %v1139, %v1225
  %v1319 = vadd.f32 %v1140, %v1266
  %v1320 = vadd.f32 %v1141, %v1268
  %v1321 = vadd.f32 %v1142, %v1309
  %v1322 = vadd.f32 %v1143, %v1311
  %v1323 = vadd.f32 %v1144, %v1227
  %v1324 = vadd.f32 %v1145, %v1229
  %v1325 = vadd.f32 %v1146, %v1270
  %v1326 = vadd.f32 %v1147, %v1272
  %v1327 = vadd.f32 %v1148, %v1313
  %v1328 = vadd.f32 %v1149, %v1315
  %s1329 = scalar_lea.vmem %s1, 56
  %v1330 = vld [vmem:[%s1329] sm:$0xf]
  %v1331 = vld [vmem:[%s1329 + $0x4] sm:$0xf]
  %v1334 = vunpack.c.l.b16 %v1330
  %v1335 = vunpack.c.l.b16 %v1331
  %v1336 = vpack.c.b16 %v1335, %v1334
  %1337 = vrot.lane.b32.xlu0 %v256, 91
  %v1338 = vpop.permute.xlu0 %1337
  %1339 = vrot.lane.b32.xlu0 %v257, 91
  %v1340 = vpop.permute.xlu0 %1339
  %1341 = vrot.lane.b32.xlu0 %v258, 91
  %v1342 = vpop.permute.xlu0 %1341
  %1343 = vrot.lane.b32.xlu0 %v259, 91
  %v1344 = vpop.permute.xlu0 %1343
  %1345 = vrot.lane.b32.xlu0 %v260, 91
  %v1346 = vpop.permute.xlu0 %1345
  %1347 = vrot.lane.b32.xlu0 %v261, 91
  %v1348 = vpop.permute.xlu0 %1347
  %1349 = vrot.lane.b32.xlu0 %v262, 91
  %v1350 = vpop.permute.xlu0 %1349
  %vm1351 = vcmask 744448
  %v1352 = vsel %vm1351, %v1338, %v1340
  %v1353 = vsel %vm1351, %v1340, %v1342
  %v1354 = vsel %vm1351, %v1342, %v1344
  %v1355 = vsel %vm1351, %v1344, %v1346
  %v1356 = vsel %vm1351, %v1346, %v1348
  %v1357 = vsel %vm1351, %v1348, %v1350
  %v1365 = vsel %vm73, %v1336, 0
  %1367 = vmatprep.subr.bf16.mxu0 %v1353
  %1368 = vmatpush1.bf16.msra.mxu0 %v1352
  %1369 = vmatprep.subr.bf16.mxu0 0
  %1370 = vmatpush1.bf16.msra.mxu0 0
  %1371 = vmatprep.subr.bf16.mxu0 0
  %1372 = vmatpush1.bf16.msra.mxu0 0
  %1373 = vmatprep.subr.bf16.mxu0 0
  %1374 = vmatpush1.bf16.msra.mxu0 0
  %1375 = vmatprep.subr.bf16.mxu0 0
  %1376 = vmatpush1.bf16.msra.mxu0 0
  %1377 = vmatprep.subr.bf16.mxu0 0
  %1378 = vmatpush1.bf16.msra.mxu0 0
  %1379 = vmatprep.subr.bf16.mxu0 0
  %1380 = vmatpush1.bf16.msra.mxu0 0
  %1381 = vmatprep.subr.bf16.mxu0 0
  %1382 = vmatpush1.bf16.msra.mxu0 0
  %1383 = vmatprep.subr.bf16.mxu0 0
  %1384 = vmatpush1.bf16.msra.mxu0 0
  %1385 = vmatprep.subr.bf16.mxu0 0
  %1386 = vmatpush1.bf16.msra.mxu0 0
  %1387 = vmatprep.subr.bf16.mxu0 0
  %1388 = vmatpush1.bf16.msra.mxu0 0
  %1389 = vmatprep.subr.bf16.mxu0 0
  %1390 = vmatpush1.bf16.msra.mxu0 0
  %1391 = vmatprep.subr.bf16.mxu0 0
  %1392 = vmatpush1.bf16.msra.mxu0 0
  %1393 = vmatprep.subr.bf16.mxu0 0
  %1394 = vmatpush1.bf16.msra.mxu0 0
  %1395 = vmatprep.subr.bf16.mxu0 0
  %1396 = vmatpush1.bf16.msra.mxu0 0
  %1397 = vmatprep.subr.bf16.mxu0 0
  %1398 = vmatpush1.bf16.msra.mxu0 0
  %1399 = vmatprep.mubr.bf16.mxu0 0
  %1400 = vmatmul.mubr.bf16.gmra.mrb[0].mxu0 %v1365
  %v1401 = vpop.f32.mrb[0].mxu0
  %v1402 = vadd.f32 0.0, %v1401
  %v1403 = vpop.f32.mrb[0].mxu0
  %v1404 = vadd.f32 0.0, %v1403
  %v1405 = vpop.f32.mrb[0].mxu0
  %v1406 = vadd.f32 0.0, %v1405
  %v1407 = vpop.f32.mrb[0].mxu0
  %v1408 = vadd.f32 0.0, %v1407
  %1409 = vdwg.mxu0
  %1410 = vmatprep.subr.bf16.mxu0 %v1355
  %1411 = vmatpush1.bf16.msra.mxu0 %v1354
  %1412 = vmatprep.subr.bf16.mxu0 0
  %1413 = vmatpush1.bf16.msra.mxu0 0
  %1414 = vmatprep.subr.bf16.mxu0 0
  %1415 = vmatpush1.bf16.msra.mxu0 0
  %1416 = vmatprep.subr.bf16.mxu0 0
  %1417 = vmatpush1.bf16.msra.mxu0 0
  %1418 = vmatprep.subr.bf16.mxu0 0
  %1419 = vmatpush1.bf16.msra.mxu0 0
  %1420 = vmatprep.subr.bf16.mxu0 0
  %1421 = vmatpush1.bf16.msra.mxu0 0
  %1422 = vmatprep.subr.bf16.mxu0 0
  %1423 = vmatpush1.bf16.msra.mxu0 0
  %1424 = vmatprep.subr.bf16.mxu0 0
  %1425 = vmatpush1.bf16.msra.mxu0 0
  %1426 = vmatprep.subr.bf16.mxu0 0
  %1427 = vmatpush1.bf16.msra.mxu0 0
  %1428 = vmatprep.subr.bf16.mxu0 0
  %1429 = vmatpush1.bf16.msra.mxu0 0
  %1430 = vmatprep.subr.bf16.mxu0 0
  %1431 = vmatpush1.bf16.msra.mxu0 0
  %1432 = vmatprep.subr.bf16.mxu0 0
  %1433 = vmatpush1.bf16.msra.mxu0 0
  %1434 = vmatprep.subr.bf16.mxu0 0
  %1435 = vmatpush1.bf16.msra.mxu0 0
  %1436 = vmatprep.subr.bf16.mxu0 0
  %1437 = vmatpush1.bf16.msra.mxu0 0
  %1438 = vmatprep.subr.bf16.mxu0 0
  %1439 = vmatpush1.bf16.msra.mxu0 0
  %1440 = vmatprep.subr.bf16.mxu0 0
  %1441 = vmatpush1.bf16.msra.mxu0 0
  %1442 = vmatprep.mubr.bf16.mxu0 0
  %1443 = vmatmul.mubr.bf16.gmra.mrb[0].mxu0 %v1365
  %v1444 = vpop.f32.mrb[0].mxu0
  %v1445 = vadd.f32 0.0, %v1444
  %v1446 = vpop.f32.mrb[0].mxu0
  %v1447 = vadd.f32 0.0, %v1446
  %v1448 = vpop.f32.mrb[0].mxu0
  %v1449 = vadd.f32 0.0, %v1448
  %v1450 = vpop.f32.mrb[0].mxu0
  %v1451 = vadd.f32 0.0, %v1450
  %1452 = vdwg.mxu0
  %1453 = vmatprep.subr.bf16.mxu0 %v1357
  %1454 = vmatpush1.bf16.msra.mxu0 %v1356
  %1455 = vmatprep.subr.bf16.mxu0 0
  %1456 = vmatpush1.bf16.msra.mxu0 0
  %1457 = vmatprep.subr.bf16.mxu0 0
  %1458 = vmatpush1.bf16.msra.mxu0 0
  %1459 = vmatprep.subr.bf16.mxu0 0
  %1460 = vmatpush1.bf16.msra.mxu0 0
  %1461 = vmatprep.subr.bf16.mxu0 0
  %1462 = vmatpush1.bf16.msra.mxu0 0
  %1463 = vmatprep.subr.bf16.mxu0 0
  %1464 = vmatpush1.bf16.msra.mxu0 0
  %1465 = vmatprep.subr.bf16.mxu0 0
  %1466 = vmatpush1.bf16.msra.mxu0 0
  %1467 = vmatprep.subr.bf16.mxu0 0
  %1468 = vmatpush1.bf16.msra.mxu0 0
  %1469 = vmatprep.subr.bf16.mxu0 0
  %1470 = vmatpush1.bf16.msra.mxu0 0
  %1471 = vmatprep.subr.bf16.mxu0 0
  %1472 = vmatpush1.bf16.msra.mxu0 0
  %1473 = vmatprep.subr.bf16.mxu0 0
  %1474 = vmatpush1.bf16.msra.mxu0 0
  %1475 = vmatprep.subr.bf16.mxu0 0
  %1476 = vmatpush1.bf16.msra.mxu0 0
  %1477 = vmatprep.subr.bf16.mxu0 0
  %1478 = vmatpush1.bf16.msra.mxu0 0
  %1479 = vmatprep.subr.bf16.mxu0 0
  %1480 = vmatpush1.bf16.msra.mxu0 0
  %1481 = vmatprep.subr.bf16.mxu0 0
  %1482 = vmatpush1.bf16.msra.mxu0 0
  %1483 = vmatprep.subr.bf16.mxu0 0
  %1484 = vmatpush1.bf16.msra.mxu0 0
  %1485 = vmatprep.mubr.bf16.mxu0 0
  %1486 = vmatmul.mubr.bf16.gmra.mrb[0].mxu0 %v1365
  %v1487 = vpop.f32.mrb[0].mxu0
  %v1488 = vadd.f32 0.0, %v1487
  %v1489 = vpop.f32.mrb[0].mxu0
  %v1490 = vadd.f32 0.0, %v1489
  %v1491 = vpop.f32.mrb[0].mxu0
  %v1492 = vadd.f32 0.0, %v1491
  %v1493 = vpop.f32.mrb[0].mxu0
  %v1494 = vadd.f32 0.0, %v1493
  %1495 = vdwg.mxu0
  %v1496 = vadd.f32 %v1317, %v1402
  %v1497 = vadd.f32 %v1318, %v1404
  %v1498 = vadd.f32 %v1319, %v1445
  %v1499 = vadd.f32 %v1320, %v1447
  %v1500 = vadd.f32 %v1321, %v1488
  %v1501 = vadd.f32 %v1322, %v1490
  %v1502 = vadd.f32 %v1323, %v1406
  %v1503 = vadd.f32 %v1324, %v1408
  %v1504 = vadd.f32 %v1325, %v1449
  %v1505 = vadd.f32 %v1326, %v1451
  %v1506 = vadd.f32 %v1327, %v1492
  %v1507 = vadd.f32 %v1328, %v1494
  %s1508 = scalar_lea.vmem %s1, 64
  %v1509 = vld [vmem:[%s1508] sm:$0xf]
  %v1510 = vld [vmem:[%s1508 + $0x4] sm:$0xf]
  %v1513 = vunpack.c.l.b16 %v1509
  %v1514 = vunpack.c.l.b16 %v1510
  %v1515 = vpack.c.b16 %v1514, %v1513
  %1516 = vrot.lane.b32.xlu0 %v256, 90
  %v1517 = vpop.permute.xlu0 %1516
  %1518 = vrot.lane.b32.xlu0 %v257, 90
  %v1519 = vpop.permute.xlu0 %1518
  %1520 = vrot.lane.b32.xlu0 %v258, 90
  %v1521 = vpop.permute.xlu0 %1520
  %1522 = vrot.lane.b32.xlu0 %v259, 90
  %v1523 = vpop.permute.xlu0 %1522
  %1524 = vrot.lane.b32.xlu0 %v260, 90
  %v1525 = vpop.permute.xlu0 %1524
  %1526 = vrot.lane.b32.xlu0 %v261, 90
  %v1527 = vpop.permute.xlu0 %1526
  %1528 = vrot.lane.b32.xlu0 %v262, 90
  %v1529 = vpop.permute.xlu0 %1528
  %vm1530 = vcmask 736256
  %v1531 = vsel %vm1530, %v1517, %v1519
  %v1532 = vsel %vm1530, %v1519, %v1521
  %v1533 = vsel %vm1530, %v1521, %v1523
  %v1534 = vsel %vm1530, %v1523, %v1525
  %v1535 = vsel %vm1530, %v1525, %v1527
  %v1536 = vsel %vm1530, %v1527, %v1529
  %v1544 = vsel %vm73, %v1515, 0
  %1546 = vmatprep.subr.bf16.mxu0 %v1532
  %1547 = vmatpush1.bf16.msra.mxu0 %v1531
  %1548 = vmatprep.subr.bf16.mxu0 0
  %1549 = vmatpush1.bf16.msra.mxu0 0
  %1550 = vmatprep.subr.bf16.mxu0 0
  %1551 = vmatpush1.bf16.msra.mxu0 0
  %1552 = vmatprep.subr.bf16.mxu0 0
  %1553 = vmatpush1.bf16.msra.mxu0 0
  %1554 = vmatprep.subr.bf16.mxu0 0
  %1555 = vmatpush1.bf16.msra.mxu0 0
  %1556 = vmatprep.subr.bf16.mxu0 0
  %1557 = vmatpush1.bf16.msra.mxu0 0
  %1558 = vmatprep.subr.bf16.mxu0 0
  %1559 = vmatpush1.bf16.msra.mxu0 0
  %1560 = vmatprep.subr.bf16.mxu0 0
  %1561 = vmatpush1.bf16.msra.mxu0 0
  %1562 = vmatprep.subr.bf16.mxu0 0
  %1563 = vmatpush1.bf16.msra.mxu0 0
  %1564 = vmatprep.subr.bf16.mxu0 0
  %1565 = vmatpush1.bf16.msra.mxu0 0
  %1566 = vmatprep.subr.bf16.mxu0 0
  %1567 = vmatpush1.bf16.msra.mxu0 0
  %1568 = vmatprep.subr.bf16.mxu0 0
  %1569 = vmatpush1.bf16.msra.mxu0 0
  %1570 = vmatprep.subr.bf16.mxu0 0
  %1571 = vmatpush1.bf16.msra.mxu0 0
  %1572 = vmatprep.subr.bf16.mxu0 0
  %1573 = vmatpush1.bf16.msra.mxu0 0
  %1574 = vmatprep.subr.bf16.mxu0 0
  %1575 = vmatpush1.bf16.msra.mxu0 0
  %1576 = vmatprep.subr.bf16.mxu0 0
  %1577 = vmatpush1.bf16.msra.mxu0 0
  %1578 = vmatprep.mubr.bf16.mxu0 0
  %1579 = vmatmul.mubr.bf16.gmra.mrb[0].mxu0 %v1544
  %v1580 = vpop.f32.mrb[0].mxu0
  %v1581 = vadd.f32 0.0, %v1580
  %v1582 = vpop.f32.mrb[0].mxu0
  %v1583 = vadd.f32 0.0, %v1582
  %v1584 = vpop.f32.mrb[0].mxu0
  %v1585 = vadd.f32 0.0, %v1584
  %v1586 = vpop.f32.mrb[0].mxu0
  %v1587 = vadd.f32 0.0, %v1586
  %1588 = vdwg.mxu0
  %1589 = vmatprep.subr.bf16.mxu0 %v1534
  %1590 = vmatpush1.bf16.msra.mxu0 %v1533
  %1591 = vmatprep.subr.bf16.mxu0 0
  %1592 = vmatpush1.bf16.msra.mxu0 0
  %1593 = vmatprep.subr.bf16.mxu0 0
  %1594 = vmatpush1.bf16.msra.mxu0 0
  %1595 = vmatprep.subr.bf16.mxu0 0
  %1596 = vmatpush1.bf16.msra.mxu0 0
  %1597 = vmatprep.subr.bf16.mxu0 0
  %1598 = vmatpush1.bf16.msra.mxu0 0
  %1599 = vmatprep.subr.bf16.mxu0 0
  %1600 = vmatpush1.bf16.msra.mxu0 0
  %1601 = vmatprep.subr.bf16.mxu0 0
  %1602 = vmatpush1.bf16.msra.mxu0 0
  %1603 = vmatprep.subr.bf16.mxu0 0
  %1604 = vmatpush1.bf16.msra.mxu0 0
  %1605 = vmatprep.subr.bf16.mxu0 0
  %1606 = vmatpush1.bf16.msra.mxu0 0
  %1607 = vmatprep.subr.bf16.mxu0 0
  %1608 = vmatpush1.bf16.msra.mxu0 0
  %1609 = vmatprep.subr.bf16.mxu0 0
  %1610 = vmatpush1.bf16.msra.mxu0 0
  %1611 = vmatprep.subr.bf16.mxu0 0
  %1612 = vmatpush1.bf16.msra.mxu0 0
  %1613 = vmatprep.subr.bf16.mxu0 0
  %1614 = vmatpush1.bf16.msra.mxu0 0
  %1615 = vmatprep.subr.bf16.mxu0 0
  %1616 = vmatpush1.bf16.msra.mxu0 0
  %1617 = vmatprep.subr.bf16.mxu0 0
  %1618 = vmatpush1.bf16.msra.mxu0 0
  %1619 = vmatprep.subr.bf16.mxu0 0
  %1620 = vmatpush1.bf16.msra.mxu0 0
  %1621 = vmatprep.mubr.bf16.mxu0 0
  %1622 = vmatmul.mubr.bf16.gmra.mrb[0].mxu0 %v1544
  %v1623 = vpop.f32.mrb[0].mxu0
  %v1624 = vadd.f32 0.0, %v1623
  %v1625 = vpop.f32.mrb[0].mxu0
  %v1626 = vadd.f32 0.0, %v1625
  %v1627 = vpop.f32.mrb[0].mxu0
  %v1628 = vadd.f32 0.0, %v1627
  %v1629 = vpop.f32.mrb[0].mxu0
  %v1630 = vadd.f32 0.0, %v1629
  %1631 = vdwg.mxu0
  %1632 = vmatprep.subr.bf16.mxu0 %v1536
  %1633 = vmatpush1.bf16.msra.mxu0 %v1535
  %1634 = vmatprep.subr.bf16.mxu0 0
  %1635 = vmatpush1.bf16.msra.mxu0 0
  %1636 = vmatprep.subr.bf16.mxu0 0
  %1637 = vmatpush1.bf16.msra.mxu0 0
  %1638 = vmatprep.subr.bf16.mxu0 0
  %1639 = vmatpush1.bf16.msra.mxu0 0
  %1640 = vmatprep.subr.bf16.mxu0 0
  %1641 = vmatpush1.bf16.msra.mxu0 0
  %1642 = vmatprep.subr.bf16.mxu0 0
  %1643 = vmatpush1.bf16.msra.mxu0 0
  %1644 = vmatprep.subr.bf16.mxu0 0
  %1645 = vmatpush1.bf16.msra.mxu0 0
  %1646 = vmatprep.subr.bf16.mxu0 0
  %1647 = vmatpush1.bf16.msra.mxu0 0
  %1648 = vmatprep.subr.bf16.mxu0 0
  %1649 = vmatpush1.bf16.msra.mxu0 0
  %1650 = vmatprep.subr.bf16.mxu0 0
  %1651 = vmatpush1.bf16.msra.mxu0 0
  %1652 = vmatprep.subr.bf16.mxu0 0
  %1653 = vmatpush1.bf16.msra.mxu0 0
  %1654 = vmatprep.subr.bf16.mxu0 0
  %1655 = vmatpush1.bf16.msra.mxu0 0
  %1656 = vmatprep.subr.bf16.mxu0 0
  %1657 = vmatpush1.bf16.msra.mxu0 0
  %1658 = vmatprep.subr.bf16.mxu0 0
  %1659 = vmatpush1.bf16.msra.mxu0 0
  %1660 = vmatprep.subr.bf16.mxu0 0
  %1661 = vmatpush1.bf16.msra.mxu0 0
  %1662 = vmatprep.subr.bf16.mxu0 0
  %1663 = vmatpush1.bf16.msra.mxu0 0
  %1664 = vmatprep.mubr.bf16.mxu0 0
  %1665 = vmatmul.mubr.bf16.gmra.mrb[0].mxu0 %v1544
  %v1666 = vpop.f32.mrb[0].mxu0
  %v1667 = vadd.f32 0.0, %v1666
  %v1668 = vpop.f32.mrb[0].mxu0
  %v1669 = vadd.f32 0.0, %v1668
  %v1670 = vpop.f32.mrb[0].mxu0
  %v1671 = vadd.f32 0.0, %v1670
  %v1672 = vpop.f32.mrb[0].mxu0
  %v1673 = vadd.f32 0.0, %v1672
  %1674 = vdwg.mxu0
  %v1675 = vadd.f32 %v1496, %v1581
  %v1676 = vadd.f32 %v1497, %v1583
  %v1677 = vadd.f32 %v1498, %v1624
  %v1678 = vadd.f32 %v1499, %v1626
  %v1679 = vadd.f32 %v1500, %v1667
  %v1680 = vadd.f32 %v1501, %v1669
  %v1681 = vadd.f32 %v1502, %v1585
  %v1682 = vadd.f32 %v1503, %v1587
  %v1683 = vadd.f32 %v1504, %v1628
  %v1684 = vadd.f32 %v1505, %v1630
  %v1685 = vadd.f32 %v1506, %v1671
  %v1686 = vadd.f32 %v1507, %v1673
  %v1687 = vld [vmem:[%s3] sm:$0xff]
  %v1688 = vld [vmem:[%s3 + $0x8] sm:$0xff]
  %v1689 = vld [vmem:[%s3 + $0x10] sm:$0xff]
  %v1690 = vld [vmem:[%s3 + $0x18] sm:$0xff]
  %v1691 = vld [vmem:[%s3 + $0x20] sm:$0xff]
  %v1692 = vld [vmem:[%s3 + $0x28] sm:$0xff]
  %v1693 = vunpack.c.l.bf16 %v1687
  %v1694 = vunpack.c.h.bf16 %v1687
  %v1695 = vunpack.c.l.bf16 %v1688
  %v1696 = vunpack.c.h.bf16 %v1688
  %v1697 = vunpack.c.l.bf16 %v1689
  %v1698 = vunpack.c.h.bf16 %v1689
  %v1699 = vunpack.c.l.bf16 %v1690
  %v1700 = vunpack.c.h.bf16 %v1690
  %v1701 = vunpack.c.l.bf16 %v1691
  %v1702 = vunpack.c.h.bf16 %v1691
  %v1703 = vunpack.c.l.bf16 %v1692
  %v1704 = vunpack.c.h.bf16 %v1692
  %v1705 = vadd.f32 %v1675, %v1693
  %v1706 = vadd.f32 %v1676, %v1694
  %v1707 = vadd.f32 %v1677, %v1695
  %v1708 = vadd.f32 %v1678, %v1696
  %v1709 = vadd.f32 %v1679, %v1697
  %v1710 = vadd.f32 %v1680, %v1698
  %v1711 = vadd.f32 %v1681, %v1699
  %v1712 = vadd.f32 %v1682, %v1700
  %v1713 = vadd.f32 %v1683, %v1701
  %v1714 = vadd.f32 %v1684, %v1702
  %v1715 = vadd.f32 %v1685, %v1703
  %v1716 = vadd.f32 %v1686, %v1704
  %v1717 = vmax.f32 %v1705, 0.0
  %v1718 = vmax.f32 %v1706, 0.0
  %v1719 = vmax.f32 %v1707, 0.0
  %v1720 = vmax.f32 %v1708, 0.0
  %v1721 = vmax.f32 %v1709, 0.0
  %v1722 = vmax.f32 %v1710, 0.0
  %v1723 = vmax.f32 %v1711, 0.0
  %v1724 = vmax.f32 %v1712, 0.0
  %v1725 = vmax.f32 %v1713, 0.0
  %v1726 = vmax.f32 %v1714, 0.0
  %v1727 = vmax.f32 %v1715, 0.0
  %v1728 = vmax.f32 %v1716, 0.0
  %v1729 = vpack.c.bf16 %v1723, %v1717
  %v1730 = vpack.c.bf16 %v1724, %v1718
  %v1731 = vpack.c.bf16 %v1725, %v1719
  %v1732 = vpack.c.bf16 %v1726, %v1720
  %v1733 = vpack.c.bf16 %v1727, %v1721
  %v1734 = vpack.c.bf16 %v1728, %v1722
  %v1741 = vunpack.c.l.b16 %v1729
  %v1742 = vunpack.c.l.b16 %v1730
  %v1743 = vunpack.c.l.b16 %v1731
  %v1744 = vunpack.c.l.b16 %v1732
  %v1745 = vunpack.c.l.b16 %v1733
  %v1746 = vunpack.c.l.b16 %v1734
  %v1747 = vunpack.c.h.b16 %v1729
  %v1748 = vunpack.c.h.b16 %v1730
  %v1749 = vunpack.c.h.b16 %v1731
  %v1750 = vunpack.c.h.b16 %v1732
  %v1751 = vunpack.c.h.b16 %v1733
  %v1752 = vunpack.c.h.b16 %v1734
  %v1753 = vpack.c.b16 %v1742, %v1741
  %v1754 = vpack.c.b16 %v1744, %v1743
  %v1755 = vpack.c.b16 %v1746, %v1745
  %v1756 = vpack.c.b16 %v1748, %v1747
  %v1757 = vpack.c.b16 %v1750, %v1749
  %v1758 = vpack.c.b16 %v1752, %v1751
  %1765 = vst [vmem:[%s4] sm:$0xff] %v1753
  %1766 = vst [vmem:[%s4 + $0x8] sm:$0xff] %v1754
  %1767 = vst [vmem:[%s4 + $0x10] sm:$0xff] %v1755
  %1768 = vst [vmem:[%s4 + $0x18] sm:$0xff] %v1756
  %1769 = vst [vmem:[%s4 + $0x20] sm:$0xff] %v1757
  %1770 = vst [vmem:[%s4 + $0x28] sm:$0xff] %v1758
  // Predicated region
  $region18: #{resnet_forward.12} parent=0 // pred_check
    _
  $region19: #{resnet_forward.12} parent=0 // pred_check_branch
    %1772 = sbr.rel (0) target = $region21
  $region20: #{resnet_forward.12} parent=0 // pred_region
    _
  $region21: #{resnet_forward.12} parent=0 // pred_fallthru
    _
  // Predicated region
  $region22: #{resnet_forward.12} parent=0 // pred_check
    _
  $region23: #{resnet_forward.12} parent=0 // pred_check_branch
    %1774 = sbr.rel (0) target = $region25
  $region24: #{resnet_forward.12} parent=0 // pred_region
    _
  $region25: #{resnet_forward.12} parent=0 // pred_fallthru
    _

// kernel: resnet_forward.14
$region0: #{resnet_forward.14}
  #allocation0 [shape = 'u32[]', space=smem, size = 0x4, offset = 0x4, fixed_abs, tag = 'smem constant byte address 0x4 - core index']
  #allocation1 [shape = 'u32[144,128]{1,0:T(1,128)}', space=vmem, size = 0x12000, scoped, tag = 'internal scratch']
  %s0 = inlined_call_operand.vmem [shape: bf16[16,384], index: 0, kind: input, shape index: {}]
  %s1 = inlined_call_operand.vmem [shape: bf16[9,16,16], index: 1, kind: input, shape index: {}]
  %s2 = inlined_call_operand.vmem [shape: f32[16,1], index: 2, kind: input, shape index: {}]
  %s3 = inlined_call_operand.vmem [shape: bf16[16,256], index: 3, kind: input, shape index: {}]
  %s4 = inlined_call_operand.vmem [shape: bf16[16,16], index: 4, kind: input, shape index: {}]
  %s5 = inlined_call_operand.vmem [shape: bf16[16,256], index: 5, kind: output, shape index: {}]
  %s6 = sld [smem:[#allocation0]]
  $region30: #{resnet_forward.14} parent=0
    _
  %s8 = ssub.s32 1, %s6
  %s9 = scalar_select 0, %s8, %s6
  // Predicated region
  $region2: #{resnet_forward.14} parent=0 // pred_check
    _
  $region3: #{resnet_forward.14} parent=0 // pred_check_branch
    %11 = sbr.rel (0) target = $region5
  $region4: #{resnet_forward.14} parent=0 // pred_region
    _
  $region5: #{resnet_forward.14} parent=0 // pred_fallthru
    _
  // Predicated region
  $region6: #{resnet_forward.14} parent=0 // pred_check
    _
  $region7: #{resnet_forward.14} parent=0 // pred_check_branch
    %13 = sbr.rel (0) target = $region9
  $region8: #{resnet_forward.14} parent=0 // pred_region
    _
  $region9: #{resnet_forward.14} parent=0 // pred_fallthru
    _
  // Predicated region
  $region10: #{resnet_forward.14} parent=0 // pred_check
    _
  $region11: #{resnet_forward.14} parent=0 // pred_check_branch
    %15 = sbr.rel (0) target = $region13
  $region12: #{resnet_forward.14} parent=0 // pred_region
    _
  $region13: #{resnet_forward.14} parent=0 // pred_fallthru
    _
  // Predicated region
  $region14: #{resnet_forward.14} parent=0 // pred_check
    _
  $region15: #{resnet_forward.14} parent=0 // pred_check_branch
    %17 = sbr.rel (0) target = $region17
  $region16: #{resnet_forward.14} parent=0 // pred_region
    _
  $region17: #{resnet_forward.14} parent=0 // pred_fallthru
    _
  // Predicated region
  $region18: #{resnet_forward.14} parent=0 // pred_check
    _
  $region19: #{resnet_forward.14} parent=0 // pred_check_branch
    %19 = sbr.rel (0) target = $region21
  $region20: #{resnet_forward.14} parent=0 // pred_region
    _
  $region21: #{resnet_forward.14} parent=0 // pred_fallthru
    _
  %v21 = vld [vmem:[%s2] sm:$0xff]
  %v22 = vld [vmem:[%s2 + $0x8] sm:$0xff]
  %24 = vset.pattern.permute.xlu0 0
  %25 = vperm.xlu0 %24, %v21
  %v26 = vpop.permute.xlu0 %25
  %29 = vset.pattern.permute.xlu0 0
  %30 = vperm.xlu0 %29, %v22
  %v31 = vpop.permute.xlu0 %30
  %v33 = vld [vmem:[%s1] sm:$0xf]
  %v34 = vld [vmem:[%s1 + $0x4] sm:$0xf]
  %v35 = vld [vmem:[%s0] sm:$0xff]
  %v36 = vld [vmem:[%s0 + $0xc] sm:$0xff]
  %v39 = vunpack.c.l.b16 %v33
  %v40 = vunpack.c.l.b16 %v34
  %v41 = vpack.c.b16 %v40, %v39
  %v44 = vunpack.c.l.b16 %v35
  %v45 = vunpack.c.h.b16 %v35
  %v46 = vunpack.c.l.b16 %v36
  %v47 = vunpack.c.h.b16 %v36
  %v48 = vpack.c.b16 %v46, %v44
  %v49 = vpack.c.b16 %v47, %v45
  %vm52 = vcmask 130048
  %v54 = vsel %vm52, %v41, 0
  %56 = vmatprep.subr.bf16.mxu0 %v49
  %57 = vmatpush1.bf16.msra.mxu0 %v48
  %58 = vmatprep.subr.bf16.mxu0 0
  %59 = vmatpush1.bf16.msra.mxu0 0
  %60 = vmatprep.subr.bf16.mxu0 0
  %61 = vmatpush1.bf16.msra.mxu0 0
  %62 = vmatprep.subr.bf16.mxu0 0
  %63 = vmatpush1.bf16.msra.mxu0 0
  %64 = vmatprep.subr.bf16.mxu0 0
  %65 = vmatpush1.bf16.msra.mxu0 0
  %66 = vmatprep.subr.bf16.mxu0 0
  %67 = vmatpush1.bf16.msra.mxu0 0
  %68 = vmatprep.subr.bf16.mxu0 0
  %69 = vmatpush1.bf16.msra.mxu0 0
  %70 = vmatprep.subr.bf16.mxu0 0
  %71 = vmatpush1.bf16.msra.mxu0 0
  %72 = vmatprep.subr.bf16.mxu0 0
  %73 = vmatpush1.bf16.msra.mxu0 0
  %74 = vmatprep.subr.bf16.mxu0 0
  %75 = vmatpush1.bf16.msra.mxu0 0
  %76 = vmatprep.subr.bf16.mxu0 0
  %77 = vmatpush1.bf16.msra.mxu0 0
  %78 = vmatprep.subr.bf16.mxu0 0
  %79 = vmatpush1.bf16.msra.mxu0 0
  %80 = vmatprep.subr.bf16.mxu0 0
  %81 = vmatpush1.bf16.msra.mxu0 0
  %82 = vmatprep.subr.bf16.mxu0 0
  %83 = vmatpush1.bf16.msra.mxu0 0
  %84 = vmatprep.subr.bf16.mxu0 0
  %85 = vmatpush1.bf16.msra.mxu0 0
  %86 = vmatprep.subr.bf16.mxu0 0
  %87 = vmatpush1.bf16.msra.mxu0 0
  %88 = vmatprep.mubr.bf16.mxu0 0
  %89 = vmatmul.mubr.bf16.gmra.mrb[0].mxu0 %v54
  %v90 = vpop.f32.mrb[0].mxu0
  %v91 = vadd.f32 0.0, %v90
  %v92 = vpop.f32.mrb[0].mxu0
  %v93 = vadd.f32 0.0, %v92
  %v94 = vpop.f32.mrb[0].mxu0
  %v95 = vadd.f32 0.0, %v94
  %v96 = vpop.f32.mrb[0].mxu0
  %v97 = vadd.f32 0.0, %v96
  %98 = vdwg.mxu0
  %v99 = vadd.f32 %v26, %v91
  %v100 = vadd.f32 %v26, %v93
  %v101 = vadd.f32 %v31, %v95
  %v102 = vadd.f32 %v31, %v97
  %s103 = scalar_lea.vmem %s1, 8
  %v104 = vld [vmem:[%s103] sm:$0xf]
  %v105 = vld [vmem:[%s103 + $0x4] sm:$0xf]
  %v106 = vld [vmem:[%s0] sm:$0xff]
  %v107 = vld [vmem:[%s0 + $0x8] sm:$0xf]
  %v108 = vld [vmem:[%s0 + $0xc] sm:$0xff]
  %v109 = vld [vmem:[%s0 + $0x14] sm:$0xf]
  %v112 = vunpack.c.l.b16 %v104
  %v113 = vunpack.c.l.b16 %v105
  %v114 = vpack.c.b16 %v113, %v112
  %v119 = vunpack.c.l.b16 %v106
  %v120 = vunpack.c.h.b16 %v106
  %v121 = vunpack.c.l.b16 %v107
  %v122 = vunpack.c.l.b16 %v108
  %v123 = vunpack.c.h.b16 %v108
  %v124 = vunpack.c.l.b16 %v109
  %v125 = vpack.c.b16 %v122, %v119
  %v126 = vpack.c.b16 %v123, %v120
  %v127 = vpack.c.b16 %v124, %v121
  %128 = vrot.lane.b32.xlu0 %v125, 127
  %v129 = vpop.permute.xlu0 %128
  %130 = vrot.lane.b32.xlu0 %v126, 127
  %v131 = vpop.permute.xlu0 %130
  %132 = vrot.lane.b32.xlu0 %v127, 127
  %v133 = vpop.permute.xlu0 %132
  %vm134 = vcmask 1039360
  %v135 = vsel %vm134, %v129, %v131
  %v136 = vsel %vm134, %v131, %v133
  %v140 = vsel %vm52, %v114, 0
  %142 = vmatprep.subr.bf16.mxu0 %v136
  %143 = vmatpush1.bf16.msra.mxu0 %v135
  %144 = vmatprep.subr.bf16.mxu0 0
  %145 = vmatpush1.bf16.msra.mxu0 0
  %146 = vmatprep.subr.bf16.mxu0 0
  %147 = vmatpush1.bf16.msra.mxu0 0
  %148 = vmatprep.subr.bf16.mxu0 0
  %149 = vmatpush1.bf16.msra.mxu0 0
  %150 = vmatprep.subr.bf16.mxu0 0
  %151 = vmatpush1.bf16.msra.mxu0 0
  %152 = vmatprep.subr.bf16.mxu0 0
  %153 = vmatpush1.bf16.msra.mxu0 0
  %154 = vmatprep.subr.bf16.mxu0 0
  %155 = vmatpush1.bf16.msra.mxu0 0
  %156 = vmatprep.subr.bf16.mxu0 0
  %157 = vmatpush1.bf16.msra.mxu0 0
  %158 = vmatprep.subr.bf16.mxu0 0
  %159 = vmatpush1.bf16.msra.mxu0 0
  %160 = vmatprep.subr.bf16.mxu0 0
  %161 = vmatpush1.bf16.msra.mxu0 0
  %162 = vmatprep.subr.bf16.mxu0 0
  %163 = vmatpush1.bf16.msra.mxu0 0
  %164 = vmatprep.subr.bf16.mxu0 0
  %165 = vmatpush1.bf16.msra.mxu0 0
  %166 = vmatprep.subr.bf16.mxu0 0
  %167 = vmatpush1.bf16.msra.mxu0 0
  %168 = vmatprep.subr.bf16.mxu0 0
  %169 = vmatpush1.bf16.msra.mxu0 0
  %170 = vmatprep.subr.bf16.mxu0 0
  %171 = vmatpush1.bf16.msra.mxu0 0
  %172 = vmatprep.subr.bf16.mxu0 0
  %173 = vmatpush1.bf16.msra.mxu0 0
  %174 = vmatprep.mubr.bf16.mxu0 0
  %175 = vmatmul.mubr.bf16.gmra.mrb[0].mxu0 %v140
  %v176 = vpop.f32.mrb[0].mxu0
  %v177 = vadd.f32 0.0, %v176
  %v178 = vpop.f32.mrb[0].mxu0
  %v179 = vadd.f32 0.0, %v178
  %v180 = vpop.f32.mrb[0].mxu0
  %v181 = vadd.f32 0.0, %v180
  %v182 = vpop.f32.mrb[0].mxu0
  %v183 = vadd.f32 0.0, %v182
  %184 = vdwg.mxu0
  %v185 = vadd.f32 %v99, %v177
  %v186 = vadd.f32 %v100, %v179
  %v187 = vadd.f32 %v101, %v181
  %v188 = vadd.f32 %v102, %v183
  %s189 = scalar_lea.vmem %s1, 16
  %v190 = vld [vmem:[%s189] sm:$0xf]
  %v191 = vld [vmem:[%s189 + $0x4] sm:$0xf]
  %v194 = vunpack.c.l.b16 %v190
  %v195 = vunpack.c.l.b16 %v191
  %v196 = vpack.c.b16 %v195, %v194
  %197 = vrot.lane.b32.xlu0 %v125, 126
  %v198 = vpop.permute.xlu0 %197
  %199 = vrot.lane.b32.xlu0 %v126, 126
  %v200 = vpop.permute.xlu0 %199
  %201 = vrot.lane.b32.xlu0 %v127, 126
  %v202 = vpop.permute.xlu0 %201
  %vm203 = vcmask 1031168
  %v204 = vsel %vm203, %v198, %v200
  %v205 = vsel %vm203, %v200, %v202
  %v209 = vsel %vm52, %v196, 0
  %211 = vmatprep.subr.bf16.mxu0 %v205
  %212 = vmatpush1.bf16.msra.mxu0 %v204
  %213 = vmatprep.subr.bf16.mxu0 0
  %214 = vmatpush1.bf16.msra.mxu0 0
  %215 = vmatprep.subr.bf16.mxu0 0
  %216 = vmatpush1.bf16.msra.mxu0 0
  %217 = vmatprep.subr.bf16.mxu0 0
  %218 = vmatpush1.bf16.msra.mxu0 0
  %219 = vmatprep.subr.bf16.mxu0 0
  %220 = vmatpush1.bf16.msra.mxu0 0
  %221 = vmatprep.subr.bf16.mxu0 0
  %222 = vmatpush1.bf16.msra.mxu0 0
  %223 = vmatprep.subr.bf16.mxu0 0
  %224 = vmatpush1.bf16.msra.mxu0 0
  %225 = vmatprep.subr.bf16.mxu0 0
  %226 = vmatpush1.bf16.msra.mxu0 0
  %227 = vmatprep.subr.bf16.mxu0 0
  %228 = vmatpush1.bf16.msra.mxu0 0
  %229 = vmatprep.subr.bf16.mxu0 0
  %230 = vmatpush1.bf16.msra.mxu0 0
  %231 = vmatprep.subr.bf16.mxu0 0
  %232 = vmatpush1.bf16.msra.mxu0 0
  %233 = vmatprep.subr.bf16.mxu0 0
  %234 = vmatpush1.bf16.msra.mxu0 0
  %235 = vmatprep.subr.bf16.mxu0 0
  %236 = vmatpush1.bf16.msra.mxu0 0
  %237 = vmatprep.subr.bf16.mxu0 0
  %238 = vmatpush1.bf16.msra.mxu0 0
  %239 = vmatprep.subr.bf16.mxu0 0
  %240 = vmatpush1.bf16.msra.mxu0 0
  %241 = vmatprep.subr.bf16.mxu0 0
  %242 = vmatpush1.bf16.msra.mxu0 0
  %243 = vmatprep.mubr.bf16.mxu0 0
  %244 = vmatmul.mubr.bf16.gmra.mrb[0].mxu0 %v209
  %v245 = vpop.f32.mrb[0].mxu0
  %v246 = vadd.f32 0.0, %v245
  %v247 = vpop.f32.mrb[0].mxu0
  %v248 = vadd.f32 0.0, %v247
  %v249 = vpop.f32.mrb[0].mxu0
  %v250 = vadd.f32 0.0, %v249
  %v251 = vpop.f32.mrb[0].mxu0
  %v252 = vadd.f32 0.0, %v251
  %253 = vdwg.mxu0
  %v254 = vadd.f32 %v185, %v246
  %v255 = vadd.f32 %v186, %v248
  %v256 = vadd.f32 %v187, %v250
  %v257 = vadd.f32 %v188, %v252
  %s258 = scalar_lea.vmem %s1, 24
  %v259 = vld [vmem:[%s258] sm:$0xf]
  %v260 = vld [vmem:[%s258 + $0x4] sm:$0xf]
  %v263 = vunpack.c.l.b16 %v259
  %v264 = vunpack.c.l.b16 %v260
  %v265 = vpack.c.b16 %v264, %v263
  %266 = vrot.lane.b32.xlu0 %v125, 118
  %v267 = vpop.permute.xlu0 %266
  %268 = vrot.lane.b32.xlu0 %v126, 118
  %v269 = vpop.permute.xlu0 %268
  %270 = vrot.lane.b32.xlu0 %v127, 118
  %v271 = vpop.permute.xlu0 %270
  %vm272 = vcmask 965632
  %v273 = vsel %vm272, %v267, %v269
  %v274 = vsel %vm272, %v269, %v271
  %v278 = vsel %vm52, %v265, 0
  %280 = vmatprep.subr.bf16.mxu0 %v274
  %281 = vmatpush1.bf16.msra.mxu0 %v273
  %282 = vmatprep.subr.bf16.mxu0 0
  %283 = vmatpush1.bf16.msra.mxu0 0
  %284 = vmatprep.subr.bf16.mxu0 0
  %285 = vmatpush1.bf16.msra.mxu0 0
  %286 = vmatprep.subr.bf16.mxu0 0
  %287 = vmatpush1.bf16.msra.mxu0 0
  %288 = vmatprep.subr.bf16.mxu0 0
  %289 = vmatpush1.bf16.msra.mxu0 0
  %290 = vmatprep.subr.bf16.mxu0 0
  %291 = vmatpush1.bf16.msra.mxu0 0
  %292 = vmatprep.subr.bf16.mxu0 0
  %293 = vmatpush1.bf16.msra.mxu0 0
  %294 = vmatprep.subr.bf16.mxu0 0
  %295 = vmatpush1.bf16.msra.mxu0 0
  %296 = vmatprep.subr.bf16.mxu0 0
  %297 = vmatpush1.bf16.msra.mxu0 0
  %298 = vmatprep.subr.bf16.mxu0 0
  %299 = vmatpush1.bf16.msra.mxu0 0
  %300 = vmatprep.subr.bf16.mxu0 0
  %301 = vmatpush1.bf16.msra.mxu0 0
  %302 = vmatprep.subr.bf16.mxu0 0
  %303 = vmatpush1.bf16.msra.mxu0 0
  %304 = vmatprep.subr.bf16.mxu0 0
  %305 = vmatpush1.bf16.msra.mxu0 0
  %306 = vmatprep.subr.bf16.mxu0 0
  %307 = vmatpush1.bf16.msra.mxu0 0
  %308 = vmatprep.subr.bf16.mxu0 0
  %309 = vmatpush1.bf16.msra.mxu0 0
  %310 = vmatprep.subr.bf16.mxu0 0
  %311 = vmatpush1.bf16.msra.mxu0 0
  %312 = vmatprep.mubr.bf16.mxu0 0
  %313 = vmatmul.mubr.bf16.gmra.mrb[0].mxu0 %v278
  %v314 = vpop.f32.mrb[0].mxu0
  %v315 = vadd.f32 0.0, %v314
  %v316 = vpop.f32.mrb[0].mxu0
  %v317 = vadd.f32 0.0, %v316
  %v318 = vpop.f32.mrb[0].mxu0
  %v319 = vadd.f32 0.0, %v318
  %v320 = vpop.f32.mrb[0].mxu0
  %v321 = vadd.f32 0.0, %v320
  %322 = vdwg.mxu0
  %v323 = vadd.f32 %v254, %v315
  %v324 = vadd.f32 %v255, %v317
  %v325 = vadd.f32 %v256, %v319
  %v326 = vadd.f32 %v257, %v321
  %s327 = scalar_lea.vmem %s1, 32
  %v328 = vld [vmem:[%s327] sm:$0xf]
  %v329 = vld [vmem:[%s327 + $0x4] sm:$0xf]
  %v332 = vunpack.c.l.b16 %v328
  %v333 = vunpack.c.l.b16 %v329
  %v334 = vpack.c.b16 %v333, %v332
  %335 = vrot.lane.b32.xlu0 %v125, 117
  %v336 = vpop.permute.xlu0 %335
  %337 = vrot.lane.b32.xlu0 %v126, 117
  %v338 = vpop.permute.xlu0 %337
  %339 = vrot.lane.b32.xlu0 %v127, 117
  %v340 = vpop.permute.xlu0 %339
  %vm341 = vcmask 957440
  %v342 = vsel %vm341, %v336, %v338
  %v343 = vsel %vm341, %v338, %v340
  %v347 = vsel %vm52, %v334, 0
  %349 = vmatprep.subr.bf16.mxu0 %v343
  %350 = vmatpush1.bf16.msra.mxu0 %v342
  %351 = vmatprep.subr.bf16.mxu0 0
  %352 = vmatpush1.bf16.msra.mxu0 0
  %353 = vmatprep.subr.bf16.mxu0 0
  %354 = vmatpush1.bf16.msra.mxu0 0
  %355 = vmatprep.subr.bf16.mxu0 0
  %356 = vmatpush1.bf16.msra.mxu0 0
  %357 = vmatprep.subr.bf16.mxu0 0
  %358 = vmatpush1.bf16.msra.mxu0 0
  %359 = vmatprep.subr.bf16.mxu0 0
  %360 = vmatpush1.bf16.msra.mxu0 0
  %361 = vmatprep.subr.bf16.mxu0 0
  %362 = vmatpush1.bf16.msra.mxu0 0
  %363 = vmatprep.subr.bf16.mxu0 0
  %364 = vmatpush1.bf16.msra.mxu0 0
  %365 = vmatprep.subr.bf16.mxu0 0
  %366 = vmatpush1.bf16.msra.mxu0 0
  %367 = vmatprep.subr.bf16.mxu0 0
  %368 = vmatpush1.bf16.msra.mxu0 0
  %369 = vmatprep.subr.bf16.mxu0 0
  %370 = vmatpush1.bf16.msra.mxu0 0
  %371 = vmatprep.subr.bf16.mxu0 0
  %372 = vmatpush1.bf16.msra.mxu0 0
  %373 = vmatprep.subr.bf16.mxu0 0
  %374 = vmatpush1.bf16.msra.mxu0 0
  %375 = vmatprep.subr.bf16.mxu0 0
  %376 = vmatpush1.bf16.msra.mxu0 0
  %377 = vmatprep.subr.bf16.mxu0 0
  %378 = vmatpush1.bf16.msra.mxu0 0
  %379 = vmatprep.subr.bf16.mxu0 0
  %380 = vmatpush1.bf16.msra.mxu0 0
  %381 = vmatprep.mubr.bf16.mxu0 0
  %382 = vmatmul.mubr.bf16.gmra.mrb[0].mxu0 %v347
  %v383 = vpop.f32.mrb[0].mxu0
  %v384 = vadd.f32 0.0, %v383
  %v385 = vpop.f32.mrb[0].mxu0
  %v386 = vadd.f32 0.0, %v385
  %v387 = vpop.f32.mrb[0].mxu0
  %v388 = vadd.f32 0.0, %v387
  %v389 = vpop.f32.mrb[0].mxu0
  %v390 = vadd.f32 0.0, %v389
  %391 = vdwg.mxu0
  %v392 = vadd.f32 %v323, %v384
  %v393 = vadd.f32 %v324, %v386
  %v394 = vadd.f32 %v325, %v388
  %v395 = vadd.f32 %v326, %v390
  %s396 = scalar_lea.vmem %s1, 40
  %v397 = vld [vmem:[%s396] sm:$0xf]
  %v398 = vld [vmem:[%s396 + $0x4] sm:$0xf]
  %v401 = vunpack.c.l.b16 %v397
  %v402 = vunpack.c.l.b16 %v398
  %v403 = vpack.c.b16 %v402, %v401
  %404 = vrot.lane.b32.xlu0 %v125, 116
  %v405 = vpop.permute.xlu0 %404
  %406 = vrot.lane.b32.xlu0 %v126, 116
  %v407 = vpop.permute.xlu0 %406
  %408 = vrot.lane.b32.xlu0 %v127, 116
  %v409 = vpop.permute.xlu0 %408
  %vm410 = vcmask 949248
  %v411 = vsel %vm410, %v405, %v407
  %v412 = vsel %vm410, %v407, %v409
  %v416 = vsel %vm52, %v403, 0
  %418 = vmatprep.subr.bf16.mxu0 %v412
  %419 = vmatpush1.bf16.msra.mxu0 %v411
  %420 = vmatprep.subr.bf16.mxu0 0
  %421 = vmatpush1.bf16.msra.mxu0 0
  %422 = vmatprep.subr.bf16.mxu0 0
  %423 = vmatpush1.bf16.msra.mxu0 0
  %424 = vmatprep.subr.bf16.mxu0 0
  %425 = vmatpush1.bf16.msra.mxu0 0
  %426 = vmatprep.subr.bf16.mxu0 0
  %427 = vmatpush1.bf16.msra.mxu0 0
  %428 = vmatprep.subr.bf16.mxu0 0
  %429 = vmatpush1.bf16.msra.mxu0 0
  %430 = vmatprep.subr.bf16.mxu0 0
  %431 = vmatpush1.bf16.msra.mxu0 0
  %432 = vmatprep.subr.bf16.mxu0 0
  %433 = vmatpush1.bf16.msra.mxu0 0
  %434 = vmatprep.subr.bf16.mxu0 0
  %435 = vmatpush1.bf16.msra.mxu0 0
  %436 = vmatprep.subr.bf16.mxu0 0
  %437 = vmatpush1.bf16.msra.mxu0 0
  %438 = vmatprep.subr.bf16.mxu0 0
  %439 = vmatpush1.bf16.msra.mxu0 0
  %440 = vmatprep.subr.bf16.mxu0 0
  %441 = vmatpush1.bf16.msra.mxu0 0
  %442 = vmatprep.subr.bf16.mxu0 0
  %443 = vmatpush1.bf16.msra.mxu0 0
  %444 = vmatprep.subr.bf16.mxu0 0
  %445 = vmatpush1.bf16.msra.mxu0 0
  %446 = vmatprep.subr.bf16.mxu0 0
  %447 = vmatpush1.bf16.msra.mxu0 0
  %448 = vmatprep.subr.bf16.mxu0 0
  %449 = vmatpush1.bf16.msra.mxu0 0
  %450 = vmatprep.mubr.bf16.mxu0 0
  %451 = vmatmul.mubr.bf16.gmra.mrb[0].mxu0 %v416
  %v452 = vpop.f32.mrb[0].mxu0
  %v453 = vadd.f32 0.0, %v452
  %v454 = vpop.f32.mrb[0].mxu0
  %v455 = vadd.f32 0.0, %v454
  %v456 = vpop.f32.mrb[0].mxu0
  %v457 = vadd.f32 0.0, %v456
  %v458 = vpop.f32.mrb[0].mxu0
  %v459 = vadd.f32 0.0, %v458
  %460 = vdwg.mxu0
  %v461 = vadd.f32 %v392, %v453
  %v462 = vadd.f32 %v393, %v455
  %v463 = vadd.f32 %v394, %v457
  %v464 = vadd.f32 %v395, %v459
  %s465 = scalar_lea.vmem %s1, 48
  %v466 = vld [vmem:[%s465] sm:$0xf]
  %v467 = vld [vmem:[%s465 + $0x4] sm:$0xf]
  %v470 = vunpack.c.l.b16 %v466
  %v471 = vunpack.c.l.b16 %v467
  %v472 = vpack.c.b16 %v471, %v470
  %473 = vrot.lane.b32.xlu0 %v125, 108
  %v474 = vpop.permute.xlu0 %473
  %475 = vrot.lane.b32.xlu0 %v126, 108
  %v476 = vpop.permute.xlu0 %475
  %477 = vrot.lane.b32.xlu0 %v127, 108
  %v478 = vpop.permute.xlu0 %477
  %vm479 = vcmask 883712
  %v480 = vsel %vm479, %v474, %v476
  %v481 = vsel %vm479, %v476, %v478
  %v485 = vsel %vm52, %v472, 0
  %487 = vmatprep.subr.bf16.mxu0 %v481
  %488 = vmatpush1.bf16.msra.mxu0 %v480
  %489 = vmatprep.subr.bf16.mxu0 0
  %490 = vmatpush1.bf16.msra.mxu0 0
  %491 = vmatprep.subr.bf16.mxu0 0
  %492 = vmatpush1.bf16.msra.mxu0 0
  %493 = vmatprep.subr.bf16.mxu0 0
  %494 = vmatpush1.bf16.msra.mxu0 0
  %495 = vmatprep.subr.bf16.mxu0 0
  %496 = vmatpush1.bf16.msra.mxu0 0
  %497 = vmatprep.subr.bf16.mxu0 0
  %498 = vmatpush1.bf16.msra.mxu0 0
  %499 = vmatprep.subr.bf16.mxu0 0
  %500 = vmatpush1.bf16.msra.mxu0 0
  %501 = vmatprep.subr.bf16.mxu0 0
  %502 = vmatpush1.bf16.msra.mxu0 0
  %503 = vmatprep.subr.bf16.mxu0 0
  %504 = vmatpush1.bf16.msra.mxu0 0
  %505 = vmatprep.subr.bf16.mxu0 0
  %506 = vmatpush1.bf16.msra.mxu0 0
  %507 = vmatprep.subr.bf16.mxu0 0
  %508 = vmatpush1.bf16.msra.mxu0 0
  %509 = vmatprep.subr.bf16.mxu0 0
  %510 = vmatpush1.bf16.msra.mxu0 0
  %511 = vmatprep.subr.bf16.mxu0 0
  %512 = vmatpush1.bf16.msra.mxu0 0
  %513 = vmatprep.subr.bf16.mxu0 0
  %514 = vmatpush1.bf16.msra.mxu0 0
  %515 = vmatprep.subr.bf16.mxu0 0
  %516 = vmatpush1.bf16.msra.mxu0 0
  %517 = vmatprep.subr.bf16.mxu0 0
  %518 = vmatpush1.bf16.msra.mxu0 0
  %519 = vmatprep.mubr.bf16.mxu0 0
  %520 = vmatmul.mubr.bf16.gmra.mrb[0].mxu0 %v485
  %v521 = vpop.f32.mrb[0].mxu0
  %v522 = vadd.f32 0.0, %v521
  %v523 = vpop.f32.mrb[0].mxu0
  %v524 = vadd.f32 0.0, %v523
  %v525 = vpop.f32.mrb[0].mxu0
  %v526 = vadd.f32 0.0, %v525
  %v527 = vpop.f32.mrb[0].mxu0
  %v528 = vadd.f32 0.0, %v527
  %529 = vdwg.mxu0
  %v530 = vadd.f32 %v461, %v522
  %v531 = vadd.f32 %v462, %v524
  %v532 = vadd.f32 %v463, %v526
  %v533 = vadd.f32 %v464, %v528
  %s534 = scalar_lea.vmem %s1, 56
  %v535 = vld [vmem:[%s534] sm:$0xf]
  %v536 = vld [vmem:[%s534 + $0x4] sm:$0xf]
  %v539 = vunpack.c.l.b16 %v535
  %v540 = vunpack.c.l.b16 %v536
  %v541 = vpack.c.b16 %v540, %v539
  %542 = vrot.lane.b32.xlu0 %v125, 107
  %v543 = vpop.permute.xlu0 %542
  %544 = vrot.lane.b32.xlu0 %v126, 107
  %v545 = vpop.permute.xlu0 %544
  %546 = vrot.lane.b32.xlu0 %v127, 107
  %v547 = vpop.permute.xlu0 %546
  %vm548 = vcmask 875520
  %v549 = vsel %vm548, %v543, %v545
  %v550 = vsel %vm548, %v545, %v547
  %v554 = vsel %vm52, %v541, 0
  %556 = vmatprep.subr.bf16.mxu0 %v550
  %557 = vmatpush1.bf16.msra.mxu0 %v549
  %558 = vmatprep.subr.bf16.mxu0 0
  %559 = vmatpush1.bf16.msra.mxu0 0
  %560 = vmatprep.subr.bf16.mxu0 0
  %561 = vmatpush1.bf16.msra.mxu0 0
  %562 = vmatprep.subr.bf16.mxu0 0
  %563 = vmatpush1.bf16.msra.mxu0 0
  %564 = vmatprep.subr.bf16.mxu0 0
  %565 = vmatpush1.bf16.msra.mxu0 0
  %566 = vmatprep.subr.bf16.mxu0 0
  %567 = vmatpush1.bf16.msra.mxu0 0
  %568 = vmatprep.subr.bf16.mxu0 0
  %569 = vmatpush1.bf16.msra.mxu0 0
  %570 = vmatprep.subr.bf16.mxu0 0
  %571 = vmatpush1.bf16.msra.mxu0 0
  %572 = vmatprep.subr.bf16.mxu0 0
  %573 = vmatpush1.bf16.msra.mxu0 0
  %574 = vmatprep.subr.bf16.mxu0 0
  %575 = vmatpush1.bf16.msra.mxu0 0
  %576 = vmatprep.subr.bf16.mxu0 0
  %577 = vmatpush1.bf16.msra.mxu0 0
  %578 = vmatprep.subr.bf16.mxu0 0
  %579 = vmatpush1.bf16.msra.mxu0 0
  %580 = vmatprep.subr.bf16.mxu0 0
  %581 = vmatpush1.bf16.msra.mxu0 0
  %582 = vmatprep.subr.bf16.mxu0 0
  %583 = vmatpush1.bf16.msra.mxu0 0
  %584 = vmatprep.subr.bf16.mxu0 0
  %585 = vmatpush1.bf16.msra.mxu0 0
  %586 = vmatprep.subr.bf16.mxu0 0
  %587 = vmatpush1.bf16.msra.mxu0 0
  %588 = vmatprep.mubr.bf16.mxu0 0
  %589 = vmatmul.mubr.bf16.gmra.mrb[0].mxu0 %v554
  %v590 = vpop.f32.mrb[0].mxu0
  %v591 = vadd.f32 0.0, %v590
  %v592 = vpop.f32.mrb[0].mxu0
  %v593 = vadd.f32 0.0, %v592
  %v594 = vpop.f32.mrb[0].mxu0
  %v595 = vadd.f32 0.0, %v594
  %v596 = vpop.f32.mrb[0].mxu0
  %v597 = vadd.f32 0.0, %v596
  %598 = vdwg.mxu0
  %v599 = vadd.f32 %v530, %v591
  %v600 = vadd.f32 %v531, %v593
  %v601 = vadd.f32 %v532, %v595
  %v602 = vadd.f32 %v533, %v597
  %s603 = scalar_lea.vmem %s1, 64
  %v604 = vld [vmem:[%s603] sm:$0xf]
  %v605 = vld [vmem:[%s603 + $0x4] sm:$0xf]
  %v608 = vunpack.c.l.b16 %v604
  %v609 = vunpack.c.l.b16 %v605
  %v610 = vpack.c.b16 %v609, %v608
  %611 = vrot.lane.b32.xlu0 %v125, 106
  %v612 = vpop.permute.xlu0 %611
  %613 = vrot.lane.b32.xlu0 %v126, 106
  %v614 = vpop.permute.xlu0 %613
  %615 = vrot.lane.b32.xlu0 %v127, 106
  %v616 = vpop.permute.xlu0 %615
  %vm617 = vcmask 867328
  %v618 = vsel %vm617, %v612, %v614
  %v619 = vsel %vm617, %v614, %v616
  %v623 = vsel %vm52, %v610, 0
  %625 = vmatprep.subr.bf16.mxu0 %v619
  %626 = vmatpush1.bf16.msra.mxu0 %v618
  %627 = vmatprep.subr.bf16.mxu0 0
  %628 = vmatpush1.bf16.msra.mxu0 0
  %629 = vmatprep.subr.bf16.mxu0 0
  %630 = vmatpush1.bf16.msra.mxu0 0
  %631 = vmatprep.subr.bf16.mxu0 0
  %632 = vmatpush1.bf16.msra.mxu0 0
  %633 = vmatprep.subr.bf16.mxu0 0
  %634 = vmatpush1.bf16.msra.mxu0 0
  %635 = vmatprep.subr.bf16.mxu0 0
  %636 = vmatpush1.bf16.msra.mxu0 0
  %637 = vmatprep.subr.bf16.mxu0 0
  %638 = vmatpush1.bf16.msra.mxu0 0
  %639 = vmatprep.subr.bf16.mxu0 0
  %640 = vmatpush1.bf16.msra.mxu0 0
  %641 = vmatprep.subr.bf16.mxu0 0
  %642 = vmatpush1.bf16.msra.mxu0 0
  %643 = vmatprep.subr.bf16.mxu0 0
  %644 = vmatpush1.bf16.msra.mxu0 0
  %645 = vmatprep.subr.bf16.mxu0 0
  %646 = vmatpush1.bf16.msra.mxu0 0
  %647 = vmatprep.subr.bf16.mxu0 0
  %648 = vmatpush1.bf16.msra.mxu0 0
  %649 = vmatprep.subr.bf16.mxu0 0
  %650 = vmatpush1.bf16.msra.mxu0 0
  %651 = vmatprep.subr.bf16.mxu0 0
  %652 = vmatpush1.bf16.msra.mxu0 0
  %653 = vmatprep.subr.bf16.mxu0 0
  %654 = vmatpush1.bf16.msra.mxu0 0
  %655 = vmatprep.subr.bf16.mxu0 0
  %656 = vmatpush1.bf16.msra.mxu0 0
  %657 = vmatprep.mubr.bf16.mxu0 0
  %658 = vmatmul.mubr.bf16.gmra.mrb[0].mxu0 %v623
  %v659 = vpop.f32.mrb[0].mxu0
  %v660 = vadd.f32 0.0, %v659
  %v661 = vpop.f32.mrb[0].mxu0
  %v662 = vadd.f32 0.0, %v661
  %v663 = vpop.f32.mrb[0].mxu0
  %v664 = vadd.f32 0.0, %v663
  %v665 = vpop.f32.mrb[0].mxu0
  %v666 = vadd.f32 0.0, %v665
  %667 = vdwg.mxu0
  %v668 = vadd.f32 %v599, %v660
  %v669 = vadd.f32 %v600, %v662
  %v670 = vadd.f32 %v601, %v664
  %v671 = vadd.f32 %v602, %v666
  %v672 = vld [vmem:[%s4] sm:$0xf]
  %v673 = vld [vmem:[%s4 + $0x4] sm:$0xf]
  %v674 = vld [vmem:[%s3] sm:$0xff]
  %v675 = vld [vmem:[%s3 + $0x8] sm:$0xff]
  %v678 = vunpack.c.l.b16 %v672
  %v679 = vunpack.c.l.b16 %v673
  %v680 = vpack.c.b16 %v679, %v678
  %v683 = vunpack.c.l.b16 %v674
  %v684 = vunpack.c.h.b16 %v674
  %v685 = vunpack.c.l.b16 %v675
  %v686 = vunpack.c.h.b16 %v675
  %v687 = vpack.c.b16 %v685, %v683
  %v688 = vpack.c.b16 %v686, %v684
  %v692 = vsel %vm52, %v680, 0
  %694 = vmatprep.subr.bf16.mxu0 %v688
  %695 = vmatpush1.bf16.msra.mxu0 %v687
  %696 = vmatprep.subr.bf16.mxu0 0
  %697 = vmatpush1.bf16.msra.mxu0 0
  %698 = vmatprep.subr.bf16.mxu0 0
  %699 = vmatpush1.bf16.msra.mxu0 0
  %700 = vmatprep.subr.bf16.mxu0 0
  %701 = vmatpush1.bf16.msra.mxu0 0
  %702 = vmatprep.subr.bf16.mxu0 0
  %703 = vmatpush1.bf16.msra.mxu0 0
  %704 = vmatprep.subr.bf16.mxu0 0
  %705 = vmatpush1.bf16.msra.mxu0 0
  %706 = vmatprep.subr.bf16.mxu0 0
  %707 = vmatpush1.bf16.msra.mxu0 0
  %708 = vmatprep.subr.bf16.mxu0 0
  %709 = vmatpush1.bf16.msra.mxu0 0
  %710 = vmatprep.subr.bf16.mxu0 0
  %711 = vmatpush1.bf16.msra.mxu0 0
  %712 = vmatprep.subr.bf16.mxu0 0
  %713 = vmatpush1.bf16.msra.mxu0 0
  %714 = vmatprep.subr.bf16.mxu0 0
  %715 = vmatpush1.bf16.msra.mxu0 0
  %716 = vmatprep.subr.bf16.mxu0 0
  %717 = vmatpush1.bf16.msra.mxu0 0
  %718 = vmatprep.subr.bf16.mxu0 0
  %719 = vmatpush1.bf16.msra.mxu0 0
  %720 = vmatprep.subr.bf16.mxu0 0
  %721 = vmatpush1.bf16.msra.mxu0 0
  %722 = vmatprep.subr.bf16.mxu0 0
  %723 = vmatpush1.bf16.msra.mxu0 0
  %724 = vmatprep.subr.bf16.mxu0 0
  %725 = vmatpush1.bf16.msra.mxu0 0
  %726 = vmatprep.mubr.bf16.mxu0 0
  %727 = vmatmul.mubr.bf16.gmra.mrb[0].mxu0 %v692
  %v728 = vpop.f32.mrb[0].mxu0
  %v729 = vadd.f32 0.0, %v728
  %v730 = vpop.f32.mrb[0].mxu0
  %v731 = vadd.f32 0.0, %v730
  %v732 = vpop.f32.mrb[0].mxu0
  %v733 = vadd.f32 0.0, %v732
  %v734 = vpop.f32.mrb[0].mxu0
  %v735 = vadd.f32 0.0, %v734
  %736 = vdwg.mxu0
  %v737 = vadd.f32 %v668, %v729
  %v738 = vadd.f32 %v669, %v731
  %v739 = vadd.f32 %v670, %v733
  %v740 = vadd.f32 %v671, %v735
  %v741 = vmax.f32 %v737, 0.0
  %v742 = vmax.f32 %v738, 0.0
  %v743 = vmax.f32 %v739, 0.0
  %v744 = vmax.f32 %v740, 0.0
  %v745 = vpack.c.bf16 %v743, %v741
  %v746 = vpack.c.bf16 %v744, %v742
  %v749 = vunpack.c.l.b16 %v745
  %v750 = vunpack.c.l.b16 %v746
  %v751 = vunpack.c.h.b16 %v745
  %v752 = vunpack.c.h.b16 %v746
  %v753 = vpack.c.b16 %v750, %v749
  %v754 = vpack.c.b16 %v752, %v751
  %757 = vst [vmem:[%s5] sm:$0xff] %v753
  %758 = vst [vmem:[%s5 + $0x8] sm:$0xff] %v754
  // Predicated region
  $region22: #{resnet_forward.14} parent=0 // pred_check
    _
  $region23: #{resnet_forward.14} parent=0 // pred_check_branch
    %760 = sbr.rel (0) target = $region25
  $region24: #{resnet_forward.14} parent=0 // pred_region
    _
  $region25: #{resnet_forward.14} parent=0 // pred_fallthru
    _
  // Predicated region
  $region26: #{resnet_forward.14} parent=0 // pred_check
    _
  $region27: #{resnet_forward.14} parent=0 // pred_check_branch
    %762 = sbr.rel (0) target = $region29
  $region28: #{resnet_forward.14} parent=0 // pred_region
    _
  $region29: #{resnet_forward.14} parent=0 // pred_fallthru
    _

// kernel: resnet_forward.15
$region0: #{resnet_forward.15}
  #allocation0 [shape = 'u32[]', space=smem, size = 0x4, offset = 0x4, fixed_abs, tag = 'smem constant byte address 0x4 - core index']
  #allocation1 [shape = 'u32[144,128]{1,0:T(1,128)}', space=vmem, size = 0x12000, scoped, tag = 'internal scratch']
  %s0 = inlined_call_operand.vmem [shape: bf16[16,384], index: 0, kind: input, shape index: {}]
  %s1 = inlined_call_operand.vmem [shape: bf16[9,16,16], index: 1, kind: input, shape index: {}]
  %s2 = inlined_call_operand.vmem [shape: f32[16,1], index: 2, kind: input, shape index: {}]
  %s3 = inlined_call_operand.vmem [shape: bf16[16,256], index: 3, kind: output, shape index: {}]
  %s4 = sld [smem:[#allocation0]]
  $region22: #{resnet_forward.15} parent=0
    _
  %s6 = ssub.s32 1, %s4
  %s7 = scalar_select 0, %s6, %s4
  // Predicated region
  $region2: #{resnet_forward.15} parent=0 // pred_check
    _
  $region3: #{resnet_forward.15} parent=0 // pred_check_branch
    %9 = sbr.rel (0) target = $region5
  $region4: #{resnet_forward.15} parent=0 // pred_region
    _
  $region5: #{resnet_forward.15} parent=0 // pred_fallthru
    _
  // Predicated region
  $region6: #{resnet_forward.15} parent=0 // pred_check
    _
  $region7: #{resnet_forward.15} parent=0 // pred_check_branch
    %11 = sbr.rel (0) target = $region9
  $region8: #{resnet_forward.15} parent=0 // pred_region
    _
  $region9: #{resnet_forward.15} parent=0 // pred_fallthru
    _
  // Predicated region
  $region10: #{resnet_forward.15} parent=0 // pred_check
    _
  $region11: #{resnet_forward.15} parent=0 // pred_check_branch
    %13 = sbr.rel (0) target = $region13
  $region12: #{resnet_forward.15} parent=0 // pred_region
    _
  $region13: #{resnet_forward.15} parent=0 // pred_fallthru
    _
  %v15 = vld [vmem:[%s2] sm:$0xff]
  %v16 = vld [vmem:[%s2 + $0x8] sm:$0xff]
  %18 = vset.pattern.permute.xlu0 0
  %19 = vperm.xlu0 %18, %v15
  %v20 = vpop.permute.xlu0 %19
  %23 = vset.pattern.permute.xlu0 0
  %24 = vperm.xlu0 %23, %v16
  %v25 = vpop.permute.xlu0 %24
  %v27 = vld [vmem:[%s1] sm:$0xf]
  %v28 = vld [vmem:[%s1 + $0x4] sm:$0xf]
  %v29 = vld [vmem:[%s0] sm:$0xff]
  %v30 = vld [vmem:[%s0 + $0xc] sm:$0xff]
  %v33 = vunpack.c.l.b16 %v27
  %v34 = vunpack.c.l.b16 %v28
  %v35 = vpack.c.b16 %v34, %v33
  %v38 = vunpack.c.l.b16 %v29
  %v39 = vunpack.c.h.b16 %v29
  %v40 = vunpack.c.l.b16 %v30
  %v41 = vunpack.c.h.b16 %v30
  %v42 = vpack.c.b16 %v40, %v38
  %v43 = vpack.c.b16 %v41, %v39
  %vm46 = vcmask 130048
  %v48 = vsel %vm46, %v35, 0
  %50 = vmatprep.subr.bf16.mxu0 %v43
  %51 = vmatpush1.bf16.msra.mxu0 %v42
  %52 = vmatprep.subr.bf16.mxu0 0
  %53 = vmatpush1.bf16.msra.mxu0 0
  %54 = vmatprep.subr.bf16.mxu0 0
  %55 = vmatpush1.bf16.msra.mxu0 0
  %56 = vmatprep.subr.bf16.mxu0 0
  %57 = vmatpush1.bf16.msra.mxu0 0
  %58 = vmatprep.subr.bf16.mxu0 0
  %59 = vmatpush1.bf16.msra.mxu0 0
  %60 = vmatprep.subr.bf16.mxu0 0
  %61 = vmatpush1.bf16.msra.mxu0 0
  %62 = vmatprep.subr.bf16.mxu0 0
  %63 = vmatpush1.bf16.msra.mxu0 0
  %64 = vmatprep.subr.bf16.mxu0 0
  %65 = vmatpush1.bf16.msra.mxu0 0
  %66 = vmatprep.subr.bf16.mxu0 0
  %67 = vmatpush1.bf16.msra.mxu0 0
  %68 = vmatprep.subr.bf16.mxu0 0
  %69 = vmatpush1.bf16.msra.mxu0 0
  %70 = vmatprep.subr.bf16.mxu0 0
  %71 = vmatpush1.bf16.msra.mxu0 0
  %72 = vmatprep.subr.bf16.mxu0 0
  %73 = vmatpush1.bf16.msra.mxu0 0
  %74 = vmatprep.subr.bf16.mxu0 0
  %75 = vmatpush1.bf16.msra.mxu0 0
  %76 = vmatprep.subr.bf16.mxu0 0
  %77 = vmatpush1.bf16.msra.mxu0 0
  %78 = vmatprep.subr.bf16.mxu0 0
  %79 = vmatpush1.bf16.msra.mxu0 0
  %80 = vmatprep.subr.bf16.mxu0 0
  %81 = vmatpush1.bf16.msra.mxu0 0
  %82 = vmatprep.mubr.bf16.mxu0 0
  %83 = vmatmul.mubr.bf16.gmra.mrb[0].mxu0 %v48
  %v84 = vpop.f32.mrb[0].mxu0
  %v85 = vadd.f32 0.0, %v84
  %v86 = vpop.f32.mrb[0].mxu0
  %v87 = vadd.f32 0.0, %v86
  %v88 = vpop.f32.mrb[0].mxu0
  %v89 = vadd.f32 0.0, %v88
  %v90 = vpop.f32.mrb[0].mxu0
  %v91 = vadd.f32 0.0, %v90
  %92 = vdwg.mxu0
  %v93 = vadd.f32 %v20, %v85
  %v94 = vadd.f32 %v20, %v87
  %v95 = vadd.f32 %v25, %v89
  %v96 = vadd.f32 %v25, %v91
  %s97 = scalar_lea.vmem %s1, 8
  %v98 = vld [vmem:[%s97] sm:$0xf]
  %v99 = vld [vmem:[%s97 + $0x4] sm:$0xf]
  %v100 = vld [vmem:[%s0] sm:$0xff]
  %v101 = vld [vmem:[%s0 + $0x8] sm:$0xf]
  %v102 = vld [vmem:[%s0 + $0xc] sm:$0xff]
  %v103 = vld [vmem:[%s0 + $0x14] sm:$0xf]
  %v106 = vunpack.c.l.b16 %v98
  %v107 = vunpack.c.l.b16 %v99
  %v108 = vpack.c.b16 %v107, %v106
  %v113 = vunpack.c.l.b16 %v100
  %v114 = vunpack.c.h.b16 %v100
  %v115 = vunpack.c.l.b16 %v101
  %v116 = vunpack.c.l.b16 %v102
  %v117 = vunpack.c.h.b16 %v102
  %v118 = vunpack.c.l.b16 %v103
  %v119 = vpack.c.b16 %v116, %v113
  %v120 = vpack.c.b16 %v117, %v114
  %v121 = vpack.c.b16 %v118, %v115
  %122 = vrot.lane.b32.xlu0 %v119, 127
  %v123 = vpop.permute.xlu0 %122
  %124 = vrot.lane.b32.xlu0 %v120, 127
  %v125 = vpop.permute.xlu0 %124
  %126 = vrot.lane.b32.xlu0 %v121, 127
  %v127 = vpop.permute.xlu0 %126
  %vm128 = vcmask 1039360
  %v129 = vsel %vm128, %v123, %v125
  %v130 = vsel %vm128, %v125, %v127
  %v134 = vsel %vm46, %v108, 0
  %136 = vmatprep.subr.bf16.mxu0 %v130
  %137 = vmatpush1.bf16.msra.mxu0 %v129
  %138 = vmatprep.subr.bf16.mxu0 0
  %139 = vmatpush1.bf16.msra.mxu0 0
  %140 = vmatprep.subr.bf16.mxu0 0
  %141 = vmatpush1.bf16.msra.mxu0 0
  %142 = vmatprep.subr.bf16.mxu0 0
  %143 = vmatpush1.bf16.msra.mxu0 0
  %144 = vmatprep.subr.bf16.mxu0 0
  %145 = vmatpush1.bf16.msra.mxu0 0
  %146 = vmatprep.subr.bf16.mxu0 0
  %147 = vmatpush1.bf16.msra.mxu0 0
  %148 = vmatprep.subr.bf16.mxu0 0
  %149 = vmatpush1.bf16.msra.mxu0 0
  %150 = vmatprep.subr.bf16.mxu0 0
  %151 = vmatpush1.bf16.msra.mxu0 0
  %152 = vmatprep.subr.bf16.mxu0 0
  %153 = vmatpush1.bf16.msra.mxu0 0
  %154 = vmatprep.subr.bf16.mxu0 0
  %155 = vmatpush1.bf16.msra.mxu0 0
  %156 = vmatprep.subr.bf16.mxu0 0
  %157 = vmatpush1.bf16.msra.mxu0 0
  %158 = vmatprep.subr.bf16.mxu0 0
  %159 = vmatpush1.bf16.msra.mxu0 0
  %160 = vmatprep.subr.bf16.mxu0 0
  %161 = vmatpush1.bf16.msra.mxu0 0
  %162 = vmatprep.subr.bf16.mxu0 0
  %163 = vmatpush1.bf16.msra.mxu0 0
  %164 = vmatprep.subr.bf16.mxu0 0
  %165 = vmatpush1.bf16.msra.mxu0 0
  %166 = vmatprep.subr.bf16.mxu0 0
  %167 = vmatpush1.bf16.msra.mxu0 0
  %168 = vmatprep.mubr.bf16.mxu0 0
  %169 = vmatmul.mubr.bf16.gmra.mrb[0].mxu0 %v134
  %v170 = vpop.f32.mrb[0].mxu0
  %v171 = vadd.f32 0.0, %v170
  %v172 = vpop.f32.mrb[0].mxu0
  %v173 = vadd.f32 0.0, %v172
  %v174 = vpop.f32.mrb[0].mxu0
  %v175 = vadd.f32 0.0, %v174
  %v176 = vpop.f32.mrb[0].mxu0
  %v177 = vadd.f32 0.0, %v176
  %178 = vdwg.mxu0
  %v179 = vadd.f32 %v93, %v171
  %v180 = vadd.f32 %v94, %v173
  %v181 = vadd.f32 %v95, %v175
  %v182 = vadd.f32 %v96, %v177
  %s183 = scalar_lea.vmem %s1, 16
  %v184 = vld [vmem:[%s183] sm:$0xf]
  %v185 = vld [vmem:[%s183 + $0x4] sm:$0xf]
  %v188 = vunpack.c.l.b16 %v184
  %v189 = vunpack.c.l.b16 %v185
  %v190 = vpack.c.b16 %v189, %v188
  %191 = vrot.lane.b32.xlu0 %v119, 126
  %v192 = vpop.permute.xlu0 %191
  %193 = vrot.lane.b32.xlu0 %v120, 126
  %v194 = vpop.permute.xlu0 %193
  %195 = vrot.lane.b32.xlu0 %v121, 126
  %v196 = vpop.permute.xlu0 %195
  %vm197 = vcmask 1031168
  %v198 = vsel %vm197, %v192, %v194
  %v199 = vsel %vm197, %v194, %v196
  %v203 = vsel %vm46, %v190, 0
  %205 = vmatprep.subr.bf16.mxu0 %v199
  %206 = vmatpush1.bf16.msra.mxu0 %v198
  %207 = vmatprep.subr.bf16.mxu0 0
  %208 = vmatpush1.bf16.msra.mxu0 0
  %209 = vmatprep.subr.bf16.mxu0 0
  %210 = vmatpush1.bf16.msra.mxu0 0
  %211 = vmatprep.subr.bf16.mxu0 0
  %212 = vmatpush1.bf16.msra.mxu0 0
  %213 = vmatprep.subr.bf16.mxu0 0
  %214 = vmatpush1.bf16.msra.mxu0 0
  %215 = vmatprep.subr.bf16.mxu0 0
  %216 = vmatpush1.bf16.msra.mxu0 0
  %217 = vmatprep.subr.bf16.mxu0 0
  %218 = vmatpush1.bf16.msra.mxu0 0
  %219 = vmatprep.subr.bf16.mxu0 0
  %220 = vmatpush1.bf16.msra.mxu0 0
  %221 = vmatprep.subr.bf16.mxu0 0
  %222 = vmatpush1.bf16.msra.mxu0 0
  %223 = vmatprep.subr.bf16.mxu0 0
  %224 = vmatpush1.bf16.msra.mxu0 0
  %225 = vmatprep.subr.bf16.mxu0 0
  %226 = vmatpush1.bf16.msra.mxu0 0
  %227 = vmatprep.subr.bf16.mxu0 0
  %228 = vmatpush1.bf16.msra.mxu0 0
  %229 = vmatprep.subr.bf16.mxu0 0
  %230 = vmatpush1.bf16.msra.mxu0 0
  %231 = vmatprep.subr.bf16.mxu0 0
  %232 = vmatpush1.bf16.msra.mxu0 0
  %233 = vmatprep.subr.bf16.mxu0 0
  %234 = vmatpush1.bf16.msra.mxu0 0
  %235 = vmatprep.subr.bf16.mxu0 0
  %236 = vmatpush1.bf16.msra.mxu0 0
  %237 = vmatprep.mubr.bf16.mxu0 0
  %238 = vmatmul.mubr.bf16.gmra.mrb[0].mxu0 %v203
  %v239 = vpop.f32.mrb[0].mxu0
  %v240 = vadd.f32 0.0, %v239
  %v241 = vpop.f32.mrb[0].mxu0
  %v242 = vadd.f32 0.0, %v241
  %v243 = vpop.f32.mrb[0].mxu0
  %v244 = vadd.f32 0.0, %v243
  %v245 = vpop.f32.mrb[0].mxu0
  %v246 = vadd.f32 0.0, %v245
  %247 = vdwg.mxu0
  %v248 = vadd.f32 %v179, %v240
  %v249 = vadd.f32 %v180, %v242
  %v250 = vadd.f32 %v181, %v244
  %v251 = vadd.f32 %v182, %v246
  %s252 = scalar_lea.vmem %s1, 24
  %v253 = vld [vmem:[%s252] sm:$0xf]
  %v254 = vld [vmem:[%s252 + $0x4] sm:$0xf]
  %v257 = vunpack.c.l.b16 %v253
  %v258 = vunpack.c.l.b16 %v254
  %v259 = vpack.c.b16 %v258, %v257
  %260 = vrot.lane.b32.xlu0 %v119, 118
  %v261 = vpop.permute.xlu0 %260
  %262 = vrot.lane.b32.xlu0 %v120, 118
  %v263 = vpop.permute.xlu0 %262
  %264 = vrot.lane.b32.xlu0 %v121, 118
  %v265 = vpop.permute.xlu0 %264
  %vm266 = vcmask 965632
  %v267 = vsel %vm266, %v261, %v263
  %v268 = vsel %vm266, %v263, %v265
  %v272 = vsel %vm46, %v259, 0
  %274 = vmatprep.subr.bf16.mxu0 %v268
  %275 = vmatpush1.bf16.msra.mxu0 %v267
  %276 = vmatprep.subr.bf16.mxu0 0
  %277 = vmatpush1.bf16.msra.mxu0 0
  %278 = vmatprep.subr.bf16.mxu0 0
  %279 = vmatpush1.bf16.msra.mxu0 0
  %280 = vmatprep.subr.bf16.mxu0 0
  %281 = vmatpush1.bf16.msra.mxu0 0
  %282 = vmatprep.subr.bf16.mxu0 0
  %283 = vmatpush1.bf16.msra.mxu0 0
  %284 = vmatprep.subr.bf16.mxu0 0
  %285 = vmatpush1.bf16.msra.mxu0 0
  %286 = vmatprep.subr.bf16.mxu0 0
  %287 = vmatpush1.bf16.msra.mxu0 0
  %288 = vmatprep.subr.bf16.mxu0 0
  %289 = vmatpush1.bf16.msra.mxu0 0
  %290 = vmatprep.subr.bf16.mxu0 0
  %291 = vmatpush1.bf16.msra.mxu0 0
  %292 = vmatprep.subr.bf16.mxu0 0
  %293 = vmatpush1.bf16.msra.mxu0 0
  %294 = vmatprep.subr.bf16.mxu0 0
  %295 = vmatpush1.bf16.msra.mxu0 0
  %296 = vmatprep.subr.bf16.mxu0 0
  %297 = vmatpush1.bf16.msra.mxu0 0
  %298 = vmatprep.subr.bf16.mxu0 0
  %299 = vmatpush1.bf16.msra.mxu0 0
  %300 = vmatprep.subr.bf16.mxu0 0
  %301 = vmatpush1.bf16.msra.mxu0 0
  %302 = vmatprep.subr.bf16.mxu0 0
  %303 = vmatpush1.bf16.msra.mxu0 0
  %304 = vmatprep.subr.bf16.mxu0 0
  %305 = vmatpush1.bf16.msra.mxu0 0
  %306 = vmatprep.mubr.bf16.mxu0 0
  %307 = vmatmul.mubr.bf16.gmra.mrb[0].mxu0 %v272
  %v308 = vpop.f32.mrb[0].mxu0
  %v309 = vadd.f32 0.0, %v308
  %v310 = vpop.f32.mrb[0].mxu0
  %v311 = vadd.f32 0.0, %v310
  %v312 = vpop.f32.mrb[0].mxu0
  %v313 = vadd.f32 0.0, %v312
  %v314 = vpop.f32.mrb[0].mxu0
  %v315 = vadd.f32 0.0, %v314
  %316 = vdwg.mxu0
  %v317 = vadd.f32 %v248, %v309
  %v318 = vadd.f32 %v249, %v311
  %v319 = vadd.f32 %v250, %v313
  %v320 = vadd.f32 %v251, %v315
  %s321 = scalar_lea.vmem %s1, 32
  %v322 = vld [vmem:[%s321] sm:$0xf]
  %v323 = vld [vmem:[%s321 + $0x4] sm:$0xf]
  %v326 = vunpack.c.l.b16 %v322
  %v327 = vunpack.c.l.b16 %v323
  %v328 = vpack.c.b16 %v327, %v326
  %329 = vrot.lane.b32.xlu0 %v119, 117
  %v330 = vpop.permute.xlu0 %329
  %331 = vrot.lane.b32.xlu0 %v120, 117
  %v332 = vpop.permute.xlu0 %331
  %333 = vrot.lane.b32.xlu0 %v121, 117
  %v334 = vpop.permute.xlu0 %333
  %vm335 = vcmask 957440
  %v336 = vsel %vm335, %v330, %v332
  %v337 = vsel %vm335, %v332, %v334
  %v341 = vsel %vm46, %v328, 0
  %343 = vmatprep.subr.bf16.mxu0 %v337
  %344 = vmatpush1.bf16.msra.mxu0 %v336
  %345 = vmatprep.subr.bf16.mxu0 0
  %346 = vmatpush1.bf16.msra.mxu0 0
  %347 = vmatprep.subr.bf16.mxu0 0
  %348 = vmatpush1.bf16.msra.mxu0 0
  %349 = vmatprep.subr.bf16.mxu0 0
  %350 = vmatpush1.bf16.msra.mxu0 0
  %351 = vmatprep.subr.bf16.mxu0 0
  %352 = vmatpush1.bf16.msra.mxu0 0
  %353 = vmatprep.subr.bf16.mxu0 0
  %354 = vmatpush1.bf16.msra.mxu0 0
  %355 = vmatprep.subr.bf16.mxu0 0
  %356 = vmatpush1.bf16.msra.mxu0 0
  %357 = vmatprep.subr.bf16.mxu0 0
  %358 = vmatpush1.bf16.msra.mxu0 0
  %359 = vmatprep.subr.bf16.mxu0 0
  %360 = vmatpush1.bf16.msra.mxu0 0
  %361 = vmatprep.subr.bf16.mxu0 0
  %362 = vmatpush1.bf16.msra.mxu0 0
  %363 = vmatprep.subr.bf16.mxu0 0
  %364 = vmatpush1.bf16.msra.mxu0 0
  %365 = vmatprep.subr.bf16.mxu0 0
  %366 = vmatpush1.bf16.msra.mxu0 0
  %367 = vmatprep.subr.bf16.mxu0 0
  %368 = vmatpush1.bf16.msra.mxu0 0
  %369 = vmatprep.subr.bf16.mxu0 0
  %370 = vmatpush1.bf16.msra.mxu0 0
  %371 = vmatprep.subr.bf16.mxu0 0
  %372 = vmatpush1.bf16.msra.mxu0 0
  %373 = vmatprep.subr.bf16.mxu0 0
  %374 = vmatpush1.bf16.msra.mxu0 0
  %375 = vmatprep.mubr.bf16.mxu0 0
  %376 = vmatmul.mubr.bf16.gmra.mrb[0].mxu0 %v341
  %v377 = vpop.f32.mrb[0].mxu0
  %v378 = vadd.f32 0.0, %v377
  %v379 = vpop.f32.mrb[0].mxu0
  %v380 = vadd.f32 0.0, %v379
  %v381 = vpop.f32.mrb[0].mxu0
  %v382 = vadd.f32 0.0, %v381
  %v383 = vpop.f32.mrb[0].mxu0
  %v384 = vadd.f32 0.0, %v383
  %385 = vdwg.mxu0
  %v386 = vadd.f32 %v317, %v378
  %v387 = vadd.f32 %v318, %v380
  %v388 = vadd.f32 %v319, %v382
  %v389 = vadd.f32 %v320, %v384
  %s390 = scalar_lea.vmem %s1, 40
  %v391 = vld [vmem:[%s390] sm:$0xf]
  %v392 = vld [vmem:[%s390 + $0x4] sm:$0xf]
  %v395 = vunpack.c.l.b16 %v391
  %v396 = vunpack.c.l.b16 %v392
  %v397 = vpack.c.b16 %v396, %v395
  %398 = vrot.lane.b32.xlu0 %v119, 116
  %v399 = vpop.permute.xlu0 %398
  %400 = vrot.lane.b32.xlu0 %v120, 116
  %v401 = vpop.permute.xlu0 %400
  %402 = vrot.lane.b32.xlu0 %v121, 116
  %v403 = vpop.permute.xlu0 %402
  %vm404 = vcmask 949248
  %v405 = vsel %vm404, %v399, %v401
  %v406 = vsel %vm404, %v401, %v403
  %v410 = vsel %vm46, %v397, 0
  %412 = vmatprep.subr.bf16.mxu0 %v406
  %413 = vmatpush1.bf16.msra.mxu0 %v405
  %414 = vmatprep.subr.bf16.mxu0 0
  %415 = vmatpush1.bf16.msra.mxu0 0
  %416 = vmatprep.subr.bf16.mxu0 0
  %417 = vmatpush1.bf16.msra.mxu0 0
  %418 = vmatprep.subr.bf16.mxu0 0
  %419 = vmatpush1.bf16.msra.mxu0 0
  %420 = vmatprep.subr.bf16.mxu0 0
  %421 = vmatpush1.bf16.msra.mxu0 0
  %422 = vmatprep.subr.bf16.mxu0 0
  %423 = vmatpush1.bf16.msra.mxu0 0
  %424 = vmatprep.subr.bf16.mxu0 0
  %425 = vmatpush1.bf16.msra.mxu0 0
  %426 = vmatprep.subr.bf16.mxu0 0
  %427 = vmatpush1.bf16.msra.mxu0 0
  %428 = vmatprep.subr.bf16.mxu0 0
  %429 = vmatpush1.bf16.msra.mxu0 0
  %430 = vmatprep.subr.bf16.mxu0 0
  %431 = vmatpush1.bf16.msra.mxu0 0
  %432 = vmatprep.subr.bf16.mxu0 0
  %433 = vmatpush1.bf16.msra.mxu0 0
  %434 = vmatprep.subr.bf16.mxu0 0
  %435 = vmatpush1.bf16.msra.mxu0 0
  %436 = vmatprep.subr.bf16.mxu0 0
  %437 = vmatpush1.bf16.msra.mxu0 0
  %438 = vmatprep.subr.bf16.mxu0 0
  %439 = vmatpush1.bf16.msra.mxu0 0
  %440 = vmatprep.subr.bf16.mxu0 0
  %441 = vmatpush1.bf16.msra.mxu0 0
  %442 = vmatprep.subr.bf16.mxu0 0
  %443 = vmatpush1.bf16.msra.mxu0 0
  %444 = vmatprep.mubr.bf16.mxu0 0
  %445 = vmatmul.mubr.bf16.gmra.mrb[0].mxu0 %v410
  %v446 = vpop.f32.mrb[0].mxu0
  %v447 = vadd.f32 0.0, %v446
  %v448 = vpop.f32.mrb[0].mxu0
  %v449 = vadd.f32 0.0, %v448
  %v450 = vpop.f32.mrb[0].mxu0
  %v451 = vadd.f32 0.0, %v450
  %v452 = vpop.f32.mrb[0].mxu0
  %v453 = vadd.f32 0.0, %v452
  %454 = vdwg.mxu0
  %v455 = vadd.f32 %v386, %v447
  %v456 = vadd.f32 %v387, %v449
  %v457 = vadd.f32 %v388, %v451
  %v458 = vadd.f32 %v389, %v453
  %s459 = scalar_lea.vmem %s1, 48
  %v460 = vld [vmem:[%s459] sm:$0xf]
  %v461 = vld [vmem:[%s459 + $0x4] sm:$0xf]
  %v464 = vunpack.c.l.b16 %v460
  %v465 = vunpack.c.l.b16 %v461
  %v466 = vpack.c.b16 %v465, %v464
  %467 = vrot.lane.b32.xlu0 %v119, 108
  %v468 = vpop.permute.xlu0 %467
  %469 = vrot.lane.b32.xlu0 %v120, 108
  %v470 = vpop.permute.xlu0 %469
  %471 = vrot.lane.b32.xlu0 %v121, 108
  %v472 = vpop.permute.xlu0 %471
  %vm473 = vcmask 883712
  %v474 = vsel %vm473, %v468, %v470
  %v475 = vsel %vm473, %v470, %v472
  %v479 = vsel %vm46, %v466, 0
  %481 = vmatprep.subr.bf16.mxu0 %v475
  %482 = vmatpush1.bf16.msra.mxu0 %v474
  %483 = vmatprep.subr.bf16.mxu0 0
  %484 = vmatpush1.bf16.msra.mxu0 0
  %485 = vmatprep.subr.bf16.mxu0 0
  %486 = vmatpush1.bf16.msra.mxu0 0
  %487 = vmatprep.subr.bf16.mxu0 0
  %488 = vmatpush1.bf16.msra.mxu0 0
  %489 = vmatprep.subr.bf16.mxu0 0
  %490 = vmatpush1.bf16.msra.mxu0 0
  %491 = vmatprep.subr.bf16.mxu0 0
  %492 = vmatpush1.bf16.msra.mxu0 0
  %493 = vmatprep.subr.bf16.mxu0 0
  %494 = vmatpush1.bf16.msra.mxu0 0
  %495 = vmatprep.subr.bf16.mxu0 0
  %496 = vmatpush1.bf16.msra.mxu0 0
  %497 = vmatprep.subr.bf16.mxu0 0
  %498 = vmatpush1.bf16.msra.mxu0 0
  %499 = vmatprep.subr.bf16.mxu0 0
  %500 = vmatpush1.bf16.msra.mxu0 0
  %501 = vmatprep.subr.bf16.mxu0 0
  %502 = vmatpush1.bf16.msra.mxu0 0
  %503 = vmatprep.subr.bf16.mxu0 0
  %504 = vmatpush1.bf16.msra.mxu0 0
  %505 = vmatprep.subr.bf16.mxu0 0
  %506 = vmatpush1.bf16.msra.mxu0 0
  %507 = vmatprep.subr.bf16.mxu0 0
  %508 = vmatpush1.bf16.msra.mxu0 0
  %509 = vmatprep.subr.bf16.mxu0 0
  %510 = vmatpush1.bf16.msra.mxu0 0
  %511 = vmatprep.subr.bf16.mxu0 0
  %512 = vmatpush1.bf16.msra.mxu0 0
  %513 = vmatprep.mubr.bf16.mxu0 0
  %514 = vmatmul.mubr.bf16.gmra.mrb[0].mxu0 %v479
  %v515 = vpop.f32.mrb[0].mxu0
  %v516 = vadd.f32 0.0, %v515
  %v517 = vpop.f32.mrb[0].mxu0
  %v518 = vadd.f32 0.0, %v517
  %v519 = vpop.f32.mrb[0].mxu0
  %v520 = vadd.f32 0.0, %v519
  %v521 = vpop.f32.mrb[0].mxu0
  %v522 = vadd.f32 0.0, %v521
  %523 = vdwg.mxu0
  %v524 = vadd.f32 %v455, %v516
  %v525 = vadd.f32 %v456, %v518
  %v526 = vadd.f32 %v457, %v520
  %v527 = vadd.f32 %v458, %v522
  %s528 = scalar_lea.vmem %s1, 56
  %v529 = vld [vmem:[%s528] sm:$0xf]
  %v530 = vld [vmem:[%s528 + $0x4] sm:$0xf]
  %v533 = vunpack.c.l.b16 %v529
  %v534 = vunpack.c.l.b16 %v530
  %v535 = vpack.c.b16 %v534, %v533
  %536 = vrot.lane.b32.xlu0 %v119, 107
  %v537 = vpop.permute.xlu0 %536
  %538 = vrot.lane.b32.xlu0 %v120, 107
  %v539 = vpop.permute.xlu0 %538
  %540 = vrot.lane.b32.xlu0 %v121, 107
  %v541 = vpop.permute.xlu0 %540
  %vm542 = vcmask 875520
  %v543 = vsel %vm542, %v537, %v539
  %v544 = vsel %vm542, %v539, %v541
  %v548 = vsel %vm46, %v535, 0
  %550 = vmatprep.subr.bf16.mxu0 %v544
  %551 = vmatpush1.bf16.msra.mxu0 %v543
  %552 = vmatprep.subr.bf16.mxu0 0
  %553 = vmatpush1.bf16.msra.mxu0 0
  %554 = vmatprep.subr.bf16.mxu0 0
  %555 = vmatpush1.bf16.msra.mxu0 0
  %556 = vmatprep.subr.bf16.mxu0 0
  %557 = vmatpush1.bf16.msra.mxu0 0
  %558 = vmatprep.subr.bf16.mxu0 0
  %559 = vmatpush1.bf16.msra.mxu0 0
  %560 = vmatprep.subr.bf16.mxu0 0
  %561 = vmatpush1.bf16.msra.mxu0 0
  %562 = vmatprep.subr.bf16.mxu0 0
  %563 = vmatpush1.bf16.msra.mxu0 0
  %564 = vmatprep.subr.bf16.mxu0 0
  %565 = vmatpush1.bf16.msra.mxu0 0
  %566 = vmatprep.subr.bf16.mxu0 0
  %567 = vmatpush1.bf16.msra.mxu0 0
  %568 = vmatprep.subr.bf16.mxu0 0
  %569 = vmatpush1.bf16.msra.mxu0 0
  %570 = vmatprep.subr.bf16.mxu0 0
  %571 = vmatpush1.bf16.msra.mxu0 0
  %572 = vmatprep.subr.bf16.mxu0 0
  %573 = vmatpush1.bf16.msra.mxu0 0
  %574 = vmatprep.subr.bf16.mxu0 0
  %575 = vmatpush1.bf16.msra.mxu0 0
  %576 = vmatprep.subr.bf16.mxu0 0
  %577 = vmatpush1.bf16.msra.mxu0 0
  %578 = vmatprep.subr.bf16.mxu0 0
  %579 = vmatpush1.bf16.msra.mxu0 0
  %580 = vmatprep.subr.bf16.mxu0 0
  %581 = vmatpush1.bf16.msra.mxu0 0
  %582 = vmatprep.mubr.bf16.mxu0 0
  %583 = vmatmul.mubr.bf16.gmra.mrb[0].mxu0 %v548
  %v584 = vpop.f32.mrb[0].mxu0
  %v585 = vadd.f32 0.0, %v584
  %v586 = vpop.f32.mrb[0].mxu0
  %v587 = vadd.f32 0.0, %v586
  %v588 = vpop.f32.mrb[0].mxu0
  %v589 = vadd.f32 0.0, %v588
  %v590 = vpop.f32.mrb[0].mxu0
  %v591 = vadd.f32 0.0, %v590
  %592 = vdwg.mxu0
  %v593 = vadd.f32 %v524, %v585
  %v594 = vadd.f32 %v525, %v587
  %v595 = vadd.f32 %v526, %v589
  %v596 = vadd.f32 %v527, %v591
  %s597 = scalar_lea.vmem %s1, 64
  %v598 = vld [vmem:[%s597] sm:$0xf]
  %v599 = vld [vmem:[%s597 + $0x4] sm:$0xf]
  %v602 = vunpack.c.l.b16 %v598
  %v603 = vunpack.c.l.b16 %v599
  %v604 = vpack.c.b16 %v603, %v602
  %605 = vrot.lane.b32.xlu0 %v119, 106
  %v606 = vpop.permute.xlu0 %605
  %607 = vrot.lane.b32.xlu0 %v120, 106
  %v608 = vpop.permute.xlu0 %607
  %609 = vrot.lane.b32.xlu0 %v121, 106
  %v610 = vpop.permute.xlu0 %609
  %vm611 = vcmask 867328
  %v612 = vsel %vm611, %v606, %v608
  %v613 = vsel %vm611, %v608, %v610
  %v617 = vsel %vm46, %v604, 0
  %619 = vmatprep.subr.bf16.mxu0 %v613
  %620 = vmatpush1.bf16.msra.mxu0 %v612
  %621 = vmatprep.subr.bf16.mxu0 0
  %622 = vmatpush1.bf16.msra.mxu0 0
  %623 = vmatprep.subr.bf16.mxu0 0
  %624 = vmatpush1.bf16.msra.mxu0 0
  %625 = vmatprep.subr.bf16.mxu0 0
  %626 = vmatpush1.bf16.msra.mxu0 0
  %627 = vmatprep.subr.bf16.mxu0 0
  %628 = vmatpush1.bf16.msra.mxu0 0
  %629 = vmatprep.subr.bf16.mxu0 0
  %630 = vmatpush1.bf16.msra.mxu0 0
  %631 = vmatprep.subr.bf16.mxu0 0
  %632 = vmatpush1.bf16.msra.mxu0 0
  %633 = vmatprep.subr.bf16.mxu0 0
  %634 = vmatpush1.bf16.msra.mxu0 0
  %635 = vmatprep.subr.bf16.mxu0 0
  %636 = vmatpush1.bf16.msra.mxu0 0
  %637 = vmatprep.subr.bf16.mxu0 0
  %638 = vmatpush1.bf16.msra.mxu0 0
  %639 = vmatprep.subr.bf16.mxu0 0
  %640 = vmatpush1.bf16.msra.mxu0 0
  %641 = vmatprep.subr.bf16.mxu0 0
  %642 = vmatpush1.bf16.msra.mxu0 0
  %643 = vmatprep.subr.bf16.mxu0 0
  %644 = vmatpush1.bf16.msra.mxu0 0
  %645 = vmatprep.subr.bf16.mxu0 0
  %646 = vmatpush1.bf16.msra.mxu0 0
  %647 = vmatprep.subr.bf16.mxu0 0
  %648 = vmatpush1.bf16.msra.mxu0 0
  %649 = vmatprep.subr.bf16.mxu0 0
  %650 = vmatpush1.bf16.msra.mxu0 0
  %651 = vmatprep.mubr.bf16.mxu0 0
  %652 = vmatmul.mubr.bf16.gmra.mrb[0].mxu0 %v617
  %v653 = vpop.f32.mrb[0].mxu0
  %v654 = vadd.f32 0.0, %v653
  %v655 = vpop.f32.mrb[0].mxu0
  %v656 = vadd.f32 0.0, %v655
  %v657 = vpop.f32.mrb[0].mxu0
  %v658 = vadd.f32 0.0, %v657
  %v659 = vpop.f32.mrb[0].mxu0
  %v660 = vadd.f32 0.0, %v659
  %661 = vdwg.mxu0
  %v662 = vadd.f32 %v593, %v654
  %v663 = vadd.f32 %v594, %v656
  %v664 = vadd.f32 %v595, %v658
  %v665 = vadd.f32 %v596, %v660
  %v666 = vmax.f32 %v662, 0.0
  %v667 = vmax.f32 %v663, 0.0
  %v668 = vmax.f32 %v664, 0.0
  %v669 = vmax.f32 %v665, 0.0
  %v670 = vpack.c.bf16 %v668, %v666
  %v671 = vpack.c.bf16 %v669, %v667
  %v674 = vunpack.c.l.b16 %v670
  %v675 = vunpack.c.l.b16 %v671
  %v676 = vunpack.c.h.b16 %v670
  %v677 = vunpack.c.h.b16 %v671
  %v678 = vpack.c.b16 %v675, %v674
  %v679 = vpack.c.b16 %v677, %v676
  %682 = vst [vmem:[%s3] sm:$0xff] %v678
  %683 = vst [vmem:[%s3 + $0x8] sm:$0xff] %v679
  // Predicated region
  $region14: #{resnet_forward.15} parent=0 // pred_check
    _
  $region15: #{resnet_forward.15} parent=0 // pred_check_branch
    %685 = sbr.rel (0) target = $region17
  $region16: #{resnet_forward.15} parent=0 // pred_region
    _
  $region17: #{resnet_forward.15} parent=0 // pred_fallthru
    _
  // Predicated region
  $region18: #{resnet_forward.15} parent=0 // pred_check
    _
  $region19: #{resnet_forward.15} parent=0 // pred_check_branch
    %687 = sbr.rel (0) target = $region21
  $region20: #{resnet_forward.15} parent=0 // pred_region
    _
  $region21: #{resnet_forward.15} parent=0 // pred_fallthru
    _

// kernel: resnet_forward.16
$region0: #{resnet_forward.16}
  #allocation0 [shape = 'u32[]', space=smem, size = 0x4, offset = 0x4, fixed_abs, tag = 'smem constant byte address 0x4 - core index']
  #allocation1 [shape = 'u32[144,128]{1,0:T(1,128)}', space=vmem, size = 0x12000, scoped, tag = 'internal scratch']
  %s0 = inlined_call_operand.vmem [shape: bf16[16,256], index: 0, kind: input, shape index: {}]
  %s1 = inlined_call_operand.vmem [shape: bf16[9,16,16], index: 1, kind: input, shape index: {}]
  %s2 = inlined_call_operand.vmem [shape: f32[16,1], index: 2, kind: input, shape index: {}]
  %s3 = inlined_call_operand.vmem [shape: bf16[16,128], index: 3, kind: input, shape index: {}]
  %s4 = inlined_call_operand.vmem [shape: bf16[16,16], index: 4, kind: input, shape index: {}]
  %s5 = inlined_call_operand.vmem [shape: bf16[16,128], index: 5, kind: output, shape index: {}]
  %s6 = sld [smem:[#allocation0]]
  $region30: #{resnet_forward.16} parent=0
    _
  %s8 = ssub.s32 1, %s6
  %s9 = scalar_select 0, %s8, %s6
  // Predicated region
  $region2: #{resnet_forward.16} parent=0 // pred_check
    _
  $region3: #{resnet_forward.16} parent=0 // pred_check_branch
    %11 = sbr.rel (0) target = $region5
  $region4: #{resnet_forward.16} parent=0 // pred_region
    _
  $region5: #{resnet_forward.16} parent=0 // pred_fallthru
    _
  // Predicated region
  $region6: #{resnet_forward.16} parent=0 // pred_check
    _
  $region7: #{resnet_forward.16} parent=0 // pred_check_branch
    %13 = sbr.rel (0) target = $region9
  $region8: #{resnet_forward.16} parent=0 // pred_region
    _
  $region9: #{resnet_forward.16} parent=0 // pred_fallthru
    _
  // Predicated region
  $region10: #{resnet_forward.16} parent=0 // pred_check
    _
  $region11: #{resnet_forward.16} parent=0 // pred_check_branch
    %15 = sbr.rel (0) target = $region13
  $region12: #{resnet_forward.16} parent=0 // pred_region
    _
  $region13: #{resnet_forward.16} parent=0 // pred_fallthru
    _
  // Predicated region
  $region14: #{resnet_forward.16} parent=0 // pred_check
    _
  $region15: #{resnet_forward.16} parent=0 // pred_check_branch
    %17 = sbr.rel (0) target = $region17
  $region16: #{resnet_forward.16} parent=0 // pred_region
    _
  $region17: #{resnet_forward.16} parent=0 // pred_fallthru
    _
  // Predicated region
  $region18: #{resnet_forward.16} parent=0 // pred_check
    _
  $region19: #{resnet_forward.16} parent=0 // pred_check_branch
    %19 = sbr.rel (0) target = $region21
  $region20: #{resnet_forward.16} parent=0 // pred_region
    _
  $region21: #{resnet_forward.16} parent=0 // pred_fallthru
    _
  %v21 = vld [vmem:[%s2] sm:$0xff]
  %v22 = vld [vmem:[%s2 + $0x8] sm:$0xff]
  %24 = vset.pattern.permute.xlu0 0
  %25 = vperm.xlu0 %24, %v21
  %v26 = vpop.permute.xlu0 %25
  %29 = vset.pattern.permute.xlu0 0
  %30 = vperm.xlu0 %29, %v22
  %v31 = vpop.permute.xlu0 %30
  %v33 = vld [vmem:[%s1] sm:$0xf]
  %v34 = vld [vmem:[%s1 + $0x4] sm:$0xf]
  %v35 = vld [vmem:[%s0] sm:$0xf]
  %v36 = vld [vmem:[%s0 + $0x8] sm:$0xf]
  %v39 = vunpack.c.l.b16 %v33
  %v40 = vunpack.c.l.b16 %v34
  %v41 = vpack.c.b16 %v40, %v39
  %v44 = vunpack.c.l.b16 %v35
  %v45 = vunpack.c.l.b16 %v36
  %v46 = vpack.c.b16 %v45, %v44
  %vm48 = vcmask 130048
  %v50 = vsel %vm48, %v41, 0
  %52 = vmatprep.subr.bf16.mxu0 0
  %53 = vmatpush1.bf16.msra.mxu0 %v46
  %54 = vmatprep.subr.bf16.mxu0 0
  %55 = vmatpush1.bf16.msra.mxu0 0
  %56 = vmatprep.subr.bf16.mxu0 0
  %57 = vmatpush1.bf16.msra.mxu0 0
  %58 = vmatprep.subr.bf16.mxu0 0
  %59 = vmatpush1.bf16.msra.mxu0 0
  %60 = vmatprep.subr.bf16.mxu0 0
  %61 = vmatpush1.bf16.msra.mxu0 0
  %62 = vmatprep.subr.bf16.mxu0 0
  %63 = vmatpush1.bf16.msra.mxu0 0
  %64 = vmatprep.subr.bf16.mxu0 0
  %65 = vmatpush1.bf16.msra.mxu0 0
  %66 = vmatprep.subr.bf16.mxu0 0
  %67 = vmatpush1.bf16.msra.mxu0 0
  %68 = vmatprep.subr.bf16.mxu0 0
  %69 = vmatpush1.bf16.msra.mxu0 0
  %70 = vmatprep.subr.bf16.mxu0 0
  %71 = vmatpush1.bf16.msra.mxu0 0
  %72 = vmatprep.subr.bf16.mxu0 0
  %73 = vmatpush1.bf16.msra.mxu0 0
  %74 = vmatprep.subr.bf16.mxu0 0
  %75 = vmatpush1.bf16.msra.mxu0 0
  %76 = vmatprep.subr.bf16.mxu0 0
  %77 = vmatpush1.bf16.msra.mxu0 0
  %78 = vmatprep.subr.bf16.mxu0 0
  %79 = vmatpush1.bf16.msra.mxu0 0
  %80 = vmatprep.subr.bf16.mxu0 0
  %81 = vmatpush1.bf16.msra.mxu0 0
  %82 = vmatprep.subr.bf16.mxu0 0
  %83 = vmatpush1.bf16.msra.mxu0 0
  %84 = vmatprep.mubr.bf16.mxu0 0
  %85 = vmatmul.mubr.bf16.gmra.mrb[0].mxu0 %v50
  %v86 = vpop.f32.mrb[0].mxu0
  %v87 = vadd.f32 0.0, %v86
  %v88 = vpop.f32.mrb[0].mxu0
  %v89 = vpop.f32.mrb[0].mxu0
  %v90 = vadd.f32 0.0, %v89
  %v91 = vpop.f32.mrb[0].mxu0
  %92 = vdwg.mxu0
  %v93 = vadd.f32 %v26, %v87
  %v94 = vadd.f32 %v31, %v90
  %s95 = scalar_lea.vmem %s1, 8
  %v96 = vld [vmem:[%s95] sm:$0xf]
  %v97 = vld [vmem:[%s95 + $0x4] sm:$0xf]
  %v98 = vld [vmem:[%s0] sm:$0xff]
  %v99 = vld [vmem:[%s0 + $0x8] sm:$0xff]
  %v102 = vunpack.c.l.b16 %v96
  %v103 = vunpack.c.l.b16 %v97
  %v104 = vpack.c.b16 %v103, %v102
  %v107 = vunpack.c.l.b16 %v98
  %v108 = vunpack.c.h.b16 %v98
  %v109 = vunpack.c.l.b16 %v99
  %v110 = vunpack.c.h.b16 %v99
  %v111 = vpack.c.b16 %v109, %v107
  %v112 = vpack.c.b16 %v110, %v108
  %113 = vrot.lane.b32.xlu0 %v111, 127
  %v114 = vpop.permute.xlu0 %113
  %115 = vrot.lane.b32.xlu0 %v112, 127
  %v116 = vpop.permute.xlu0 %115
  %vm117 = vcmask 1039360
  %v118 = vsel %vm117, %v114, %v116
  %v121 = vsel %vm48, %v104, 0
  %123 = vmatprep.subr.bf16.mxu0 0
  %124 = vmatpush1.bf16.msra.mxu0 %v118
  %125 = vmatprep.subr.bf16.mxu0 0
  %126 = vmatpush1.bf16.msra.mxu0 0
  %127 = vmatprep.subr.bf16.mxu0 0
  %128 = vmatpush1.bf16.msra.mxu0 0
  %129 = vmatprep.subr.bf16.mxu0 0
  %130 = vmatpush1.bf16.msra.mxu0 0
  %131 = vmatprep.subr.bf16.mxu0 0
  %132 = vmatpush1.bf16.msra.mxu0 0
  %133 = vmatprep.subr.bf16.mxu0 0
  %134 = vmatpush1.bf16.msra.mxu0 0
  %135 = vmatprep.subr.bf16.mxu0 0
  %136 = vmatpush1.bf16.msra.mxu0 0
  %137 = vmatprep.subr.bf16.mxu0 0
  %138 = vmatpush1.bf16.msra.mxu0 0
  %139 = vmatprep.subr.bf16.mxu0 0
  %140 = vmatpush1.bf16.msra.mxu0 0
  %141 = vmatprep.subr.bf16.mxu0 0
  %142 = vmatpush1.bf16.msra.mxu0 0
  %143 = vmatprep.subr.bf16.mxu0 0
  %144 = vmatpush1.bf16.msra.mxu0 0
  %145 = vmatprep.subr.bf16.mxu0 0
  %146 = vmatpush1.bf16.msra.mxu0 0
  %147 = vmatprep.subr.bf16.mxu0 0
  %148 = vmatpush1.bf16.msra.mxu0 0
  %149 = vmatprep.subr.bf16.mxu0 0
  %150 = vmatpush1.bf16.msra.mxu0 0
  %151 = vmatprep.subr.bf16.mxu0 0
  %152 = vmatpush1.bf16.msra.mxu0 0
  %153 = vmatprep.subr.bf16.mxu0 0
  %154 = vmatpush1.bf16.msra.mxu0 0
  %155 = vmatprep.mubr.bf16.mxu0 0
  %156 = vmatmul.mubr.bf16.gmra.mrb[0].mxu0 %v121
  %v157 = vpop.f32.mrb[0].mxu0
  %v158 = vadd.f32 0.0, %v157
  %v159 = vpop.f32.mrb[0].mxu0
  %v160 = vpop.f32.mrb[0].mxu0
  %v161 = vadd.f32 0.0, %v160
  %v162 = vpop.f32.mrb[0].mxu0
  %163 = vdwg.mxu0
  %v164 = vadd.f32 %v93, %v158
  %v165 = vadd.f32 %v94, %v161
  %s166 = scalar_lea.vmem %s1, 16
  %v167 = vld [vmem:[%s166] sm:$0xf]
  %v168 = vld [vmem:[%s166 + $0x4] sm:$0xf]
  %v171 = vunpack.c.l.b16 %v167
  %v172 = vunpack.c.l.b16 %v168
  %v173 = vpack.c.b16 %v172, %v171
  %174 = vrot.lane.b32.xlu0 %v111, 126
  %v175 = vpop.permute.xlu0 %174
  %176 = vrot.lane.b32.xlu0 %v112, 126
  %v177 = vpop.permute.xlu0 %176
  %vm178 = vcmask 1031168
  %v179 = vsel %vm178, %v175, %v177
  %v182 = vsel %vm48, %v173, 0
  %184 = vmatprep.subr.bf16.mxu0 0
  %185 = vmatpush1.bf16.msra.mxu0 %v179
  %186 = vmatprep.subr.bf16.mxu0 0
  %187 = vmatpush1.bf16.msra.mxu0 0
  %188 = vmatprep.subr.bf16.mxu0 0
  %189 = vmatpush1.bf16.msra.mxu0 0
  %190 = vmatprep.subr.bf16.mxu0 0
  %191 = vmatpush1.bf16.msra.mxu0 0
  %192 = vmatprep.subr.bf16.mxu0 0
  %193 = vmatpush1.bf16.msra.mxu0 0
  %194 = vmatprep.subr.bf16.mxu0 0
  %195 = vmatpush1.bf16.msra.mxu0 0
  %196 = vmatprep.subr.bf16.mxu0 0
  %197 = vmatpush1.bf16.msra.mxu0 0
  %198 = vmatprep.subr.bf16.mxu0 0
  %199 = vmatpush1.bf16.msra.mxu0 0
  %200 = vmatprep.subr.bf16.mxu0 0
  %201 = vmatpush1.bf16.msra.mxu0 0
  %202 = vmatprep.subr.bf16.mxu0 0
  %203 = vmatpush1.bf16.msra.mxu0 0
  %204 = vmatprep.subr.bf16.mxu0 0
  %205 = vmatpush1.bf16.msra.mxu0 0
  %206 = vmatprep.subr.bf16.mxu0 0
  %207 = vmatpush1.bf16.msra.mxu0 0
  %208 = vmatprep.subr.bf16.mxu0 0
  %209 = vmatpush1.bf16.msra.mxu0 0
  %210 = vmatprep.subr.bf16.mxu0 0
  %211 = vmatpush1.bf16.msra.mxu0 0
  %212 = vmatprep.subr.bf16.mxu0 0
  %213 = vmatpush1.bf16.msra.mxu0 0
  %214 = vmatprep.subr.bf16.mxu0 0
  %215 = vmatpush1.bf16.msra.mxu0 0
  %216 = vmatprep.mubr.bf16.mxu0 0
  %217 = vmatmul.mubr.bf16.gmra.mrb[0].mxu0 %v182
  %v218 = vpop.f32.mrb[0].mxu0
  %v219 = vadd.f32 0.0, %v218
  %v220 = vpop.f32.mrb[0].mxu0
  %v221 = vpop.f32.mrb[0].mxu0
  %v222 = vadd.f32 0.0, %v221
  %v223 = vpop.f32.mrb[0].mxu0
  %224 = vdwg.mxu0
  %v225 = vadd.f32 %v164, %v219
  %v226 = vadd.f32 %v165, %v222
  %s227 = scalar_lea.vmem %s1, 24
  %v228 = vld [vmem:[%s227] sm:$0xf]
  %v229 = vld [vmem:[%s227 + $0x4] sm:$0xf]
  %v232 = vunpack.c.l.b16 %v228
  %v233 = vunpack.c.l.b16 %v229
  %v234 = vpack.c.b16 %v233, %v232
  %235 = vrot.lane.b32.xlu0 %v111, 122
  %v236 = vpop.permute.xlu0 %235
  %237 = vrot.lane.b32.xlu0 %v112, 122
  %v238 = vpop.permute.xlu0 %237
  %vm239 = vcmask 998400
  %v240 = vsel %vm239, %v236, %v238
  %v243 = vsel %vm48, %v234, 0
  %245 = vmatprep.subr.bf16.mxu0 0
  %246 = vmatpush1.bf16.msra.mxu0 %v240
  %247 = vmatprep.subr.bf16.mxu0 0
  %248 = vmatpush1.bf16.msra.mxu0 0
  %249 = vmatprep.subr.bf16.mxu0 0
  %250 = vmatpush1.bf16.msra.mxu0 0
  %251 = vmatprep.subr.bf16.mxu0 0
  %252 = vmatpush1.bf16.msra.mxu0 0
  %253 = vmatprep.subr.bf16.mxu0 0
  %254 = vmatpush1.bf16.msra.mxu0 0
  %255 = vmatprep.subr.bf16.mxu0 0
  %256 = vmatpush1.bf16.msra.mxu0 0
  %257 = vmatprep.subr.bf16.mxu0 0
  %258 = vmatpush1.bf16.msra.mxu0 0
  %259 = vmatprep.subr.bf16.mxu0 0
  %260 = vmatpush1.bf16.msra.mxu0 0
  %261 = vmatprep.subr.bf16.mxu0 0
  %262 = vmatpush1.bf16.msra.mxu0 0
  %263 = vmatprep.subr.bf16.mxu0 0
  %264 = vmatpush1.bf16.msra.mxu0 0
  %265 = vmatprep.subr.bf16.mxu0 0
  %266 = vmatpush1.bf16.msra.mxu0 0
  %267 = vmatprep.subr.bf16.mxu0 0
  %268 = vmatpush1.bf16.msra.mxu0 0
  %269 = vmatprep.subr.bf16.mxu0 0
  %270 = vmatpush1.bf16.msra.mxu0 0
  %271 = vmatprep.subr.bf16.mxu0 0
  %272 = vmatpush1.bf16.msra.mxu0 0
  %273 = vmatprep.subr.bf16.mxu0 0
  %274 = vmatpush1.bf16.msra.mxu0 0
  %275 = vmatprep.subr.bf16.mxu0 0
  %276 = vmatpush1.bf16.msra.mxu0 0
  %277 = vmatprep.mubr.bf16.mxu0 0
  %278 = vmatmul.mubr.bf16.gmra.mrb[0].mxu0 %v243
  %v279 = vpop.f32.mrb[0].mxu0
  %v280 = vadd.f32 0.0, %v279
  %v281 = vpop.f32.mrb[0].mxu0
  %v282 = vpop.f32.mrb[0].mxu0
  %v283 = vadd.f32 0.0, %v282
  %v284 = vpop.f32.mrb[0].mxu0
  %285 = vdwg.mxu0
  %v286 = vadd.f32 %v225, %v280
  %v287 = vadd.f32 %v226, %v283
  %s288 = scalar_lea.vmem %s1, 32
  %v289 = vld [vmem:[%s288] sm:$0xf]
  %v290 = vld [vmem:[%s288 + $0x4] sm:$0xf]
  %v293 = vunpack.c.l.b16 %v289
  %v294 = vunpack.c.l.b16 %v290
  %v295 = vpack.c.b16 %v294, %v293
  %296 = vrot.lane.b32.xlu0 %v111, 121
  %v297 = vpop.permute.xlu0 %296
  %298 = vrot.lane.b32.xlu0 %v112, 121
  %v299 = vpop.permute.xlu0 %298
  %vm300 = vcmask 990208
  %v301 = vsel %vm300, %v297, %v299
  %v304 = vsel %vm48, %v295, 0
  %306 = vmatprep.subr.bf16.mxu0 0
  %307 = vmatpush1.bf16.msra.mxu0 %v301
  %308 = vmatprep.subr.bf16.mxu0 0
  %309 = vmatpush1.bf16.msra.mxu0 0
  %310 = vmatprep.subr.bf16.mxu0 0
  %311 = vmatpush1.bf16.msra.mxu0 0
  %312 = vmatprep.subr.bf16.mxu0 0
  %313 = vmatpush1.bf16.msra.mxu0 0
  %314 = vmatprep.subr.bf16.mxu0 0
  %315 = vmatpush1.bf16.msra.mxu0 0
  %316 = vmatprep.subr.bf16.mxu0 0
  %317 = vmatpush1.bf16.msra.mxu0 0
  %318 = vmatprep.subr.bf16.mxu0 0
  %319 = vmatpush1.bf16.msra.mxu0 0
  %320 = vmatprep.subr.bf16.mxu0 0
  %321 = vmatpush1.bf16.msra.mxu0 0
  %322 = vmatprep.subr.bf16.mxu0 0
  %323 = vmatpush1.bf16.msra.mxu0 0
  %324 = vmatprep.subr.bf16.mxu0 0
  %325 = vmatpush1.bf16.msra.mxu0 0
  %326 = vmatprep.subr.bf16.mxu0 0
  %327 = vmatpush1.bf16.msra.mxu0 0
  %328 = vmatprep.subr.bf16.mxu0 0
  %329 = vmatpush1.bf16.msra.mxu0 0
  %330 = vmatprep.subr.bf16.mxu0 0
  %331 = vmatpush1.bf16.msra.mxu0 0
  %332 = vmatprep.subr.bf16.mxu0 0
  %333 = vmatpush1.bf16.msra.mxu0 0
  %334 = vmatprep.subr.bf16.mxu0 0
  %335 = vmatpush1.bf16.msra.mxu0 0
  %336 = vmatprep.subr.bf16.mxu0 0
  %337 = vmatpush1.bf16.msra.mxu0 0
  %338 = vmatprep.mubr.bf16.mxu0 0
  %339 = vmatmul.mubr.bf16.gmra.mrb[0].mxu0 %v304
  %v340 = vpop.f32.mrb[0].mxu0
  %v341 = vadd.f32 0.0, %v340
  %v342 = vpop.f32.mrb[0].mxu0
  %v343 = vpop.f32.mrb[0].mxu0
  %v344 = vadd.f32 0.0, %v343
  %v345 = vpop.f32.mrb[0].mxu0
  %346 = vdwg.mxu0
  %v347 = vadd.f32 %v286, %v341
  %v348 = vadd.f32 %v287, %v344
  %s349 = scalar_lea.vmem %s1, 40
  %v350 = vld [vmem:[%s349] sm:$0xf]
  %v351 = vld [vmem:[%s349 + $0x4] sm:$0xf]
  %v354 = vunpack.c.l.b16 %v350
  %v355 = vunpack.c.l.b16 %v351
  %v356 = vpack.c.b16 %v355, %v354
  %357 = vrot.lane.b32.xlu0 %v111, 120
  %v358 = vpop.permute.xlu0 %357
  %359 = vrot.lane.b32.xlu0 %v112, 120
  %v360 = vpop.permute.xlu0 %359
  %vm361 = vcmask 982016
  %v362 = vsel %vm361, %v358, %v360
  %v365 = vsel %vm48, %v356, 0
  %367 = vmatprep.subr.bf16.mxu0 0
  %368 = vmatpush1.bf16.msra.mxu0 %v362
  %369 = vmatprep.subr.bf16.mxu0 0
  %370 = vmatpush1.bf16.msra.mxu0 0
  %371 = vmatprep.subr.bf16.mxu0 0
  %372 = vmatpush1.bf16.msra.mxu0 0
  %373 = vmatprep.subr.bf16.mxu0 0
  %374 = vmatpush1.bf16.msra.mxu0 0
  %375 = vmatprep.subr.bf16.mxu0 0
  %376 = vmatpush1.bf16.msra.mxu0 0
  %377 = vmatprep.subr.bf16.mxu0 0
  %378 = vmatpush1.bf16.msra.mxu0 0
  %379 = vmatprep.subr.bf16.mxu0 0
  %380 = vmatpush1.bf16.msra.mxu0 0
  %381 = vmatprep.subr.bf16.mxu0 0
  %382 = vmatpush1.bf16.msra.mxu0 0
  %383 = vmatprep.subr.bf16.mxu0 0
  %384 = vmatpush1.bf16.msra.mxu0 0
  %385 = vmatprep.subr.bf16.mxu0 0
  %386 = vmatpush1.bf16.msra.mxu0 0
  %387 = vmatprep.subr.bf16.mxu0 0
  %388 = vmatpush1.bf16.msra.mxu0 0
  %389 = vmatprep.subr.bf16.mxu0 0
  %390 = vmatpush1.bf16.msra.mxu0 0
  %391 = vmatprep.subr.bf16.mxu0 0
  %392 = vmatpush1.bf16.msra.mxu0 0
  %393 = vmatprep.subr.bf16.mxu0 0
  %394 = vmatpush1.bf16.msra.mxu0 0
  %395 = vmatprep.subr.bf16.mxu0 0
  %396 = vmatpush1.bf16.msra.mxu0 0
  %397 = vmatprep.subr.bf16.mxu0 0
  %398 = vmatpush1.bf16.msra.mxu0 0
  %399 = vmatprep.mubr.bf16.mxu0 0
  %400 = vmatmul.mubr.bf16.gmra.mrb[0].mxu0 %v365
  %v401 = vpop.f32.mrb[0].mxu0
  %v402 = vadd.f32 0.0, %v401
  %v403 = vpop.f32.mrb[0].mxu0
  %v404 = vpop.f32.mrb[0].mxu0
  %v405 = vadd.f32 0.0, %v404
  %v406 = vpop.f32.mrb[0].mxu0
  %407 = vdwg.mxu0
  %v408 = vadd.f32 %v347, %v402
  %v409 = vadd.f32 %v348, %v405
  %s410 = scalar_lea.vmem %s1, 48
  %v411 = vld [vmem:[%s410] sm:$0xf]
  %v412 = vld [vmem:[%s410 + $0x4] sm:$0xf]
  %v415 = vunpack.c.l.b16 %v411
  %v416 = vunpack.c.l.b16 %v412
  %v417 = vpack.c.b16 %v416, %v415
  %418 = vrot.lane.b32.xlu0 %v111, 116
  %v419 = vpop.permute.xlu0 %418
  %420 = vrot.lane.b32.xlu0 %v112, 116
  %v421 = vpop.permute.xlu0 %420
  %vm422 = vcmask 949248
  %v423 = vsel %vm422, %v419, %v421
  %v426 = vsel %vm48, %v417, 0
  %428 = vmatprep.subr.bf16.mxu0 0
  %429 = vmatpush1.bf16.msra.mxu0 %v423
  %430 = vmatprep.subr.bf16.mxu0 0
  %431 = vmatpush1.bf16.msra.mxu0 0
  %432 = vmatprep.subr.bf16.mxu0 0
  %433 = vmatpush1.bf16.msra.mxu0 0
  %434 = vmatprep.subr.bf16.mxu0 0
  %435 = vmatpush1.bf16.msra.mxu0 0
  %436 = vmatprep.subr.bf16.mxu0 0
  %437 = vmatpush1.bf16.msra.mxu0 0
  %438 = vmatprep.subr.bf16.mxu0 0
  %439 = vmatpush1.bf16.msra.mxu0 0
  %440 = vmatprep.subr.bf16.mxu0 0
  %441 = vmatpush1.bf16.msra.mxu0 0
  %442 = vmatprep.subr.bf16.mxu0 0
  %443 = vmatpush1.bf16.msra.mxu0 0
  %444 = vmatprep.subr.bf16.mxu0 0
  %445 = vmatpush1.bf16.msra.mxu0 0
  %446 = vmatprep.subr.bf16.mxu0 0
  %447 = vmatpush1.bf16.msra.mxu0 0
  %448 = vmatprep.subr.bf16.mxu0 0
  %449 = vmatpush1.bf16.msra.mxu0 0
  %450 = vmatprep.subr.bf16.mxu0 0
  %451 = vmatpush1.bf16.msra.mxu0 0
  %452 = vmatprep.subr.bf16.mxu0 0
  %453 = vmatpush1.bf16.msra.mxu0 0
  %454 = vmatprep.subr.bf16.mxu0 0
  %455 = vmatpush1.bf16.msra.mxu0 0
  %456 = vmatprep.subr.bf16.mxu0 0
  %457 = vmatpush1.bf16.msra.mxu0 0
  %458 = vmatprep.subr.bf16.mxu0 0
  %459 = vmatpush1.bf16.msra.mxu0 0
  %460 = vmatprep.mubr.bf16.mxu0 0
  %461 = vmatmul.mubr.bf16.gmra.mrb[0].mxu0 %v426
  %v462 = vpop.f32.mrb[0].mxu0
  %v463 = vadd.f32 0.0, %v462
  %v464 = vpop.f32.mrb[0].mxu0
  %v465 = vpop.f32.mrb[0].mxu0
  %v466 = vadd.f32 0.0, %v465
  %v467 = vpop.f32.mrb[0].mxu0
  %468 = vdwg.mxu0
  %v469 = vadd.f32 %v408, %v463
  %v470 = vadd.f32 %v409, %v466
  %s471 = scalar_lea.vmem %s1, 56
  %v472 = vld [vmem:[%s471] sm:$0xf]
  %v473 = vld [vmem:[%s471 + $0x4] sm:$0xf]
  %v476 = vunpack.c.l.b16 %v472
  %v477 = vunpack.c.l.b16 %v473
  %v478 = vpack.c.b16 %v477, %v476
  %479 = vrot.lane.b32.xlu0 %v111, 115
  %v480 = vpop.permute.xlu0 %479
  %481 = vrot.lane.b32.xlu0 %v112, 115
  %v482 = vpop.permute.xlu0 %481
  %vm483 = vcmask 941056
  %v484 = vsel %vm483, %v480, %v482
  %v487 = vsel %vm48, %v478, 0
  %489 = vmatprep.subr.bf16.mxu0 0
  %490 = vmatpush1.bf16.msra.mxu0 %v484
  %491 = vmatprep.subr.bf16.mxu0 0
  %492 = vmatpush1.bf16.msra.mxu0 0
  %493 = vmatprep.subr.bf16.mxu0 0
  %494 = vmatpush1.bf16.msra.mxu0 0
  %495 = vmatprep.subr.bf16.mxu0 0
  %496 = vmatpush1.bf16.msra.mxu0 0
  %497 = vmatprep.subr.bf16.mxu0 0
  %498 = vmatpush1.bf16.msra.mxu0 0
  %499 = vmatprep.subr.bf16.mxu0 0
  %500 = vmatpush1.bf16.msra.mxu0 0
  %501 = vmatprep.subr.bf16.mxu0 0
  %502 = vmatpush1.bf16.msra.mxu0 0
  %503 = vmatprep.subr.bf16.mxu0 0
  %504 = vmatpush1.bf16.msra.mxu0 0
  %505 = vmatprep.subr.bf16.mxu0 0
  %506 = vmatpush1.bf16.msra.mxu0 0
  %507 = vmatprep.subr.bf16.mxu0 0
  %508 = vmatpush1.bf16.msra.mxu0 0
  %509 = vmatprep.subr.bf16.mxu0 0
  %510 = vmatpush1.bf16.msra.mxu0 0
  %511 = vmatprep.subr.bf16.mxu0 0
  %512 = vmatpush1.bf16.msra.mxu0 0
  %513 = vmatprep.subr.bf16.mxu0 0
  %514 = vmatpush1.bf16.msra.mxu0 0
  %515 = vmatprep.subr.bf16.mxu0 0
  %516 = vmatpush1.bf16.msra.mxu0 0
  %517 = vmatprep.subr.bf16.mxu0 0
  %518 = vmatpush1.bf16.msra.mxu0 0
  %519 = vmatprep.subr.bf16.mxu0 0
  %520 = vmatpush1.bf16.msra.mxu0 0
  %521 = vmatprep.mubr.bf16.mxu0 0
  %522 = vmatmul.mubr.bf16.gmra.mrb[0].mxu0 %v487
  %v523 = vpop.f32.mrb[0].mxu0
  %v524 = vadd.f32 0.0, %v523
  %v525 = vpop.f32.mrb[0].mxu0
  %v526 = vpop.f32.mrb[0].mxu0
  %v527 = vadd.f32 0.0, %v526
  %v528 = vpop.f32.mrb[0].mxu0
  %529 = vdwg.mxu0
  %v530 = vadd.f32 %v469, %v524
  %v531 = vadd.f32 %v470, %v527
  %s532 = scalar_lea.vmem %s1, 64
  %v533 = vld [vmem:[%s532] sm:$0xf]
  %v534 = vld [vmem:[%s532 + $0x4] sm:$0xf]
  %v537 = vunpack.c.l.b16 %v533
  %v538 = vunpack.c.l.b16 %v534
  %v539 = vpack.c.b16 %v538, %v537
  %540 = vrot.lane.b32.xlu0 %v111, 114
  %v541 = vpop.permute.xlu0 %540
  %542 = vrot.lane.b32.xlu0 %v112, 114
  %v543 = vpop.permute.xlu0 %542
  %vm544 = vcmask 932864
  %v545 = vsel %vm544, %v541, %v543
  %v548 = vsel %vm48, %v539, 0
  %550 = vmatprep.subr.bf16.mxu0 0
  %551 = vmatpush1.bf16.msra.mxu0 %v545
  %552 = vmatprep.subr.bf16.mxu0 0
  %553 = vmatpush1.bf16.msra.mxu0 0
  %554 = vmatprep.subr.bf16.mxu0 0
  %555 = vmatpush1.bf16.msra.mxu0 0
  %556 = vmatprep.subr.bf16.mxu0 0
  %557 = vmatpush1.bf16.msra.mxu0 0
  %558 = vmatprep.subr.bf16.mxu0 0
  %559 = vmatpush1.bf16.msra.mxu0 0
  %560 = vmatprep.subr.bf16.mxu0 0
  %561 = vmatpush1.bf16.msra.mxu0 0
  %562 = vmatprep.subr.bf16.mxu0 0
  %563 = vmatpush1.bf16.msra.mxu0 0
  %564 = vmatprep.subr.bf16.mxu0 0
  %565 = vmatpush1.bf16.msra.mxu0 0
  %566 = vmatprep.subr.bf16.mxu0 0
  %567 = vmatpush1.bf16.msra.mxu0 0
  %568 = vmatprep.subr.bf16.mxu0 0
  %569 = vmatpush1.bf16.msra.mxu0 0
  %570 = vmatprep.subr.bf16.mxu0 0
  %571 = vmatpush1.bf16.msra.mxu0 0
  %572 = vmatprep.subr.bf16.mxu0 0
  %573 = vmatpush1.bf16.msra.mxu0 0
  %574 = vmatprep.subr.bf16.mxu0 0
  %575 = vmatpush1.bf16.msra.mxu0 0
  %576 = vmatprep.subr.bf16.mxu0 0
  %577 = vmatpush1.bf16.msra.mxu0 0
  %578 = vmatprep.subr.bf16.mxu0 0
  %579 = vmatpush1.bf16.msra.mxu0 0
  %580 = vmatprep.subr.bf16.mxu0 0
  %581 = vmatpush1.bf16.msra.mxu0 0
  %582 = vmatprep.mubr.bf16.mxu0 0
  %583 = vmatmul.mubr.bf16.gmra.mrb[0].mxu0 %v548
  %v584 = vpop.f32.mrb[0].mxu0
  %v585 = vadd.f32 0.0, %v584
  %v586 = vpop.f32.mrb[0].mxu0
  %v587 = vpop.f32.mrb[0].mxu0
  %v588 = vadd.f32 0.0, %v587
  %v589 = vpop.f32.mrb[0].mxu0
  %590 = vdwg.mxu0
  %v591 = vadd.f32 %v530, %v585
  %v592 = vadd.f32 %v531, %v588
  %v593 = vld [vmem:[%s4] sm:$0xf]
  %v594 = vld [vmem:[%s4 + $0x4] sm:$0xf]
  %v595 = vld [vmem:[%s3] sm:$0xf]
  %v596 = vld [vmem:[%s3 + $0x4] sm:$0xf]
  %v599 = vunpack.c.l.b16 %v593
  %v600 = vunpack.c.l.b16 %v594
  %v601 = vpack.c.b16 %v600, %v599
  %v604 = vunpack.c.l.b16 %v595
  %v605 = vunpack.c.l.b16 %v596
  %v606 = vpack.c.b16 %v605, %v604
  %v609 = vsel %vm48, %v601, 0
  %611 = vmatprep.subr.bf16.mxu0 0
  %612 = vmatpush1.bf16.msra.mxu0 %v606
  %613 = vmatprep.subr.bf16.mxu0 0
  %614 = vmatpush1.bf16.msra.mxu0 0
  %615 = vmatprep.subr.bf16.mxu0 0
  %616 = vmatpush1.bf16.msra.mxu0 0
  %617 = vmatprep.subr.bf16.mxu0 0
  %618 = vmatpush1.bf16.msra.mxu0 0
  %619 = vmatprep.subr.bf16.mxu0 0
  %620 = vmatpush1.bf16.msra.mxu0 0
  %621 = vmatprep.subr.bf16.mxu0 0
  %622 = vmatpush1.bf16.msra.mxu0 0
  %623 = vmatprep.subr.bf16.mxu0 0
  %624 = vmatpush1.bf16.msra.mxu0 0
  %625 = vmatprep.subr.bf16.mxu0 0
  %626 = vmatpush1.bf16.msra.mxu0 0
  %627 = vmatprep.subr.bf16.mxu0 0
  %628 = vmatpush1.bf16.msra.mxu0 0
  %629 = vmatprep.subr.bf16.mxu0 0
  %630 = vmatpush1.bf16.msra.mxu0 0
  %631 = vmatprep.subr.bf16.mxu0 0
  %632 = vmatpush1.bf16.msra.mxu0 0
  %633 = vmatprep.subr.bf16.mxu0 0
  %634 = vmatpush1.bf16.msra.mxu0 0
  %635 = vmatprep.subr.bf16.mxu0 0
  %636 = vmatpush1.bf16.msra.mxu0 0
  %637 = vmatprep.subr.bf16.mxu0 0
  %638 = vmatpush1.bf16.msra.mxu0 0
  %639 = vmatprep.subr.bf16.mxu0 0
  %640 = vmatpush1.bf16.msra.mxu0 0
  %641 = vmatprep.subr.bf16.mxu0 0
  %642 = vmatpush1.bf16.msra.mxu0 0
  %643 = vmatprep.mubr.bf16.mxu0 0
  %644 = vmatmul.mubr.bf16.gmra.mrb[0].mxu0 %v609
  %v645 = vpop.f32.mrb[0].mxu0
  %v646 = vadd.f32 0.0, %v645
  %v647 = vpop.f32.mrb[0].mxu0
  %v648 = vpop.f32.mrb[0].mxu0
  %v649 = vadd.f32 0.0, %v648
  %v650 = vpop.f32.mrb[0].mxu0
  %651 = vdwg.mxu0
  %v652 = vadd.f32 %v591, %v646
  %v653 = vadd.f32 %v592, %v649
  %v654 = vmax.f32 %v652, 0.0
  %v655 = vmax.f32 %v653, 0.0
  %v656 = vpack.c.bf16 %v655, %v654
  %v658 = vunpack.c.l.b16 %v656
  %v659 = vunpack.c.h.b16 %v656
  %v660 = vpack.c.b16 %v658, %v658
  %v661 = vpack.c.b16 %v659, %v659
  %664 = vst [vmem:[%s5] sm:$0xf] %v660
  %665 = vst [vmem:[%s5 + $0x4] sm:$0xf] %v661
  // Predicated region
  $region22: #{resnet_forward.16} parent=0 // pred_check
    _
  $region23: #{resnet_forward.16} parent=0 // pred_check_branch
    %667 = sbr.rel (0) target = $region25
  $region24: #{resnet_forward.16} parent=0 // pred_region
    _
  $region25: #{resnet_forward.16} parent=0 // pred_fallthru
    _
  // Predicated region
  $region26: #{resnet_forward.16} parent=0 // pred_check
    _
  $region27: #{resnet_forward.16} parent=0 // pred_check_branch
    %669 = sbr.rel (0) target = $region29
  $region28: #{resnet_forward.16} parent=0 // pred_region
    _
  $region29: #{resnet_forward.16} parent=0 // pred_fallthru
    _

// kernel: resnet_forward.17
$region0: #{resnet_forward.17}
  #allocation0 [shape = 'u32[]', space=smem, size = 0x4, offset = 0x4, fixed_abs, tag = 'smem constant byte address 0x4 - core index']
  #allocation1 [shape = 'u32[144,128]{1,0:T(1,128)}', space=vmem, size = 0x12000, scoped, tag = 'internal scratch']
  %s0 = inlined_call_operand.vmem [shape: bf16[16,256], index: 0, kind: input, shape index: {}]
  %s1 = inlined_call_operand.vmem [shape: bf16[9,32,16], index: 1, kind: input, shape index: {}]
  %s2 = inlined_call_operand.vmem [shape: f32[32,1], index: 2, kind: input, shape index: {}]
  %s3 = inlined_call_operand.vmem [shape: bf16[32,128], index: 3, kind: output, shape index: {}]
  %s4 = sld [smem:[#allocation0]]
  $region22: #{resnet_forward.17} parent=0
    _
  %s6 = ssub.s32 1, %s4
  %s7 = scalar_select 0, %s6, %s4
  // Predicated region
  $region2: #{resnet_forward.17} parent=0 // pred_check
    _
  $region3: #{resnet_forward.17} parent=0 // pred_check_branch
    %9 = sbr.rel (0) target = $region5
  $region4: #{resnet_forward.17} parent=0 // pred_region
    _
  $region5: #{resnet_forward.17} parent=0 // pred_fallthru
    _
  // Predicated region
  $region6: #{resnet_forward.17} parent=0 // pred_check
    _
  $region7: #{resnet_forward.17} parent=0 // pred_check_branch
    %11 = sbr.rel (0) target = $region9
  $region8: #{resnet_forward.17} parent=0 // pred_region
    _
  $region9: #{resnet_forward.17} parent=0 // pred_fallthru
    _
  // Predicated region
  $region10: #{resnet_forward.17} parent=0 // pred_check
    _
  $region11: #{resnet_forward.17} parent=0 // pred_check_branch
    %13 = sbr.rel (0) target = $region13
  $region12: #{resnet_forward.17} parent=0 // pred_region
    _
  $region13: #{resnet_forward.17} parent=0 // pred_fallthru
    _
  %v15 = vld [vmem:[%s2] sm:$0xff]
  %v16 = vld [vmem:[%s2 + $0x8] sm:$0xff]
  %v17 = vld [vmem:[%s2 + $0x10] sm:$0xff]
  %v18 = vld [vmem:[%s2 + $0x18] sm:$0xff]
  %20 = vset.pattern.permute.xlu0 0
  %21 = vperm.xlu0 %20, %v15
  %v22 = vpop.permute.xlu0 %21
  %25 = vset.pattern.permute.xlu0 0
  %26 = vperm.xlu0 %25, %v16
  %v27 = vpop.permute.xlu0 %26
  %30 = vset.pattern.permute.xlu0 0
  %31 = vperm.xlu0 %30, %v17
  %v32 = vpop.permute.xlu0 %31
  %35 = vset.pattern.permute.xlu0 0
  %36 = vperm.xlu0 %35, %v18
  %v37 = vpop.permute.xlu0 %36
  %v39 = vld [vmem:[%s1] sm:$0xf]
  %v40 = vld [vmem:[%s1 + $0x4] sm:$0xf]
  %v41 = vld [vmem:[%s1 + $0x8] sm:$0xf]
  %v42 = vld [vmem:[%s1 + $0xc] sm:$0xf]
  %v43 = vld [vmem:[%s0] sm:$0xf]
  %v44 = vld [vmem:[%s0 + $0x8] sm:$0xf]
  %v49 = vunpack.c.l.b16 %v39
  %v50 = vunpack.c.l.b16 %v40
  %v51 = vunpack.c.l.b16 %v41
  %v52 = vunpack.c.l.b16 %v42
  %v53 = vpack.c.b16 %v50, %v49
  %v54 = vpack.c.b16 %v52, %v51
  %v57 = vunpack.c.l.b16 %v43
  %v58 = vunpack.c.l.b16 %v44
  %v59 = vpack.c.b16 %v58, %v57
  %vm61 = vcmask 130048
  %v63 = vsel %vm61, %v53, 0
  %v66 = vsel %vm61, %v54, 0
  %68 = vmatprep.subr.bf16.mxu0 0
  %69 = vmatpush1.bf16.msra.mxu0 %v59
  %70 = vmatprep.subr.bf16.mxu0 0
  %71 = vmatpush1.bf16.msra.mxu0 0
  %72 = vmatprep.subr.bf16.mxu0 0
  %73 = vmatpush1.bf16.msra.mxu0 0
  %74 = vmatprep.subr.bf16.mxu0 0
  %75 = vmatpush1.bf16.msra.mxu0 0
  %76 = vmatprep.subr.bf16.mxu0 0
  %77 = vmatpush1.bf16.msra.mxu0 0
  %78 = vmatprep.subr.bf16.mxu0 0
  %79 = vmatpush1.bf16.msra.mxu0 0
  %80 = vmatprep.subr.bf16.mxu0 0
  %81 = vmatpush1.bf16.msra.mxu0 0
  %82 = vmatprep.subr.bf16.mxu0 0
  %83 = vmatpush1.bf16.msra.mxu0 0
  %84 = vmatprep.subr.bf16.mxu0 0
  %85 = vmatpush1.bf16.msra.mxu0 0
  %86 = vmatprep.subr.bf16.mxu0 0
  %87 = vmatpush1.bf16.msra.mxu0 0
  %88 = vmatprep.subr.bf16.mxu0 0
  %89 = vmatpush1.bf16.msra.mxu0 0
  %90 = vmatprep.subr.bf16.mxu0 0
  %91 = vmatpush1.bf16.msra.mxu0 0
  %92 = vmatprep.subr.bf16.mxu0 0
  %93 = vmatpush1.bf16.msra.mxu0 0
  %94 = vmatprep.subr.bf16.mxu0 0
  %95 = vmatpush1.bf16.msra.mxu0 0
  %96 = vmatprep.subr.bf16.mxu0 0
  %97 = vmatpush1.bf16.msra.mxu0 0
  %98 = vmatprep.subr.bf16.mxu0 0
  %99 = vmatpush1.bf16.msra.mxu0 0
  %100 = vmatprep.mubr.bf16.mxu0 0
  %101 = vmatmul.mubr.bf16.gmra.mrb[0].mxu0 %v63
  %v102 = vpop.f32.mrb[0].mxu0
  %v103 = vadd.f32 0.0, %v102
  %v104 = vpop.f32.mrb[0].mxu0
  %v105 = vpop.f32.mrb[0].mxu0
  %v106 = vadd.f32 0.0, %v105
  %v107 = vpop.f32.mrb[0].mxu0
  %108 = vmatprep.mubr.bf16.mxu0 0
  %109 = vmatmul.mubr.bf16.gmra.mrb[0].mxu0 %v66
  %v110 = vpop.f32.mrb[0].mxu0
  %v111 = vadd.f32 0.0, %v110
  %v112 = vpop.f32.mrb[0].mxu0
  %v113 = vpop.f32.mrb[0].mxu0
  %v114 = vadd.f32 0.0, %v113
  %v115 = vpop.f32.mrb[0].mxu0
  %116 = vdwg.mxu0
  %v117 = vadd.f32 %v22, %v103
  %v118 = vadd.f32 %v27, %v106
  %v119 = vadd.f32 %v32, %v111
  %v120 = vadd.f32 %v37, %v114
  %s121 = scalar_lea.vmem %s1, 16
  %v122 = vld [vmem:[%s121] sm:$0xf]
  %v123 = vld [vmem:[%s121 + $0x4] sm:$0xf]
  %v124 = vld [vmem:[%s121 + $0x8] sm:$0xf]
  %v125 = vld [vmem:[%s121 + $0xc] sm:$0xf]
  %v126 = vld [vmem:[%s0] sm:$0xff]
  %v127 = vld [vmem:[%s0 + $0x8] sm:$0xff]
  %v132 = vunpack.c.l.b16 %v122
  %v133 = vunpack.c.l.b16 %v123
  %v134 = vunpack.c.l.b16 %v124
  %v135 = vunpack.c.l.b16 %v125
  %v136 = vpack.c.b16 %v133, %v132
  %v137 = vpack.c.b16 %v135, %v134
  %v140 = vunpack.c.l.b16 %v126
  %v141 = vunpack.c.h.b16 %v126
  %v142 = vunpack.c.l.b16 %v127
  %v143 = vunpack.c.h.b16 %v127
  %v144 = vpack.c.b16 %v142, %v140
  %v145 = vpack.c.b16 %v143, %v141
  %146 = vrot.lane.b32.xlu0 %v144, 127
  %v147 = vpop.permute.xlu0 %146
  %148 = vrot.lane.b32.xlu0 %v145, 127
  %v149 = vpop.permute.xlu0 %148
  %vm150 = vcmask 1039360
  %v151 = vsel %vm150, %v147, %v149
  %v154 = vsel %vm61, %v136, 0
  %v157 = vsel %vm61, %v137, 0
  %159 = vmatprep.subr.bf16.mxu0 0
  %160 = vmatpush1.bf16.msra.mxu0 %v151
  %161 = vmatprep.subr.bf16.mxu0 0
  %162 = vmatpush1.bf16.msra.mxu0 0
  %163 = vmatprep.subr.bf16.mxu0 0
  %164 = vmatpush1.bf16.msra.mxu0 0
  %165 = vmatprep.subr.bf16.mxu0 0
  %166 = vmatpush1.bf16.msra.mxu0 0
  %167 = vmatprep.subr.bf16.mxu0 0
  %168 = vmatpush1.bf16.msra.mxu0 0
  %169 = vmatprep.subr.bf16.mxu0 0
  %170 = vmatpush1.bf16.msra.mxu0 0
  %171 = vmatprep.subr.bf16.mxu0 0
  %172 = vmatpush1.bf16.msra.mxu0 0
  %173 = vmatprep.subr.bf16.mxu0 0
  %174 = vmatpush1.bf16.msra.mxu0 0
  %175 = vmatprep.subr.bf16.mxu0 0
  %176 = vmatpush1.bf16.msra.mxu0 0
  %177 = vmatprep.subr.bf16.mxu0 0
  %178 = vmatpush1.bf16.msra.mxu0 0
  %179 = vmatprep.subr.bf16.mxu0 0
  %180 = vmatpush1.bf16.msra.mxu0 0
  %181 = vmatprep.subr.bf16.mxu0 0
  %182 = vmatpush1.bf16.msra.mxu0 0
  %183 = vmatprep.subr.bf16.mxu0 0
  %184 = vmatpush1.bf16.msra.mxu0 0
  %185 = vmatprep.subr.bf16.mxu0 0
  %186 = vmatpush1.bf16.msra.mxu0 0
  %187 = vmatprep.subr.bf16.mxu0 0
  %188 = vmatpush1.bf16.msra.mxu0 0
  %189 = vmatprep.subr.bf16.mxu0 0
  %190 = vmatpush1.bf16.msra.mxu0 0
  %191 = vmatprep.mubr.bf16.mxu0 0
  %192 = vmatmul.mubr.bf16.gmra.mrb[0].mxu0 %v154
  %v193 = vpop.f32.mrb[0].mxu0
  %v194 = vadd.f32 0.0, %v193
  %v195 = vpop.f32.mrb[0].mxu0
  %v196 = vpop.f32.mrb[0].mxu0
  %v197 = vadd.f32 0.0, %v196
  %v198 = vpop.f32.mrb[0].mxu0
  %199 = vmatprep.mubr.bf16.mxu0 0
  %200 = vmatmul.mubr.bf16.gmra.mrb[0].mxu0 %v157
  %v201 = vpop.f32.mrb[0].mxu0
  %v202 = vadd.f32 0.0, %v201
  %v203 = vpop.f32.mrb[0].mxu0
  %v204 = vpop.f32.mrb[0].mxu0
  %v205 = vadd.f32 0.0, %v204
  %v206 = vpop.f32.mrb[0].mxu0
  %207 = vdwg.mxu0
  %v208 = vadd.f32 %v117, %v194
  %v209 = vadd.f32 %v118, %v197
  %v210 = vadd.f32 %v119, %v202
  %v211 = vadd.f32 %v120, %v205
  %s212 = scalar_lea.vmem %s1, 32
  %v213 = vld [vmem:[%s212] sm:$0xf]
  %v214 = vld [vmem:[%s212 + $0x4] sm:$0xf]
  %v215 = vld [vmem:[%s212 + $0x8] sm:$0xf]
  %v216 = vld [vmem:[%s212 + $0xc] sm:$0xf]
  %v221 = vunpack.c.l.b16 %v213
  %v222 = vunpack.c.l.b16 %v214
  %v223 = vunpack.c.l.b16 %v215
  %v224 = vunpack.c.l.b16 %v216
  %v225 = vpack.c.b16 %v222, %v221
  %v226 = vpack.c.b16 %v224, %v223
  %227 = vrot.lane.b32.xlu0 %v144, 126
  %v228 = vpop.permute.xlu0 %227
  %229 = vrot.lane.b32.xlu0 %v145, 126
  %v230 = vpop.permute.xlu0 %229
  %vm231 = vcmask 1031168
  %v232 = vsel %vm231, %v228, %v230
  %v235 = vsel %vm61, %v225, 0
  %v238 = vsel %vm61, %v226, 0
  %240 = vmatprep.subr.bf16.mxu0 0
  %241 = vmatpush1.bf16.msra.mxu0 %v232
  %242 = vmatprep.subr.bf16.mxu0 0
  %243 = vmatpush1.bf16.msra.mxu0 0
  %244 = vmatprep.subr.bf16.mxu0 0
  %245 = vmatpush1.bf16.msra.mxu0 0
  %246 = vmatprep.subr.bf16.mxu0 0
  %247 = vmatpush1.bf16.msra.mxu0 0
  %248 = vmatprep.subr.bf16.mxu0 0
  %249 = vmatpush1.bf16.msra.mxu0 0
  %250 = vmatprep.subr.bf16.mxu0 0
  %251 = vmatpush1.bf16.msra.mxu0 0
  %252 = vmatprep.subr.bf16.mxu0 0
  %253 = vmatpush1.bf16.msra.mxu0 0
  %254 = vmatprep.subr.bf16.mxu0 0
  %255 = vmatpush1.bf16.msra.mxu0 0
  %256 = vmatprep.subr.bf16.mxu0 0
  %257 = vmatpush1.bf16.msra.mxu0 0
  %258 = vmatprep.subr.bf16.mxu0 0
  %259 = vmatpush1.bf16.msra.mxu0 0
  %260 = vmatprep.subr.bf16.mxu0 0
  %261 = vmatpush1.bf16.msra.mxu0 0
  %262 = vmatprep.subr.bf16.mxu0 0
  %263 = vmatpush1.bf16.msra.mxu0 0
  %264 = vmatprep.subr.bf16.mxu0 0
  %265 = vmatpush1.bf16.msra.mxu0 0
  %266 = vmatprep.subr.bf16.mxu0 0
  %267 = vmatpush1.bf16.msra.mxu0 0
  %268 = vmatprep.subr.bf16.mxu0 0
  %269 = vmatpush1.bf16.msra.mxu0 0
  %270 = vmatprep.subr.bf16.mxu0 0
  %271 = vmatpush1.bf16.msra.mxu0 0
  %272 = vmatprep.mubr.bf16.mxu0 0
  %273 = vmatmul.mubr.bf16.gmra.mrb[0].mxu0 %v235
  %v274 = vpop.f32.mrb[0].mxu0
  %v275 = vadd.f32 0.0, %v274
  %v276 = vpop.f32.mrb[0].mxu0
  %v277 = vpop.f32.mrb[0].mxu0
  %v278 = vadd.f32 0.0, %v277
  %v279 = vpop.f32.mrb[0].mxu0
  %280 = vmatprep.mubr.bf16.mxu0 0
  %281 = vmatmul.mubr.bf16.gmra.mrb[0].mxu0 %v238
  %v282 = vpop.f32.mrb[0].mxu0
  %v283 = vadd.f32 0.0, %v282
  %v284 = vpop.f32.mrb[0].mxu0
  %v285 = vpop.f32.mrb[0].mxu0
  %v286 = vadd.f32 0.0, %v285
  %v287 = vpop.f32.mrb[0].mxu0
  %288 = vdwg.mxu0
  %v289 = vadd.f32 %v208, %v275
  %v290 = vadd.f32 %v209, %v278
  %v291 = vadd.f32 %v210, %v283
  %v292 = vadd.f32 %v211, %v286
  %s293 = scalar_lea.vmem %s1, 48
  %v294 = vld [vmem:[%s293] sm:$0xf]
  %v295 = vld [vmem:[%s293 + $0x4] sm:$0xf]
  %v296 = vld [vmem:[%s293 + $0x8] sm:$0xf]
  %v297 = vld [vmem:[%s293 + $0xc] sm:$0xf]
  %v302 = vunpack.c.l.b16 %v294
  %v303 = vunpack.c.l.b16 %v295
  %v304 = vunpack.c.l.b16 %v296
  %v305 = vunpack.c.l.b16 %v297
  %v306 = vpack.c.b16 %v303, %v302
  %v307 = vpack.c.b16 %v305, %v304
  %308 = vrot.lane.b32.xlu0 %v144, 122
  %v309 = vpop.permute.xlu0 %308
  %310 = vrot.lane.b32.xlu0 %v145, 122
  %v311 = vpop.permute.xlu0 %310
  %vm312 = vcmask 998400
  %v313 = vsel %vm312, %v309, %v311
  %v316 = vsel %vm61, %v306, 0
  %v319 = vsel %vm61, %v307, 0
  %321 = vmatprep.subr.bf16.mxu0 0
  %322 = vmatpush1.bf16.msra.mxu0 %v313
  %323 = vmatprep.subr.bf16.mxu0 0
  %324 = vmatpush1.bf16.msra.mxu0 0
  %325 = vmatprep.subr.bf16.mxu0 0
  %326 = vmatpush1.bf16.msra.mxu0 0
  %327 = vmatprep.subr.bf16.mxu0 0
  %328 = vmatpush1.bf16.msra.mxu0 0
  %329 = vmatprep.subr.bf16.mxu0 0
  %330 = vmatpush1.bf16.msra.mxu0 0
  %331 = vmatprep.subr.bf16.mxu0 0
  %332 = vmatpush1.bf16.msra.mxu0 0
  %333 = vmatprep.subr.bf16.mxu0 0
  %334 = vmatpush1.bf16.msra.mxu0 0
  %335 = vmatprep.subr.bf16.mxu0 0
  %336 = vmatpush1.bf16.msra.mxu0 0
  %337 = vmatprep.subr.bf16.mxu0 0
  %338 = vmatpush1.bf16.msra.mxu0 0
  %339 = vmatprep.subr.bf16.mxu0 0
  %340 = vmatpush1.bf16.msra.mxu0 0
  %341 = vmatprep.subr.bf16.mxu0 0
  %342 = vmatpush1.bf16.msra.mxu0 0
  %343 = vmatprep.subr.bf16.mxu0 0
  %344 = vmatpush1.bf16.msra.mxu0 0
  %345 = vmatprep.subr.bf16.mxu0 0
  %346 = vmatpush1.bf16.msra.mxu0 0
  %347 = vmatprep.subr.bf16.mxu0 0
  %348 = vmatpush1.bf16.msra.mxu0 0
  %349 = vmatprep.subr.bf16.mxu0 0
  %350 = vmatpush1.bf16.msra.mxu0 0
  %351 = vmatprep.subr.bf16.mxu0 0
  %352 = vmatpush1.bf16.msra.mxu0 0
  %353 = vmatprep.mubr.bf16.mxu0 0
  %354 = vmatmul.mubr.bf16.gmra.mrb[0].mxu0 %v316
  %v355 = vpop.f32.mrb[0].mxu0
  %v356 = vadd.f32 0.0, %v355
  %v357 = vpop.f32.mrb[0].mxu0
  %v358 = vpop.f32.mrb[0].mxu0
  %v359 = vadd.f32 0.0, %v358
  %v360 = vpop.f32.mrb[0].mxu0
  %361 = vmatprep.mubr.bf16.mxu0 0
  %362 = vmatmul.mubr.bf16.gmra.mrb[0].mxu0 %v319
  %v363 = vpop.f32.mrb[0].mxu0
  %v364 = vadd.f32 0.0, %v363
  %v365 = vpop.f32.mrb[0].mxu0
  %v366 = vpop.f32.mrb[0].mxu0
  %v367 = vadd.f32 0.0, %v366
  %v368 = vpop.f32.mrb[0].mxu0
  %369 = vdwg.mxu0
  %v370 = vadd.f32 %v289, %v356
  %v371 = vadd.f32 %v290, %v359
  %v372 = vadd.f32 %v291, %v364
  %v373 = vadd.f32 %v292, %v367
  %s374 = scalar_lea.vmem %s1, 64
  %v375 = vld [vmem:[%s374] sm:$0xf]
  %v376 = vld [vmem:[%s374 + $0x4] sm:$0xf]
  %v377 = vld [vmem:[%s374 + $0x8] sm:$0xf]
  %v378 = vld [vmem:[%s374 + $0xc] sm:$0xf]
  %v383 = vunpack.c.l.b16 %v375
  %v384 = vunpack.c.l.b16 %v376
  %v385 = vunpack.c.l.b16 %v377
  %v386 = vunpack.c.l.b16 %v378
  %v387 = vpack.c.b16 %v384, %v383
  %v388 = vpack.c.b16 %v386, %v385
  %389 = vrot.lane.b32.xlu0 %v144, 121
  %v390 = vpop.permute.xlu0 %389
  %391 = vrot.lane.b32.xlu0 %v145, 121
  %v392 = vpop.permute.xlu0 %391
  %vm393 = vcmask 990208
  %v394 = vsel %vm393, %v390, %v392
  %v397 = vsel %vm61, %v387, 0
  %v400 = vsel %vm61, %v388, 0
  %402 = vmatprep.subr.bf16.mxu0 0
  %403 = vmatpush1.bf16.msra.mxu0 %v394
  %404 = vmatprep.subr.bf16.mxu0 0
  %405 = vmatpush1.bf16.msra.mxu0 0
  %406 = vmatprep.subr.bf16.mxu0 0
  %407 = vmatpush1.bf16.msra.mxu0 0
  %408 = vmatprep.subr.bf16.mxu0 0
  %409 = vmatpush1.bf16.msra.mxu0 0
  %410 = vmatprep.subr.bf16.mxu0 0
  %411 = vmatpush1.bf16.msra.mxu0 0
  %412 = vmatprep.subr.bf16.mxu0 0
  %413 = vmatpush1.bf16.msra.mxu0 0
  %414 = vmatprep.subr.bf16.mxu0 0
  %415 = vmatpush1.bf16.msra.mxu0 0
  %416 = vmatprep.subr.bf16.mxu0 0
  %417 = vmatpush1.bf16.msra.mxu0 0
  %418 = vmatprep.subr.bf16.mxu0 0
  %419 = vmatpush1.bf16.msra.mxu0 0
  %420 = vmatprep.subr.bf16.mxu0 0
  %421 = vmatpush1.bf16.msra.mxu0 0
  %422 = vmatprep.subr.bf16.mxu0 0
  %423 = vmatpush1.bf16.msra.mxu0 0
  %424 = vmatprep.subr.bf16.mxu0 0
  %425 = vmatpush1.bf16.msra.mxu0 0
  %426 = vmatprep.subr.bf16.mxu0 0
  %427 = vmatpush1.bf16.msra.mxu0 0
  %428 = vmatprep.subr.bf16.mxu0 0
  %429 = vmatpush1.bf16.msra.mxu0 0
  %430 = vmatprep.subr.bf16.mxu0 0
  %431 = vmatpush1.bf16.msra.mxu0 0
  %432 = vmatprep.subr.bf16.mxu0 0
  %433 = vmatpush1.bf16.msra.mxu0 0
  %434 = vmatprep.mubr.bf16.mxu0 0
  %435 = vmatmul.mubr.bf16.gmra.mrb[0].mxu0 %v397
  %v436 = vpop.f32.mrb[0].mxu0
  %v437 = vadd.f32 0.0, %v436
  %v438 = vpop.f32.mrb[0].mxu0
  %v439 = vpop.f32.mrb[0].mxu0
  %v440 = vadd.f32 0.0, %v439
  %v441 = vpop.f32.mrb[0].mxu0
  %442 = vmatprep.mubr.bf16.mxu0 0
  %443 = vmatmul.mubr.bf16.gmra.mrb[0].mxu0 %v400
  %v444 = vpop.f32.mrb[0].mxu0
  %v445 = vadd.f32 0.0, %v444
  %v446 = vpop.f32.mrb[0].mxu0
  %v447 = vpop.f32.mrb[0].mxu0
  %v448 = vadd.f32 0.0, %v447
  %v449 = vpop.f32.mrb[0].mxu0
  %450 = vdwg.mxu0
  %v451 = vadd.f32 %v370, %v437
  %v452 = vadd.f32 %v371, %v440
  %v453 = vadd.f32 %v372, %v445
  %v454 = vadd.f32 %v373, %v448
  %s455 = scalar_lea.vmem %s1, 80
  %v456 = vld [vmem:[%s455] sm:$0xf]
  %v457 = vld [vmem:[%s455 + $0x4] sm:$0xf]
  %v458 = vld [vmem:[%s455 + $0x8] sm:$0xf]
  %v459 = vld [vmem:[%s455 + $0xc] sm:$0xf]
  %v464 = vunpack.c.l.b16 %v456
  %v465 = vunpack.c.l.b16 %v457
  %v466 = vunpack.c.l.b16 %v458
  %v467 = vunpack.c.l.b16 %v459
  %v468 = vpack.c.b16 %v465, %v464
  %v469 = vpack.c.b16 %v467, %v466
  %470 = vrot.lane.b32.xlu0 %v144, 120
  %v471 = vpop.permute.xlu0 %470
  %472 = vrot.lane.b32.xlu0 %v145, 120
  %v473 = vpop.permute.xlu0 %472
  %vm474 = vcmask 982016
  %v475 = vsel %vm474, %v471, %v473
  %v478 = vsel %vm61, %v468, 0
  %v481 = vsel %vm61, %v469, 0
  %483 = vmatprep.subr.bf16.mxu0 0
  %484 = vmatpush1.bf16.msra.mxu0 %v475
  %485 = vmatprep.subr.bf16.mxu0 0
  %486 = vmatpush1.bf16.msra.mxu0 0
  %487 = vmatprep.subr.bf16.mxu0 0
  %488 = vmatpush1.bf16.msra.mxu0 0
  %489 = vmatprep.subr.bf16.mxu0 0
  %490 = vmatpush1.bf16.msra.mxu0 0
  %491 = vmatprep.subr.bf16.mxu0 0
  %492 = vmatpush1.bf16.msra.mxu0 0
  %493 = vmatprep.subr.bf16.mxu0 0
  %494 = vmatpush1.bf16.msra.mxu0 0
  %495 = vmatprep.subr.bf16.mxu0 0
  %496 = vmatpush1.bf16.msra.mxu0 0
  %497 = vmatprep.subr.bf16.mxu0 0
  %498 = vmatpush1.bf16.msra.mxu0 0
  %499 = vmatprep.subr.bf16.mxu0 0
  %500 = vmatpush1.bf16.msra.mxu0 0
  %501 = vmatprep.subr.bf16.mxu0 0
  %502 = vmatpush1.bf16.msra.mxu0 0
  %503 = vmatprep.subr.bf16.mxu0 0
  %504 = vmatpush1.bf16.msra.mxu0 0
  %505 = vmatprep.subr.bf16.mxu0 0
  %506 = vmatpush1.bf16.msra.mxu0 0
  %507 = vmatprep.subr.bf16.mxu0 0
  %508 = vmatpush1.bf16.msra.mxu0 0
  %509 = vmatprep.subr.bf16.mxu0 0
  %510 = vmatpush1.bf16.msra.mxu0 0
  %511 = vmatprep.subr.bf16.mxu0 0
  %512 = vmatpush1.bf16.msra.mxu0 0
  %513 = vmatprep.subr.bf16.mxu0 0
  %514 = vmatpush1.bf16.msra.mxu0 0
  %515 = vmatprep.mubr.bf16.mxu0 0
  %516 = vmatmul.mubr.bf16.gmra.mrb[0].mxu0 %v478
  %v517 = vpop.f32.mrb[0].mxu0
  %v518 = vadd.f32 0.0, %v517
  %v519 = vpop.f32.mrb[0].mxu0
  %v520 = vpop.f32.mrb[0].mxu0
  %v521 = vadd.f32 0.0, %v520
  %v522 = vpop.f32.mrb[0].mxu0
  %523 = vmatprep.mubr.bf16.mxu0 0
  %524 = vmatmul.mubr.bf16.gmra.mrb[0].mxu0 %v481
  %v525 = vpop.f32.mrb[0].mxu0
  %v526 = vadd.f32 0.0, %v525
  %v527 = vpop.f32.mrb[0].mxu0
  %v528 = vpop.f32.mrb[0].mxu0
  %v529 = vadd.f32 0.0, %v528
  %v530 = vpop.f32.mrb[0].mxu0
  %531 = vdwg.mxu0
  %v532 = vadd.f32 %v451, %v518
  %v533 = vadd.f32 %v452, %v521
  %v534 = vadd.f32 %v453, %v526
  %v535 = vadd.f32 %v454, %v529
  %s536 = scalar_lea.vmem %s1, 96
  %v537 = vld [vmem:[%s536] sm:$0xf]
  %v538 = vld [vmem:[%s536 + $0x4] sm:$0xf]
  %v539 = vld [vmem:[%s536 + $0x8] sm:$0xf]
  %v540 = vld [vmem:[%s536 + $0xc] sm:$0xf]
  %v545 = vunpack.c.l.b16 %v537
  %v546 = vunpack.c.l.b16 %v538
  %v547 = vunpack.c.l.b16 %v539
  %v548 = vunpack.c.l.b16 %v540
  %v549 = vpack.c.b16 %v546, %v545
  %v550 = vpack.c.b16 %v548, %v547
  %551 = vrot.lane.b32.xlu0 %v144, 116
  %v552 = vpop.permute.xlu0 %551
  %553 = vrot.lane.b32.xlu0 %v145, 116
  %v554 = vpop.permute.xlu0 %553
  %vm555 = vcmask 949248
  %v556 = vsel %vm555, %v552, %v554
  %v559 = vsel %vm61, %v549, 0
  %v562 = vsel %vm61, %v550, 0
  %564 = vmatprep.subr.bf16.mxu0 0
  %565 = vmatpush1.bf16.msra.mxu0 %v556
  %566 = vmatprep.subr.bf16.mxu0 0
  %567 = vmatpush1.bf16.msra.mxu0 0
  %568 = vmatprep.subr.bf16.mxu0 0
  %569 = vmatpush1.bf16.msra.mxu0 0
  %570 = vmatprep.subr.bf16.mxu0 0
  %571 = vmatpush1.bf16.msra.mxu0 0
  %572 = vmatprep.subr.bf16.mxu0 0
  %573 = vmatpush1.bf16.msra.mxu0 0
  %574 = vmatprep.subr.bf16.mxu0 0
  %575 = vmatpush1.bf16.msra.mxu0 0
  %576 = vmatprep.subr.bf16.mxu0 0
  %577 = vmatpush1.bf16.msra.mxu0 0
  %578 = vmatprep.subr.bf16.mxu0 0
  %579 = vmatpush1.bf16.msra.mxu0 0
  %580 = vmatprep.subr.bf16.mxu0 0
  %581 = vmatpush1.bf16.msra.mxu0 0
  %582 = vmatprep.subr.bf16.mxu0 0
  %583 = vmatpush1.bf16.msra.mxu0 0
  %584 = vmatprep.subr.bf16.mxu0 0
  %585 = vmatpush1.bf16.msra.mxu0 0
  %586 = vmatprep.subr.bf16.mxu0 0
  %587 = vmatpush1.bf16.msra.mxu0 0
  %588 = vmatprep.subr.bf16.mxu0 0
  %589 = vmatpush1.bf16.msra.mxu0 0
  %590 = vmatprep.subr.bf16.mxu0 0
  %591 = vmatpush1.bf16.msra.mxu0 0
  %592 = vmatprep.subr.bf16.mxu0 0
  %593 = vmatpush1.bf16.msra.mxu0 0
  %594 = vmatprep.subr.bf16.mxu0 0
  %595 = vmatpush1.bf16.msra.mxu0 0
  %596 = vmatprep.mubr.bf16.mxu0 0
  %597 = vmatmul.mubr.bf16.gmra.mrb[0].mxu0 %v559
  %v598 = vpop.f32.mrb[0].mxu0
  %v599 = vadd.f32 0.0, %v598
  %v600 = vpop.f32.mrb[0].mxu0
  %v601 = vpop.f32.mrb[0].mxu0
  %v602 = vadd.f32 0.0, %v601
  %v603 = vpop.f32.mrb[0].mxu0
  %604 = vmatprep.mubr.bf16.mxu0 0
  %605 = vmatmul.mubr.bf16.gmra.mrb[0].mxu0 %v562
  %v606 = vpop.f32.mrb[0].mxu0
  %v607 = vadd.f32 0.0, %v606
  %v608 = vpop.f32.mrb[0].mxu0
  %v609 = vpop.f32.mrb[0].mxu0
  %v610 = vadd.f32 0.0, %v609
  %v611 = vpop.f32.mrb[0].mxu0
  %612 = vdwg.mxu0
  %v613 = vadd.f32 %v532, %v599
  %v614 = vadd.f32 %v533, %v602
  %v615 = vadd.f32 %v534, %v607
  %v616 = vadd.f32 %v535, %v610
  %s617 = scalar_lea.vmem %s1, 112
  %v618 = vld [vmem:[%s617] sm:$0xf]
  %v619 = vld [vmem:[%s617 + $0x4] sm:$0xf]
  %v620 = vld [vmem:[%s617 + $0x8] sm:$0xf]
  %v621 = vld [vmem:[%s617 + $0xc] sm:$0xf]
  %v626 = vunpack.c.l.b16 %v618
  %v627 = vunpack.c.l.b16 %v619
  %v628 = vunpack.c.l.b16 %v620
  %v629 = vunpack.c.l.b16 %v621
  %v630 = vpack.c.b16 %v627, %v626
  %v631 = vpack.c.b16 %v629, %v628
  %632 = vrot.lane.b32.xlu0 %v144, 115
  %v633 = vpop.permute.xlu0 %632
  %634 = vrot.lane.b32.xlu0 %v145, 115
  %v635 = vpop.permute.xlu0 %634
  %vm636 = vcmask 941056
  %v637 = vsel %vm636, %v633, %v635
  %v640 = vsel %vm61, %v630, 0
  %v643 = vsel %vm61, %v631, 0
  %645 = vmatprep.subr.bf16.mxu0 0
  %646 = vmatpush1.bf16.msra.mxu0 %v637
  %647 = vmatprep.subr.bf16.mxu0 0
  %648 = vmatpush1.bf16.msra.mxu0 0
  %649 = vmatprep.subr.bf16.mxu0 0
  %650 = vmatpush1.bf16.msra.mxu0 0
  %651 = vmatprep.subr.bf16.mxu0 0
  %652 = vmatpush1.bf16.msra.mxu0 0
  %653 = vmatprep.subr.bf16.mxu0 0
  %654 = vmatpush1.bf16.msra.mxu0 0
  %655 = vmatprep.subr.bf16.mxu0 0
  %656 = vmatpush1.bf16.msra.mxu0 0
  %657 = vmatprep.subr.bf16.mxu0 0
  %658 = vmatpush1.bf16.msra.mxu0 0
  %659 = vmatprep.subr.bf16.mxu0 0
  %660 = vmatpush1.bf16.msra.mxu0 0
  %661 = vmatprep.subr.bf16.mxu0 0
  %662 = vmatpush1.bf16.msra.mxu0 0
  %663 = vmatprep.subr.bf16.mxu0 0
  %664 = vmatpush1.bf16.msra.mxu0 0
  %665 = vmatprep.subr.bf16.mxu0 0
  %666 = vmatpush1.bf16.msra.mxu0 0
  %667 = vmatprep.subr.bf16.mxu0 0
  %668 = vmatpush1.bf16.msra.mxu0 0
  %669 = vmatprep.subr.bf16.mxu0 0
  %670 = vmatpush1.bf16.msra.mxu0 0
  %671 = vmatprep.subr.bf16.mxu0 0
  %672 = vmatpush1.bf16.msra.mxu0 0
  %673 = vmatprep.subr.bf16.mxu0 0
  %674 = vmatpush1.bf16.msra.mxu0 0
  %675 = vmatprep.subr.bf16.mxu0 0
  %676 = vmatpush1.bf16.msra.mxu0 0
  %677 = vmatprep.mubr.bf16.mxu0 0
  %678 = vmatmul.mubr.bf16.gmra.mrb[0].mxu0 %v640
  %v679 = vpop.f32.mrb[0].mxu0
  %v680 = vadd.f32 0.0, %v679
  %v681 = vpop.f32.mrb[0].mxu0
  %v682 = vpop.f32.mrb[0].mxu0
  %v683 = vadd.f32 0.0, %v682
  %v684 = vpop.f32.mrb[0].mxu0
  %685 = vmatprep.mubr.bf16.mxu0 0
  %686 = vmatmul.mubr.bf16.gmra.mrb[0].mxu0 %v643
  %v687 = vpop.f32.mrb[0].mxu0
  %v688 = vadd.f32 0.0, %v687
  %v689 = vpop.f32.mrb[0].mxu0
  %v690 = vpop.f32.mrb[0].mxu0
  %v691 = vadd.f32 0.0, %v690
  %v692 = vpop.f32.mrb[0].mxu0
  %693 = vdwg.mxu0
  %v694 = vadd.f32 %v613, %v680
  %v695 = vadd.f32 %v614, %v683
  %v696 = vadd.f32 %v615, %v688
  %v697 = vadd.f32 %v616, %v691
  %s698 = scalar_lea.vmem %s1, 128
  %v699 = vld [vmem:[%s698] sm:$0xf]
  %v700 = vld [vmem:[%s698 + $0x4] sm:$0xf]
  %v701 = vld [vmem:[%s698 + $0x8] sm:$0xf]
  %v702 = vld [vmem:[%s698 + $0xc] sm:$0xf]
  %v707 = vunpack.c.l.b16 %v699
  %v708 = vunpack.c.l.b16 %v700
  %v709 = vunpack.c.l.b16 %v701
  %v710 = vunpack.c.l.b16 %v702
  %v711 = vpack.c.b16 %v708, %v707
  %v712 = vpack.c.b16 %v710, %v709
  %713 = vrot.lane.b32.xlu0 %v144, 114
  %v714 = vpop.permute.xlu0 %713
  %715 = vrot.lane.b32.xlu0 %v145, 114
  %v716 = vpop.permute.xlu0 %715
  %vm717 = vcmask 932864
  %v718 = vsel %vm717, %v714, %v716
  %v721 = vsel %vm61, %v711, 0
  %v724 = vsel %vm61, %v712, 0
  %726 = vmatprep.subr.bf16.mxu0 0
  %727 = vmatpush1.bf16.msra.mxu0 %v718
  %728 = vmatprep.subr.bf16.mxu0 0
  %729 = vmatpush1.bf16.msra.mxu0 0
  %730 = vmatprep.subr.bf16.mxu0 0
  %731 = vmatpush1.bf16.msra.mxu0 0
  %732 = vmatprep.subr.bf16.mxu0 0
  %733 = vmatpush1.bf16.msra.mxu0 0
  %734 = vmatprep.subr.bf16.mxu0 0
  %735 = vmatpush1.bf16.msra.mxu0 0
  %736 = vmatprep.subr.bf16.mxu0 0
  %737 = vmatpush1.bf16.msra.mxu0 0
  %738 = vmatprep.subr.bf16.mxu0 0
  %739 = vmatpush1.bf16.msra.mxu0 0
  %740 = vmatprep.subr.bf16.mxu0 0
  %741 = vmatpush1.bf16.msra.mxu0 0
  %742 = vmatprep.subr.bf16.mxu0 0
  %743 = vmatpush1.bf16.msra.mxu0 0
  %744 = vmatprep.subr.bf16.mxu0 0
  %745 = vmatpush1.bf16.msra.mxu0 0
  %746 = vmatprep.subr.bf16.mxu0 0
  %747 = vmatpush1.bf16.msra.mxu0 0
  %748 = vmatprep.subr.bf16.mxu0 0
  %749 = vmatpush1.bf16.msra.mxu0 0
  %750 = vmatprep.subr.bf16.mxu0 0
  %751 = vmatpush1.bf16.msra.mxu0 0
  %752 = vmatprep.subr.bf16.mxu0 0
  %753 = vmatpush1.bf16.msra.mxu0 0
  %754 = vmatprep.subr.bf16.mxu0 0
  %755 = vmatpush1.bf16.msra.mxu0 0
  %756 = vmatprep.subr.bf16.mxu0 0
  %757 = vmatpush1.bf16.msra.mxu0 0
  %758 = vmatprep.mubr.bf16.mxu0 0
  %759 = vmatmul.mubr.bf16.gmra.mrb[0].mxu0 %v721
  %v760 = vpop.f32.mrb[0].mxu0
  %v761 = vadd.f32 0.0, %v760
  %v762 = vpop.f32.mrb[0].mxu0
  %v763 = vpop.f32.mrb[0].mxu0
  %v764 = vadd.f32 0.0, %v763
  %v765 = vpop.f32.mrb[0].mxu0
  %766 = vmatprep.mubr.bf16.mxu0 0
  %767 = vmatmul.mubr.bf16.gmra.mrb[0].mxu0 %v724
  %v768 = vpop.f32.mrb[0].mxu0
  %v769 = vadd.f32 0.0, %v768
  %v770 = vpop.f32.mrb[0].mxu0
  %v771 = vpop.f32.mrb[0].mxu0
  %v772 = vadd.f32 0.0, %v771
  %v773 = vpop.f32.mrb[0].mxu0
  %774 = vdwg.mxu0
  %v775 = vadd.f32 %v694, %v761
  %v776 = vadd.f32 %v695, %v764
  %v777 = vadd.f32 %v696, %v769
  %v778 = vadd.f32 %v697, %v772
  %v779 = vmax.f32 %v775, 0.0
  %v780 = vmax.f32 %v776, 0.0
  %v781 = vmax.f32 %v777, 0.0
  %v782 = vmax.f32 %v778, 0.0
  %v783 = vpack.c.bf16 %v780, %v779
  %v784 = vpack.c.bf16 %v782, %v781
  %v787 = vunpack.c.l.b16 %v783
  %v788 = vunpack.c.h.b16 %v783
  %v789 = vunpack.c.l.b16 %v784
  %v790 = vunpack.c.h.b16 %v784
  %v791 = vpack.c.b16 %v787, %v787
  %v792 = vpack.c.b16 %v788, %v788
  %v793 = vpack.c.b16 %v789, %v789
  %v794 = vpack.c.b16 %v790, %v790
  %799 = vst [vmem:[%s3] sm:$0xf] %v791
  %800 = vst [vmem:[%s3 + $0x4] sm:$0xf] %v792
  %801 = vst [vmem:[%s3 + $0x8] sm:$0xf] %v793
  %802 = vst [vmem:[%s3 + $0xc] sm:$0xf] %v794
  // Predicated region
  $region14: #{resnet_forward.17} parent=0 // pred_check
    _
  $region15: #{resnet_forward.17} parent=0 // pred_check_branch
    %804 = sbr.rel (0) target = $region17
  $region16: #{resnet_forward.17} parent=0 // pred_region
    _
  $region17: #{resnet_forward.17} parent=0 // pred_fallthru
    _
  // Predicated region
  $region18: #{resnet_forward.17} parent=0 // pred_check
    _
  $region19: #{resnet_forward.17} parent=0 // pred_check_branch
    %806 = sbr.rel (0) target = $region21
  $region20: #{resnet_forward.17} parent=0 // pred_region
    _
  $region21: #{resnet_forward.17} parent=0 // pred_fallthru
    _

// kernel: resnet_forward.18
$region0: #{resnet_forward.18}
  #allocation0 [shape = 'u32[]', space=smem, size = 0x4, offset = 0x4, fixed_abs, tag = 'smem constant byte address 0x4 - core index']
  #allocation1 [shape = 'u32[144,128]{1,0:T(1,128)}', space=vmem, size = 0x12000, scoped, tag = 'internal scratch']
  %s0 = inlined_call_operand.vmem [shape: bf16[32,256], index: 0, kind: input, shape index: {}]
  %s1 = inlined_call_operand.vmem [shape: bf16[9,32,32], index: 1, kind: input, shape index: {}]
  %s2 = inlined_call_operand.vmem [shape: f32[32,1], index: 2, kind: input, shape index: {}]
  %s3 = inlined_call_operand.vmem [shape: bf16[16,128], index: 3, kind: input, shape index: {}]
  %s4 = inlined_call_operand.vmem [shape: bf16[32,16], index: 4, kind: input, shape index: {}]
  %s5 = inlined_call_operand.vmem [shape: bf16[32,128], index: 5, kind: output, shape index: {}]
  %s6 = sld [smem:[#allocation0]]
  $region30: #{resnet_forward.18} parent=0
    _
  %s8 = ssub.s32 1, %s6
  %s9 = scalar_select 0, %s8, %s6
  // Predicated region
  $region2: #{resnet_forward.18} parent=0 // pred_check
    _
  $region3: #{resnet_forward.18} parent=0 // pred_check_branch
    %11 = sbr.rel (0) target = $region5
  $region4: #{resnet_forward.18} parent=0 // pred_region
    _
  $region5: #{resnet_forward.18} parent=0 // pred_fallthru
    _
  // Predicated region
  $region6: #{resnet_forward.18} parent=0 // pred_check
    _
  $region7: #{resnet_forward.18} parent=0 // pred_check_branch
    %13 = sbr.rel (0) target = $region9
  $region8: #{resnet_forward.18} parent=0 // pred_region
    _
  $region9: #{resnet_forward.18} parent=0 // pred_fallthru
    _
  // Predicated region
  $region10: #{resnet_forward.18} parent=0 // pred_check
    _
  $region11: #{resnet_forward.18} parent=0 // pred_check_branch
    %15 = sbr.rel (0) target = $region13
  $region12: #{resnet_forward.18} parent=0 // pred_region
    _
  $region13: #{resnet_forward.18} parent=0 // pred_fallthru
    _
  // Predicated region
  $region14: #{resnet_forward.18} parent=0 // pred_check
    _
  $region15: #{resnet_forward.18} parent=0 // pred_check_branch
    %17 = sbr.rel (0) target = $region17
  $region16: #{resnet_forward.18} parent=0 // pred_region
    _
  $region17: #{resnet_forward.18} parent=0 // pred_fallthru
    _
  // Predicated region
  $region18: #{resnet_forward.18} parent=0 // pred_check
    _
  $region19: #{resnet_forward.18} parent=0 // pred_check_branch
    %19 = sbr.rel (0) target = $region21
  $region20: #{resnet_forward.18} parent=0 // pred_region
    _
  $region21: #{resnet_forward.18} parent=0 // pred_fallthru
    _
  %v21 = vld [vmem:[%s2] sm:$0xff]
  %v22 = vld [vmem:[%s2 + $0x8] sm:$0xff]
  %v23 = vld [vmem:[%s2 + $0x10] sm:$0xff]
  %v24 = vld [vmem:[%s2 + $0x18] sm:$0xff]
  %26 = vset.pattern.permute.xlu0 0
  %27 = vperm.xlu0 %26, %v21
  %v28 = vpop.permute.xlu0 %27
  %31 = vset.pattern.permute.xlu0 0
  %32 = vperm.xlu0 %31, %v22
  %v33 = vpop.permute.xlu0 %32
  %36 = vset.pattern.permute.xlu0 0
  %37 = vperm.xlu0 %36, %v23
  %v38 = vpop.permute.xlu0 %37
  %41 = vset.pattern.permute.xlu0 0
  %42 = vperm.xlu0 %41, %v24
  %v43 = vpop.permute.xlu0 %42
  %v45 = vld [vmem:[%s1] sm:$0xf]
  %v46 = vld [vmem:[%s1 + $0x4] sm:$0xf]
  %v47 = vld [vmem:[%s1 + $0x8] sm:$0xf]
  %v48 = vld [vmem:[%s1 + $0xc] sm:$0xf]
  %v49 = vld [vmem:[%s0] sm:$0xf]
  %v50 = vld [vmem:[%s0 + $0x8] sm:$0xf]
  %v51 = vld [vmem:[%s0 + $0x10] sm:$0xf]
  %v52 = vld [vmem:[%s0 + $0x18] sm:$0xf]
  %v57 = vunpack.c.l.b16 %v45
  %v58 = vunpack.c.l.b16 %v46
  %v59 = vunpack.c.l.b16 %v47
  %v60 = vunpack.c.l.b16 %v48
  %v61 = vpack.c.b16 %v58, %v57
  %v62 = vpack.c.b16 %v60, %v59
  %v67 = vunpack.c.l.b16 %v49
  %v68 = vunpack.c.l.b16 %v50
  %v69 = vunpack.c.l.b16 %v51
  %v70 = vunpack.c.l.b16 %v52
  %v71 = vpack.c.b16 %v68, %v67
  %v72 = vpack.c.b16 %v70, %v69
  %vm75 = vcmask 261120
  %v77 = vsel %vm75, %v61, 0
  %v80 = vsel %vm75, %v62, 0
  %82 = vmatprep.subr.bf16.mxu0 0
  %83 = vmatpush1.bf16.msra.mxu0 %v71
  %84 = vmatprep.subr.bf16.mxu0 0
  %85 = vmatpush1.bf16.msra.mxu0 %v72
  %86 = vmatprep.subr.bf16.mxu0 0
  %87 = vmatpush1.bf16.msra.mxu0 0
  %88 = vmatprep.subr.bf16.mxu0 0
  %89 = vmatpush1.bf16.msra.mxu0 0
  %90 = vmatprep.subr.bf16.mxu0 0
  %91 = vmatpush1.bf16.msra.mxu0 0
  %92 = vmatprep.subr.bf16.mxu0 0
  %93 = vmatpush1.bf16.msra.mxu0 0
  %94 = vmatprep.subr.bf16.mxu0 0
  %95 = vmatpush1.bf16.msra.mxu0 0
  %96 = vmatprep.subr.bf16.mxu0 0
  %97 = vmatpush1.bf16.msra.mxu0 0
  %98 = vmatprep.subr.bf16.mxu0 0
  %99 = vmatpush1.bf16.msra.mxu0 0
  %100 = vmatprep.subr.bf16.mxu0 0
  %101 = vmatpush1.bf16.msra.mxu0 0
  %102 = vmatprep.subr.bf16.mxu0 0
  %103 = vmatpush1.bf16.msra.mxu0 0
  %104 = vmatprep.subr.bf16.mxu0 0
  %105 = vmatpush1.bf16.msra.mxu0 0
  %106 = vmatprep.subr.bf16.mxu0 0
  %107 = vmatpush1.bf16.msra.mxu0 0
  %108 = vmatprep.subr.bf16.mxu0 0
  %109 = vmatpush1.bf16.msra.mxu0 0
  %110 = vmatprep.subr.bf16.mxu0 0
  %111 = vmatpush1.bf16.msra.mxu0 0
  %112 = vmatprep.subr.bf16.mxu0 0
  %113 = vmatpush1.bf16.msra.mxu0 0
  %114 = vmatprep.mubr.bf16.mxu0 0
  %115 = vmatmul.mubr.bf16.gmra.mrb[0].mxu0 %v77
  %v116 = vpop.f32.mrb[0].mxu0
  %v117 = vadd.f32 0.0, %v116
  %v118 = vpop.f32.mrb[0].mxu0
  %v119 = vpop.f32.mrb[0].mxu0
  %v120 = vadd.f32 0.0, %v119
  %v121 = vpop.f32.mrb[0].mxu0
  %122 = vmatprep.mubr.bf16.mxu0 0
  %123 = vmatmul.mubr.bf16.gmra.mrb[0].mxu0 %v80
  %v124 = vpop.f32.mrb[0].mxu0
  %v125 = vadd.f32 0.0, %v124
  %v126 = vpop.f32.mrb[0].mxu0
  %v127 = vpop.f32.mrb[0].mxu0
  %v128 = vadd.f32 0.0, %v127
  %v129 = vpop.f32.mrb[0].mxu0
  %130 = vdwg.mxu0
  %v131 = vadd.f32 %v28, %v117
  %v132 = vadd.f32 %v33, %v120
  %v133 = vadd.f32 %v38, %v125
  %v134 = vadd.f32 %v43, %v128
  %s135 = scalar_lea.vmem %s1, 16
  %v136 = vld [vmem:[%s135] sm:$0xf]
  %v137 = vld [vmem:[%s135 + $0x4] sm:$0xf]
  %v138 = vld [vmem:[%s135 + $0x8] sm:$0xf]
  %v139 = vld [vmem:[%s135 + $0xc] sm:$0xf]
  %v140 = vld [vmem:[%s0] sm:$0xff]
  %v141 = vld [vmem:[%s0 + $0x8] sm:$0xff]
  %v142 = vld [vmem:[%s0 + $0x10] sm:$0xff]
  %v143 = vld [vmem:[%s0 + $0x18] sm:$0xff]
  %v148 = vunpack.c.l.b16 %v136
  %v149 = vunpack.c.l.b16 %v137
  %v150 = vunpack.c.l.b16 %v138
  %v151 = vunpack.c.l.b16 %v139
  %v152 = vpack.c.b16 %v149, %v148
  %v153 = vpack.c.b16 %v151, %v150
  %v158 = vunpack.c.l.b16 %v140
  %v159 = vunpack.c.h.b16 %v140
  %v160 = vunpack.c.l.b16 %v141
  %v161 = vunpack.c.h.b16 %v141
  %v162 = vunpack.c.l.b16 %v142
  %v163 = vunpack.c.h.b16 %v142
  %v164 = vunpack.c.l.b16 %v143
  %v165 = vunpack.c.h.b16 %v143
  %v166 = vpack.c.b16 %v160, %v158
  %v167 = vpack.c.b16 %v161, %v159
  %v168 = vpack.c.b16 %v164, %v162
  %v169 = vpack.c.b16 %v165, %v163
  %170 = vrot.lane.b32.xlu0 %v166, 127
  %v171 = vpop.permute.xlu0 %170
  %172 = vrot.lane.b32.xlu0 %v167, 127
  %v173 = vpop.permute.xlu0 %172
  %174 = vrot.lane.b32.xlu0 %v168, 127
  %v175 = vpop.permute.xlu0 %174
  %176 = vrot.lane.b32.xlu0 %v169, 127
  %v177 = vpop.permute.xlu0 %176
  %vm178 = vcmask 1039360
  %v179 = vsel %vm178, %v171, %v173
  %v180 = vsel %vm178, %v175, %v177
  %v184 = vsel %vm75, %v152, 0
  %v187 = vsel %vm75, %v153, 0
  %189 = vmatprep.subr.bf16.mxu0 0
  %190 = vmatpush1.bf16.msra.mxu0 %v179
  %191 = vmatprep.subr.bf16.mxu0 0
  %192 = vmatpush1.bf16.msra.mxu0 %v180
  %193 = vmatprep.subr.bf16.mxu0 0
  %194 = vmatpush1.bf16.msra.mxu0 0
  %195 = vmatprep.subr.bf16.mxu0 0
  %196 = vmatpush1.bf16.msra.mxu0 0
  %197 = vmatprep.subr.bf16.mxu0 0
  %198 = vmatpush1.bf16.msra.mxu0 0
  %199 = vmatprep.subr.bf16.mxu0 0
  %200 = vmatpush1.bf16.msra.mxu0 0
  %201 = vmatprep.subr.bf16.mxu0 0
  %202 = vmatpush1.bf16.msra.mxu0 0
  %203 = vmatprep.subr.bf16.mxu0 0
  %204 = vmatpush1.bf16.msra.mxu0 0
  %205 = vmatprep.subr.bf16.mxu0 0
  %206 = vmatpush1.bf16.msra.mxu0 0
  %207 = vmatprep.subr.bf16.mxu0 0
  %208 = vmatpush1.bf16.msra.mxu0 0
  %209 = vmatprep.subr.bf16.mxu0 0
  %210 = vmatpush1.bf16.msra.mxu0 0
  %211 = vmatprep.subr.bf16.mxu0 0
  %212 = vmatpush1.bf16.msra.mxu0 0
  %213 = vmatprep.subr.bf16.mxu0 0
  %214 = vmatpush1.bf16.msra.mxu0 0
  %215 = vmatprep.subr.bf16.mxu0 0
  %216 = vmatpush1.bf16.msra.mxu0 0
  %217 = vmatprep.subr.bf16.mxu0 0
  %218 = vmatpush1.bf16.msra.mxu0 0
  %219 = vmatprep.subr.bf16.mxu0 0
  %220 = vmatpush1.bf16.msra.mxu0 0
  %221 = vmatprep.mubr.bf16.mxu0 0
  %222 = vmatmul.mubr.bf16.gmra.mrb[0].mxu0 %v184
  %v223 = vpop.f32.mrb[0].mxu0
  %v224 = vadd.f32 0.0, %v223
  %v225 = vpop.f32.mrb[0].mxu0
  %v226 = vpop.f32.mrb[0].mxu0
  %v227 = vadd.f32 0.0, %v226
  %v228 = vpop.f32.mrb[0].mxu0
  %229 = vmatprep.mubr.bf16.mxu0 0
  %230 = vmatmul.mubr.bf16.gmra.mrb[0].mxu0 %v187
  %v231 = vpop.f32.mrb[0].mxu0
  %v232 = vadd.f32 0.0, %v231
  %v233 = vpop.f32.mrb[0].mxu0
  %v234 = vpop.f32.mrb[0].mxu0
  %v235 = vadd.f32 0.0, %v234
  %v236 = vpop.f32.mrb[0].mxu0
  %237 = vdwg.mxu0
  %v238 = vadd.f32 %v131, %v224
  %v239 = vadd.f32 %v132, %v227
  %v240 = vadd.f32 %v133, %v232
  %v241 = vadd.f32 %v134, %v235
  %s242 = scalar_lea.vmem %s1, 32
  %v243 = vld [vmem:[%s242] sm:$0xf]
  %v244 = vld [vmem:[%s242 + $0x4] sm:$0xf]
  %v245 = vld [vmem:[%s242 + $0x8] sm:$0xf]
  %v246 = vld [vmem:[%s242 + $0xc] sm:$0xf]
  %v251 = vunpack.c.l.b16 %v243
  %v252 = vunpack.c.l.b16 %v244
  %v253 = vunpack.c.l.b16 %v245
  %v254 = vunpack.c.l.b16 %v246
  %v255 = vpack.c.b16 %v252, %v251
  %v256 = vpack.c.b16 %v254, %v253
  %257 = vrot.lane.b32.xlu0 %v166, 126
  %v258 = vpop.permute.xlu0 %257
  %259 = vrot.lane.b32.xlu0 %v167, 126
  %v260 = vpop.permute.xlu0 %259
  %261 = vrot.lane.b32.xlu0 %v168, 126
  %v262 = vpop.permute.xlu0 %261
  %263 = vrot.lane.b32.xlu0 %v169, 126
  %v264 = vpop.permute.xlu0 %263
  %vm265 = vcmask 1031168
  %v266 = vsel %vm265, %v258, %v260
  %v267 = vsel %vm265, %v262, %v264
  %v271 = vsel %vm75, %v255, 0
  %v274 = vsel %vm75, %v256, 0
  %276 = vmatprep.subr.bf16.mxu0 0
  %277 = vmatpush1.bf16.msra.mxu0 %v266
  %278 = vmatprep.subr.bf16.mxu0 0
  %279 = vmatpush1.bf16.msra.mxu0 %v267
  %280 = vmatprep.subr.bf16.mxu0 0
  %281 = vmatpush1.bf16.msra.mxu0 0
  %282 = vmatprep.subr.bf16.mxu0 0
  %283 = vmatpush1.bf16.msra.mxu0 0
  %284 = vmatprep.subr.bf16.mxu0 0
  %285 = vmatpush1.bf16.msra.mxu0 0
  %286 = vmatprep.subr.bf16.mxu0 0
  %287 = vmatpush1.bf16.msra.mxu0 0
  %288 = vmatprep.subr.bf16.mxu0 0
  %289 = vmatpush1.bf16.msra.mxu0 0
  %290 = vmatprep.subr.bf16.mxu0 0
  %291 = vmatpush1.bf16.msra.mxu0 0
  %292 = vmatprep.subr.bf16.mxu0 0
  %293 = vmatpush1.bf16.msra.mxu0 0
  %294 = vmatprep.subr.bf16.mxu0 0
  %295 = vmatpush1.bf16.msra.mxu0 0
  %296 = vmatprep.subr.bf16.mxu0 0
  %297 = vmatpush1.bf16.msra.mxu0 0
  %298 = vmatprep.subr.bf16.mxu0 0
  %299 = vmatpush1.bf16.msra.mxu0 0
  %300 = vmatprep.subr.bf16.mxu0 0
  %301 = vmatpush1.bf16.msra.mxu0 0
  %302 = vmatprep.subr.bf16.mxu0 0
  %303 = vmatpush1.bf16.msra.mxu0 0
  %304 = vmatprep.subr.bf16.mxu0 0
  %305 = vmatpush1.bf16.msra.mxu0 0
  %306 = vmatprep.subr.bf16.mxu0 0
  %307 = vmatpush1.bf16.msra.mxu0 0
  %308 = vmatprep.mubr.bf16.mxu0 0
  %309 = vmatmul.mubr.bf16.gmra.mrb[0].mxu0 %v271
  %v310 = vpop.f32.mrb[0].mxu0
  %v311 = vadd.f32 0.0, %v310
  %v312 = vpop.f32.mrb[0].mxu0
  %v313 = vpop.f32.mrb[0].mxu0
  %v314 = vadd.f32 0.0, %v313
  %v315 = vpop.f32.mrb[0].mxu0
  %316 = vmatprep.mubr.bf16.mxu0 0
  %317 = vmatmul.mubr.bf16.gmra.mrb[0].mxu0 %v274
  %v318 = vpop.f32.mrb[0].mxu0
  %v319 = vadd.f32 0.0, %v318
  %v320 = vpop.f32.mrb[0].mxu0
  %v321 = vpop.f32.mrb[0].mxu0
  %v322 = vadd.f32 0.0, %v321
  %v323 = vpop.f32.mrb[0].mxu0
  %324 = vdwg.mxu0
  %v325 = vadd.f32 %v238, %v311
  %v326 = vadd.f32 %v239, %v314
  %v327 = vadd.f32 %v240, %v319
  %v328 = vadd.f32 %v241, %v322
  %s329 = scalar_lea.vmem %s1, 48
  %v330 = vld [vmem:[%s329] sm:$0xf]
  %v331 = vld [vmem:[%s329 + $0x4] sm:$0xf]
  %v332 = vld [vmem:[%s329 + $0x8] sm:$0xf]
  %v333 = vld [vmem:[%s329 + $0xc] sm:$0xf]
  %v338 = vunpack.c.l.b16 %v330
  %v339 = vunpack.c.l.b16 %v331
  %v340 = vunpack.c.l.b16 %v332
  %v341 = vunpack.c.l.b16 %v333
  %v342 = vpack.c.b16 %v339, %v338
  %v343 = vpack.c.b16 %v341, %v340
  %344 = vrot.lane.b32.xlu0 %v166, 124
  %v345 = vpop.permute.xlu0 %344
  %346 = vrot.lane.b32.xlu0 %v167, 124
  %v347 = vpop.permute.xlu0 %346
  %348 = vrot.lane.b32.xlu0 %v168, 124
  %v349 = vpop.permute.xlu0 %348
  %350 = vrot.lane.b32.xlu0 %v169, 124
  %v351 = vpop.permute.xlu0 %350
  %vm352 = vcmask 1014784
  %v353 = vsel %vm352, %v345, %v347
  %v354 = vsel %vm352, %v349, %v351
  %v358 = vsel %vm75, %v342, 0
  %v361 = vsel %vm75, %v343, 0
  %363 = vmatprep.subr.bf16.mxu0 0
  %364 = vmatpush1.bf16.msra.mxu0 %v353
  %365 = vmatprep.subr.bf16.mxu0 0
  %366 = vmatpush1.bf16.msra.mxu0 %v354
  %367 = vmatprep.subr.bf16.mxu0 0
  %368 = vmatpush1.bf16.msra.mxu0 0
  %369 = vmatprep.subr.bf16.mxu0 0
  %370 = vmatpush1.bf16.msra.mxu0 0
  %371 = vmatprep.subr.bf16.mxu0 0
  %372 = vmatpush1.bf16.msra.mxu0 0
  %373 = vmatprep.subr.bf16.mxu0 0
  %374 = vmatpush1.bf16.msra.mxu0 0
  %375 = vmatprep.subr.bf16.mxu0 0
  %376 = vmatpush1.bf16.msra.mxu0 0
  %377 = vmatprep.subr.bf16.mxu0 0
  %378 = vmatpush1.bf16.msra.mxu0 0
  %379 = vmatprep.subr.bf16.mxu0 0
  %380 = vmatpush1.bf16.msra.mxu0 0
  %381 = vmatprep.subr.bf16.mxu0 0
  %382 = vmatpush1.bf16.msra.mxu0 0
  %383 = vmatprep.subr.bf16.mxu0 0
  %384 = vmatpush1.bf16.msra.mxu0 0
  %385 = vmatprep.subr.bf16.mxu0 0
  %386 = vmatpush1.bf16.msra.mxu0 0
  %387 = vmatprep.subr.bf16.mxu0 0
  %388 = vmatpush1.bf16.msra.mxu0 0
  %389 = vmatprep.subr.bf16.mxu0 0
  %390 = vmatpush1.bf16.msra.mxu0 0
  %391 = vmatprep.subr.bf16.mxu0 0
  %392 = vmatpush1.bf16.msra.mxu0 0
  %393 = vmatprep.subr.bf16.mxu0 0
  %394 = vmatpush1.bf16.msra.mxu0 0
  %395 = vmatprep.mubr.bf16.mxu0 0
  %396 = vmatmul.mubr.bf16.gmra.mrb[0].mxu0 %v358
  %v397 = vpop.f32.mrb[0].mxu0
  %v398 = vadd.f32 0.0, %v397
  %v399 = vpop.f32.mrb[0].mxu0
  %v400 = vpop.f32.mrb[0].mxu0
  %v401 = vadd.f32 0.0, %v400
  %v402 = vpop.f32.mrb[0].mxu0
  %403 = vmatprep.mubr.bf16.mxu0 0
  %404 = vmatmul.mubr.bf16.gmra.mrb[0].mxu0 %v361
  %v405 = vpop.f32.mrb[0].mxu0
  %v406 = vadd.f32 0.0, %v405
  %v407 = vpop.f32.mrb[0].mxu0
  %v408 = vpop.f32.mrb[0].mxu0
  %v409 = vadd.f32 0.0, %v408
  %v410 = vpop.f32.mrb[0].mxu0
  %411 = vdwg.mxu0
  %v412 = vadd.f32 %v325, %v398
  %v413 = vadd.f32 %v326, %v401
  %v414 = vadd.f32 %v327, %v406
  %v415 = vadd.f32 %v328, %v409
  %s416 = scalar_lea.vmem %s1, 64
  %v417 = vld [vmem:[%s416] sm:$0xf]
  %v418 = vld [vmem:[%s416 + $0x4] sm:$0xf]
  %v419 = vld [vmem:[%s416 + $0x8] sm:$0xf]
  %v420 = vld [vmem:[%s416 + $0xc] sm:$0xf]
  %v425 = vunpack.c.l.b16 %v417
  %v426 = vunpack.c.l.b16 %v418
  %v427 = vunpack.c.l.b16 %v419
  %v428 = vunpack.c.l.b16 %v420
  %v429 = vpack.c.b16 %v426, %v425
  %v430 = vpack.c.b16 %v428, %v427
  %431 = vrot.lane.b32.xlu0 %v166, 123
  %v432 = vpop.permute.xlu0 %431
  %433 = vrot.lane.b32.xlu0 %v167, 123
  %v434 = vpop.permute.xlu0 %433
  %435 = vrot.lane.b32.xlu0 %v168, 123
  %v436 = vpop.permute.xlu0 %435
  %437 = vrot.lane.b32.xlu0 %v169, 123
  %v438 = vpop.permute.xlu0 %437
  %vm439 = vcmask 1006592
  %v440 = vsel %vm439, %v432, %v434
  %v441 = vsel %vm439, %v436, %v438
  %v445 = vsel %vm75, %v429, 0
  %v448 = vsel %vm75, %v430, 0
  %450 = vmatprep.subr.bf16.mxu0 0
  %451 = vmatpush1.bf16.msra.mxu0 %v440
  %452 = vmatprep.subr.bf16.mxu0 0
  %453 = vmatpush1.bf16.msra.mxu0 %v441
  %454 = vmatprep.subr.bf16.mxu0 0
  %455 = vmatpush1.bf16.msra.mxu0 0
  %456 = vmatprep.subr.bf16.mxu0 0
  %457 = vmatpush1.bf16.msra.mxu0 0
  %458 = vmatprep.subr.bf16.mxu0 0
  %459 = vmatpush1.bf16.msra.mxu0 0
  %460 = vmatprep.subr.bf16.mxu0 0
  %461 = vmatpush1.bf16.msra.mxu0 0
  %462 = vmatprep.subr.bf16.mxu0 0
  %463 = vmatpush1.bf16.msra.mxu0 0
  %464 = vmatprep.subr.bf16.mxu0 0
  %465 = vmatpush1.bf16.msra.mxu0 0
  %466 = vmatprep.subr.bf16.mxu0 0
  %467 = vmatpush1.bf16.msra.mxu0 0
  %468 = vmatprep.subr.bf16.mxu0 0
  %469 = vmatpush1.bf16.msra.mxu0 0
  %470 = vmatprep.subr.bf16.mxu0 0
  %471 = vmatpush1.bf16.msra.mxu0 0
  %472 = vmatprep.subr.bf16.mxu0 0
  %473 = vmatpush1.bf16.msra.mxu0 0
  %474 = vmatprep.subr.bf16.mxu0 0
  %475 = vmatpush1.bf16.msra.mxu0 0
  %476 = vmatprep.subr.bf16.mxu0 0
  %477 = vmatpush1.bf16.msra.mxu0 0
  %478 = vmatprep.subr.bf16.mxu0 0
  %479 = vmatpush1.bf16.msra.mxu0 0
  %480 = vmatprep.subr.bf16.mxu0 0
  %481 = vmatpush1.bf16.msra.mxu0 0
  %482 = vmatprep.mubr.bf16.mxu0 0
  %483 = vmatmul.mubr.bf16.gmra.mrb[0].mxu0 %v445
  %v484 = vpop.f32.mrb[0].mxu0
  %v485 = vadd.f32 0.0, %v484
  %v486 = vpop.f32.mrb[0].mxu0
  %v487 = vpop.f32.mrb[0].mxu0
  %v488 = vadd.f32 0.0, %v487
  %v489 = vpop.f32.mrb[0].mxu0
  %490 = vmatprep.mubr.bf16.mxu0 0
  %491 = vmatmul.mubr.bf16.gmra.mrb[0].mxu0 %v448
  %v492 = vpop.f32.mrb[0].mxu0
  %v493 = vadd.f32 0.0, %v492
  %v494 = vpop.f32.mrb[0].mxu0
  %v495 = vpop.f32.mrb[0].mxu0
  %v496 = vadd.f32 0.0, %v495
  %v497 = vpop.f32.mrb[0].mxu0
  %498 = vdwg.mxu0
  %v499 = vadd.f32 %v412, %v485
  %v500 = vadd.f32 %v413, %v488
  %v501 = vadd.f32 %v414, %v493
  %v502 = vadd.f32 %v415, %v496
  %s503 = scalar_lea.vmem %s1, 80
  %v504 = vld [vmem:[%s503] sm:$0xf]
  %v505 = vld [vmem:[%s503 + $0x4] sm:$0xf]
  %v506 = vld [vmem:[%s503 + $0x8] sm:$0xf]
  %v507 = vld [vmem:[%s503 + $0xc] sm:$0xf]
  %v512 = vunpack.c.l.b16 %v504
  %v513 = vunpack.c.l.b16 %v505
  %v514 = vunpack.c.l.b16 %v506
  %v515 = vunpack.c.l.b16 %v507
  %v516 = vpack.c.b16 %v513, %v512
  %v517 = vpack.c.b16 %v515, %v514
  %518 = vrot.lane.b32.xlu0 %v166, 122
  %v519 = vpop.permute.xlu0 %518
  %520 = vrot.lane.b32.xlu0 %v167, 122
  %v521 = vpop.permute.xlu0 %520
  %522 = vrot.lane.b32.xlu0 %v168, 122
  %v523 = vpop.permute.xlu0 %522
  %524 = vrot.lane.b32.xlu0 %v169, 122
  %v525 = vpop.permute.xlu0 %524
  %vm526 = vcmask 998400
  %v527 = vsel %vm526, %v519, %v521
  %v528 = vsel %vm526, %v523, %v525
  %v532 = vsel %vm75, %v516, 0
  %v535 = vsel %vm75, %v517, 0
  %537 = vmatprep.subr.bf16.mxu0 0
  %538 = vmatpush1.bf16.msra.mxu0 %v527
  %539 = vmatprep.subr.bf16.mxu0 0
  %540 = vmatpush1.bf16.msra.mxu0 %v528
  %541 = vmatprep.subr.bf16.mxu0 0
  %542 = vmatpush1.bf16.msra.mxu0 0
  %543 = vmatprep.subr.bf16.mxu0 0
  %544 = vmatpush1.bf16.msra.mxu0 0
  %545 = vmatprep.subr.bf16.mxu0 0
  %546 = vmatpush1.bf16.msra.mxu0 0
  %547 = vmatprep.subr.bf16.mxu0 0
  %548 = vmatpush1.bf16.msra.mxu0 0
  %549 = vmatprep.subr.bf16.mxu0 0
  %550 = vmatpush1.bf16.msra.mxu0 0
  %551 = vmatprep.subr.bf16.mxu0 0
  %552 = vmatpush1.bf16.msra.mxu0 0
  %553 = vmatprep.subr.bf16.mxu0 0
  %554 = vmatpush1.bf16.msra.mxu0 0
  %555 = vmatprep.subr.bf16.mxu0 0
  %556 = vmatpush1.bf16.msra.mxu0 0
  %557 = vmatprep.subr.bf16.mxu0 0
  %558 = vmatpush1.bf16.msra.mxu0 0
  %559 = vmatprep.subr.bf16.mxu0 0
  %560 = vmatpush1.bf16.msra.mxu0 0
  %561 = vmatprep.subr.bf16.mxu0 0
  %562 = vmatpush1.bf16.msra.mxu0 0
  %563 = vmatprep.subr.bf16.mxu0 0
  %564 = vmatpush1.bf16.msra.mxu0 0
  %565 = vmatprep.subr.bf16.mxu0 0
  %566 = vmatpush1.bf16.msra.mxu0 0
  %567 = vmatprep.subr.bf16.mxu0 0
  %568 = vmatpush1.bf16.msra.mxu0 0
  %569 = vmatprep.mubr.bf16.mxu0 0
  %570 = vmatmul.mubr.bf16.gmra.mrb[0].mxu0 %v532
  %v571 = vpop.f32.mrb[0].mxu0
  %v572 = vadd.f32 0.0, %v571
  %v573 = vpop.f32.mrb[0].mxu0
  %v574 = vpop.f32.mrb[0].mxu0
  %v575 = vadd.f32 0.0, %v574
  %v576 = vpop.f32.mrb[0].mxu0
  %577 = vmatprep.mubr.bf16.mxu0 0
  %578 = vmatmul.mubr.bf16.gmra.mrb[0].mxu0 %v535
  %v579 = vpop.f32.mrb[0].mxu0
  %v580 = vadd.f32 0.0, %v579
  %v581 = vpop.f32.mrb[0].mxu0
  %v582 = vpop.f32.mrb[0].mxu0
  %v583 = vadd.f32 0.0, %v582
  %v584 = vpop.f32.mrb[0].mxu0
  %585 = vdwg.mxu0
  %v586 = vadd.f32 %v499, %v572
  %v587 = vadd.f32 %v500, %v575
  %v588 = vadd.f32 %v501, %v580
  %v589 = vadd.f32 %v502, %v583
  %s590 = scalar_lea.vmem %s1, 96
  %v591 = vld [vmem:[%s590] sm:$0xf]
  %v592 = vld [vmem:[%s590 + $0x4] sm:$0xf]
  %v593 = vld [vmem:[%s590 + $0x8] sm:$0xf]
  %v594 = vld [vmem:[%s590 + $0xc] sm:$0xf]
  %v599 = vunpack.c.l.b16 %v591
  %v600 = vunpack.c.l.b16 %v592
  %v601 = vunpack.c.l.b16 %v593
  %v602 = vunpack.c.l.b16 %v594
  %v603 = vpack.c.b16 %v600, %v599
  %v604 = vpack.c.b16 %v602, %v601
  %605 = vrot.lane.b32.xlu0 %v166, 120
  %v606 = vpop.permute.xlu0 %605
  %607 = vrot.lane.b32.xlu0 %v167, 120
  %v608 = vpop.permute.xlu0 %607
  %609 = vrot.lane.b32.xlu0 %v168, 120
  %v610 = vpop.permute.xlu0 %609
  %611 = vrot.lane.b32.xlu0 %v169, 120
  %v612 = vpop.permute.xlu0 %611
  %vm613 = vcmask 982016
  %v614 = vsel %vm613, %v606, %v608
  %v615 = vsel %vm613, %v610, %v612
  %v619 = vsel %vm75, %v603, 0
  %v622 = vsel %vm75, %v604, 0
  %624 = vmatprep.subr.bf16.mxu0 0
  %625 = vmatpush1.bf16.msra.mxu0 %v614
  %626 = vmatprep.subr.bf16.mxu0 0
  %627 = vmatpush1.bf16.msra.mxu0 %v615
  %628 = vmatprep.subr.bf16.mxu0 0
  %629 = vmatpush1.bf16.msra.mxu0 0
  %630 = vmatprep.subr.bf16.mxu0 0
  %631 = vmatpush1.bf16.msra.mxu0 0
  %632 = vmatprep.subr.bf16.mxu0 0
  %633 = vmatpush1.bf16.msra.mxu0 0
  %634 = vmatprep.subr.bf16.mxu0 0
  %635 = vmatpush1.bf16.msra.mxu0 0
  %636 = vmatprep.subr.bf16.mxu0 0
  %637 = vmatpush1.bf16.msra.mxu0 0
  %638 = vmatprep.subr.bf16.mxu0 0
  %639 = vmatpush1.bf16.msra.mxu0 0
  %640 = vmatprep.subr.bf16.mxu0 0
  %641 = vmatpush1.bf16.msra.mxu0 0
  %642 = vmatprep.subr.bf16.mxu0 0
  %643 = vmatpush1.bf16.msra.mxu0 0
  %644 = vmatprep.subr.bf16.mxu0 0
  %645 = vmatpush1.bf16.msra.mxu0 0
  %646 = vmatprep.subr.bf16.mxu0 0
  %647 = vmatpush1.bf16.msra.mxu0 0
  %648 = vmatprep.subr.bf16.mxu0 0
  %649 = vmatpush1.bf16.msra.mxu0 0
  %650 = vmatprep.subr.bf16.mxu0 0
  %651 = vmatpush1.bf16.msra.mxu0 0
  %652 = vmatprep.subr.bf16.mxu0 0
  %653 = vmatpush1.bf16.msra.mxu0 0
  %654 = vmatprep.subr.bf16.mxu0 0
  %655 = vmatpush1.bf16.msra.mxu0 0
  %656 = vmatprep.mubr.bf16.mxu0 0
  %657 = vmatmul.mubr.bf16.gmra.mrb[0].mxu0 %v619
  %v658 = vpop.f32.mrb[0].mxu0
  %v659 = vadd.f32 0.0, %v658
  %v660 = vpop.f32.mrb[0].mxu0
  %v661 = vpop.f32.mrb[0].mxu0
  %v662 = vadd.f32 0.0, %v661
  %v663 = vpop.f32.mrb[0].mxu0
  %664 = vmatprep.mubr.bf16.mxu0 0
  %665 = vmatmul.mubr.bf16.gmra.mrb[0].mxu0 %v622
  %v666 = vpop.f32.mrb[0].mxu0
  %v667 = vadd.f32 0.0, %v666
  %v668 = vpop.f32.mrb[0].mxu0
  %v669 = vpop.f32.mrb[0].mxu0
  %v670 = vadd.f32 0.0, %v669
  %v671 = vpop.f32.mrb[0].mxu0
  %672 = vdwg.mxu0
  %v673 = vadd.f32 %v586, %v659
  %v674 = vadd.f32 %v587, %v662
  %v675 = vadd.f32 %v588, %v667
  %v676 = vadd.f32 %v589, %v670
  %s677 = scalar_lea.vmem %s1, 112
  %v678 = vld [vmem:[%s677] sm:$0xf]
  %v679 = vld [vmem:[%s677 + $0x4] sm:$0xf]
  %v680 = vld [vmem:[%s677 + $0x8] sm:$0xf]
  %v681 = vld [vmem:[%s677 + $0xc] sm:$0xf]
  %v686 = vunpack.c.l.b16 %v678
  %v687 = vunpack.c.l.b16 %v679
  %v688 = vunpack.c.l.b16 %v680
  %v689 = vunpack.c.l.b16 %v681
  %v690 = vpack.c.b16 %v687, %v686
  %v691 = vpack.c.b16 %v689, %v688
  %692 = vrot.lane.b32.xlu0 %v166, 119
  %v693 = vpop.permute.xlu0 %692
  %694 = vrot.lane.b32.xlu0 %v167, 119
  %v695 = vpop.permute.xlu0 %694
  %696 = vrot.lane.b32.xlu0 %v168, 119
  %v697 = vpop.permute.xlu0 %696
  %698 = vrot.lane.b32.xlu0 %v169, 119
  %v699 = vpop.permute.xlu0 %698
  %vm700 = vcmask 973824
  %v701 = vsel %vm700, %v693, %v695
  %v702 = vsel %vm700, %v697, %v699
  %v706 = vsel %vm75, %v690, 0
  %v709 = vsel %vm75, %v691, 0
  %711 = vmatprep.subr.bf16.mxu0 0
  %712 = vmatpush1.bf16.msra.mxu0 %v701
  %713 = vmatprep.subr.bf16.mxu0 0
  %714 = vmatpush1.bf16.msra.mxu0 %v702
  %715 = vmatprep.subr.bf16.mxu0 0
  %716 = vmatpush1.bf16.msra.mxu0 0
  %717 = vmatprep.subr.bf16.mxu0 0
  %718 = vmatpush1.bf16.msra.mxu0 0
  %719 = vmatprep.subr.bf16.mxu0 0
  %720 = vmatpush1.bf16.msra.mxu0 0
  %721 = vmatprep.subr.bf16.mxu0 0
  %722 = vmatpush1.bf16.msra.mxu0 0
  %723 = vmatprep.subr.bf16.mxu0 0
  %724 = vmatpush1.bf16.msra.mxu0 0
  %725 = vmatprep.subr.bf16.mxu0 0
  %726 = vmatpush1.bf16.msra.mxu0 0
  %727 = vmatprep.subr.bf16.mxu0 0
  %728 = vmatpush1.bf16.msra.mxu0 0
  %729 = vmatprep.subr.bf16.mxu0 0
  %730 = vmatpush1.bf16.msra.mxu0 0
  %731 = vmatprep.subr.bf16.mxu0 0
  %732 = vmatpush1.bf16.msra.mxu0 0
  %733 = vmatprep.subr.bf16.mxu0 0
  %734 = vmatpush1.bf16.msra.mxu0 0
  %735 = vmatprep.subr.bf16.mxu0 0
  %736 = vmatpush1.bf16.msra.mxu0 0
  %737 = vmatprep.subr.bf16.mxu0 0
  %738 = vmatpush1.bf16.msra.mxu0 0
  %739 = vmatprep.subr.bf16.mxu0 0
  %740 = vmatpush1.bf16.msra.mxu0 0
  %741 = vmatprep.subr.bf16.mxu0 0
  %742 = vmatpush1.bf16.msra.mxu0 0
  %743 = vmatprep.mubr.bf16.mxu0 0
  %744 = vmatmul.mubr.bf16.gmra.mrb[0].mxu0 %v706
  %v745 = vpop.f32.mrb[0].mxu0
  %v746 = vadd.f32 0.0, %v745
  %v747 = vpop.f32.mrb[0].mxu0
  %v748 = vpop.f32.mrb[0].mxu0
  %v749 = vadd.f32 0.0, %v748
  %v750 = vpop.f32.mrb[0].mxu0
  %751 = vmatprep.mubr.bf16.mxu0 0
  %752 = vmatmul.mubr.bf16.gmra.mrb[0].mxu0 %v709
  %v753 = vpop.f32.mrb[0].mxu0
  %v754 = vadd.f32 0.0, %v753
  %v755 = vpop.f32.mrb[0].mxu0
  %v756 = vpop.f32.mrb[0].mxu0
  %v757 = vadd.f32 0.0, %v756
  %v758 = vpop.f32.mrb[0].mxu0
  %759 = vdwg.mxu0
  %v760 = vadd.f32 %v673, %v746
  %v761 = vadd.f32 %v674, %v749
  %v762 = vadd.f32 %v675, %v754
  %v763 = vadd.f32 %v676, %v757
  %s764 = scalar_lea.vmem %s1, 128
  %v765 = vld [vmem:[%s764] sm:$0xf]
  %v766 = vld [vmem:[%s764 + $0x4] sm:$0xf]
  %v767 = vld [vmem:[%s764 + $0x8] sm:$0xf]
  %v768 = vld [vmem:[%s764 + $0xc] sm:$0xf]
  %v773 = vunpack.c.l.b16 %v765
  %v774 = vunpack.c.l.b16 %v766
  %v775 = vunpack.c.l.b16 %v767
  %v776 = vunpack.c.l.b16 %v768
  %v777 = vpack.c.b16 %v774, %v773
  %v778 = vpack.c.b16 %v776, %v775
  %779 = vrot.lane.b32.xlu0 %v166, 118
  %v780 = vpop.permute.xlu0 %779
  %781 = vrot.lane.b32.xlu0 %v167, 118
  %v782 = vpop.permute.xlu0 %781
  %783 = vrot.lane.b32.xlu0 %v168, 118
  %v784 = vpop.permute.xlu0 %783
  %785 = vrot.lane.b32.xlu0 %v169, 118
  %v786 = vpop.permute.xlu0 %785
  %vm787 = vcmask 965632
  %v788 = vsel %vm787, %v780, %v782
  %v789 = vsel %vm787, %v784, %v786
  %v793 = vsel %vm75, %v777, 0
  %v796 = vsel %vm75, %v778, 0
  %798 = vmatprep.subr.bf16.mxu0 0
  %799 = vmatpush1.bf16.msra.mxu0 %v788
  %800 = vmatprep.subr.bf16.mxu0 0
  %801 = vmatpush1.bf16.msra.mxu0 %v789
  %802 = vmatprep.subr.bf16.mxu0 0
  %803 = vmatpush1.bf16.msra.mxu0 0
  %804 = vmatprep.subr.bf16.mxu0 0
  %805 = vmatpush1.bf16.msra.mxu0 0
  %806 = vmatprep.subr.bf16.mxu0 0
  %807 = vmatpush1.bf16.msra.mxu0 0
  %808 = vmatprep.subr.bf16.mxu0 0
  %809 = vmatpush1.bf16.msra.mxu0 0
  %810 = vmatprep.subr.bf16.mxu0 0
  %811 = vmatpush1.bf16.msra.mxu0 0
  %812 = vmatprep.subr.bf16.mxu0 0
  %813 = vmatpush1.bf16.msra.mxu0 0
  %814 = vmatprep.subr.bf16.mxu0 0
  %815 = vmatpush1.bf16.msra.mxu0 0
  %816 = vmatprep.subr.bf16.mxu0 0
  %817 = vmatpush1.bf16.msra.mxu0 0
  %818 = vmatprep.subr.bf16.mxu0 0
  %819 = vmatpush1.bf16.msra.mxu0 0
  %820 = vmatprep.subr.bf16.mxu0 0
  %821 = vmatpush1.bf16.msra.mxu0 0
  %822 = vmatprep.subr.bf16.mxu0 0
  %823 = vmatpush1.bf16.msra.mxu0 0
  %824 = vmatprep.subr.bf16.mxu0 0
  %825 = vmatpush1.bf16.msra.mxu0 0
  %826 = vmatprep.subr.bf16.mxu0 0
  %827 = vmatpush1.bf16.msra.mxu0 0
  %828 = vmatprep.subr.bf16.mxu0 0
  %829 = vmatpush1.bf16.msra.mxu0 0
  %830 = vmatprep.mubr.bf16.mxu0 0
  %831 = vmatmul.mubr.bf16.gmra.mrb[0].mxu0 %v793
  %v832 = vpop.f32.mrb[0].mxu0
  %v833 = vadd.f32 0.0, %v832
  %v834 = vpop.f32.mrb[0].mxu0
  %v835 = vpop.f32.mrb[0].mxu0
  %v836 = vadd.f32 0.0, %v835
  %v837 = vpop.f32.mrb[0].mxu0
  %838 = vmatprep.mubr.bf16.mxu0 0
  %839 = vmatmul.mubr.bf16.gmra.mrb[0].mxu0 %v796
  %v840 = vpop.f32.mrb[0].mxu0
  %v841 = vadd.f32 0.0, %v840
  %v842 = vpop.f32.mrb[0].mxu0
  %v843 = vpop.f32.mrb[0].mxu0
  %v844 = vadd.f32 0.0, %v843
  %v845 = vpop.f32.mrb[0].mxu0
  %846 = vdwg.mxu0
  %v847 = vadd.f32 %v760, %v833
  %v848 = vadd.f32 %v761, %v836
  %v849 = vadd.f32 %v762, %v841
  %v850 = vadd.f32 %v763, %v844
  %v851 = vld [vmem:[%s4] sm:$0xf]
  %v852 = vld [vmem:[%s4 + $0x4] sm:$0xf]
  %v853 = vld [vmem:[%s4 + $0x8] sm:$0xf]
  %v854 = vld [vmem:[%s4 + $0xc] sm:$0xf]
  %v855 = vld [vmem:[%s3] sm:$0xf]
  %v856 = vld [vmem:[%s3 + $0x4] sm:$0xf]
  %v861 = vunpack.c.l.b16 %v851
  %v862 = vunpack.c.l.b16 %v852
  %v863 = vunpack.c.l.b16 %v853
  %v864 = vunpack.c.l.b16 %v854
  %v865 = vpack.c.b16 %v862, %v861
  %v866 = vpack.c.b16 %v864, %v863
  %v869 = vunpack.c.l.b16 %v855
  %v870 = vunpack.c.l.b16 %v856
  %v871 = vpack.c.b16 %v870, %v869
  %vm873 = vcmask 130048
  %v875 = vsel %vm873, %v865, 0
  %v878 = vsel %vm873, %v866, 0
  %880 = vmatprep.subr.bf16.mxu0 0
  %881 = vmatpush1.bf16.msra.mxu0 %v871
  %882 = vmatprep.subr.bf16.mxu0 0
  %883 = vmatpush1.bf16.msra.mxu0 0
  %884 = vmatprep.subr.bf16.mxu0 0
  %885 = vmatpush1.bf16.msra.mxu0 0
  %886 = vmatprep.subr.bf16.mxu0 0
  %887 = vmatpush1.bf16.msra.mxu0 0
  %888 = vmatprep.subr.bf16.mxu0 0
  %889 = vmatpush1.bf16.msra.mxu0 0
  %890 = vmatprep.subr.bf16.mxu0 0
  %891 = vmatpush1.bf16.msra.mxu0 0
  %892 = vmatprep.subr.bf16.mxu0 0
  %893 = vmatpush1.bf16.msra.mxu0 0
  %894 = vmatprep.subr.bf16.mxu0 0
  %895 = vmatpush1.bf16.msra.mxu0 0
  %896 = vmatprep.subr.bf16.mxu0 0
  %897 = vmatpush1.bf16.msra.mxu0 0
  %898 = vmatprep.subr.bf16.mxu0 0
  %899 = vmatpush1.bf16.msra.mxu0 0
  %900 = vmatprep.subr.bf16.mxu0 0
  %901 = vmatpush1.bf16.msra.mxu0 0
  %902 = vmatprep.subr.bf16.mxu0 0
  %903 = vmatpush1.bf16.msra.mxu0 0
  %904 = vmatprep.subr.bf16.mxu0 0
  %905 = vmatpush1.bf16.msra.mxu0 0
  %906 = vmatprep.subr.bf16.mxu0 0
  %907 = vmatpush1.bf16.msra.mxu0 0
  %908 = vmatprep.subr.bf16.mxu0 0
  %909 = vmatpush1.bf16.msra.mxu0 0
  %910 = vmatprep.subr.bf16.mxu0 0
  %911 = vmatpush1.bf16.msra.mxu0 0
  %912 = vmatprep.mubr.bf16.mxu0 0
  %913 = vmatmul.mubr.bf16.gmra.mrb[0].mxu0 %v875
  %v914 = vpop.f32.mrb[0].mxu0
  %v915 = vadd.f32 0.0, %v914
  %v916 = vpop.f32.mrb[0].mxu0
  %v917 = vpop.f32.mrb[0].mxu0
  %v918 = vadd.f32 0.0, %v917
  %v919 = vpop.f32.mrb[0].mxu0
  %920 = vmatprep.mubr.bf16.mxu0 0
  %921 = vmatmul.mubr.bf16.gmra.mrb[0].mxu0 %v878
  %v922 = vpop.f32.mrb[0].mxu0
  %v923 = vadd.f32 0.0, %v922
  %v924 = vpop.f32.mrb[0].mxu0
  %v925 = vpop.f32.mrb[0].mxu0
  %v926 = vadd.f32 0.0, %v925
  %v927 = vpop.f32.mrb[0].mxu0
  %928 = vdwg.mxu0
  %v929 = vadd.f32 %v847, %v915
  %v930 = vadd.f32 %v848, %v918
  %v931 = vadd.f32 %v849, %v923
  %v932 = vadd.f32 %v850, %v926
  %v933 = vmax.f32 %v929, 0.0
  %v934 = vmax.f32 %v930, 0.0
  %v935 = vmax.f32 %v931, 0.0
  %v936 = vmax.f32 %v932, 0.0
  %v937 = vpack.c.bf16 %v934, %v933
  %v938 = vpack.c.bf16 %v936, %v935
  %v941 = vunpack.c.l.b16 %v937
  %v942 = vunpack.c.h.b16 %v937
  %v943 = vunpack.c.l.b16 %v938
  %v944 = vunpack.c.h.b16 %v938
  %v945 = vpack.c.b16 %v941, %v941
  %v946 = vpack.c.b16 %v942, %v942
  %v947 = vpack.c.b16 %v943, %v943
  %v948 = vpack.c.b16 %v944, %v944
  %953 = vst [vmem:[%s5] sm:$0xf] %v945
  %954 = vst [vmem:[%s5 + $0x4] sm:$0xf] %v946
  %955 = vst [vmem:[%s5 + $0x8] sm:$0xf] %v947
  %956 = vst [vmem:[%s5 + $0xc] sm:$0xf] %v948
  // Predicated region
  $region22: #{resnet_forward.18} parent=0 // pred_check
    _
  $region23: #{resnet_forward.18} parent=0 // pred_check_branch
    %958 = sbr.rel (0) target = $region25
  $region24: #{resnet_forward.18} parent=0 // pred_region
    _
  $region25: #{resnet_forward.18} parent=0 // pred_fallthru
    _
  // Predicated region
  $region26: #{resnet_forward.18} parent=0 // pred_check
    _
  $region27: #{resnet_forward.18} parent=0 // pred_check_branch
    %960 = sbr.rel (0) target = $region29
  $region28: #{resnet_forward.18} parent=0 // pred_region
    _
  $region29: #{resnet_forward.18} parent=0 // pred_fallthru
    _

// kernel: resnet_forward.19
$region0: #{resnet_forward.19}
  #allocation0 [shape = 'u32[]', space=smem, size = 0x4, offset = 0x4, fixed_abs, tag = 'smem constant byte address 0x4 - core index']
  #allocation1 [shape = 'u32[144,128]{1,0:T(1,128)}', space=vmem, size = 0x12000, scoped, tag = 'internal scratch']
  %s0 = inlined_call_operand.vmem [shape: f32[2,128], index: 0, kind: input, shape index: {}]
  %s1 = inlined_call_operand.vmem [shape: f32[128,32], index: 1, kind: input, shape index: {}]
  %s2 = inlined_call_operand.vmem [shape: f32[1,32], index: 2, kind: input, shape index: {}]
  %s3 = inlined_call_operand.vmem [shape: f32[1,32], index: 3, kind: input, shape index: {}]
  %s4 = inlined_call_operand.vmem [shape: f32[1,32], index: 4, kind: input, shape index: {}]
  %s5 = inlined_call_operand.vmem [shape: f32[32,32], index: 5, kind: input, shape index: {}]
  %s6 = inlined_call_operand.vmem [shape: f32[1,32], index: 6, kind: input, shape index: {}]
  %s7 = inlined_call_operand.hbm [shape: f32[2,32], index: 7, kind: output, shape index: {0}]
  %s8 = inlined_call_operand.hbm [shape: f32[2,32], index: 8, kind: output, shape index: {1}]
  %9 = xla_tuple %s7, %s8
  %s10 = sld [smem:[#allocation0]]
  $region46: #{resnet_forward.19} parent=0
    _
  %s12 = ssub.s32 1, %s10
  %s13 = scalar_select 0, %s12, %s10
  $region1: #{resnet_forward.19} parent=0
    #allocation2 [shape = 'u8[1024]{0}', space=vmem, size = 0x400, scoped, tag = 'output window, operand 0, single buffered']
    #allocation3 [shape = 's32[1]{0}', space=sflag, size = 0x4, scoped, tag = 'scoped memory for resnet_forward.19']
    #allocation4 [shape = 'u8[1024]{0}', space=vmem, size = 0x400, scoped, tag = 'output window, operand 1, single buffered']
    #allocation5 [shape = 's32[1]{0}', space=sflag, size = 0x4, scoped, tag = 'scoped memory for resnet_forward.19']
    %14 = vsyncpa [#allocation3], 0
    %15 = vsyncpa [#allocation5], 0
    // Predicated region
    $region2: #{resnet_forward.19} parent=1 // pred_check
      _
    $region3: #{resnet_forward.19} parent=1 // pred_check_branch
      %17 = sbr.rel (0) target = $region5
    $region4: #{resnet_forward.19} parent=1 // pred_region
      _
    $region5: #{resnet_forward.19} parent=1 // pred_fallthru
      _
    // Predicated region
    $region6: #{resnet_forward.19} parent=1 // pred_check
      _
    $region7: #{resnet_forward.19} parent=1 // pred_check_branch
      %19 = sbr.rel (0) target = $region9
    $region8: #{resnet_forward.19} parent=1 // pred_region
      _
    $region9: #{resnet_forward.19} parent=1 // pred_fallthru
      _
    // Predicated region
    $region10: #{resnet_forward.19} parent=1 // pred_check
      _
    $region11: #{resnet_forward.19} parent=1 // pred_check_branch
      %21 = sbr.rel (0) target = $region13
    $region12: #{resnet_forward.19} parent=1 // pred_region
      _
    $region13: #{resnet_forward.19} parent=1 // pred_fallthru
      _
    // Predicated region
    $region14: #{resnet_forward.19} parent=1 // pred_check
      _
    $region15: #{resnet_forward.19} parent=1 // pred_check_branch
      %23 = sbr.rel (0) target = $region17
    $region16: #{resnet_forward.19} parent=1 // pred_region
      _
    $region17: #{resnet_forward.19} parent=1 // pred_fallthru
      _
    // Predicated region
    $region18: #{resnet_forward.19} parent=1 // pred_check
      _
    $region19: #{resnet_forward.19} parent=1 // pred_check_branch
      %25 = sbr.rel (0) target = $region21
    $region20: #{resnet_forward.19} parent=1 // pred_region
      _
    $region21: #{resnet_forward.19} parent=1 // pred_fallthru
      _
    // Predicated region
    $region22: #{resnet_forward.19} parent=1 // pred_check
      _
    $region23: #{resnet_forward.19} parent=1 // pred_check_branch
      %27 = sbr.rel (0) target = $region25
    $region24: #{resnet_forward.19} parent=1 // pred_region
      _
    $region25: #{resnet_forward.19} parent=1 // pred_fallthru
      _
    // Predicated region
    $region26: #{resnet_forward.19} parent=1 // pred_check
      _
    $region27: #{resnet_forward.19} parent=1 // pred_check_branch
      %29 = sbr.rel (0) target = $region29
    $region28: #{resnet_forward.19} parent=1 // pred_region
      _
    $region29: #{resnet_forward.19} parent=1 // pred_fallthru
      _
    %v30 = vld [vmem:[%s0] sm:$0x3]
    %v31 = vld [vmem:[%s1] sm:$0xff]
    %v32 = vld [vmem:[%s1 + $0x8] sm:$0xff]
    %v33 = vld [vmem:[%s1 + $0x10] sm:$0xff]
    %v34 = vld [vmem:[%s1 + $0x18] sm:$0xff]
    %v35 = vld [vmem:[%s1 + $0x20] sm:$0xff]
    %v36 = vld [vmem:[%s1 + $0x28] sm:$0xff]
    %v37 = vld [vmem:[%s1 + $0x30] sm:$0xff]
    %v38 = vld [vmem:[%s1 + $0x38] sm:$0xff]
    %v39 = vld [vmem:[%s1 + $0x40] sm:$0xff]
    %v40 = vld [vmem:[%s1 + $0x48] sm:$0xff]
    %v41 = vld [vmem:[%s1 + $0x50] sm:$0xff]
    %v42 = vld [vmem:[%s1 + $0x58] sm:$0xff]
    %v43 = vld [vmem:[%s1 + $0x60] sm:$0xff]
    %v44 = vld [vmem:[%s1 + $0x68] sm:$0xff]
    %v45 = vld [vmem:[%s1 + $0x70] sm:$0xff]
    %v46 = vld [vmem:[%s1 + $0x78] sm:$0xff]
    %v47 = vld [vmem:[%s2] sm:$0x1]
    %v49 = vlaneseq
    %v50 = vshrl.u32 %v49, 7
    %v51 = vsub.s32 0, %v50
    %v52 = vrot.slane %v47, %v51
    %54 = vmatprep.subr.mxu0 0.0
    %55 = vmatpush1.msra.mxu0 %v31
    %56 = vmatprep.subr.mxu0 0.0
    %57 = vmatpush1.msra.mxu0 %v32
    %58 = vmatprep.subr.mxu0 0.0
    %59 = vmatpush1.msra.mxu0 %v33
    %60 = vmatprep.subr.mxu0 0.0
    %61 = vmatpush1.msra.mxu0 %v34
    %62 = vmatprep.subr.mxu0 0.0
    %63 = vmatpush1.msra.mxu0 %v35
    %64 = vmatprep.subr.mxu0 0.0
    %65 = vmatpush1.msra.mxu0 %v36
    %66 = vmatprep.subr.mxu0 0.0
    %67 = vmatpush1.msra.mxu0 %v37
    %68 = vmatprep.subr.mxu0 0.0
    %69 = vmatpush1.msra.mxu0 %v38
    %70 = vmatprep.subr.mxu0 0.0
    %71 = vmatpush1.msra.mxu0 %v39
    %72 = vmatprep.subr.mxu0 0.0
    %73 = vmatpush1.msra.mxu0 %v40
    %74 = vmatprep.subr.mxu0 0.0
    %75 = vmatpush1.msra.mxu0 %v41
    %76 = vmatprep.subr.mxu0 0.0
    %77 = vmatpush1.msra.mxu0 %v42
    %78 = vmatprep.subr.mxu0 0.0
    %79 = vmatpush1.msra.mxu0 %v43
    %80 = vmatprep.subr.mxu0 0.0
    %81 = vmatpush1.msra.mxu0 %v44
    %82 = vmatprep.subr.mxu0 0.0
    %83 = vmatpush1.msra.mxu0 %v45
    %84 = vmatprep.subr.mxu0 0.0
    %85 = vmatpush1.msra.mxu0 %v46
    %86 = vmatprep.subr.mxu0 0.0
    %87 = vmatpush1.msra.mxu0 0.0
    %88 = vmatprep.subr.mxu0 0.0
    %89 = vmatpush1.msra.mxu0 0.0
    %90 = vmatprep.subr.mxu0 0.0
    %91 = vmatpush1.msra.mxu0 0.0
    %92 = vmatprep.subr.mxu0 0.0
    %93 = vmatpush1.msra.mxu0 0.0
    %94 = vmatprep.subr.mxu0 0.0
    %95 = vmatpush1.msra.mxu0 0.0
    %96 = vmatprep.subr.mxu0 0.0
    %97 = vmatpush1.msra.mxu0 0.0
    %98 = vmatprep.subr.mxu0 0.0
    %99 = vmatpush1.msra.mxu0 0.0
    %100 = vmatprep.subr.mxu0 0.0
    %101 = vmatpush1.msra.mxu0 0.0
    %102 = vmatprep.subr.mxu0 0.0
    %103 = vmatpush1.msra.mxu0 0.0
    %104 = vmatprep.subr.mxu0 0.0
    %105 = vmatpush1.msra.mxu0 0.0
    %106 = vmatprep.subr.mxu0 0.0
    %107 = vmatpush1.msra.mxu0 0.0
    %108 = vmatprep.subr.mxu0 0.0
    %109 = vmatpush1.msra.mxu0 0.0
    %110 = vmatprep.subr.mxu0 0.0
    %111 = vmatpush1.msra.mxu0 0.0
    %112 = vmatprep.subr.mxu0 0.0
    %113 = vmatpush1.msra.mxu0 0.0
    %114 = vmatprep.subr.mxu0 0.0
    %115 = vmatpush1.msra.mxu0 0.0
    %116 = vmatprep.subr.mxu0 0.0
    %117 = vmatpush1.msra.mxu0 0.0
    %118 = vmatprep.mubr.f32.mxu0 0.0
    %119 = vmatmul.mubr.f32.gmra.mrb[0].mxu0 %v30
    %v120 = vpop.f32.mrb[0].mxu0
    %v121 = vadd.f32 %v52, %v120
    %v122 = vpop.f32.mrb[0].mxu0
    %123 = vdwg.mxu0
    %vm124 = vcmask 254976
    %125 = vst.msk [vmem:[#allocation2] sm:$0x3] %vm124, %v121
    %v126 = vmax.f32 %v121, 0.0
    %v127 = vld [vmem:[%s3] sm:$0x1]
    %v129 = vlaneseq
    %v130 = vshrl.u32 %v129, 7
    %v131 = vsub.s32 0, %v130
    %v132 = vrot.slane %v127, %v131
    %v134 = vsub.f32 %v126, %v132
    %v135 = vld [vmem:[%s4] sm:$0x1]
    %v137 = vlaneseq
    %v138 = vshrl.u32 %v137, 7
    %v139 = vsub.s32 0, %v138
    %v140 = vrot.slane %v135, %v139
    %v142 = vmul.f32 %v134, %v140
    %v143 = vld [vmem:[%s5] sm:$0xff]
    %v144 = vld [vmem:[%s5 + $0x8] sm:$0xff]
    %v145 = vld [vmem:[%s5 + $0x10] sm:$0xff]
    %v146 = vld [vmem:[%s5 + $0x18] sm:$0xff]
    %v147 = vld [vmem:[%s6] sm:$0x1]
    %v149 = vlaneseq
    %v150 = vshrl.u32 %v149, 7
    %v151 = vsub.s32 0, %v150
    %v152 = vrot.slane %v147, %v151
    %vm154 = vcmask 261120
    %v156 = vsel %vm154, %v142, 0
    %158 = vmatprep.subr.mxu0 0.0
    %159 = vmatpush1.msra.mxu0 %v143
    %160 = vmatprep.subr.mxu0 0.0
    %161 = vmatpush1.msra.mxu0 %v144
    %162 = vmatprep.subr.mxu0 0.0
    %163 = vmatpush1.msra.mxu0 %v145
    %164 = vmatprep.subr.mxu0 0.0
    %165 = vmatpush1.msra.mxu0 %v146
    %166 = vmatprep.subr.mxu0 0.0
    %167 = vmatpush1.msra.mxu0 0.0
    %168 = vmatprep.subr.mxu0 0.0
    %169 = vmatpush1.msra.mxu0 0.0
    %170 = vmatprep.subr.mxu0 0.0
    %171 = vmatpush1.msra.mxu0 0.0
    %172 = vmatprep.subr.mxu0 0.0
    %173 = vmatpush1.msra.mxu0 0.0
    %174 = vmatprep.subr.mxu0 0.0
    %175 = vmatpush1.msra.mxu0 0.0
    %176 = vmatprep.subr.mxu0 0.0
    %177 = vmatpush1.msra.mxu0 0.0
    %178 = vmatprep.subr.mxu0 0.0
    %179 = vmatpush1.msra.mxu0 0.0
    %180 = vmatprep.subr.mxu0 0.0
    %181 = vmatpush1.msra.mxu0 0.0
    %182 = vmatprep.subr.mxu0 0.0
    %183 = vmatpush1.msra.mxu0 0.0
    %184 = vmatprep.subr.mxu0 0.0
    %185 = vmatpush1.msra.mxu0 0.0
    %186 = vmatprep.subr.mxu0 0.0
    %187 = vmatpush1.msra.mxu0 0.0
    %188 = vmatprep.subr.mxu0 0.0
    %189 = vmatpush1.msra.mxu0 0.0
    %190 = vmatprep.subr.mxu0 0.0
    %191 = vmatpush1.msra.mxu0 0.0
    %192 = vmatprep.subr.mxu0 0.0
    %193 = vmatpush1.msra.mxu0 0.0
    %194 = vmatprep.subr.mxu0 0.0
    %195 = vmatpush1.msra.mxu0 0.0
    %196 = vmatprep.subr.mxu0 0.0
    %197 = vmatpush1.msra.mxu0 0.0
    %198 = vmatprep.subr.mxu0 0.0
    %199 = vmatpush1.msra.mxu0 0.0
    %200 = vmatprep.subr.mxu0 0.0
    %201 = vmatpush1.msra.mxu0 0.0
    %202 = vmatprep.subr.mxu0 0.0
    %203 = vmatpush1.msra.mxu0 0.0
    %204 = vmatprep.subr.mxu0 0.0
    %205 = vmatpush1.msra.mxu0 0.0
    %206 = vmatprep.subr.mxu0 0.0
    %207 = vmatpush1.msra.mxu0 0.0
    %208 = vmatprep.subr.mxu0 0.0
    %209 = vmatpush1.msra.mxu0 0.0
    %210 = vmatprep.subr.mxu0 0.0
    %211 = vmatpush1.msra.mxu0 0.0
    %212 = vmatprep.subr.mxu0 0.0
    %213 = vmatpush1.msra.mxu0 0.0
    %214 = vmatprep.subr.mxu0 0.0
    %215 = vmatpush1.msra.mxu0 0.0
    %216 = vmatprep.subr.mxu0 0.0
    %217 = vmatpush1.msra.mxu0 0.0
    %218 = vmatprep.subr.mxu0 0.0
    %219 = vmatpush1.msra.mxu0 0.0
    %220 = vmatprep.subr.mxu0 0.0
    %221 = vmatpush1.msra.mxu0 0.0
    %222 = vmatprep.mubr.f32.mxu0 0.0
    %223 = vmatmul.mubr.f32.gmra.mrb[0].mxu0 %v156
    %v224 = vpop.f32.mrb[0].mxu0
    %v225 = vadd.f32 %v152, %v224
    %v226 = vpop.f32.mrb[0].mxu0
    %227 = vdwg.mxu0
    %228 = vst.msk [vmem:[#allocation4] sm:$0x3] %vm124, %v225
    // Predicated region
    $region30: #{resnet_forward.19} parent=1 // pred_check
      _
    $region31: #{resnet_forward.19} parent=1 // pred_check_branch
      %230 = sbr.rel (0) target = $region33
    $region32: #{resnet_forward.19} parent=1 // pred_region
      %s232 = ssub.s32 32, 32
      %233 = vsyncadd [#allocation3], %s232
      %s235 = sshll.u32 [#allocation2], 4
      %s236 = int_to_ptr.vmem [resolvable:$true] %s235
      %238 = dma.vmem_to_hbm [thread:$0]  %s236, 32, %s7, [#allocation3]
    $region33: #{resnet_forward.19} parent=1 // pred_fallthru
      _
    // Predicated region
    $region34: #{resnet_forward.19} parent=1 // pred_check
      _
    $region35: #{resnet_forward.19} parent=1 // pred_check_branch
      %240 = sbr.rel (0) target = $region37
    $region36: #{resnet_forward.19} parent=1 // pred_region
      %s242 = ssub.s32 32, 32
      %243 = vsyncadd [#allocation5], %s242
      %s245 = sshll.u32 [#allocation4], 4
      %s246 = int_to_ptr.vmem [resolvable:$true] %s245
      %248 = dma.vmem_to_hbm [thread:$0]  %s246, 32, %s8, [#allocation5]
    $region37: #{resnet_forward.19} parent=1 // pred_fallthru
      _
    // Predicated region
    $region38: #{resnet_forward.19} parent=1 // pred_check
      _
    $region39: #{resnet_forward.19} parent=1 // pred_check_branch
      %250 = sbr.rel (0) target = $region41
    $region40: #{resnet_forward.19} parent=1 // pred_region
      %251 = dma.done [#allocation3], 32
    $region41: #{resnet_forward.19} parent=1 // pred_fallthru
      _
    // Predicated region
    $region42: #{resnet_forward.19} parent=1 // pred_check
      _
    $region43: #{resnet_forward.19} parent=1 // pred_check_branch
      %253 = sbr.rel (0) target = $region45
    $region44: #{resnet_forward.19} parent=1 // pred_region
      %254 = dma.done [#allocation5], 32
    $region45: #{resnet_forward.19} parent=1 // pred_fallthru
      _
    %255 = vsyncpa [#allocation3], 1
    %256 = vsyncpa [#allocation5], 1

</llo_original>
